<compile_context>
chip_gen: v6e
topology: v6e:2x2x1
jax: 0.10.0
libtpu: 0.0.40
codegen_flags: <defaults>
</compile_context>

<pallas_src>
import functools

import jax
import jax.numpy as jnp
import numpy as np
from jax import lax
from jax.experimental import pallas as pl
from jax.experimental.pallas import tpu as pltpu


# ---------------------------------------------------------------------------
# Helpers
# ---------------------------------------------------------------------------
def _resident_spec(arr):
    """Full-array BlockSpec with a constant index map: the weight block index never
    changes across the (1-D) grid, so the pipeline keeps it resident (no per-step DMA)."""
    zeros = (0,) * arr.ndim
    return pl.BlockSpec(arr.shape, lambda i, _z=zeros: _z)


def _padded_bytes(shape, itemsize):
    """VMEM footprint of an array: last two dims pad to the (8, 128) native tile."""
    lead = int(np.prod(shape[:-2])) if len(shape) > 2 else 1
    sub = -(-shape[-2] // 8) * 8
    lane = -(-shape[-1] // 128) * 128
    return lead * sub * lane * itemsize


def _vmem_estimate(c, S, T, F, H):
    """Per-grid-step VMEM (tile-padded), counting double-buffered blocks, the residual
    staging scratch, the four GRU scratches and the materialized softmax temporaries."""
    bn = c * S
    est = 0
    est += 2 * _padded_bytes((c * T, S, F), 4)      # double-buffered f32 input blocks
    est += _padded_bytes((T, bn, F), 2)             # bf16 residual staging scratch
    est += 4 * _padded_bytes((T, bn, H), 4)         # hidden-seq + 3 gate scratches (f32)
    est += 3 * _padded_bytes((c * T, S, S), 4)      # softmax temps (scores, e, p)
    est += 2 * _padded_bytes((c * T, S, F), 4)      # x / attn temporaries
    return est


def _choose_batches_per_step(B, S, T, F, H, *, target_rows=256, vmem_budget=20 << 20):
    """Batches (cross-sections x T) per grid step: fill ~target_rows of the MXU M dim,
    stay within the VMEM budget (conservative for v7x's 64 MiB physical / 32 MiB scoped
    default), and keep >= 2 grid steps when B allows it (v7x has 2 TensorCores)."""
    divisors = [c for c in range(1, B + 1) if B % c == 0]
    fits = [c for c in divisors if _vmem_estimate(c, S, T, F, H) <= vmem_budget] or [1]
    pref = [c for c in fits if c * S <= target_rows and B // c >= 2]
    pool = pref or [c for c in fits if c * S <= target_rows] or fits[:1]
    return max(pool)


# ---------------------------------------------------------------------------
# Fused kernel: cross-sectional attention + residual + multi-layer GRU + Linear
# Per layer the kernel receives pre-transposed weights:
#   gate-split (H % 128 != 0):  w_ih (3, F_in, H) bf16, w_hh (3, H, H) bf16
#   packed     (H % 128 == 0):  w_ih (F_in, 3H)   bf16, w_hh (H, 3H)   bf16
#   b (4, H) f32  rows [b_ir+b_hr, b_iz+b_hz, b_in, b_hn]
# plus w_out (H, K) bf16 and b_out (1, K) f32.
# ---------------------------------------------------------------------------
def cst_kernel(*refs, num_layers, c, S, scale):
    x_ref = refs[0]                               # (c, T, S, F) f32 input block
    nw = 3 * num_layers
    w_out_ref = refs[1 + nw]                      # (H, K) bf16
    b_out_ref = refs[2 + nw]                      # (1, K) f32
    o_ref = refs[3 + nw]                          # (bn, K)
    xres_ref = refs[4 + nw]                       # (T, bn, F) bf16: time-major residual
    seq_ref = refs[5 + nw]                        # (T, bn, H) f32: layer hidden sequence
    gi_r_ref, gi_z_ref, gi_n_ref = refs[6 + nw:9 + nw]   # (T, bn, H) f32 gate inputs

    _, T, _, F = x_ref.shape
    bn = c * S
    H = seq_ref.shape[-1]

    # ---- 1) cross-sectional attention + residual (fused; no HBM intermediate) -------
    x = x_ref[...].astype(jnp.float32).reshape(c * T, S, F)   # leading-dim reshape: free
    xb = x.astype(jnp.bfloat16)
    xq = (x * scale).astype(jnp.bfloat16)         # fold 1/sqrt(F) into one MXU operand
    scores = jnp.einsum('nsf,nqf->nsq', xq, xb,
                        preferred_element_type=jnp.float32)           # (cT, S, S) f32
    m = jnp.max(scores, axis=-1, keepdims=True)
    e = jnp.exp(scores - m)                       # f32 exp (v5e has no bf16 EUP)
    p = e * pl.reciprocal(jnp.sum(e, axis=-1, keepdims=True), approx=True)
    # TODO(synk): attention-weight dropout omitted (eval mode / dropout == 0).
    attn = jnp.einsum('nsq,nqf->nsf', p.astype(jnp.bfloat16), xb,
                      preferred_element_type=jnp.float32)             # (cT, S, F)
    res = (x - attn).astype(jnp.bfloat16).reshape(c, T, S, F)
    # Stage time-major; row order (local batch, stock) matches the output block rows.
    for j in range(c):                            # c is a small static Python int
        xres_ref[:, j * S:(j + 1) * S, :] = res[j]

    # ---- 2) multi-layer GRU over the period axis (PyTorch gate order [r, z, n]) -----
    h = jnp.zeros((bn, H), jnp.float32)
    for l in range(num_layers):
        w_ih_ref = refs[1 + 3 * l]
        w_hh_ref = refs[2 + 3 * l]
        b_all = refs[3 + 3 * l][...]              # (4, H) f32

        # Batched input->hidden matmuls: one MXU call per gate (or one packed call)
        # covering ALL T timesteps.
        if l == 0:
            x2d = xres_ref[...].reshape(T * bn, F)                     # bf16
        else:
            x2d = seq_ref[...].astype(jnp.bfloat16).reshape(T * bn, H)

        packed = len(w_ih_ref.shape) == 2         # (Fin, 3H) layout when H % 128 == 0
        if packed:
            gi = jnp.dot(x2d, w_ih_ref[...], preferred_element_type=jnp.float32)
            gi_r_ref[...] = (gi[:, 0:H] + b_all[0:1, :]).reshape(T, bn, H)
            gi_z_ref[...] = (gi[:, H:2 * H] + b_all[1:2, :]).reshape(T, bn, H)
            gi_n_ref[...] = (gi[:, 2 * H:3 * H] + b_all[2:3, :]).reshape(T, bn, H)
            w_hh = w_hh_ref[...]                  # (H, 3H) bf16, loaded once per layer
        else:
            gi_r_ref[...] = (jnp.dot(x2d, w_ih_ref[0], preferred_element_type=jnp.float32)
                             + b_all[0:1, :]).reshape(T, bn, H)
            gi_z_ref[...] = (jnp.dot(x2d, w_ih_ref[1], preferred_element_type=jnp.float32)
                             + b_all[1:2, :]).reshape(T, bn, H)
            gi_n_ref[...] = (jnp.dot(x2d, w_ih_ref[2], preferred_element_type=jnp.float32)
                             + b_all[2:3, :]).reshape(T, bn, H)
            w_hh_r, w_hh_z, w_hh_n = w_hh_ref[0], w_hh_ref[1], w_hh_ref[2]

        b_hn = jnp.broadcast_to(b_all[3:4, :], (bn, H))   # hoisted out of the time loop
        write_seq = l < num_layers - 1

        # TODO(synk): stage W_hh on the MXU once per layer (matmul_push_rhs/acc_lhs/pop)
        #             to avoid re-pushing the recurrent RHS every timestep.
        def step(t, h_prev):
            hb = h_prev.astype(jnp.bfloat16)
            if packed:
                gh = jnp.dot(hb, w_hh, preferred_element_type=jnp.float32)    # (bn, 3H)
                gh_r, gh_z = gh[:, 0:H], gh[:, H:2 * H]
                gh_n = gh[:, 2 * H:3 * H] + b_hn
            else:
                gh_r = jnp.dot(hb, w_hh_r, preferred_element_type=jnp.float32)
                gh_z = jnp.dot(hb, w_hh_z, preferred_element_type=jnp.float32)
                gh_n = jnp.dot(hb, w_hh_n, preferred_element_type=jnp.float32) + b_hn
            r = jax.nn.sigmoid(gi_r_ref[t] + gh_r)
            z = jax.nn.sigmoid(gi_z_ref[t] + gh_z)
            n = jnp.tanh(gi_n_ref[t] + r * gh_n)
            h_new = (1.0 - z) * n + z * h_prev
            if write_seq:
                seq_ref[t] = h_new                # next layer's input (VMEM, no stack)
            return h_new

        h = jnp.zeros((bn, H), jnp.float32)
        if T <= 8:
            for t in range(T):                    # small static T: full unroll
                h = step(t, h)
        else:
            h = lax.fori_loop(0, T, step, h)      # bounded live ranges for long T

    out = (jnp.dot(h.astype(jnp.bfloat16), w_out_ref[...],
                   preferred_element_type=jnp.float32) + b_out_ref[...])
    o_ref[...] = out.astype(o_ref.dtype)


# ---------------------------------------------------------------------------
# Parameter preparation (PyTorch layout -> kernel layout). Call ONCE at load time.
# ---------------------------------------------------------------------------
def prepare_gru_params(layer_params, w_out, b_out, *, compute_dtype=jnp.bfloat16):
    layers = []
    for (w_ih, w_hh, b_ih, b_hh) in layer_params:
        H = w_hh.shape[1]
        w_ih_g = jnp.transpose(w_ih.reshape(3, H, -1), (0, 2, 1)).astype(compute_dtype)
        w_hh_g = jnp.transpose(w_hh.reshape(3, H, H), (0, 2, 1)).astype(compute_dtype)
        if H % 128 == 0:
            # Pack the gates along the output (lane) dim -> lane-aligned slices at k*H.
            f_in = w_ih_g.shape[1]
            w_ih_k = jnp.transpose(w_ih_g, (1, 0, 2)).reshape(f_in, 3 * H)
            w_hh_k = jnp.transpose(w_hh_g, (1, 0, 2)).reshape(H, 3 * H)
        else:
            w_ih_k, w_hh_k = w_ih_g, w_hh_g
        bi = b_ih.reshape(3, H).astype(jnp.float32)
        bh = b_hh.reshape(3, H).astype(jnp.float32)
        b_k = jnp.stack([bi[0] + bh[0], bi[1] + bh[1], bi[2], bh[2]], axis=0)   # (4, H)
        layers.append((w_ih_k, w_hh_k, b_k))
    w_out_k = jnp.transpose(w_out).astype(compute_dtype)    # (H, K)
    b_out_k = b_out.reshape(1, -1).astype(jnp.float32)      # (1, K)
    return tuple(layers), w_out_k, b_out_k


# ---------------------------------------------------------------------------
# Full CStRiskFactor forward (single fused pallas_call)
# ---------------------------------------------------------------------------
def cst_risk_factor(x, kernel_params, *, batches_per_step=None):
    """x: (B, T, S, F); kernel_params from prepare_gru_params. Returns (B, S, K) f32."""
    layers, w_out_k, b_out_k = kernel_params
    B, T, S, F = x.shape
    H = layers[0][2].shape[-1]
    K = w_out_k.shape[-1]
    num_layers = len(layers)

    c = batches_per_step or _choose_batches_per_step(B, S, T, F, H)
    assert B % c == 0
    bn = c * S
    N = B * S
    est = _vmem_estimate(c, S, T, F, H)

    in_specs = [pl.BlockSpec((c, T, S, F), lambda i: (i, 0, 0, 0))]
    args = [x]
    for lp in layers:
        for w in lp:
            in_specs.append(_resident_spec(w))
            args.append(w)
    in_specs.append(_resident_spec(w_out_k)); args.append(w_out_k)
    in_specs.append(_resident_spec(b_out_k)); args.append(b_out_k)

    kernel = functools.partial(cst_kernel, num_layers=num_layers, c=c, S=S,
                               scale=1.0 / float(np.sqrt(F)))
    out = pl.pallas_call(
        kernel,
        out_shape=jax.ShapeDtypeStruct((N, K), jnp.float32),
        grid=(B // c,),
        in_specs=in_specs,
        out_specs=pl.BlockSpec((bn, K), lambda i: (i, 0)),
        scratch_shapes=[
            pltpu.VMEM((T, bn, F), jnp.bfloat16),   # time-major residual staging
            pltpu.VMEM((T, bn, H), jnp.float32),    # per-layer hidden sequence
            pltpu.VMEM((T, bn, H), jnp.float32),    # gi_r
            pltpu.VMEM((T, bn, H), jnp.float32),    # gi_z
            pltpu.VMEM((T, bn, H), jnp.float32),    # gi_n
        ],
        compiler_params=pltpu.CompilerParams(
            dimension_semantics=("parallel",),
            vmem_limit_bytes=int(min(max(32 << 20, 2 * est), 64 << 20))),
    )(*args)
    return out.reshape(B, S, K)


# ---------------------------------------------------------------------------
# Deterministic PyTorch-style init: uniform(-1/sqrt(H), 1/sqrt(H)), PyTorch layouts
# ---------------------------------------------------------------------------
def init_params(key, F, H, K, num_layers):
    scale = 1.0 / float(np.sqrt(H))
    layer_params = []
    for l in range(num_layers):
        f_in = F if l == 0 else H
        key, k1, k2, k3, k4 = jax.random.split(key, 5)
        layer_params.append((
            jax.random.uniform(k1, (3 * H, f_in), jnp.float32, -scale, scale),  # w_ih
            jax.random.uniform(k2, (3 * H, H), jnp.float32, -scale, scale),     # w_hh
            jax.random.uniform(k3, (3 * H,), jnp.float32, -scale, scale),       # b_ih
            jax.random.uniform(k4, (3 * H,), jnp.float32, -scale, scale),       # b_hh
        ))
    key, k5, k6 = jax.random.split(key, 3)
    w_out = jax.random.uniform(k5, (K, H), jnp.float32, -scale, scale)
    b_out = jax.random.uniform(k6, (K,), jnp.float32, -scale, scale)
    return layer_params, (w_out, b_out)


# ---------------------------------------------------------------------------
# Pure-JAX f32 reference (PyTorch GRU equations) for a sanity check
# ---------------------------------------------------------------------------
def reference(x, params):
    layer_params, (w_out, b_out) = params
    B, T, S, F = x.shape
    scores = jnp.einsum('btsf,btqf->btsq', x, x) / jnp.sqrt(jnp.float32(F))
    p = jax.nn.softmax(scores, axis=-1)
    gat = jnp.einsum('btsq,btqf->btsf', p, x)
    seq = jnp.transpose(x - gat, (0, 2, 1, 3)).reshape(B * S, T, F)
    h = None
    for (w_ih, w_hh, b_ih, b_hh) in layer_params:
        H = w_hh.shape[1]
        n_rows = seq.shape[0]
        h = jnp.zeros((n_rows, H), jnp.float32)
        outs = []
        for t in range(T):
            gi = seq[:, t, :] @ w_ih.T + b_ih
            gh = h @ w_hh.T + b_hh
            r = jax.nn.sigmoid(gi[:, :H] + gh[:, :H])
            z = jax.nn.sigmoid(gi[:, H:2 * H] + gh[:, H:2 * H])
            n = jnp.tanh(gi[:, 2 * H:] + r * gh[:, 2 * H:])
            h = (1.0 - z) * n + z * h
            outs.append(h)
        seq = jnp.stack(outs, axis=1)
    out = h @ w_out.T + b_out
    return out.reshape(B, S, -1)


if __name__ == "__main__":
    # Small shapes consistent with the module:
    B, T, S, F = 2, 8, 16, 8        # batch, period, stock, features
    H, K, num_layers = 32, 8, 2     # hidden, risk_factor_size (K/2), GRU layers

    key = jax.random.PRNGKey(0)
    key, kx, kp = jax.random.split(key, 3)
    x = jax.random.normal(kx, (B, T, S, F), jnp.float32)
    raw_params = init_params(kp, F, H, K, num_layers)

    # Parameter re-layout hoisted out of the forward: done once at load time.
    layer_params, (w_out, b_out) = raw_params
    kernel_params = prepare_gru_params(layer_params, w_out, b_out)

    fwd = jax.jit(cst_risk_factor)
    out = jax.block_until_ready(fwd(x, kernel_params))
    assert out.shape == (B, S, K), out.shape

    ref = jax.block_until_ready(reference(x, raw_params))
    # bf16 matmul operands + bf16 residual staging (f32 accumulation / gate math).
    np.testing.assert_allclose(np.asarray(out), np.asarray(ref), rtol=2e-2, atol=2e-2)

    print("KERNEL_OK")
</pallas_src>

<mosaic_0001>
module attributes {stable_mosaic.version = 11 : i64} {
  func.func @cst_kernel(%arg0: i32, %arg1: memref<1x8x16x8xf32, #tpu.memory_space<vmem>>, %arg2: memref<3x8x32xbf16, #tpu.memory_space<vmem>>, %arg3: memref<3x32x32xbf16, #tpu.memory_space<vmem>>, %arg4: memref<4x32xf32, #tpu.memory_space<vmem>>, %arg5: memref<3x32x32xbf16, #tpu.memory_space<vmem>>, %arg6: memref<3x32x32xbf16, #tpu.memory_space<vmem>>, %arg7: memref<4x32xf32, #tpu.memory_space<vmem>>, %arg8: memref<32x8xbf16, #tpu.memory_space<vmem>>, %arg9: memref<1x8xf32, #tpu.memory_space<vmem>>, %arg10: memref<16x8xf32, #tpu.memory_space<vmem>>, %arg11: memref<8x16x8xbf16, #tpu.memory_space<vmem>>, %arg12: memref<8x16x32xf32, #tpu.memory_space<vmem>>, %arg13: memref<8x16x32xf32, #tpu.memory_space<vmem>>, %arg14: memref<8x16x32xf32, #tpu.memory_space<vmem>>, %arg15: memref<8x16x32xf32, #tpu.memory_space<vmem>>) attributes {dimension_semantics = [#tpu.dimension_semantics<parallel>], iteration_bounds = array<i64: 2>, scalar_prefetch = 0 : i64, scratch_operands = 5 : i64, tpu.core_type = #tpu.core_type<tc>, window_params = [{transform_indices = @transform_0, window_bounds = array<i64: 1, 8, 16, 8>}, {pipeline_mode = #tpu.pipeline_mode<synchronous>, transform_indices = @transform_1, window_bounds = array<i64: 3, 8, 32>}, {pipeline_mode = #tpu.pipeline_mode<synchronous>, transform_indices = @transform_2, window_bounds = array<i64: 3, 32, 32>}, {pipeline_mode = #tpu.pipeline_mode<synchronous>, transform_indices = @transform_3, window_bounds = array<i64: 4, 32>}, {pipeline_mode = #tpu.pipeline_mode<synchronous>, transform_indices = @transform_4, window_bounds = array<i64: 3, 32, 32>}, {pipeline_mode = #tpu.pipeline_mode<synchronous>, transform_indices = @transform_5, window_bounds = array<i64: 3, 32, 32>}, {pipeline_mode = #tpu.pipeline_mode<synchronous>, transform_indices = @transform_6, window_bounds = array<i64: 4, 32>}, {pipeline_mode = #tpu.pipeline_mode<synchronous>, transform_indices = @transform_7, window_bounds = array<i64: 32, 8>}, {pipeline_mode = #tpu.pipeline_mode<synchronous>, transform_indices = @transform_8, window_bounds = array<i64: 1, 8>}, {transform_indices = @transform_9, window_bounds = array<i64: 16, 8>}]} {
    %c0 = arith.constant 0 : index
    %c0_0 = arith.constant 0 : index
    %c0_1 = arith.constant 0 : index
    %c0_2 = arith.constant 0 : index
    %0 = vector.load %arg1[%c0, %c0_0, %c0_1, %c0_2] : memref<1x8x16x8xf32, #tpu.memory_space<vmem>>, vector<1x8x16x8xf32>
    %1 = vector.shape_cast %0 : vector<1x8x16x8xf32> to vector<8x16x8xf32>
    %2 = arith.truncf %1 : vector<8x16x8xf32> to vector<8x16x8xbf16>
    %cst = arith.constant 0.353553385 : f32
    %3 = vector.broadcast %cst : f32 to vector<8x16x8xf32>
    %4 = arith.mulf %1, %3 : vector<8x16x8xf32>
    %5 = arith.truncf %4 : vector<8x16x8xf32> to vector<8x16x8xbf16>
    "tpu.trace_start"() <{level = 10 : i32, message = "nsf,nqf->nsq"}> : () -> ()
    %cst_3 = arith.constant dense<0.000000e+00> : vector<8x16x16xf32>
    %6 = tpu.matmul %5, %2, %cst_3 {dimension_numbers = #tpu.dot_dimension_numbers<[2], [2], [1], [1], [0, 0, 0, 1, 1, 1], [0], [0]>} : vector<8x16x8xbf16>, vector<8x16x8xbf16>, vector<8x16x16xf32> -> vector<8x16x16xf32>
    "tpu.trace_stop"() : () -> ()
    %cst_4 = arith.constant dense<0xFF800000> : vector<8x16xf32>
    %7 = vector.multi_reduction <maximumf>, %6, %cst_4 [2] : vector<8x16x16xf32> to vector<8x16xf32>
    %8 = vector.shape_cast %7 : vector<8x16xf32> to vector<8x16x1xf32>
    %9 = vector.broadcast %8 : vector<8x16x1xf32> to vector<8x16x16xf32>
    %10 = arith.subf %6, %9 : vector<8x16x16xf32>
    %11 = math.exp %10 : vector<8x16x16xf32>
    %cst_5 = arith.constant dense<0.000000e+00> : vector<8x16xf32>
    %12 = vector.multi_reduction <add>, %11, %cst_5 [2] : vector<8x16x16xf32> to vector<8x16xf32>
    %13 = vector.shape_cast %12 : vector<8x16xf32> to vector<8x16x1xf32>
    %14 = tpu.reciprocal %13 {approx = true} : vector<8x16x1xf32> -> vector<8x16x1xf32>
    %15 = vector.broadcast %14 : vector<8x16x1xf32> to vector<8x16x16xf32>
    %16 = arith.mulf %11, %15 : vector<8x16x16xf32>
    %17 = arith.truncf %16 : vector<8x16x16xf32> to vector<8x16x16xbf16>
    "tpu.trace_start"() <{level = 10 : i32, message = "nsq,nqf->nsf"}> : () -> ()
    %cst_6 = arith.constant dense<0.000000e+00> : vector<8x16x8xf32>
    %18 = tpu.matmul %17, %2, %cst_6 {dimension_numbers = #tpu.dot_dimension_numbers<[2], [1], [1], [2], [0, 0, 0, 1, 1, 2], [0], [0]>} : vector<8x16x16xbf16>, vector<8x16x8xbf16>, vector<8x16x8xf32> -> vector<8x16x8xf32>
    "tpu.trace_stop"() : () -> ()
    %19 = arith.subf %1, %18 : vector<8x16x8xf32>
    %20 = arith.truncf %19 : vector<8x16x8xf32> to vector<8x16x8xbf16>
    %21 = vector.shape_cast %20 : vector<8x16x8xbf16> to vector<1x8x16x8xbf16>
    %22 = vector.shape_cast %21 : vector<1x8x16x8xbf16> to vector<8x16x8xbf16>
    %c0_7 = arith.constant 0 : index
    %c0_8 = arith.constant 0 : index
    %c0_9 = arith.constant 0 : index
    %23 = vector.load %arg11[%c0_7, %c0_8, %c0_9] : memref<8x16x8xbf16, #tpu.memory_space<vmem>>, vector<8x16x8xbf16>
    tpu.vector_store %arg11[%c0_7, %c0_8, %c0_9], %22 {strides = array<i32>} : memref<8x16x8xbf16, #tpu.memory_space<vmem>>, vector<8x16x8xbf16>,
    %c0_10 = arith.constant 0 : index
    %c0_11 = arith.constant 0 : index
    %24 = vector.load %arg4[%c0_10, %c0_11] : memref<4x32xf32, #tpu.memory_space<vmem>>, vector<4x32xf32>
    %c0_12 = arith.constant 0 : index
    %c0_13 = arith.constant 0 : index
    %c0_14 = arith.constant 0 : index
    %25 = vector.load %arg11[%c0_12, %c0_13, %c0_14] : memref<8x16x8xbf16, #tpu.memory_space<vmem>>, vector<8x16x8xbf16>
    %26 = vector.shape_cast %25 : vector<8x16x8xbf16> to vector<128x8xbf16>
    %c0_15 = arith.constant 0 : index
    %c0_16 = arith.constant 0 : index
    %c0_17 = arith.constant 0 : index
    %27 = vector.load %arg2[%c0_15, %c0_16, %c0_17] : memref<3x8x32xbf16, #tpu.memory_space<vmem>>, vector<1x8x32xbf16>
    %28 = vector.shape_cast %27 : vector<1x8x32xbf16> to vector<8x32xbf16>
    %cst_18 = arith.constant dense<0.000000e+00> : vector<128x32xf32>
    %29 = tpu.matmul %26, %28, %cst_18 {dimension_numbers = #tpu.dot_dimension_numbers<[1], [0], [0], [1], [0, 0, 1, 1], [], []>} : vector<128x8xbf16>, vector<8x32xbf16>, vector<128x32xf32> -> vector<128x32xf32>
    %30 = vector.extract_strided_slice %24 {offsets = [0, 0], sizes = [1, 32], strides = [1, 1]} : vector<4x32xf32> to vector<1x32xf32>
    %31 = vector.broadcast %30 : vector<1x32xf32> to vector<128x32xf32>
    %32 = arith.addf %29, %31 : vector<128x32xf32>
    %33 = vector.shape_cast %32 : vector<128x32xf32> to vector<8x16x32xf32>
    %c0_19 = arith.constant 0 : index
    %c0_20 = arith.constant 0 : index
    %c0_21 = arith.constant 0 : index
    %34 = vector.load %arg13[%c0_19, %c0_20, %c0_21] : memref<8x16x32xf32, #tpu.memory_space<vmem>>, vector<8x16x32xf32>
    tpu.vector_store %arg13[%c0_19, %c0_20, %c0_21], %33 {strides = array<i32>} : memref<8x16x32xf32, #tpu.memory_space<vmem>>, vector<8x16x32xf32>,
    %c1 = arith.constant 1 : index
    %c0_22 = arith.constant 0 : index
    %c0_23 = arith.constant 0 : index
    %35 = vector.load %arg2[%c1, %c0_22, %c0_23] : memref<3x8x32xbf16, #tpu.memory_space<vmem>>, vector<1x8x32xbf16>
    %36 = vector.shape_cast %35 : vector<1x8x32xbf16> to vector<8x32xbf16>
    %cst_24 = arith.constant dense<0.000000e+00> : vector<128x32xf32>
    %37 = tpu.matmul %26, %36, %cst_24 {dimension_numbers = #tpu.dot_dimension_numbers<[1], [0], [0], [1], [0, 0, 1, 1], [], []>} : vector<128x8xbf16>, vector<8x32xbf16>, vector<128x32xf32> -> vector<128x32xf32>
    %38 = vector.extract_strided_slice %24 {offsets = [1, 0], sizes = [1, 32], strides = [1, 1]} : vector<4x32xf32> to vector<1x32xf32>
    %39 = vector.broadcast %38 : vector<1x32xf32> to vector<128x32xf32>
    %40 = arith.addf %37, %39 : vector<128x32xf32>
    %41 = vector.shape_cast %40 : vector<128x32xf32> to vector<8x16x32xf32>
    %c0_25 = arith.constant 0 : index
    %c0_26 = arith.constant 0 : index
    %c0_27 = arith.constant 0 : index
    %42 = vector.load %arg14[%c0_25, %c0_26, %c0_27] : memref<8x16x32xf32, #tpu.memory_space<vmem>>, vector<8x16x32xf32>
    tpu.vector_store %arg14[%c0_25, %c0_26, %c0_27], %41 {strides = array<i32>} : memref<8x16x32xf32, #tpu.memory_space<vmem>>, vector<8x16x32xf32>,
    %c2 = arith.constant 2 : index
    %c0_28 = arith.constant 0 : index
    %c0_29 = arith.constant 0 : index
    %43 = vector.load %arg2[%c2, %c0_28, %c0_29] : memref<3x8x32xbf16, #tpu.memory_space<vmem>>, vector<1x8x32xbf16>
    %44 = vector.shape_cast %43 : vector<1x8x32xbf16> to vector<8x32xbf16>
    %cst_30 = arith.constant dense<0.000000e+00> : vector<128x32xf32>
    %45 = tpu.matmul %26, %44, %cst_30 {dimension_numbers = #tpu.dot_dimension_numbers<[1], [0], [0], [1], [0, 0, 1, 1], [], []>} : vector<128x8xbf16>, vector<8x32xbf16>, vector<128x32xf32> -> vector<128x32xf32>
    %46 = vector.extract_strided_slice %24 {offsets = [2, 0], sizes = [1, 32], strides = [1, 1]} : vector<4x32xf32> to vector<1x32xf32>
    %47 = vector.broadcast %46 : vector<1x32xf32> to vector<128x32xf32>
    %48 = arith.addf %45, %47 : vector<128x32xf32>
    %49 = vector.shape_cast %48 : vector<128x32xf32> to vector<8x16x32xf32>
    %c0_31 = arith.constant 0 : index
    %c0_32 = arith.constant 0 : index
    %c0_33 = arith.constant 0 : index
    %50 = vector.load %arg15[%c0_31, %c0_32, %c0_33] : memref<8x16x32xf32, #tpu.memory_space<vmem>>, vector<8x16x32xf32>
    tpu.vector_store %arg15[%c0_31, %c0_32, %c0_33], %49 {strides = array<i32>} : memref<8x16x32xf32, #tpu.memory_space<vmem>>, vector<8x16x32xf32>,
    %c0_34 = arith.constant 0 : index
    %c0_35 = arith.constant 0 : index
    %c0_36 = arith.constant 0 : index
    %51 = vector.load %arg3[%c0_34, %c0_35, %c0_36] : memref<3x32x32xbf16, #tpu.memory_space<vmem>>, vector<1x32x32xbf16>
    %52 = vector.shape_cast %51 : vector<1x32x32xbf16> to vector<32x32xbf16>
    %c1_37 = arith.constant 1 : index
    %c0_38 = arith.constant 0 : index
    %c0_39 = arith.constant 0 : index
    %53 = vector.load %arg3[%c1_37, %c0_38, %c0_39] : memref<3x32x32xbf16, #tpu.memory_space<vmem>>, vector<1x32x32xbf16>
    %54 = vector.shape_cast %53 : vector<1x32x32xbf16> to vector<32x32xbf16>
    %c2_40 = arith.constant 2 : index
    %c0_41 = arith.constant 0 : index
    %c0_42 = arith.constant 0 : index
    %55 = vector.load %arg3[%c2_40, %c0_41, %c0_42] : memref<3x32x32xbf16, #tpu.memory_space<vmem>>, vector<1x32x32xbf16>
    %56 = vector.shape_cast %55 : vector<1x32x32xbf16> to vector<32x32xbf16>
    %57 = vector.extract_strided_slice %24 {offsets = [3, 0], sizes = [1, 32], strides = [1, 1]} : vector<4x32xf32> to vector<1x32xf32>
    %58 = vector.shape_cast %57 : vector<1x32xf32> to vector<1x32xf32>
    %59 = vector.broadcast %58 : vector<1x32xf32> to vector<16x32xf32>
    %cst_43 = arith.constant 0.000000e+00 : f32
    %60 = vector.broadcast %cst_43 : f32 to vector<16x32xf32>
    %61 = arith.truncf %60 : vector<16x32xf32> to vector<16x32xbf16>
    %cst_44 = arith.constant dense<0.000000e+00> : vector<16x32xf32>
    %62 = tpu.matmul %61, %52, %cst_44 {dimension_numbers = #tpu.dot_dimension_numbers<[1], [0], [0], [1], [0, 0, 1, 1], [], []>} : vector<16x32xbf16>, vector<32x32xbf16>, vector<16x32xf32> -> vector<16x32xf32>
    %cst_45 = arith.constant dense<0.000000e+00> : vector<16x32xf32>
    %63 = tpu.matmul %61, %54, %cst_45 {dimension_numbers = #tpu.dot_dimension_numbers<[1], [0], [0], [1], [0, 0, 1, 1], [], []>} : vector<16x32xbf16>, vector<32x32xbf16>, vector<16x32xf32> -> vector<16x32xf32>
    %cst_46 = arith.constant dense<0.000000e+00> : vector<16x32xf32>
    %64 = tpu.matmul %61, %56, %cst_46 {dimension_numbers = #tpu.dot_dimension_numbers<[1], [0], [0], [1], [0, 0, 1, 1], [], []>} : vector<16x32xbf16>, vector<32x32xbf16>, vector<16x32xf32> -> vector<16x32xf32>
    %65 = arith.addf %64, %59 : vector<16x32xf32>
    %c0_47 = arith.constant 0 : index
    %c0_48 = arith.constant 0 : index
    %c0_49 = arith.constant 0 : index
    %66 = vector.load %arg13[%c0_47, %c0_48, %c0_49] : memref<8x16x32xf32, #tpu.memory_space<vmem>>, vector<1x16x32xf32>
    %67 = vector.shape_cast %66 : vector<1x16x32xf32> to vector<16x32xf32>
    %68 = arith.addf %67, %62 : vector<16x32xf32>
    %69 = arith.negf %68 : vector<16x32xf32>
    %70 = math.exp %69 : vector<16x32xf32>
    %cst_50 = arith.constant 1.000000e+00 : f32
    %71 = vector.broadcast %cst_50 : f32 to vector<16x32xf32>
    %72 = arith.addf %71, %70 : vector<16x32xf32>
    %73 = arith.divf %71, %72 : vector<16x32xf32>
    %c0_51 = arith.constant 0 : index
    %c0_52 = arith.constant 0 : index
    %c0_53 = arith.constant 0 : index
    %74 = vector.load %arg14[%c0_51, %c0_52, %c0_53] : memref<8x16x32xf32, #tpu.memory_space<vmem>>, vector<1x16x32xf32>
    %75 = vector.shape_cast %74 : vector<1x16x32xf32> to vector<16x32xf32>
    %76 = arith.addf %75, %63 : vector<16x32xf32>
    %77 = arith.negf %76 : vector<16x32xf32>
    %78 = math.exp %77 : vector<16x32xf32>
    %cst_54 = arith.constant 1.000000e+00 : f32
    %79 = vector.broadcast %cst_54 : f32 to vector<16x32xf32>
    %80 = arith.addf %79, %78 : vector<16x32xf32>
    %81 = arith.divf %79, %80 : vector<16x32xf32>
    %c0_55 = arith.constant 0 : index
    %c0_56 = arith.constant 0 : index
    %c0_57 = arith.constant 0 : index
    %82 = vector.load %arg15[%c0_55, %c0_56, %c0_57] : memref<8x16x32xf32, #tpu.memory_space<vmem>>, vector<1x16x32xf32>
    %83 = vector.shape_cast %82 : vector<1x16x32xf32> to vector<16x32xf32>
    %84 = arith.mulf %73, %65 : vector<16x32xf32>
    %85 = arith.addf %83, %84 : vector<16x32xf32>
    %86 = math.tanh %85 : vector<16x32xf32>
    %cst_58 = arith.constant 1.000000e+00 : f32
    %87 = vector.broadcast %cst_58 : f32 to vector<16x32xf32>
    %88 = arith.subf %87, %81 : vector<16x32xf32>
    %89 = arith.mulf %88, %86 : vector<16x32xf32>
    %90 = arith.mulf %81, %60 : vector<16x32xf32>
    %91 = arith.addf %89, %90 : vector<16x32xf32>
    %c0_59 = arith.constant 0 : index
    %c0_60 = arith.constant 0 : index
    %c0_61 = arith.constant 0 : index
    %92 = vector.load %arg12[%c0_59, %c0_60, %c0_61] : memref<8x16x32xf32, #tpu.memory_space<vmem>>, vector<1x16x32xf32>
    %93 = vector.shape_cast %92 : vector<1x16x32xf32> to vector<16x32xf32>
    %94 = vector.shape_cast %91 : vector<16x32xf32> to vector<1x16x32xf32>
    tpu.vector_store %arg12[%c0_59, %c0_60, %c0_61], %94 {strides = array<i32>} : memref<8x16x32xf32, #tpu.memory_space<vmem>>, vector<1x16x32xf32>,
    %95 = arith.truncf %91 : vector<16x32xf32> to vector<16x32xbf16>
    %cst_62 = arith.constant dense<0.000000e+00> : vector<16x32xf32>
    %96 = tpu.matmul %95, %52, %cst_62 {dimension_numbers = #tpu.dot_dimension_numbers<[1], [0], [0], [1], [0, 0, 1, 1], [], []>} : vector<16x32xbf16>, vector<32x32xbf16>, vector<16x32xf32> -> vector<16x32xf32>
    %cst_63 = arith.constant dense<0.000000e+00> : vector<16x32xf32>
    %97 = tpu.matmul %95, %54, %cst_63 {dimension_numbers = #tpu.dot_dimension_numbers<[1], [0], [0], [1], [0, 0, 1, 1], [], []>} : vector<16x32xbf16>, vector<32x32xbf16>, vector<16x32xf32> -> vector<16x32xf32>
    %cst_64 = arith.constant dense<0.000000e+00> : vector<16x32xf32>
    %98 = tpu.matmul %95, %56, %cst_64 {dimension_numbers = #tpu.dot_dimension_numbers<[1], [0], [0], [1], [0, 0, 1, 1], [], []>} : vector<16x32xbf16>, vector<32x32xbf16>, vector<16x32xf32> -> vector<16x32xf32>
    %99 = arith.addf %98, %59 : vector<16x32xf32>
    %c1_65 = arith.constant 1 : index
    %c0_66 = arith.constant 0 : index
    %c0_67 = arith.constant 0 : index
    %100 = vector.load %arg13[%c1_65, %c0_66, %c0_67] : memref<8x16x32xf32, #tpu.memory_space<vmem>>, vector<1x16x32xf32>
    %101 = vector.shape_cast %100 : vector<1x16x32xf32> to vector<16x32xf32>
    %102 = arith.addf %101, %96 : vector<16x32xf32>
    %103 = arith.negf %102 : vector<16x32xf32>
    %104 = math.exp %103 : vector<16x32xf32>
    %cst_68 = arith.constant 1.000000e+00 : f32
    %105 = vector.broadcast %cst_68 : f32 to vector<16x32xf32>
    %106 = arith.addf %105, %104 : vector<16x32xf32>
    %107 = arith.divf %105, %106 : vector<16x32xf32>
    %c1_69 = arith.constant 1 : index
    %c0_70 = arith.constant 0 : index
    %c0_71 = arith.constant 0 : index
    %108 = vector.load %arg14[%c1_69, %c0_70, %c0_71] : memref<8x16x32xf32, #tpu.memory_space<vmem>>, vector<1x16x32xf32>
    %109 = vector.shape_cast %108 : vector<1x16x32xf32> to vector<16x32xf32>
    %110 = arith.addf %109, %97 : vector<16x32xf32>
    %111 = arith.negf %110 : vector<16x32xf32>
    %112 = math.exp %111 : vector<16x32xf32>
    %cst_72 = arith.constant 1.000000e+00 : f32
    %113 = vector.broadcast %cst_72 : f32 to vector<16x32xf32>
    %114 = arith.addf %113, %112 : vector<16x32xf32>
    %115 = arith.divf %113, %114 : vector<16x32xf32>
    %c1_73 = arith.constant 1 : index
    %c0_74 = arith.constant 0 : index
    %c0_75 = arith.constant 0 : index
    %116 = vector.load %arg15[%c1_73, %c0_74, %c0_75] : memref<8x16x32xf32, #tpu.memory_space<vmem>>, vector<1x16x32xf32>
    %117 = vector.shape_cast %116 : vector<1x16x32xf32> to vector<16x32xf32>
    %118 = arith.mulf %107, %99 : vector<16x32xf32>
    %119 = arith.addf %117, %118 : vector<16x32xf32>
    %120 = math.tanh %119 : vector<16x32xf32>
    %cst_76 = arith.constant 1.000000e+00 : f32
    %121 = vector.broadcast %cst_76 : f32 to vector<16x32xf32>
    %122 = arith.subf %121, %115 : vector<16x32xf32>
    %123 = arith.mulf %122, %120 : vector<16x32xf32>
    %124 = arith.mulf %115, %91 : vector<16x32xf32>
    %125 = arith.addf %123, %124 : vector<16x32xf32>
    %c1_77 = arith.constant 1 : index
    %c0_78 = arith.constant 0 : index
    %c0_79 = arith.constant 0 : index
    %126 = vector.load %arg12[%c1_77, %c0_78, %c0_79] : memref<8x16x32xf32, #tpu.memory_space<vmem>>, vector<1x16x32xf32>
    %127 = vector.shape_cast %126 : vector<1x16x32xf32> to vector<16x32xf32>
    %128 = vector.shape_cast %125 : vector<16x32xf32> to vector<1x16x32xf32>
    tpu.vector_store %arg12[%c1_77, %c0_78, %c0_79], %128 {strides = array<i32>} : memref<8x16x32xf32, #tpu.memory_space<vmem>>, vector<1x16x32xf32>,
    %129 = arith.truncf %125 : vector<16x32xf32> to vector<16x32xbf16>
    %cst_80 = arith.constant dense<0.000000e+00> : vector<16x32xf32>
    %130 = tpu.matmul %129, %52, %cst_80 {dimension_numbers = #tpu.dot_dimension_numbers<[1], [0], [0], [1], [0, 0, 1, 1], [], []>} : vector<16x32xbf16>, vector<32x32xbf16>, vector<16x32xf32> -> vector<16x32xf32>
    %cst_81 = arith.constant dense<0.000000e+00> : vector<16x32xf32>
    %131 = tpu.matmul %129, %54, %cst_81 {dimension_numbers = #tpu.dot_dimension_numbers<[1], [0], [0], [1], [0, 0, 1, 1], [], []>} : vector<16x32xbf16>, vector<32x32xbf16>, vector<16x32xf32> -> vector<16x32xf32>
    %cst_82 = arith.constant dense<0.000000e+00> : vector<16x32xf32>
    %132 = tpu.matmul %129, %56, %cst_82 {dimension_numbers = #tpu.dot_dimension_numbers<[1], [0], [0], [1], [0, 0, 1, 1], [], []>} : vector<16x32xbf16>, vector<32x32xbf16>, vector<16x32xf32> -> vector<16x32xf32>
    %133 = arith.addf %132, %59 : vector<16x32xf32>
    %c2_83 = arith.constant 2 : index
    %c0_84 = arith.constant 0 : index
    %c0_85 = arith.constant 0 : index
    %134 = vector.load %arg13[%c2_83, %c0_84, %c0_85] : memref<8x16x32xf32, #tpu.memory_space<vmem>>, vector<1x16x32xf32>
    %135 = vector.shape_cast %134 : vector<1x16x32xf32> to vector<16x32xf32>
    %136 = arith.addf %135, %130 : vector<16x32xf32>
    %137 = arith.negf %136 : vector<16x32xf32>
    %138 = math.exp %137 : vector<16x32xf32>
    %cst_86 = arith.constant 1.000000e+00 : f32
    %139 = vector.broadcast %cst_86 : f32 to vector<16x32xf32>
    %140 = arith.addf %139, %138 : vector<16x32xf32>
    %141 = arith.divf %139, %140 : vector<16x32xf32>
    %c2_87 = arith.constant 2 : index
    %c0_88 = arith.constant 0 : index
    %c0_89 = arith.constant 0 : index
    %142 = vector.load %arg14[%c2_87, %c0_88, %c0_89] : memref<8x16x32xf32, #tpu.memory_space<vmem>>, vector<1x16x32xf32>
    %143 = vector.shape_cast %142 : vector<1x16x32xf32> to vector<16x32xf32>
    %144 = arith.addf %143, %131 : vector<16x32xf32>
    %145 = arith.negf %144 : vector<16x32xf32>
    %146 = math.exp %145 : vector<16x32xf32>
    %cst_90 = arith.constant 1.000000e+00 : f32
    %147 = vector.broadcast %cst_90 : f32 to vector<16x32xf32>
    %148 = arith.addf %147, %146 : vector<16x32xf32>
    %149 = arith.divf %147, %148 : vector<16x32xf32>
    %c2_91 = arith.constant 2 : index
    %c0_92 = arith.constant 0 : index
    %c0_93 = arith.constant 0 : index
    %150 = vector.load %arg15[%c2_91, %c0_92, %c0_93] : memref<8x16x32xf32, #tpu.memory_space<vmem>>, vector<1x16x32xf32>
    %151 = vector.shape_cast %150 : vector<1x16x32xf32> to vector<16x32xf32>
    %152 = arith.mulf %141, %133 : vector<16x32xf32>
    %153 = arith.addf %151, %152 : vector<16x32xf32>
    %154 = math.tanh %153 : vector<16x32xf32>
    %cst_94 = arith.constant 1.000000e+00 : f32
    %155 = vector.broadcast %cst_94 : f32 to vector<16x32xf32>
    %156 = arith.subf %155, %149 : vector<16x32xf32>
    %157 = arith.mulf %156, %154 : vector<16x32xf32>
    %158 = arith.mulf %149, %125 : vector<16x32xf32>
    %159 = arith.addf %157, %158 : vector<16x32xf32>
    %c2_95 = arith.constant 2 : index
    %c0_96 = arith.constant 0 : index
    %c0_97 = arith.constant 0 : index
    %160 = vector.load %arg12[%c2_95, %c0_96, %c0_97] : memref<8x16x32xf32, #tpu.memory_space<vmem>>, vector<1x16x32xf32>
    %161 = vector.shape_cast %160 : vector<1x16x32xf32> to vector<16x32xf32>
    %162 = vector.shape_cast %159 : vector<16x32xf32> to vector<1x16x32xf32>
    tpu.vector_store %arg12[%c2_95, %c0_96, %c0_97], %162 {strides = array<i32>} : memref<8x16x32xf32, #tpu.memory_space<vmem>>, vector<1x16x32xf32>,
    %163 = arith.truncf %159 : vector<16x32xf32> to vector<16x32xbf16>
    %cst_98 = arith.constant dense<0.000000e+00> : vector<16x32xf32>
    %164 = tpu.matmul %163, %52, %cst_98 {dimension_numbers = #tpu.dot_dimension_numbers<[1], [0], [0], [1], [0, 0, 1, 1], [], []>} : vector<16x32xbf16>, vector<32x32xbf16>, vector<16x32xf32> -> vector<16x32xf32>
    %cst_99 = arith.constant dense<0.000000e+00> : vector<16x32xf32>
    %165 = tpu.matmul %163, %54, %cst_99 {dimension_numbers = #tpu.dot_dimension_numbers<[1], [0], [0], [1], [0, 0, 1, 1], [], []>} : vector<16x32xbf16>, vector<32x32xbf16>, vector<16x32xf32> -> vector<16x32xf32>
    %cst_100 = arith.constant dense<0.000000e+00> : vector<16x32xf32>
    %166 = tpu.matmul %163, %56, %cst_100 {dimension_numbers = #tpu.dot_dimension_numbers<[1], [0], [0], [1], [0, 0, 1, 1], [], []>} : vector<16x32xbf16>, vector<32x32xbf16>, vector<16x32xf32> -> vector<16x32xf32>
    %167 = arith.addf %166, %59 : vector<16x32xf32>
    %c3 = arith.constant 3 : index
    %c0_101 = arith.constant 0 : index
    %c0_102 = arith.constant 0 : index
    %168 = vector.load %arg13[%c3, %c0_101, %c0_102] : memref<8x16x32xf32, #tpu.memory_space<vmem>>, vector<1x16x32xf32>
    %169 = vector.shape_cast %168 : vector<1x16x32xf32> to vector<16x32xf32>
    %170 = arith.addf %169, %164 : vector<16x32xf32>
    %171 = arith.negf %170 : vector<16x32xf32>
    %172 = math.exp %171 : vector<16x32xf32>
    %cst_103 = arith.constant 1.000000e+00 : f32
    %173 = vector.broadcast %cst_103 : f32 to vector<16x32xf32>
    %174 = arith.addf %173, %172 : vector<16x32xf32>
    %175 = arith.divf %173, %174 : vector<16x32xf32>
    %c3_104 = arith.constant 3 : index
    %c0_105 = arith.constant 0 : index
    %c0_106 = arith.constant 0 : index
    %176 = vector.load %arg14[%c3_104, %c0_105, %c0_106] : memref<8x16x32xf32, #tpu.memory_space<vmem>>, vector<1x16x32xf32>
    %177 = vector.shape_cast %176 : vector<1x16x32xf32> to vector<16x32xf32>
    %178 = arith.addf %177, %165 : vector<16x32xf32>
    %179 = arith.negf %178 : vector<16x32xf32>
    %180 = math.exp %179 : vector<16x32xf32>
    %cst_107 = arith.constant 1.000000e+00 : f32
    %181 = vector.broadcast %cst_107 : f32 to vector<16x32xf32>
    %182 = arith.addf %181, %180 : vector<16x32xf32>
    %183 = arith.divf %181, %182 : vector<16x32xf32>
    %c3_108 = arith.constant 3 : index
    %c0_109 = arith.constant 0 : index
    %c0_110 = arith.constant 0 : index
    %184 = vector.load %arg15[%c3_108, %c0_109, %c0_110] : memref<8x16x32xf32, #tpu.memory_space<vmem>>, vector<1x16x32xf32>
    %185 = vector.shape_cast %184 : vector<1x16x32xf32> to vector<16x32xf32>
    %186 = arith.mulf %175, %167 : vector<16x32xf32>
    %187 = arith.addf %185, %186 : vector<16x32xf32>
    %188 = math.tanh %187 : vector<16x32xf32>
    %cst_111 = arith.constant 1.000000e+00 : f32
    %189 = vector.broadcast %cst_111 : f32 to vector<16x32xf32>
    %190 = arith.subf %189, %183 : vector<16x32xf32>
    %191 = arith.mulf %190, %188 : vector<16x32xf32>
    %192 = arith.mulf %183, %159 : vector<16x32xf32>
    %193 = arith.addf %191, %192 : vector<16x32xf32>
    %c3_112 = arith.constant 3 : index
    %c0_113 = arith.constant 0 : index
    %c0_114 = arith.constant 0 : index
    %194 = vector.load %arg12[%c3_112, %c0_113, %c0_114] : memref<8x16x32xf32, #tpu.memory_space<vmem>>, vector<1x16x32xf32>
    %195 = vector.shape_cast %194 : vector<1x16x32xf32> to vector<16x32xf32>
    %196 = vector.shape_cast %193 : vector<16x32xf32> to vector<1x16x32xf32>
    tpu.vector_store %arg12[%c3_112, %c0_113, %c0_114], %196 {strides = array<i32>} : memref<8x16x32xf32, #tpu.memory_space<vmem>>, vector<1x16x32xf32>,
    %197 = arith.truncf %193 : vector<16x32xf32> to vector<16x32xbf16>
    %cst_115 = arith.constant dense<0.000000e+00> : vector<16x32xf32>
    %198 = tpu.matmul %197, %52, %cst_115 {dimension_numbers = #tpu.dot_dimension_numbers<[1], [0], [0], [1], [0, 0, 1, 1], [], []>} : vector<16x32xbf16>, vector<32x32xbf16>, vector<16x32xf32> -> vector<16x32xf32>
    %cst_116 = arith.constant dense<0.000000e+00> : vector<16x32xf32>
    %199 = tpu.matmul %197, %54, %cst_116 {dimension_numbers = #tpu.dot_dimension_numbers<[1], [0], [0], [1], [0, 0, 1, 1], [], []>} : vector<16x32xbf16>, vector<32x32xbf16>, vector<16x32xf32> -> vector<16x32xf32>
    %cst_117 = arith.constant dense<0.000000e+00> : vector<16x32xf32>
    %200 = tpu.matmul %197, %56, %cst_117 {dimension_numbers = #tpu.dot_dimension_numbers<[1], [0], [0], [1], [0, 0, 1, 1], [], []>} : vector<16x32xbf16>, vector<32x32xbf16>, vector<16x32xf32> -> vector<16x32xf32>
    %201 = arith.addf %200, %59 : vector<16x32xf32>
    %c4 = arith.constant 4 : index
    %c0_118 = arith.constant 0 : index
    %c0_119 = arith.constant 0 : index
    %202 = vector.load %arg13[%c4, %c0_118, %c0_119] : memref<8x16x32xf32, #tpu.memory_space<vmem>>, vector<1x16x32xf32>
    %203 = vector.shape_cast %202 : vector<1x16x32xf32> to vector<16x32xf32>
    %204 = arith.addf %203, %198 : vector<16x32xf32>
    %205 = arith.negf %204 : vector<16x32xf32>
    %206 = math.exp %205 : vector<16x32xf32>
    %cst_120 = arith.constant 1.000000e+00 : f32
    %207 = vector.broadcast %cst_120 : f32 to vector<16x32xf32>
    %208 = arith.addf %207, %206 : vector<16x32xf32>
    %209 = arith.divf %207, %208 : vector<16x32xf32>
    %c4_121 = arith.constant 4 : index
    %c0_122 = arith.constant 0 : index
    %c0_123 = arith.constant 0 : index
    %210 = vector.load %arg14[%c4_121, %c0_122, %c0_123] : memref<8x16x32xf32, #tpu.memory_space<vmem>>, vector<1x16x32xf32>
    %211 = vector.shape_cast %210 : vector<1x16x32xf32> to vector<16x32xf32>
    %212 = arith.addf %211, %199 : vector<16x32xf32>
    %213 = arith.negf %212 : vector<16x32xf32>
    %214 = math.exp %213 : vector<16x32xf32>
    %cst_124 = arith.constant 1.000000e+00 : f32
    %215 = vector.broadcast %cst_124 : f32 to vector<16x32xf32>
    %216 = arith.addf %215, %214 : vector<16x32xf32>
    %217 = arith.divf %215, %216 : vector<16x32xf32>
    %c4_125 = arith.constant 4 : index
    %c0_126 = arith.constant 0 : index
    %c0_127 = arith.constant 0 : index
    %218 = vector.load %arg15[%c4_125, %c0_126, %c0_127] : memref<8x16x32xf32, #tpu.memory_space<vmem>>, vector<1x16x32xf32>
    %219 = vector.shape_cast %218 : vector<1x16x32xf32> to vector<16x32xf32>
    %220 = arith.mulf %209, %201 : vector<16x32xf32>
    %221 = arith.addf %219, %220 : vector<16x32xf32>
    %222 = math.tanh %221 : vector<16x32xf32>
    %cst_128 = arith.constant 1.000000e+00 : f32
    %223 = vector.broadcast %cst_128 : f32 to vector<16x32xf32>
    %224 = arith.subf %223, %217 : vector<16x32xf32>
    %225 = arith.mulf %224, %222 : vector<16x32xf32>
    %226 = arith.mulf %217, %193 : vector<16x32xf32>
    %227 = arith.addf %225, %226 : vector<16x32xf32>
    %c4_129 = arith.constant 4 : index
    %c0_130 = arith.constant 0 : index
    %c0_131 = arith.constant 0 : index
    %228 = vector.load %arg12[%c4_129, %c0_130, %c0_131] : memref<8x16x32xf32, #tpu.memory_space<vmem>>, vector<1x16x32xf32>
    %229 = vector.shape_cast %228 : vector<1x16x32xf32> to vector<16x32xf32>
    %230 = vector.shape_cast %227 : vector<16x32xf32> to vector<1x16x32xf32>
    tpu.vector_store %arg12[%c4_129, %c0_130, %c0_131], %230 {strides = array<i32>} : memref<8x16x32xf32, #tpu.memory_space<vmem>>, vector<1x16x32xf32>,
    %231 = arith.truncf %227 : vector<16x32xf32> to vector<16x32xbf16>
    %cst_132 = arith.constant dense<0.000000e+00> : vector<16x32xf32>
    %232 = tpu.matmul %231, %52, %cst_132 {dimension_numbers = #tpu.dot_dimension_numbers<[1], [0], [0], [1], [0, 0, 1, 1], [], []>} : vector<16x32xbf16>, vector<32x32xbf16>, vector<16x32xf32> -> vector<16x32xf32>
    %cst_133 = arith.constant dense<0.000000e+00> : vector<16x32xf32>
    %233 = tpu.matmul %231, %54, %cst_133 {dimension_numbers = #tpu.dot_dimension_numbers<[1], [0], [0], [1], [0, 0, 1, 1], [], []>} : vector<16x32xbf16>, vector<32x32xbf16>, vector<16x32xf32> -> vector<16x32xf32>
    %cst_134 = arith.constant dense<0.000000e+00> : vector<16x32xf32>
    %234 = tpu.matmul %231, %56, %cst_134 {dimension_numbers = #tpu.dot_dimension_numbers<[1], [0], [0], [1], [0, 0, 1, 1], [], []>} : vector<16x32xbf16>, vector<32x32xbf16>, vector<16x32xf32> -> vector<16x32xf32>
    %235 = arith.addf %234, %59 : vector<16x32xf32>
    %c5 = arith.constant 5 : index
    %c0_135 = arith.constant 0 : index
    %c0_136 = arith.constant 0 : index
    %236 = vector.load %arg13[%c5, %c0_135, %c0_136] : memref<8x16x32xf32, #tpu.memory_space<vmem>>, vector<1x16x32xf32>
    %237 = vector.shape_cast %236 : vector<1x16x32xf32> to vector<16x32xf32>
    %238 = arith.addf %237, %232 : vector<16x32xf32>
    %239 = arith.negf %238 : vector<16x32xf32>
    %240 = math.exp %239 : vector<16x32xf32>
    %cst_137 = arith.constant 1.000000e+00 : f32
    %241 = vector.broadcast %cst_137 : f32 to vector<16x32xf32>
    %242 = arith.addf %241, %240 : vector<16x32xf32>
    %243 = arith.divf %241, %242 : vector<16x32xf32>
    %c5_138 = arith.constant 5 : index
    %c0_139 = arith.constant 0 : index
    %c0_140 = arith.constant 0 : index
    %244 = vector.load %arg14[%c5_138, %c0_139, %c0_140] : memref<8x16x32xf32, #tpu.memory_space<vmem>>, vector<1x16x32xf32>
    %245 = vector.shape_cast %244 : vector<1x16x32xf32> to vector<16x32xf32>
    %246 = arith.addf %245, %233 : vector<16x32xf32>
    %247 = arith.negf %246 : vector<16x32xf32>
    %248 = math.exp %247 : vector<16x32xf32>
    %cst_141 = arith.constant 1.000000e+00 : f32
    %249 = vector.broadcast %cst_141 : f32 to vector<16x32xf32>
    %250 = arith.addf %249, %248 : vector<16x32xf32>
    %251 = arith.divf %249, %250 : vector<16x32xf32>
    %c5_142 = arith.constant 5 : index
    %c0_143 = arith.constant 0 : index
    %c0_144 = arith.constant 0 : index
    %252 = vector.load %arg15[%c5_142, %c0_143, %c0_144] : memref<8x16x32xf32, #tpu.memory_space<vmem>>, vector<1x16x32xf32>
    %253 = vector.shape_cast %252 : vector<1x16x32xf32> to vector<16x32xf32>
    %254 = arith.mulf %243, %235 : vector<16x32xf32>
    %255 = arith.addf %253, %254 : vector<16x32xf32>
    %256 = math.tanh %255 : vector<16x32xf32>
    %cst_145 = arith.constant 1.000000e+00 : f32
    %257 = vector.broadcast %cst_145 : f32 to vector<16x32xf32>
    %258 = arith.subf %257, %251 : vector<16x32xf32>
    %259 = arith.mulf %258, %256 : vector<16x32xf32>
    %260 = arith.mulf %251, %227 : vector<16x32xf32>
    %261 = arith.addf %259, %260 : vector<16x32xf32>
    %c5_146 = arith.constant 5 : index
    %c0_147 = arith.constant 0 : index
    %c0_148 = arith.constant 0 : index
    %262 = vector.load %arg12[%c5_146, %c0_147, %c0_148] : memref<8x16x32xf32, #tpu.memory_space<vmem>>, vector<1x16x32xf32>
    %263 = vector.shape_cast %262 : vector<1x16x32xf32> to vector<16x32xf32>
    %264 = vector.shape_cast %261 : vector<16x32xf32> to vector<1x16x32xf32>
    tpu.vector_store %arg12[%c5_146, %c0_147, %c0_148], %264 {strides = array<i32>} : memref<8x16x32xf32, #tpu.memory_space<vmem>>, vector<1x16x32xf32>,
    %265 = arith.truncf %261 : vector<16x32xf32> to vector<16x32xbf16>
    %cst_149 = arith.constant dense<0.000000e+00> : vector<16x32xf32>
    %266 = tpu.matmul %265, %52, %cst_149 {dimension_numbers = #tpu.dot_dimension_numbers<[1], [0], [0], [1], [0, 0, 1, 1], [], []>} : vector<16x32xbf16>, vector<32x32xbf16>, vector<16x32xf32> -> vector<16x32xf32>
    %cst_150 = arith.constant dense<0.000000e+00> : vector<16x32xf32>
    %267 = tpu.matmul %265, %54, %cst_150 {dimension_numbers = #tpu.dot_dimension_numbers<[1], [0], [0], [1], [0, 0, 1, 1], [], []>} : vector<16x32xbf16>, vector<32x32xbf16>, vector<16x32xf32> -> vector<16x32xf32>
    %cst_151 = arith.constant dense<0.000000e+00> : vector<16x32xf32>
    %268 = tpu.matmul %265, %56, %cst_151 {dimension_numbers = #tpu.dot_dimension_numbers<[1], [0], [0], [1], [0, 0, 1, 1], [], []>} : vector<16x32xbf16>, vector<32x32xbf16>, vector<16x32xf32> -> vector<16x32xf32>
    %269 = arith.addf %268, %59 : vector<16x32xf32>
    %c6 = arith.constant 6 : index
    %c0_152 = arith.constant 0 : index
    %c0_153 = arith.constant 0 : index
    %270 = vector.load %arg13[%c6, %c0_152, %c0_153] : memref<8x16x32xf32, #tpu.memory_space<vmem>>, vector<1x16x32xf32>
    %271 = vector.shape_cast %270 : vector<1x16x32xf32> to vector<16x32xf32>
    %272 = arith.addf %271, %266 : vector<16x32xf32>
    %273 = arith.negf %272 : vector<16x32xf32>
    %274 = math.exp %273 : vector<16x32xf32>
    %cst_154 = arith.constant 1.000000e+00 : f32
    %275 = vector.broadcast %cst_154 : f32 to vector<16x32xf32>
    %276 = arith.addf %275, %274 : vector<16x32xf32>
    %277 = arith.divf %275, %276 : vector<16x32xf32>
    %c6_155 = arith.constant 6 : index
    %c0_156 = arith.constant 0 : index
    %c0_157 = arith.constant 0 : index
    %278 = vector.load %arg14[%c6_155, %c0_156, %c0_157] : memref<8x16x32xf32, #tpu.memory_space<vmem>>, vector<1x16x32xf32>
    %279 = vector.shape_cast %278 : vector<1x16x32xf32> to vector<16x32xf32>
    %280 = arith.addf %279, %267 : vector<16x32xf32>
    %281 = arith.negf %280 : vector<16x32xf32>
    %282 = math.exp %281 : vector<16x32xf32>
    %cst_158 = arith.constant 1.000000e+00 : f32
    %283 = vector.broadcast %cst_158 : f32 to vector<16x32xf32>
    %284 = arith.addf %283, %282 : vector<16x32xf32>
    %285 = arith.divf %283, %284 : vector<16x32xf32>
    %c6_159 = arith.constant 6 : index
    %c0_160 = arith.constant 0 : index
    %c0_161 = arith.constant 0 : index
    %286 = vector.load %arg15[%c6_159, %c0_160, %c0_161] : memref<8x16x32xf32, #tpu.memory_space<vmem>>, vector<1x16x32xf32>
    %287 = vector.shape_cast %286 : vector<1x16x32xf32> to vector<16x32xf32>
    %288 = arith.mulf %277, %269 : vector<16x32xf32>
    %289 = arith.addf %287, %288 : vector<16x32xf32>
    %290 = math.tanh %289 : vector<16x32xf32>
    %cst_162 = arith.constant 1.000000e+00 : f32
    %291 = vector.broadcast %cst_162 : f32 to vector<16x32xf32>
    %292 = arith.subf %291, %285 : vector<16x32xf32>
    %293 = arith.mulf %292, %290 : vector<16x32xf32>
    %294 = arith.mulf %285, %261 : vector<16x32xf32>
    %295 = arith.addf %293, %294 : vector<16x32xf32>
    %c6_163 = arith.constant 6 : index
    %c0_164 = arith.constant 0 : index
    %c0_165 = arith.constant 0 : index
    %296 = vector.load %arg12[%c6_163, %c0_164, %c0_165] : memref<8x16x32xf32, #tpu.memory_space<vmem>>, vector<1x16x32xf32>
    %297 = vector.shape_cast %296 : vector<1x16x32xf32> to vector<16x32xf32>
    %298 = vector.shape_cast %295 : vector<16x32xf32> to vector<1x16x32xf32>
    tpu.vector_store %arg12[%c6_163, %c0_164, %c0_165], %298 {strides = array<i32>} : memref<8x16x32xf32, #tpu.memory_space<vmem>>, vector<1x16x32xf32>,
    %299 = arith.truncf %295 : vector<16x32xf32> to vector<16x32xbf16>
    %cst_166 = arith.constant dense<0.000000e+00> : vector<16x32xf32>
    %300 = tpu.matmul %299, %52, %cst_166 {dimension_numbers = #tpu.dot_dimension_numbers<[1], [0], [0], [1], [0, 0, 1, 1], [], []>} : vector<16x32xbf16>, vector<32x32xbf16>, vector<16x32xf32> -> vector<16x32xf32>
    %cst_167 = arith.constant dense<0.000000e+00> : vector<16x32xf32>
    %301 = tpu.matmul %299, %54, %cst_167 {dimension_numbers = #tpu.dot_dimension_numbers<[1], [0], [0], [1], [0, 0, 1, 1], [], []>} : vector<16x32xbf16>, vector<32x32xbf16>, vector<16x32xf32> -> vector<16x32xf32>
    %cst_168 = arith.constant dense<0.000000e+00> : vector<16x32xf32>
    %302 = tpu.matmul %299, %56, %cst_168 {dimension_numbers = #tpu.dot_dimension_numbers<[1], [0], [0], [1], [0, 0, 1, 1], [], []>} : vector<16x32xbf16>, vector<32x32xbf16>, vector<16x32xf32> -> vector<16x32xf32>
    %303 = arith.addf %302, %59 : vector<16x32xf32>
    %c7 = arith.constant 7 : index
    %c0_169 = arith.constant 0 : index
    %c0_170 = arith.constant 0 : index
    %304 = vector.load %arg13[%c7, %c0_169, %c0_170] : memref<8x16x32xf32, #tpu.memory_space<vmem>>, vector<1x16x32xf32>
    %305 = vector.shape_cast %304 : vector<1x16x32xf32> to vector<16x32xf32>
    %306 = arith.addf %305, %300 : vector<16x32xf32>
    %307 = arith.negf %306 : vector<16x32xf32>
    %308 = math.exp %307 : vector<16x32xf32>
    %cst_171 = arith.constant 1.000000e+00 : f32
    %309 = vector.broadcast %cst_171 : f32 to vector<16x32xf32>
    %310 = arith.addf %309, %308 : vector<16x32xf32>
    %311 = arith.divf %309, %310 : vector<16x32xf32>
    %c7_172 = arith.constant 7 : index
    %c0_173 = arith.constant 0 : index
    %c0_174 = arith.constant 0 : index
    %312 = vector.load %arg14[%c7_172, %c0_173, %c0_174] : memref<8x16x32xf32, #tpu.memory_space<vmem>>, vector<1x16x32xf32>
    %313 = vector.shape_cast %312 : vector<1x16x32xf32> to vector<16x32xf32>
    %314 = arith.addf %313, %301 : vector<16x32xf32>
    %315 = arith.negf %314 : vector<16x32xf32>
    %316 = math.exp %315 : vector<16x32xf32>
    %cst_175 = arith.constant 1.000000e+00 : f32
    %317 = vector.broadcast %cst_175 : f32 to vector<16x32xf32>
    %318 = arith.addf %317, %316 : vector<16x32xf32>
    %319 = arith.divf %317, %318 : vector<16x32xf32>
    %c7_176 = arith.constant 7 : index
    %c0_177 = arith.constant 0 : index
    %c0_178 = arith.constant 0 : index
    %320 = vector.load %arg15[%c7_176, %c0_177, %c0_178] : memref<8x16x32xf32, #tpu.memory_space<vmem>>, vector<1x16x32xf32>
    %321 = vector.shape_cast %320 : vector<1x16x32xf32> to vector<16x32xf32>
    %322 = arith.mulf %311, %303 : vector<16x32xf32>
    %323 = arith.addf %321, %322 : vector<16x32xf32>
    %324 = math.tanh %323 : vector<16x32xf32>
    %cst_179 = arith.constant 1.000000e+00 : f32
    %325 = vector.broadcast %cst_179 : f32 to vector<16x32xf32>
    %326 = arith.subf %325, %319 : vector<16x32xf32>
    %327 = arith.mulf %326, %324 : vector<16x32xf32>
    %328 = arith.mulf %319, %295 : vector<16x32xf32>
    %329 = arith.addf %327, %328 : vector<16x32xf32>
    %c7_180 = arith.constant 7 : index
    %c0_181 = arith.constant 0 : index
    %c0_182 = arith.constant 0 : index
    %330 = vector.load %arg12[%c7_180, %c0_181, %c0_182] : memref<8x16x32xf32, #tpu.memory_space<vmem>>, vector<1x16x32xf32>
    %331 = vector.shape_cast %330 : vector<1x16x32xf32> to vector<16x32xf32>
    %332 = vector.shape_cast %329 : vector<16x32xf32> to vector<1x16x32xf32>
    tpu.vector_store %arg12[%c7_180, %c0_181, %c0_182], %332 {strides = array<i32>} : memref<8x16x32xf32, #tpu.memory_space<vmem>>, vector<1x16x32xf32>,
    %c0_183 = arith.constant 0 : index
    %c0_184 = arith.constant 0 : index
    %333 = vector.load %arg7[%c0_183, %c0_184] : memref<4x32xf32, #tpu.memory_space<vmem>>, vector<4x32xf32>
    %c0_185 = arith.constant 0 : index
    %c0_186 = arith.constant 0 : index
    %c0_187 = arith.constant 0 : index
    %334 = vector.load %arg12[%c0_185, %c0_186, %c0_187] : memref<8x16x32xf32, #tpu.memory_space<vmem>>, vector<8x16x32xf32>
    %335 = arith.truncf %334 : vector<8x16x32xf32> to vector<8x16x32xbf16>
    %336 = vector.shape_cast %335 : vector<8x16x32xbf16> to vector<128x32xbf16>
    %c0_188 = arith.constant 0 : index
    %c0_189 = arith.constant 0 : index
    %c0_190 = arith.constant 0 : index
    %337 = vector.load %arg5[%c0_188, %c0_189, %c0_190] : memref<3x32x32xbf16, #tpu.memory_space<vmem>>, vector<1x32x32xbf16>
    %338 = vector.shape_cast %337 : vector<1x32x32xbf16> to vector<32x32xbf16>
    %cst_191 = arith.constant dense<0.000000e+00> : vector<128x32xf32>
    %339 = tpu.matmul %336, %338, %cst_191 {dimension_numbers = #tpu.dot_dimension_numbers<[1], [0], [0], [1], [0, 0, 1, 1], [], []>} : vector<128x32xbf16>, vector<32x32xbf16>, vector<128x32xf32> -> vector<128x32xf32>
    %340 = vector.extract_strided_slice %333 {offsets = [0, 0], sizes = [1, 32], strides = [1, 1]} : vector<4x32xf32> to vector<1x32xf32>
    %341 = vector.broadcast %340 : vector<1x32xf32> to vector<128x32xf32>
    %342 = arith.addf %339, %341 : vector<128x32xf32>
    %343 = vector.shape_cast %342 : vector<128x32xf32> to vector<8x16x32xf32>
    %c0_192 = arith.constant 0 : index
    %c0_193 = arith.constant 0 : index
    %c0_194 = arith.constant 0 : index
    %344 = vector.load %arg13[%c0_192, %c0_193, %c0_194] : memref<8x16x32xf32, #tpu.memory_space<vmem>>, vector<8x16x32xf32>
    tpu.vector_store %arg13[%c0_192, %c0_193, %c0_194], %343 {strides = array<i32>} : memref<8x16x32xf32, #tpu.memory_space<vmem>>, vector<8x16x32xf32>,
    %c1_195 = arith.constant 1 : index
    %c0_196 = arith.constant 0 : index
    %c0_197 = arith.constant 0 : index
    %345 = vector.load %arg5[%c1_195, %c0_196, %c0_197] : memref<3x32x32xbf16, #tpu.memory_space<vmem>>, vector<1x32x32xbf16>
    %346 = vector.shape_cast %345 : vector<1x32x32xbf16> to vector<32x32xbf16>
    %cst_198 = arith.constant dense<0.000000e+00> : vector<128x32xf32>
    %347 = tpu.matmul %336, %346, %cst_198 {dimension_numbers = #tpu.dot_dimension_numbers<[1], [0], [0], [1], [0, 0, 1, 1], [], []>} : vector<128x32xbf16>, vector<32x32xbf16>, vector<128x32xf32> -> vector<128x32xf32>
    %348 = vector.extract_strided_slice %333 {offsets = [1, 0], sizes = [1, 32], strides = [1, 1]} : vector<4x32xf32> to vector<1x32xf32>
    %349 = vector.broadcast %348 : vector<1x32xf32> to vector<128x32xf32>
    %350 = arith.addf %347, %349 : vector<128x32xf32>
    %351 = vector.shape_cast %350 : vector<128x32xf32> to vector<8x16x32xf32>
    %c0_199 = arith.constant 0 : index
    %c0_200 = arith.constant 0 : index
    %c0_201 = arith.constant 0 : index
    %352 = vector.load %arg14[%c0_199, %c0_200, %c0_201] : memref<8x16x32xf32, #tpu.memory_space<vmem>>, vector<8x16x32xf32>
    tpu.vector_store %arg14[%c0_199, %c0_200, %c0_201], %351 {strides = array<i32>} : memref<8x16x32xf32, #tpu.memory_space<vmem>>, vector<8x16x32xf32>,
    %c2_202 = arith.constant 2 : index
    %c0_203 = arith.constant 0 : index
    %c0_204 = arith.constant 0 : index
    %353 = vector.load %arg5[%c2_202, %c0_203, %c0_204] : memref<3x32x32xbf16, #tpu.memory_space<vmem>>, vector<1x32x32xbf16>
    %354 = vector.shape_cast %353 : vector<1x32x32xbf16> to vector<32x32xbf16>
    %cst_205 = arith.constant dense<0.000000e+00> : vector<128x32xf32>
    %355 = tpu.matmul %336, %354, %cst_205 {dimension_numbers = #tpu.dot_dimension_numbers<[1], [0], [0], [1], [0, 0, 1, 1], [], []>} : vector<128x32xbf16>, vector<32x32xbf16>, vector<128x32xf32> -> vector<128x32xf32>
    %356 = vector.extract_strided_slice %333 {offsets = [2, 0], sizes = [1, 32], strides = [1, 1]} : vector<4x32xf32> to vector<1x32xf32>
    %357 = vector.broadcast %356 : vector<1x32xf32> to vector<128x32xf32>
    %358 = arith.addf %355, %357 : vector<128x32xf32>
    %359 = vector.shape_cast %358 : vector<128x32xf32> to vector<8x16x32xf32>
    %c0_206 = arith.constant 0 : index
    %c0_207 = arith.constant 0 : index
    %c0_208 = arith.constant 0 : index
    %360 = vector.load %arg15[%c0_206, %c0_207, %c0_208] : memref<8x16x32xf32, #tpu.memory_space<vmem>>, vector<8x16x32xf32>
    tpu.vector_store %arg15[%c0_206, %c0_207, %c0_208], %359 {strides = array<i32>} : memref<8x16x32xf32, #tpu.memory_space<vmem>>, vector<8x16x32xf32>,
    %c0_209 = arith.constant 0 : index
    %c0_210 = arith.constant 0 : index
    %c0_211 = arith.constant 0 : index
    %361 = vector.load %arg6[%c0_209, %c0_210, %c0_211] : memref<3x32x32xbf16, #tpu.memory_space<vmem>>, vector<1x32x32xbf16>
    %362 = vector.shape_cast %361 : vector<1x32x32xbf16> to vector<32x32xbf16>
    %c1_212 = arith.constant 1 : index
    %c0_213 = arith.constant 0 : index
    %c0_214 = arith.constant 0 : index
    %363 = vector.load %arg6[%c1_212, %c0_213, %c0_214] : memref<3x32x32xbf16, #tpu.memory_space<vmem>>, vector<1x32x32xbf16>
    %364 = vector.shape_cast %363 : vector<1x32x32xbf16> to vector<32x32xbf16>
    %c2_215 = arith.constant 2 : index
    %c0_216 = arith.constant 0 : index
    %c0_217 = arith.constant 0 : index
    %365 = vector.load %arg6[%c2_215, %c0_216, %c0_217] : memref<3x32x32xbf16, #tpu.memory_space<vmem>>, vector<1x32x32xbf16>
    %366 = vector.shape_cast %365 : vector<1x32x32xbf16> to vector<32x32xbf16>
    %367 = vector.extract_strided_slice %333 {offsets = [3, 0], sizes = [1, 32], strides = [1, 1]} : vector<4x32xf32> to vector<1x32xf32>
    %368 = vector.shape_cast %367 : vector<1x32xf32> to vector<1x32xf32>
    %369 = vector.broadcast %368 : vector<1x32xf32> to vector<16x32xf32>
    %cst_218 = arith.constant 0.000000e+00 : f32
    %370 = vector.broadcast %cst_218 : f32 to vector<16x32xf32>
    %371 = arith.truncf %370 : vector<16x32xf32> to vector<16x32xbf16>
    %cst_219 = arith.constant dense<0.000000e+00> : vector<16x32xf32>
    %372 = tpu.matmul %371, %362, %cst_219 {dimension_numbers = #tpu.dot_dimension_numbers<[1], [0], [0], [1], [0, 0, 1, 1], [], []>} : vector<16x32xbf16>, vector<32x32xbf16>, vector<16x32xf32> -> vector<16x32xf32>
    %cst_220 = arith.constant dense<0.000000e+00> : vector<16x32xf32>
    %373 = tpu.matmul %371, %364, %cst_220 {dimension_numbers = #tpu.dot_dimension_numbers<[1], [0], [0], [1], [0, 0, 1, 1], [], []>} : vector<16x32xbf16>, vector<32x32xbf16>, vector<16x32xf32> -> vector<16x32xf32>
    %cst_221 = arith.constant dense<0.000000e+00> : vector<16x32xf32>
    %374 = tpu.matmul %371, %366, %cst_221 {dimension_numbers = #tpu.dot_dimension_numbers<[1], [0], [0], [1], [0, 0, 1, 1], [], []>} : vector<16x32xbf16>, vector<32x32xbf16>, vector<16x32xf32> -> vector<16x32xf32>
    %375 = arith.addf %374, %369 : vector<16x32xf32>
    %c0_222 = arith.constant 0 : index
    %c0_223 = arith.constant 0 : index
    %c0_224 = arith.constant 0 : index
    %376 = vector.load %arg13[%c0_222, %c0_223, %c0_224] : memref<8x16x32xf32, #tpu.memory_space<vmem>>, vector<1x16x32xf32>
    %377 = vector.shape_cast %376 : vector<1x16x32xf32> to vector<16x32xf32>
    %378 = arith.addf %377, %372 : vector<16x32xf32>
    %379 = arith.negf %378 : vector<16x32xf32>
    %380 = math.exp %379 : vector<16x32xf32>
    %cst_225 = arith.constant 1.000000e+00 : f32
    %381 = vector.broadcast %cst_225 : f32 to vector<16x32xf32>
    %382 = arith.addf %381, %380 : vector<16x32xf32>
    %383 = arith.divf %381, %382 : vector<16x32xf32>
    %c0_226 = arith.constant 0 : index
    %c0_227 = arith.constant 0 : index
    %c0_228 = arith.constant 0 : index
    %384 = vector.load %arg14[%c0_226, %c0_227, %c0_228] : memref<8x16x32xf32, #tpu.memory_space<vmem>>, vector<1x16x32xf32>
    %385 = vector.shape_cast %384 : vector<1x16x32xf32> to vector<16x32xf32>
    %386 = arith.addf %385, %373 : vector<16x32xf32>
    %387 = arith.negf %386 : vector<16x32xf32>
    %388 = math.exp %387 : vector<16x32xf32>
    %cst_229 = arith.constant 1.000000e+00 : f32
    %389 = vector.broadcast %cst_229 : f32 to vector<16x32xf32>
    %390 = arith.addf %389, %388 : vector<16x32xf32>
    %391 = arith.divf %389, %390 : vector<16x32xf32>
    %c0_230 = arith.constant 0 : index
    %c0_231 = arith.constant 0 : index
    %c0_232 = arith.constant 0 : index
    %392 = vector.load %arg15[%c0_230, %c0_231, %c0_232] : memref<8x16x32xf32, #tpu.memory_space<vmem>>, vector<1x16x32xf32>
    %393 = vector.shape_cast %392 : vector<1x16x32xf32> to vector<16x32xf32>
    %394 = arith.mulf %383, %375 : vector<16x32xf32>
    %395 = arith.addf %393, %394 : vector<16x32xf32>
    %396 = math.tanh %395 : vector<16x32xf32>
    %cst_233 = arith.constant 1.000000e+00 : f32
    %397 = vector.broadcast %cst_233 : f32 to vector<16x32xf32>
    %398 = arith.subf %397, %391 : vector<16x32xf32>
    %399 = arith.mulf %398, %396 : vector<16x32xf32>
    %400 = arith.mulf %391, %370 : vector<16x32xf32>
    %401 = arith.addf %399, %400 : vector<16x32xf32>
    %402 = arith.truncf %401 : vector<16x32xf32> to vector<16x32xbf16>
    %cst_234 = arith.constant dense<0.000000e+00> : vector<16x32xf32>
    %403 = tpu.matmul %402, %362, %cst_234 {dimension_numbers = #tpu.dot_dimension_numbers<[1], [0], [0], [1], [0, 0, 1, 1], [], []>} : vector<16x32xbf16>, vector<32x32xbf16>, vector<16x32xf32> -> vector<16x32xf32>
    %cst_235 = arith.constant dense<0.000000e+00> : vector<16x32xf32>
    %404 = tpu.matmul %402, %364, %cst_235 {dimension_numbers = #tpu.dot_dimension_numbers<[1], [0], [0], [1], [0, 0, 1, 1], [], []>} : vector<16x32xbf16>, vector<32x32xbf16>, vector<16x32xf32> -> vector<16x32xf32>
    %cst_236 = arith.constant dense<0.000000e+00> : vector<16x32xf32>
    %405 = tpu.matmul %402, %366, %cst_236 {dimension_numbers = #tpu.dot_dimension_numbers<[1], [0], [0], [1], [0, 0, 1, 1], [], []>} : vector<16x32xbf16>, vector<32x32xbf16>, vector<16x32xf32> -> vector<16x32xf32>
    %406 = arith.addf %405, %369 : vector<16x32xf32>
    %c1_237 = arith.constant 1 : index
    %c0_238 = arith.constant 0 : index
    %c0_239 = arith.constant 0 : index
    %407 = vector.load %arg13[%c1_237, %c0_238, %c0_239] : memref<8x16x32xf32, #tpu.memory_space<vmem>>, vector<1x16x32xf32>
    %408 = vector.shape_cast %407 : vector<1x16x32xf32> to vector<16x32xf32>
    %409 = arith.addf %408, %403 : vector<16x32xf32>
    %410 = arith.negf %409 : vector<16x32xf32>
    %411 = math.exp %410 : vector<16x32xf32>
    %cst_240 = arith.constant 1.000000e+00 : f32
    %412 = vector.broadcast %cst_240 : f32 to vector<16x32xf32>
    %413 = arith.addf %412, %411 : vector<16x32xf32>
    %414 = arith.divf %412, %413 : vector<16x32xf32>
    %c1_241 = arith.constant 1 : index
    %c0_242 = arith.constant 0 : index
    %c0_243 = arith.constant 0 : index
    %415 = vector.load %arg14[%c1_241, %c0_242, %c0_243] : memref<8x16x32xf32, #tpu.memory_space<vmem>>, vector<1x16x32xf32>
    %416 = vector.shape_cast %415 : vector<1x16x32xf32> to vector<16x32xf32>
    %417 = arith.addf %416, %404 : vector<16x32xf32>
    %418 = arith.negf %417 : vector<16x32xf32>
    %419 = math.exp %418 : vector<16x32xf32>
    %cst_244 = arith.constant 1.000000e+00 : f32
    %420 = vector.broadcast %cst_244 : f32 to vector<16x32xf32>
    %421 = arith.addf %420, %419 : vector<16x32xf32>
    %422 = arith.divf %420, %421 : vector<16x32xf32>
    %c1_245 = arith.constant 1 : index
    %c0_246 = arith.constant 0 : index
    %c0_247 = arith.constant 0 : index
    %423 = vector.load %arg15[%c1_245, %c0_246, %c0_247] : memref<8x16x32xf32, #tpu.memory_space<vmem>>, vector<1x16x32xf32>
    %424 = vector.shape_cast %423 : vector<1x16x32xf32> to vector<16x32xf32>
    %425 = arith.mulf %414, %406 : vector<16x32xf32>
    %426 = arith.addf %424, %425 : vector<16x32xf32>
    %427 = math.tanh %426 : vector<16x32xf32>
    %cst_248 = arith.constant 1.000000e+00 : f32
    %428 = vector.broadcast %cst_248 : f32 to vector<16x32xf32>
    %429 = arith.subf %428, %422 : vector<16x32xf32>
    %430 = arith.mulf %429, %427 : vector<16x32xf32>
    %431 = arith.mulf %422, %401 : vector<16x32xf32>
    %432 = arith.addf %430, %431 : vector<16x32xf32>
    %433 = arith.truncf %432 : vector<16x32xf32> to vector<16x32xbf16>
    %cst_249 = arith.constant dense<0.000000e+00> : vector<16x32xf32>
    %434 = tpu.matmul %433, %362, %cst_249 {dimension_numbers = #tpu.dot_dimension_numbers<[1], [0], [0], [1], [0, 0, 1, 1], [], []>} : vector<16x32xbf16>, vector<32x32xbf16>, vector<16x32xf32> -> vector<16x32xf32>
    %cst_250 = arith.constant dense<0.000000e+00> : vector<16x32xf32>
    %435 = tpu.matmul %433, %364, %cst_250 {dimension_numbers = #tpu.dot_dimension_numbers<[1], [0], [0], [1], [0, 0, 1, 1], [], []>} : vector<16x32xbf16>, vector<32x32xbf16>, vector<16x32xf32> -> vector<16x32xf32>
    %cst_251 = arith.constant dense<0.000000e+00> : vector<16x32xf32>
    %436 = tpu.matmul %433, %366, %cst_251 {dimension_numbers = #tpu.dot_dimension_numbers<[1], [0], [0], [1], [0, 0, 1, 1], [], []>} : vector<16x32xbf16>, vector<32x32xbf16>, vector<16x32xf32> -> vector<16x32xf32>
    %437 = arith.addf %436, %369 : vector<16x32xf32>
    %c2_252 = arith.constant 2 : index
    %c0_253 = arith.constant 0 : index
    %c0_254 = arith.constant 0 : index
    %438 = vector.load %arg13[%c2_252, %c0_253, %c0_254] : memref<8x16x32xf32, #tpu.memory_space<vmem>>, vector<1x16x32xf32>
    %439 = vector.shape_cast %438 : vector<1x16x32xf32> to vector<16x32xf32>
    %440 = arith.addf %439, %434 : vector<16x32xf32>
    %441 = arith.negf %440 : vector<16x32xf32>
    %442 = math.exp %441 : vector<16x32xf32>
    %cst_255 = arith.constant 1.000000e+00 : f32
    %443 = vector.broadcast %cst_255 : f32 to vector<16x32xf32>
    %444 = arith.addf %443, %442 : vector<16x32xf32>
    %445 = arith.divf %443, %444 : vector<16x32xf32>
    %c2_256 = arith.constant 2 : index
    %c0_257 = arith.constant 0 : index
    %c0_258 = arith.constant 0 : index
    %446 = vector.load %arg14[%c2_256, %c0_257, %c0_258] : memref<8x16x32xf32, #tpu.memory_space<vmem>>, vector<1x16x32xf32>
    %447 = vector.shape_cast %446 : vector<1x16x32xf32> to vector<16x32xf32>
    %448 = arith.addf %447, %435 : vector<16x32xf32>
    %449 = arith.negf %448 : vector<16x32xf32>
    %450 = math.exp %449 : vector<16x32xf32>
    %cst_259 = arith.constant 1.000000e+00 : f32
    %451 = vector.broadcast %cst_259 : f32 to vector<16x32xf32>
    %452 = arith.addf %451, %450 : vector<16x32xf32>
    %453 = arith.divf %451, %452 : vector<16x32xf32>
    %c2_260 = arith.constant 2 : index
    %c0_261 = arith.constant 0 : index
    %c0_262 = arith.constant 0 : index
    %454 = vector.load %arg15[%c2_260, %c0_261, %c0_262] : memref<8x16x32xf32, #tpu.memory_space<vmem>>, vector<1x16x32xf32>
    %455 = vector.shape_cast %454 : vector<1x16x32xf32> to vector<16x32xf32>
    %456 = arith.mulf %445, %437 : vector<16x32xf32>
    %457 = arith.addf %455, %456 : vector<16x32xf32>
    %458 = math.tanh %457 : vector<16x32xf32>
    %cst_263 = arith.constant 1.000000e+00 : f32
    %459 = vector.broadcast %cst_263 : f32 to vector<16x32xf32>
    %460 = arith.subf %459, %453 : vector<16x32xf32>
    %461 = arith.mulf %460, %458 : vector<16x32xf32>
    %462 = arith.mulf %453, %432 : vector<16x32xf32>
    %463 = arith.addf %461, %462 : vector<16x32xf32>
    %464 = arith.truncf %463 : vector<16x32xf32> to vector<16x32xbf16>
    %cst_264 = arith.constant dense<0.000000e+00> : vector<16x32xf32>
    %465 = tpu.matmul %464, %362, %cst_264 {dimension_numbers = #tpu.dot_dimension_numbers<[1], [0], [0], [1], [0, 0, 1, 1], [], []>} : vector<16x32xbf16>, vector<32x32xbf16>, vector<16x32xf32> -> vector<16x32xf32>
    %cst_265 = arith.constant dense<0.000000e+00> : vector<16x32xf32>
    %466 = tpu.matmul %464, %364, %cst_265 {dimension_numbers = #tpu.dot_dimension_numbers<[1], [0], [0], [1], [0, 0, 1, 1], [], []>} : vector<16x32xbf16>, vector<32x32xbf16>, vector<16x32xf32> -> vector<16x32xf32>
    %cst_266 = arith.constant dense<0.000000e+00> : vector<16x32xf32>
    %467 = tpu.matmul %464, %366, %cst_266 {dimension_numbers = #tpu.dot_dimension_numbers<[1], [0], [0], [1], [0, 0, 1, 1], [], []>} : vector<16x32xbf16>, vector<32x32xbf16>, vector<16x32xf32> -> vector<16x32xf32>
    %468 = arith.addf %467, %369 : vector<16x32xf32>
    %c3_267 = arith.constant 3 : index
    %c0_268 = arith.constant 0 : index
    %c0_269 = arith.constant 0 : index
    %469 = vector.load %arg13[%c3_267, %c0_268, %c0_269] : memref<8x16x32xf32, #tpu.memory_space<vmem>>, vector<1x16x32xf32>
    %470 = vector.shape_cast %469 : vector<1x16x32xf32> to vector<16x32xf32>
    %471 = arith.addf %470, %465 : vector<16x32xf32>
    %472 = arith.negf %471 : vector<16x32xf32>
    %473 = math.exp %472 : vector<16x32xf32>
    %cst_270 = arith.constant 1.000000e+00 : f32
    %474 = vector.broadcast %cst_270 : f32 to vector<16x32xf32>
    %475 = arith.addf %474, %473 : vector<16x32xf32>
    %476 = arith.divf %474, %475 : vector<16x32xf32>
    %c3_271 = arith.constant 3 : index
    %c0_272 = arith.constant 0 : index
    %c0_273 = arith.constant 0 : index
    %477 = vector.load %arg14[%c3_271, %c0_272, %c0_273] : memref<8x16x32xf32, #tpu.memory_space<vmem>>, vector<1x16x32xf32>
    %478 = vector.shape_cast %477 : vector<1x16x32xf32> to vector<16x32xf32>
    %479 = arith.addf %478, %466 : vector<16x32xf32>
    %480 = arith.negf %479 : vector<16x32xf32>
    %481 = math.exp %480 : vector<16x32xf32>
    %cst_274 = arith.constant 1.000000e+00 : f32
    %482 = vector.broadcast %cst_274 : f32 to vector<16x32xf32>
    %483 = arith.addf %482, %481 : vector<16x32xf32>
    %484 = arith.divf %482, %483 : vector<16x32xf32>
    %c3_275 = arith.constant 3 : index
    %c0_276 = arith.constant 0 : index
    %c0_277 = arith.constant 0 : index
    %485 = vector.load %arg15[%c3_275, %c0_276, %c0_277] : memref<8x16x32xf32, #tpu.memory_space<vmem>>, vector<1x16x32xf32>
    %486 = vector.shape_cast %485 : vector<1x16x32xf32> to vector<16x32xf32>
    %487 = arith.mulf %476, %468 : vector<16x32xf32>
    %488 = arith.addf %486, %487 : vector<16x32xf32>
    %489 = math.tanh %488 : vector<16x32xf32>
    %cst_278 = arith.constant 1.000000e+00 : f32
    %490 = vector.broadcast %cst_278 : f32 to vector<16x32xf32>
    %491 = arith.subf %490, %484 : vector<16x32xf32>
    %492 = arith.mulf %491, %489 : vector<16x32xf32>
    %493 = arith.mulf %484, %463 : vector<16x32xf32>
    %494 = arith.addf %492, %493 : vector<16x32xf32>
    %495 = arith.truncf %494 : vector<16x32xf32> to vector<16x32xbf16>
    %cst_279 = arith.constant dense<0.000000e+00> : vector<16x32xf32>
    %496 = tpu.matmul %495, %362, %cst_279 {dimension_numbers = #tpu.dot_dimension_numbers<[1], [0], [0], [1], [0, 0, 1, 1], [], []>} : vector<16x32xbf16>, vector<32x32xbf16>, vector<16x32xf32> -> vector<16x32xf32>
    %cst_280 = arith.constant dense<0.000000e+00> : vector<16x32xf32>
    %497 = tpu.matmul %495, %364, %cst_280 {dimension_numbers = #tpu.dot_dimension_numbers<[1], [0], [0], [1], [0, 0, 1, 1], [], []>} : vector<16x32xbf16>, vector<32x32xbf16>, vector<16x32xf32> -> vector<16x32xf32>
    %cst_281 = arith.constant dense<0.000000e+00> : vector<16x32xf32>
    %498 = tpu.matmul %495, %366, %cst_281 {dimension_numbers = #tpu.dot_dimension_numbers<[1], [0], [0], [1], [0, 0, 1, 1], [], []>} : vector<16x32xbf16>, vector<32x32xbf16>, vector<16x32xf32> -> vector<16x32xf32>
    %499 = arith.addf %498, %369 : vector<16x32xf32>
    %c4_282 = arith.constant 4 : index
    %c0_283 = arith.constant 0 : index
    %c0_284 = arith.constant 0 : index
    %500 = vector.load %arg13[%c4_282, %c0_283, %c0_284] : memref<8x16x32xf32, #tpu.memory_space<vmem>>, vector<1x16x32xf32>
    %501 = vector.shape_cast %500 : vector<1x16x32xf32> to vector<16x32xf32>
    %502 = arith.addf %501, %496 : vector<16x32xf32>
    %503 = arith.negf %502 : vector<16x32xf32>
    %504 = math.exp %503 : vector<16x32xf32>
    %cst_285 = arith.constant 1.000000e+00 : f32
    %505 = vector.broadcast %cst_285 : f32 to vector<16x32xf32>
    %506 = arith.addf %505, %504 : vector<16x32xf32>
    %507 = arith.divf %505, %506 : vector<16x32xf32>
    %c4_286 = arith.constant 4 : index
    %c0_287 = arith.constant 0 : index
    %c0_288 = arith.constant 0 : index
    %508 = vector.load %arg14[%c4_286, %c0_287, %c0_288] : memref<8x16x32xf32, #tpu.memory_space<vmem>>, vector<1x16x32xf32>
    %509 = vector.shape_cast %508 : vector<1x16x32xf32> to vector<16x32xf32>
    %510 = arith.addf %509, %497 : vector<16x32xf32>
    %511 = arith.negf %510 : vector<16x32xf32>
    %512 = math.exp %511 : vector<16x32xf32>
    %cst_289 = arith.constant 1.000000e+00 : f32
    %513 = vector.broadcast %cst_289 : f32 to vector<16x32xf32>
    %514 = arith.addf %513, %512 : vector<16x32xf32>
    %515 = arith.divf %513, %514 : vector<16x32xf32>
    %c4_290 = arith.constant 4 : index
    %c0_291 = arith.constant 0 : index
    %c0_292 = arith.constant 0 : index
    %516 = vector.load %arg15[%c4_290, %c0_291, %c0_292] : memref<8x16x32xf32, #tpu.memory_space<vmem>>, vector<1x16x32xf32>
    %517 = vector.shape_cast %516 : vector<1x16x32xf32> to vector<16x32xf32>
    %518 = arith.mulf %507, %499 : vector<16x32xf32>
    %519 = arith.addf %517, %518 : vector<16x32xf32>
    %520 = math.tanh %519 : vector<16x32xf32>
    %cst_293 = arith.constant 1.000000e+00 : f32
    %521 = vector.broadcast %cst_293 : f32 to vector<16x32xf32>
    %522 = arith.subf %521, %515 : vector<16x32xf32>
    %523 = arith.mulf %522, %520 : vector<16x32xf32>
    %524 = arith.mulf %515, %494 : vector<16x32xf32>
    %525 = arith.addf %523, %524 : vector<16x32xf32>
    %526 = arith.truncf %525 : vector<16x32xf32> to vector<16x32xbf16>
    %cst_294 = arith.constant dense<0.000000e+00> : vector<16x32xf32>
    %527 = tpu.matmul %526, %362, %cst_294 {dimension_numbers = #tpu.dot_dimension_numbers<[1], [0], [0], [1], [0, 0, 1, 1], [], []>} : vector<16x32xbf16>, vector<32x32xbf16>, vector<16x32xf32> -> vector<16x32xf32>
    %cst_295 = arith.constant dense<0.000000e+00> : vector<16x32xf32>
    %528 = tpu.matmul %526, %364, %cst_295 {dimension_numbers = #tpu.dot_dimension_numbers<[1], [0], [0], [1], [0, 0, 1, 1], [], []>} : vector<16x32xbf16>, vector<32x32xbf16>, vector<16x32xf32> -> vector<16x32xf32>
    %cst_296 = arith.constant dense<0.000000e+00> : vector<16x32xf32>
    %529 = tpu.matmul %526, %366, %cst_296 {dimension_numbers = #tpu.dot_dimension_numbers<[1], [0], [0], [1], [0, 0, 1, 1], [], []>} : vector<16x32xbf16>, vector<32x32xbf16>, vector<16x32xf32> -> vector<16x32xf32>
    %530 = arith.addf %529, %369 : vector<16x32xf32>
    %c5_297 = arith.constant 5 : index
    %c0_298 = arith.constant 0 : index
    %c0_299 = arith.constant 0 : index
    %531 = vector.load %arg13[%c5_297, %c0_298, %c0_299] : memref<8x16x32xf32, #tpu.memory_space<vmem>>, vector<1x16x32xf32>
    %532 = vector.shape_cast %531 : vector<1x16x32xf32> to vector<16x32xf32>
    %533 = arith.addf %532, %527 : vector<16x32xf32>
    %534 = arith.negf %533 : vector<16x32xf32>
    %535 = math.exp %534 : vector<16x32xf32>
    %cst_300 = arith.constant 1.000000e+00 : f32
    %536 = vector.broadcast %cst_300 : f32 to vector<16x32xf32>
    %537 = arith.addf %536, %535 : vector<16x32xf32>
    %538 = arith.divf %536, %537 : vector<16x32xf32>
    %c5_301 = arith.constant 5 : index
    %c0_302 = arith.constant 0 : index
    %c0_303 = arith.constant 0 : index
    %539 = vector.load %arg14[%c5_301, %c0_302, %c0_303] : memref<8x16x32xf32, #tpu.memory_space<vmem>>, vector<1x16x32xf32>
    %540 = vector.shape_cast %539 : vector<1x16x32xf32> to vector<16x32xf32>
    %541 = arith.addf %540, %528 : vector<16x32xf32>
    %542 = arith.negf %541 : vector<16x32xf32>
    %543 = math.exp %542 : vector<16x32xf32>
    %cst_304 = arith.constant 1.000000e+00 : f32
    %544 = vector.broadcast %cst_304 : f32 to vector<16x32xf32>
    %545 = arith.addf %544, %543 : vector<16x32xf32>
    %546 = arith.divf %544, %545 : vector<16x32xf32>
    %c5_305 = arith.constant 5 : index
    %c0_306 = arith.constant 0 : index
    %c0_307 = arith.constant 0 : index
    %547 = vector.load %arg15[%c5_305, %c0_306, %c0_307] : memref<8x16x32xf32, #tpu.memory_space<vmem>>, vector<1x16x32xf32>
    %548 = vector.shape_cast %547 : vector<1x16x32xf32> to vector<16x32xf32>
    %549 = arith.mulf %538, %530 : vector<16x32xf32>
    %550 = arith.addf %548, %549 : vector<16x32xf32>
    %551 = math.tanh %550 : vector<16x32xf32>
    %cst_308 = arith.constant 1.000000e+00 : f32
    %552 = vector.broadcast %cst_308 : f32 to vector<16x32xf32>
    %553 = arith.subf %552, %546 : vector<16x32xf32>
    %554 = arith.mulf %553, %551 : vector<16x32xf32>
    %555 = arith.mulf %546, %525 : vector<16x32xf32>
    %556 = arith.addf %554, %555 : vector<16x32xf32>
    %557 = arith.truncf %556 : vector<16x32xf32> to vector<16x32xbf16>
    %cst_309 = arith.constant dense<0.000000e+00> : vector<16x32xf32>
    %558 = tpu.matmul %557, %362, %cst_309 {dimension_numbers = #tpu.dot_dimension_numbers<[1], [0], [0], [1], [0, 0, 1, 1], [], []>} : vector<16x32xbf16>, vector<32x32xbf16>, vector<16x32xf32> -> vector<16x32xf32>
    %cst_310 = arith.constant dense<0.000000e+00> : vector<16x32xf32>
    %559 = tpu.matmul %557, %364, %cst_310 {dimension_numbers = #tpu.dot_dimension_numbers<[1], [0], [0], [1], [0, 0, 1, 1], [], []>} : vector<16x32xbf16>, vector<32x32xbf16>, vector<16x32xf32> -> vector<16x32xf32>
    %cst_311 = arith.constant dense<0.000000e+00> : vector<16x32xf32>
    %560 = tpu.matmul %557, %366, %cst_311 {dimension_numbers = #tpu.dot_dimension_numbers<[1], [0], [0], [1], [0, 0, 1, 1], [], []>} : vector<16x32xbf16>, vector<32x32xbf16>, vector<16x32xf32> -> vector<16x32xf32>
    %561 = arith.addf %560, %369 : vector<16x32xf32>
    %c6_312 = arith.constant 6 : index
    %c0_313 = arith.constant 0 : index
    %c0_314 = arith.constant 0 : index
    %562 = vector.load %arg13[%c6_312, %c0_313, %c0_314] : memref<8x16x32xf32, #tpu.memory_space<vmem>>, vector<1x16x32xf32>
    %563 = vector.shape_cast %562 : vector<1x16x32xf32> to vector<16x32xf32>
    %564 = arith.addf %563, %558 : vector<16x32xf32>
    %565 = arith.negf %564 : vector<16x32xf32>
    %566 = math.exp %565 : vector<16x32xf32>
    %cst_315 = arith.constant 1.000000e+00 : f32
    %567 = vector.broadcast %cst_315 : f32 to vector<16x32xf32>
    %568 = arith.addf %567, %566 : vector<16x32xf32>
    %569 = arith.divf %567, %568 : vector<16x32xf32>
    %c6_316 = arith.constant 6 : index
    %c0_317 = arith.constant 0 : index
    %c0_318 = arith.constant 0 : index
    %570 = vector.load %arg14[%c6_316, %c0_317, %c0_318] : memref<8x16x32xf32, #tpu.memory_space<vmem>>, vector<1x16x32xf32>
    %571 = vector.shape_cast %570 : vector<1x16x32xf32> to vector<16x32xf32>
    %572 = arith.addf %571, %559 : vector<16x32xf32>
    %573 = arith.negf %572 : vector<16x32xf32>
    %574 = math.exp %573 : vector<16x32xf32>
    %cst_319 = arith.constant 1.000000e+00 : f32
    %575 = vector.broadcast %cst_319 : f32 to vector<16x32xf32>
    %576 = arith.addf %575, %574 : vector<16x32xf32>
    %577 = arith.divf %575, %576 : vector<16x32xf32>
    %c6_320 = arith.constant 6 : index
    %c0_321 = arith.constant 0 : index
    %c0_322 = arith.constant 0 : index
    %578 = vector.load %arg15[%c6_320, %c0_321, %c0_322] : memref<8x16x32xf32, #tpu.memory_space<vmem>>, vector<1x16x32xf32>
    %579 = vector.shape_cast %578 : vector<1x16x32xf32> to vector<16x32xf32>
    %580 = arith.mulf %569, %561 : vector<16x32xf32>
    %581 = arith.addf %579, %580 : vector<16x32xf32>
    %582 = math.tanh %581 : vector<16x32xf32>
    %cst_323 = arith.constant 1.000000e+00 : f32
    %583 = vector.broadcast %cst_323 : f32 to vector<16x32xf32>
    %584 = arith.subf %583, %577 : vector<16x32xf32>
    %585 = arith.mulf %584, %582 : vector<16x32xf32>
    %586 = arith.mulf %577, %556 : vector<16x32xf32>
    %587 = arith.addf %585, %586 : vector<16x32xf32>
    %588 = arith.truncf %587 : vector<16x32xf32> to vector<16x32xbf16>
    %cst_324 = arith.constant dense<0.000000e+00> : vector<16x32xf32>
    %589 = tpu.matmul %588, %362, %cst_324 {dimension_numbers = #tpu.dot_dimension_numbers<[1], [0], [0], [1], [0, 0, 1, 1], [], []>} : vector<16x32xbf16>, vector<32x32xbf16>, vector<16x32xf32> -> vector<16x32xf32>
    %cst_325 = arith.constant dense<0.000000e+00> : vector<16x32xf32>
    %590 = tpu.matmul %588, %364, %cst_325 {dimension_numbers = #tpu.dot_dimension_numbers<[1], [0], [0], [1], [0, 0, 1, 1], [], []>} : vector<16x32xbf16>, vector<32x32xbf16>, vector<16x32xf32> -> vector<16x32xf32>
    %cst_326 = arith.constant dense<0.000000e+00> : vector<16x32xf32>
    %591 = tpu.matmul %588, %366, %cst_326 {dimension_numbers = #tpu.dot_dimension_numbers<[1], [0], [0], [1], [0, 0, 1, 1], [], []>} : vector<16x32xbf16>, vector<32x32xbf16>, vector<16x32xf32> -> vector<16x32xf32>
    %592 = arith.addf %591, %369 : vector<16x32xf32>
    %c7_327 = arith.constant 7 : index
    %c0_328 = arith.constant 0 : index
    %c0_329 = arith.constant 0 : index
    %593 = vector.load %arg13[%c7_327, %c0_328, %c0_329] : memref<8x16x32xf32, #tpu.memory_space<vmem>>, vector<1x16x32xf32>
    %594 = vector.shape_cast %593 : vector<1x16x32xf32> to vector<16x32xf32>
    %595 = arith.addf %594, %589 : vector<16x32xf32>
    %596 = arith.negf %595 : vector<16x32xf32>
    %597 = math.exp %596 : vector<16x32xf32>
    %cst_330 = arith.constant 1.000000e+00 : f32
    %598 = vector.broadcast %cst_330 : f32 to vector<16x32xf32>
    %599 = arith.addf %598, %597 : vector<16x32xf32>
    %600 = arith.divf %598, %599 : vector<16x32xf32>
    %c7_331 = arith.constant 7 : index
    %c0_332 = arith.constant 0 : index
    %c0_333 = arith.constant 0 : index
    %601 = vector.load %arg14[%c7_331, %c0_332, %c0_333] : memref<8x16x32xf32, #tpu.memory_space<vmem>>, vector<1x16x32xf32>
    %602 = vector.shape_cast %601 : vector<1x16x32xf32> to vector<16x32xf32>
    %603 = arith.addf %602, %590 : vector<16x32xf32>
    %604 = arith.negf %603 : vector<16x32xf32>
    %605 = math.exp %604 : vector<16x32xf32>
    %cst_334 = arith.constant 1.000000e+00 : f32
    %606 = vector.broadcast %cst_334 : f32 to vector<16x32xf32>
    %607 = arith.addf %606, %605 : vector<16x32xf32>
    %608 = arith.divf %606, %607 : vector<16x32xf32>
    %c7_335 = arith.constant 7 : index
    %c0_336 = arith.constant 0 : index
    %c0_337 = arith.constant 0 : index
    %609 = vector.load %arg15[%c7_335, %c0_336, %c0_337] : memref<8x16x32xf32, #tpu.memory_space<vmem>>, vector<1x16x32xf32>
    %610 = vector.shape_cast %609 : vector<1x16x32xf32> to vector<16x32xf32>
    %611 = arith.mulf %600, %592 : vector<16x32xf32>
    %612 = arith.addf %610, %611 : vector<16x32xf32>
    %613 = math.tanh %612 : vector<16x32xf32>
    %cst_338 = arith.constant 1.000000e+00 : f32
    %614 = vector.broadcast %cst_338 : f32 to vector<16x32xf32>
    %615 = arith.subf %614, %608 : vector<16x32xf32>
    %616 = arith.mulf %615, %613 : vector<16x32xf32>
    %617 = arith.mulf %608, %587 : vector<16x32xf32>
    %618 = arith.addf %616, %617 : vector<16x32xf32>
    %619 = arith.truncf %618 : vector<16x32xf32> to vector<16x32xbf16>
    %c0_339 = arith.constant 0 : index
    %c0_340 = arith.constant 0 : index
    %620 = vector.load %arg8[%c0_339, %c0_340] : memref<32x8xbf16, #tpu.memory_space<vmem>>, vector<32x8xbf16>
    %cst_341 = arith.constant dense<0.000000e+00> : vector<16x8xf32>
    %621 = tpu.matmul %619, %620, %cst_341 {dimension_numbers = #tpu.dot_dimension_numbers<[1], [0], [0], [1], [0, 0, 1, 1], [], []>} : vector<16x32xbf16>, vector<32x8xbf16>, vector<16x8xf32> -> vector<16x8xf32>
    %c0_342 = arith.constant 0 : index
    %c0_343 = arith.constant 0 : index
    %622 = vector.load %arg9[%c0_342, %c0_343] : memref<1x8xf32, #tpu.memory_space<vmem>>, vector<1x8xf32>
    %623 = vector.broadcast %622 : vector<1x8xf32> to vector<16x8xf32>
    %624 = arith.addf %621, %623 : vector<16x8xf32>
    %c0_344 = arith.constant 0 : index
    %c0_345 = arith.constant 0 : index
    %625 = vector.load %arg10[%c0_344, %c0_345] : memref<16x8xf32, #tpu.memory_space<vmem>>, vector<16x8xf32>
    tpu.vector_store %arg10[%c0_344, %c0_345], %624 {strides = array<i32>} : memref<16x8xf32, #tpu.memory_space<vmem>>, vector<16x8xf32>,
    return
  }
  func.func @transform_0(%arg0: i32) -> (i32, i32, i32, i32) {
    %c0_i32 = arith.constant 0 : i32
    %c0_i32_0 = arith.constant 0 : i32
    %c0_i32_1 = arith.constant 0 : i32
    %c0_i32_2 = arith.constant 0 : i32
    return %arg0, %c0_i32, %c0_i32_0, %c0_i32_1 : i32, i32, i32, i32
  }
  func.func @transform_1(%arg0: i32) -> (i32, i32, i32) {
    %c0_i32 = arith.constant 0 : i32
    %c0_i32_0 = arith.constant 0 : i32
    %c0_i32_1 = arith.constant 0 : i32
    %c0_i32_2 = arith.constant 0 : i32
    return %c0_i32, %c0_i32_0, %c0_i32_1 : i32, i32, i32
  }
  func.func @transform_2(%arg0: i32) -> (i32, i32, i32) {
    %c0_i32 = arith.constant 0 : i32
    %c0_i32_0 = arith.constant 0 : i32
    %c0_i32_1 = arith.constant 0 : i32
    %c0_i32_2 = arith.constant 0 : i32
    return %c0_i32, %c0_i32_0, %c0_i32_1 : i32, i32, i32
  }
  func.func @transform_3(%arg0: i32) -> (i32, i32) {
    %c0_i32 = arith.constant 0 : i32
    %c0_i32_0 = arith.constant 0 : i32
    %c0_i32_1 = arith.constant 0 : i32
    return %c0_i32, %c0_i32_0 : i32, i32
  }
  func.func @transform_4(%arg0: i32) -> (i32, i32, i32) {
    %c0_i32 = arith.constant 0 : i32
    %c0_i32_0 = arith.constant 0 : i32
    %c0_i32_1 = arith.constant 0 : i32
    %c0_i32_2 = arith.constant 0 : i32
    return %c0_i32, %c0_i32_0, %c0_i32_1 : i32, i32, i32
  }
  func.func @transform_5(%arg0: i32) -> (i32, i32, i32) {
    %c0_i32 = arith.constant 0 : i32
    %c0_i32_0 = arith.constant 0 : i32
    %c0_i32_1 = arith.constant 0 : i32
    %c0_i32_2 = arith.constant 0 : i32
    return %c0_i32, %c0_i32_0, %c0_i32_1 : i32, i32, i32
  }
  func.func @transform_6(%arg0: i32) -> (i32, i32) {
    %c0_i32 = arith.constant 0 : i32
    %c0_i32_0 = arith.constant 0 : i32
    %c0_i32_1 = arith.constant 0 : i32
    return %c0_i32, %c0_i32_0 : i32, i32
  }
  func.func @transform_7(%arg0: i32) -> (i32, i32) {
    %c0_i32 = arith.constant 0 : i32
    %c0_i32_0 = arith.constant 0 : i32
    %c0_i32_1 = arith.constant 0 : i32
    return %c0_i32, %c0_i32_0 : i32, i32
  }
  func.func @transform_8(%arg0: i32) -> (i32, i32) {
    %c0_i32 = arith.constant 0 : i32
    %c0_i32_0 = arith.constant 0 : i32
    %c0_i32_1 = arith.constant 0 : i32
    return %c0_i32, %c0_i32_0 : i32, i32
  }
  func.func @transform_9(%arg0: i32) -> (i32, i32) {
    %c0_i32 = arith.constant 0 : i32
    %c0_i32_0 = arith.constant 0 : i32
    return %arg0, %c0_i32 : i32, i32
  }
}

</mosaic_0001>

<llo_original>
// kernel: cst_risk_factor.1
$region0: #{cst_risk_factor.1}
  #allocation0 [shape = 'u32[]', space=smem, size = 0x4, offset = 0x4, fixed_abs, tag = 'smem constant byte address 0x4 - core index']
  #allocation1 [shape = 'u32[144,128]{1,0:T(1,128)}', space=vmem, size = 0x12000, scoped, tag = 'internal scratch']
  #allocation2 [shape = 'bf16[8,16,8]{2,1,0:T(8,128)(2,1)}', space=vmem, size = 0x8000, scoped, tag = 'scratch operand']
  #allocation3 [shape = 'f32[8,16,32]{2,1,0:T(8,128)}', space=vmem, size = 0x10000, scoped, tag = 'scratch operand']
  #allocation4 [shape = 'f32[8,16,32]{2,1,0:T(8,128)}', space=vmem, size = 0x10000, scoped, tag = 'scratch operand']
  #allocation5 [shape = 'f32[8,16,32]{2,1,0:T(8,128)}', space=vmem, size = 0x10000, scoped, tag = 'scratch operand']
  #allocation6 [shape = 'f32[8,16,32]{2,1,0:T(8,128)}', space=vmem, size = 0x10000, scoped, tag = 'scratch operand']
  %s0 = inlined_call_operand.vmem [shape: f32[2,8,16,8], index: 0, kind: input, shape index: {}]
  %s1 = inlined_call_operand.vmem [shape: bf16[3,8,32], index: 1, kind: input, shape index: {}]
  %s2 = inlined_call_operand.vmem [shape: bf16[3,32,32], index: 2, kind: input, shape index: {}]
  %s3 = inlined_call_operand.vmem [shape: f32[4,32], index: 3, kind: input, shape index: {}]
  %s4 = inlined_call_operand.vmem [shape: bf16[3,32,32], index: 4, kind: input, shape index: {}]
  %s5 = inlined_call_operand.vmem [shape: bf16[3,32,32], index: 5, kind: input, shape index: {}]
  %s6 = inlined_call_operand.vmem [shape: f32[4,32], index: 6, kind: input, shape index: {}]
  %s7 = inlined_call_operand.vmem [shape: bf16[32,8], index: 7, kind: input, shape index: {}]
  %s8 = inlined_call_operand.vmem [shape: f32[1,8], index: 8, kind: input, shape index: {}]
  %s9 = inlined_call_operand.vmem [shape: f32[32,8], index: 9, kind: output, shape index: {}]
  %s10 = sld [smem:[#allocation0]]
  $region69: #{cst_risk_factor.1} parent=0
    _
  %s12 = ssub.s32 1, %s10
  %s13 = scalar_select 0, %s12, %s10
  loop: start=0, step=1, limit=4
  $region2: #{cst_risk_factor.1} parent=0 // loop_pre_header
    _
  $region3: #{cst_risk_factor.1} parent=0 // loop_header
    %s15 = sphi 0, %s19
    %p16 = scmp.ge.s32.totalorder %s15, 4
    %s25 = sphi 0, %s27
    %s28 = sphi 0, %s25
    %s29 = sphi 0, %s28
    %s45 = sphi 0, %s29
    %s49 = sphi 0, %s49
    %s51 = sphi 0, %s49
    %s52 = sphi 0, %s51
    %s66 = sphi 0, %s52
    %s70 = sphi 0, %s70
    %s72 = sphi 0, %s70
    %s73 = sphi 0, %s72
    %s87 = sphi 0, %s73
    %s91 = sphi 0, %s91
    %s93 = sphi 0, %s91
    %s94 = sphi 0, %s93
    %s108 = sphi 0, %s94
    %s112 = sphi 0, %s112
    %s114 = sphi 0, %s112
    %s115 = sphi 0, %s114
    %s129 = sphi 0, %s115
    %s133 = sphi 0, %s133
    %s135 = sphi 0, %s133
    %s136 = sphi 0, %s135
    %s150 = sphi 0, %s136
    %s154 = sphi 0, %s154
    %s156 = sphi 0, %s154
    %s157 = sphi 0, %s156
    %s171 = sphi 0, %s157
    %s175 = sphi 0, %s175
    %s177 = sphi 0, %s175
    %s178 = sphi 0, %s177
    %s192 = sphi 0, %s178
    %s196 = sphi 0, %s196
    %s198 = sphi 0, %s196
    %s199 = sphi 0, %s198
    %s213 = sphi 0, %s199
    %s219 = sphi 0, %s221
    %s222 = sphi 0, %s219
    %s223 = sphi 0, %s222
    %s239 = sphi 0, %s223
  $region4: #{cst_risk_factor.1} parent=0 // loop_header_branch
    %18 = sbr.rel (%p16) target = $region8
  $region5: #{cst_risk_factor.1} parent=0 // loop_body
    %s20 = ssub.s32 %s15, 1
    %s21 = ssub.s32 %s15, 2
    %s22 = sadd.s32 %s15, 1
    %s23 = ssub.s32 %s15, %s22
    %p24 = scmp.eq.s32.totalorder %s23, 0
    %s26 = sadd.s32 %s25, 1
    %s27 = scalar_select %p24, %s25, %s26
    %p30 = pneg %p24
    %p31 = scmp.eq.s32.totalorder %s15, 1
    %p32 = por %p30, %p31
    %p33 = scmp.ne.s32.totalorder %s25, %s28
    %p34 = scmp.eq.s32.totalorder %s15, 0
    %p35 = por %p33, %p34
    %p36 = scmp.ne.s32.totalorder %s25, %s28
    %p37 = scmp.eq.s32.totalorder %s20, 1
    %p38 = por %p36, %p37
    %p39 = scmp.ne.s32.totalorder %s28, %s29
    %p40 = scmp.eq.s32.totalorder %s20, 0
    %p41 = por %p39, %p40
    %p42 = scmp.ne.s32.totalorder %s28, %s29
    %p43 = scmp.eq.s32.totalorder %s21, 1
    %p44 = por %p42, %p43
    %p46 = scmp.ne.s32.totalorder %s29, %s45
    %p47 = scmp.eq.s32.totalorder %s21, 0
    %p48 = por %p46, %p47
    %s50 = sadd.s32 %s49, 1
    %p53 = scmp.eq.s32.totalorder %s15, 1
    %p54 = scmp.ne.s32.totalorder %s49, %s51
    %p55 = scmp.eq.s32.totalorder %s15, 0
    %p56 = por %p54, %p55
    %p57 = scmp.ne.s32.totalorder %s49, %s51
    %p58 = scmp.eq.s32.totalorder %s20, 1
    %p59 = por %p57, %p58
    %p60 = scmp.ne.s32.totalorder %s51, %s52
    %p61 = scmp.eq.s32.totalorder %s20, 0
    %p62 = por %p60, %p61
    %p63 = scmp.ne.s32.totalorder %s51, %s52
    %p64 = scmp.eq.s32.totalorder %s21, 1
    %p65 = por %p63, %p64
    %p67 = scmp.ne.s32.totalorder %s52, %s66
    %p68 = scmp.eq.s32.totalorder %s21, 0
    %p69 = por %p67, %p68
    %s71 = sadd.s32 %s70, 1
    %p74 = scmp.eq.s32.totalorder %s15, 1
    %p75 = scmp.ne.s32.totalorder %s70, %s72
    %p76 = scmp.eq.s32.totalorder %s15, 0
    %p77 = por %p75, %p76
    %p78 = scmp.ne.s32.totalorder %s70, %s72
    %p79 = scmp.eq.s32.totalorder %s20, 1
    %p80 = por %p78, %p79
    %p81 = scmp.ne.s32.totalorder %s72, %s73
    %p82 = scmp.eq.s32.totalorder %s20, 0
    %p83 = por %p81, %p82
    %p84 = scmp.ne.s32.totalorder %s72, %s73
    %p85 = scmp.eq.s32.totalorder %s21, 1
    %p86 = por %p84, %p85
    %p88 = scmp.ne.s32.totalorder %s73, %s87
    %p89 = scmp.eq.s32.totalorder %s21, 0
    %p90 = por %p88, %p89
    %s92 = sadd.s32 %s91, 1
    %p95 = scmp.eq.s32.totalorder %s15, 1
    %p96 = scmp.ne.s32.totalorder %s91, %s93
    %p97 = scmp.eq.s32.totalorder %s15, 0
    %p98 = por %p96, %p97
    %p99 = scmp.ne.s32.totalorder %s91, %s93
    %p100 = scmp.eq.s32.totalorder %s20, 1
    %p101 = por %p99, %p100
    %p102 = scmp.ne.s32.totalorder %s93, %s94
    %p103 = scmp.eq.s32.totalorder %s20, 0
    %p104 = por %p102, %p103
    %p105 = scmp.ne.s32.totalorder %s93, %s94
    %p106 = scmp.eq.s32.totalorder %s21, 1
    %p107 = por %p105, %p106
    %p109 = scmp.ne.s32.totalorder %s94, %s108
    %p110 = scmp.eq.s32.totalorder %s21, 0
    %p111 = por %p109, %p110
    %s113 = sadd.s32 %s112, 1
    %p116 = scmp.eq.s32.totalorder %s15, 1
    %p117 = scmp.ne.s32.totalorder %s112, %s114
    %p118 = scmp.eq.s32.totalorder %s15, 0
    %p119 = por %p117, %p118
    %p120 = scmp.ne.s32.totalorder %s112, %s114
    %p121 = scmp.eq.s32.totalorder %s20, 1
    %p122 = por %p120, %p121
    %p123 = scmp.ne.s32.totalorder %s114, %s115
    %p124 = scmp.eq.s32.totalorder %s20, 0
    %p125 = por %p123, %p124
    %p126 = scmp.ne.s32.totalorder %s114, %s115
    %p127 = scmp.eq.s32.totalorder %s21, 1
    %p128 = por %p126, %p127
    %p130 = scmp.ne.s32.totalorder %s115, %s129
    %p131 = scmp.eq.s32.totalorder %s21, 0
    %p132 = por %p130, %p131
    %s134 = sadd.s32 %s133, 1
    %p137 = scmp.eq.s32.totalorder %s15, 1
    %p138 = scmp.ne.s32.totalorder %s133, %s135
    %p139 = scmp.eq.s32.totalorder %s15, 0
    %p140 = por %p138, %p139
    %p141 = scmp.ne.s32.totalorder %s133, %s135
    %p142 = scmp.eq.s32.totalorder %s20, 1
    %p143 = por %p141, %p142
    %p144 = scmp.ne.s32.totalorder %s135, %s136
    %p145 = scmp.eq.s32.totalorder %s20, 0
    %p146 = por %p144, %p145
    %p147 = scmp.ne.s32.totalorder %s135, %s136
    %p148 = scmp.eq.s32.totalorder %s21, 1
    %p149 = por %p147, %p148
    %p151 = scmp.ne.s32.totalorder %s136, %s150
    %p152 = scmp.eq.s32.totalorder %s21, 0
    %p153 = por %p151, %p152
    %s155 = sadd.s32 %s154, 1
    %p158 = scmp.eq.s32.totalorder %s15, 1
    %p159 = scmp.ne.s32.totalorder %s154, %s156
    %p160 = scmp.eq.s32.totalorder %s15, 0
    %p161 = por %p159, %p160
    %p162 = scmp.ne.s32.totalorder %s154, %s156
    %p163 = scmp.eq.s32.totalorder %s20, 1
    %p164 = por %p162, %p163
    %p165 = scmp.ne.s32.totalorder %s156, %s157
    %p166 = scmp.eq.s32.totalorder %s20, 0
    %p167 = por %p165, %p166
    %p168 = scmp.ne.s32.totalorder %s156, %s157
    %p169 = scmp.eq.s32.totalorder %s21, 1
    %p170 = por %p168, %p169
    %p172 = scmp.ne.s32.totalorder %s157, %s171
    %p173 = scmp.eq.s32.totalorder %s21, 0
    %p174 = por %p172, %p173
    %s176 = sadd.s32 %s175, 1
    %p179 = scmp.eq.s32.totalorder %s15, 1
    %p180 = scmp.ne.s32.totalorder %s175, %s177
    %p181 = scmp.eq.s32.totalorder %s15, 0
    %p182 = por %p180, %p181
    %p183 = scmp.ne.s32.totalorder %s175, %s177
    %p184 = scmp.eq.s32.totalorder %s20, 1
    %p185 = por %p183, %p184
    %p186 = scmp.ne.s32.totalorder %s177, %s178
    %p187 = scmp.eq.s32.totalorder %s20, 0
    %p188 = por %p186, %p187
    %p189 = scmp.ne.s32.totalorder %s177, %s178
    %p190 = scmp.eq.s32.totalorder %s21, 1
    %p191 = por %p189, %p190
    %p193 = scmp.ne.s32.totalorder %s178, %s192
    %p194 = scmp.eq.s32.totalorder %s21, 0
    %p195 = por %p193, %p194
    %s197 = sadd.s32 %s196, 1
    %p200 = scmp.eq.s32.totalorder %s15, 1
    %p201 = scmp.ne.s32.totalorder %s196, %s198
    %p202 = scmp.eq.s32.totalorder %s15, 0
    %p203 = por %p201, %p202
    %p204 = scmp.ne.s32.totalorder %s196, %s198
    %p205 = scmp.eq.s32.totalorder %s20, 1
    %p206 = por %p204, %p205
    %p207 = scmp.ne.s32.totalorder %s198, %s199
    %p208 = scmp.eq.s32.totalorder %s20, 0
    %p209 = por %p207, %p208
    %p210 = scmp.ne.s32.totalorder %s198, %s199
    %p211 = scmp.eq.s32.totalorder %s21, 1
    %p212 = por %p210, %p211
    %p214 = scmp.ne.s32.totalorder %s199, %s213
    %p215 = scmp.eq.s32.totalorder %s21, 0
    %p216 = por %p214, %p215
    %s217 = ssub.s32 %s15, %s22
    %p218 = scmp.eq.s32.totalorder %s217, 0
    %s220 = sadd.s32 %s219, 1
    %s221 = scalar_select %p218, %s219, %s220
    %p224 = pneg %p218
    %p225 = scmp.eq.s32.totalorder %s15, 1
    %p226 = por %p224, %p225
    %p227 = scmp.ne.s32.totalorder %s219, %s222
    %p228 = scmp.eq.s32.totalorder %s15, 0
    %p229 = por %p227, %p228
    %p230 = scmp.ne.s32.totalorder %s219, %s222
    %p231 = scmp.eq.s32.totalorder %s20, 1
    %p232 = por %p230, %p231
    %p233 = scmp.ne.s32.totalorder %s222, %s223
    %p234 = scmp.eq.s32.totalorder %s20, 0
    %p235 = por %p233, %p234
    %p236 = scmp.ne.s32.totalorder %s222, %s223
    %p237 = scmp.eq.s32.totalorder %s21, 1
    %p238 = por %p236, %p237
    %p240 = scmp.ne.s32.totalorder %s223, %s239
    %p241 = scmp.eq.s32.totalorder %s21, 0
    %p242 = por %p240, %p241
    %p243 = scmp.le.s32.totalorder 1, %s15
    %p244 = scmp.lt.s32.totalorder %s15, 3
    %p245 = pnand %p243, %p244
    %p246 = pneg %p245
    // Predicated region
    $region9: #{cst_risk_factor.1} parent=5 // pred_check
      _
    $region10: #{cst_risk_factor.1} parent=5 // pred_check_branch
      %248 = sbr.rel (%p245) target = $region12
    $region11: #{cst_risk_factor.1} parent=5 // pred_region
      %s249 = ssub.s32 %s15, 1
      // Predicated region
      $region13: #{cst_risk_factor.1} parent=11 // pred_check
        %p250 = pneg %p62
      $region14: #{cst_risk_factor.1} parent=11 // pred_check_branch
        %252 = sbr.rel (%p250) target = $region16
      $region15: #{cst_risk_factor.1} parent=11 // pred_region
        _
      $region16: #{cst_risk_factor.1} parent=11 // pred_fallthru
        _
      // Predicated region
      $region17: #{cst_risk_factor.1} parent=11 // pred_check
        %p253 = pneg %p83
      $region18: #{cst_risk_factor.1} parent=11 // pred_check_branch
        %255 = sbr.rel (%p253) target = $region20
      $region19: #{cst_risk_factor.1} parent=11 // pred_region
        _
      $region20: #{cst_risk_factor.1} parent=11 // pred_fallthru
        _
      // Predicated region
      $region21: #{cst_risk_factor.1} parent=11 // pred_check
        %p256 = pneg %p104
      $region22: #{cst_risk_factor.1} parent=11 // pred_check_branch
        %258 = sbr.rel (%p256) target = $region24
      $region23: #{cst_risk_factor.1} parent=11 // pred_region
        _
      $region24: #{cst_risk_factor.1} parent=11 // pred_fallthru
        _
      // Predicated region
      $region25: #{cst_risk_factor.1} parent=11 // pred_check
        %p259 = pneg %p125
      $region26: #{cst_risk_factor.1} parent=11 // pred_check_branch
        %261 = sbr.rel (%p259) target = $region28
      $region27: #{cst_risk_factor.1} parent=11 // pred_region
        _
      $region28: #{cst_risk_factor.1} parent=11 // pred_fallthru
        _
      // Predicated region
      $region29: #{cst_risk_factor.1} parent=11 // pred_check
        %p262 = pneg %p146
      $region30: #{cst_risk_factor.1} parent=11 // pred_check_branch
        %264 = sbr.rel (%p262) target = $region32
      $region31: #{cst_risk_factor.1} parent=11 // pred_region
        _
      $region32: #{cst_risk_factor.1} parent=11 // pred_fallthru
        _
      // Predicated region
      $region33: #{cst_risk_factor.1} parent=11 // pred_check
        %p265 = pneg %p167
      $region34: #{cst_risk_factor.1} parent=11 // pred_check_branch
        %267 = sbr.rel (%p265) target = $region36
      $region35: #{cst_risk_factor.1} parent=11 // pred_region
        _
      $region36: #{cst_risk_factor.1} parent=11 // pred_fallthru
        _
      // Predicated region
      $region37: #{cst_risk_factor.1} parent=11 // pred_check
        %p268 = pneg %p188
      $region38: #{cst_risk_factor.1} parent=11 // pred_check_branch
        %270 = sbr.rel (%p268) target = $region40
      $region39: #{cst_risk_factor.1} parent=11 // pred_region
        _
      $region40: #{cst_risk_factor.1} parent=11 // pred_fallthru
        _
      // Predicated region
      $region41: #{cst_risk_factor.1} parent=11 // pred_check
        %p271 = pneg %p209
      $region42: #{cst_risk_factor.1} parent=11 // pred_check_branch
        %273 = sbr.rel (%p271) target = $region44
      $region43: #{cst_risk_factor.1} parent=11 // pred_region
        _
      $region44: #{cst_risk_factor.1} parent=11 // pred_fallthru
        _
    $region12: #{cst_risk_factor.1} parent=5 // pred_fallthru
      _
    %p274 = scmp.lt.s32.totalorder %s15, 2
    // Predicated region
    $region45: #{cst_risk_factor.1} parent=5 // pred_check
      %p275 = pneg %p274
    $region46: #{cst_risk_factor.1} parent=5 // pred_check_branch
      %277 = sbr.rel (%p275) target = $region48
    $region47: #{cst_risk_factor.1} parent=5 // pred_region
      // Predicated region
      $region49: #{cst_risk_factor.1} parent=47 // pred_check
        %p278 = pneg %p35
      $region50: #{cst_risk_factor.1} parent=47 // pred_check_branch
        %280 = sbr.rel (%p278) target = $region52
      $region51: #{cst_risk_factor.1} parent=47 // pred_region
        %p281 = scmp.lt.s32.totalorder %s15, 1
        %s282 = scalar_select %p281, %s15, 1
        %s283 = smul.addr %s282, 16
        %s284 = smul.addr %s283, 8
        %s285 = scalar_lea.vmem %s0, %s284
      $region52: #{cst_risk_factor.1} parent=47 // pred_fallthru
        _
    $region48: #{cst_risk_factor.1} parent=5 // pred_fallthru
      _
    %p286 = scmp.le.s32.totalorder 1, %s15
    %p287 = scmp.lt.s32.totalorder %s15, 3
    %p288 = pnand %p286, %p287
    %p289 = pneg %p288
    // Predicated region
    $region53: #{cst_risk_factor.1} parent=5 // pred_check
      _
    $region54: #{cst_risk_factor.1} parent=5 // pred_check_branch
      %291 = sbr.rel (%p288) target = $region56
    $region55: #{cst_risk_factor.1} parent=5 // pred_region
      %s292 = ssub.s32 %s15, 1
      %p293 = scmp.lt.s32.totalorder %s20, 1
      %s294 = scalar_select %p293, %s20, 1
      %s295 = smul.addr %s294, 16
      %s296 = smul.addr %s295, 8
      %s297 = scalar_lea.vmem %s0, %s296
      %p298 = pneg %p41
      %p299 = pneg %p38
      %p300 = pneg %p62
      %p301 = pneg %p59
      %p302 = pneg %p83
      %p303 = pneg %p80
      %p304 = pneg %p104
      %p305 = pneg %p101
      %p306 = pneg %p125
      %p307 = pneg %p122
      %p308 = pneg %p146
      %p309 = pneg %p143
      %p310 = pneg %p167
      %p311 = pneg %p164
      %p312 = pneg %p188
      %p313 = pneg %p185
      %p314 = pneg %p209
      %p315 = pneg %p206
      %p316 = pneg %p235
      %p317 = pneg %p232
      %s318 = smul.u32 2, %s20
      %p319 = scmp.lt.s32.totalorder %s318, 3
      %s320 = scalar_select %p319, %s318, 3
      %s321 = smul.addr %s320, 8
      %s322 = scalar_lea.vmem %s9, %s321
      %p323 = scmp.lt.s32.totalorder %s20, 1
      %s324 = scalar_select %p323, %s20, 1
      %s325 = smul.addr %s324, 16
      %s326 = smul.addr %s325, 8
      %s327 = scalar_lea.vmem %s0, %s326
      %s328 = smul.u32 2, %s20
      %p329 = scmp.lt.s32.totalorder %s328, 3
      %s330 = scalar_select %p329, %s328, 3
      %s331 = smul.addr %s330, 8
      %s332 = scalar_lea.vmem %s9, %s331
      %s333 = smul.u32 2, %s20
      %v335 = vld [vmem:[%s327] sm:$0xff]
      %v336 = vld [vmem:[%s327 + $0x8] sm:$0xff]
      %v337 = vld [vmem:[%s327 + $0x10] sm:$0xff]
      %v338 = vld [vmem:[%s327 + $0x18] sm:$0xff]
      %v339 = vld [vmem:[%s327 + $0x20] sm:$0xff]
      %v340 = vld [vmem:[%s327 + $0x28] sm:$0xff]
      %v341 = vld [vmem:[%s327 + $0x30] sm:$0xff]
      %v342 = vld [vmem:[%s327 + $0x38] sm:$0xff]
      %v343 = vld [vmem:[%s327 + $0x40] sm:$0xff]
      %v344 = vld [vmem:[%s327 + $0x48] sm:$0xff]
      %v345 = vld [vmem:[%s327 + $0x50] sm:$0xff]
      %v346 = vld [vmem:[%s327 + $0x58] sm:$0xff]
      %v347 = vld [vmem:[%s327 + $0x60] sm:$0xff]
      %v348 = vld [vmem:[%s327 + $0x68] sm:$0xff]
      %v349 = vld [vmem:[%s327 + $0x70] sm:$0xff]
      %v350 = vld [vmem:[%s327 + $0x78] sm:$0xff]
      %v351 = vpack.c.bf16 %v336, %v335
      %v352 = vpack.c.bf16 %v338, %v337
      %v353 = vpack.c.bf16 %v340, %v339
      %v354 = vpack.c.bf16 %v342, %v341
      %v355 = vpack.c.bf16 %v344, %v343
      %v356 = vpack.c.bf16 %v346, %v345
      %v357 = vpack.c.bf16 %v348, %v347
      %v358 = vpack.c.bf16 %v350, %v349
      %v359 = vmul.f32 %v335, 0.35355338
      %v360 = vmul.f32 %v336, 0.35355338
      %v361 = vmul.f32 %v337, 0.35355338
      %v362 = vmul.f32 %v338, 0.35355338
      %v363 = vmul.f32 %v339, 0.35355338
      %v364 = vmul.f32 %v340, 0.35355338
      %v365 = vmul.f32 %v341, 0.35355338
      %v366 = vmul.f32 %v342, 0.35355338
      %v367 = vmul.f32 %v343, 0.35355338
      %v368 = vmul.f32 %v344, 0.35355338
      %v369 = vmul.f32 %v345, 0.35355338
      %v370 = vmul.f32 %v346, 0.35355338
      %v371 = vmul.f32 %v347, 0.35355338
      %v372 = vmul.f32 %v348, 0.35355338
      %v373 = vmul.f32 %v349, 0.35355338
      %v374 = vmul.f32 %v350, 0.35355338
      %v375 = vpack.c.bf16 %v360, %v359
      %v376 = vpack.c.bf16 %v362, %v361
      %v377 = vpack.c.bf16 %v364, %v363
      %v378 = vpack.c.bf16 %v366, %v365
      %v379 = vpack.c.bf16 %v368, %v367
      %v380 = vpack.c.bf16 %v370, %v369
      %v381 = vpack.c.bf16 %v372, %v371
      %v382 = vpack.c.bf16 %v374, %v373
      %vm383 = vcmask 64512
      %v385 = vsel %vm383, %v375, 0
      %v388 = vsel %vm383, %v351, 0
      %390 = vmatprep.subr.bf16.mxu0 0
      %391 = vmatpush1.bf16.xpose.msra.mxu0 0
      %392 = vmatprep.subr.bf16.mxu0 0
      %393 = vmatpush1.bf16.xpose.msra.mxu0 0
      %394 = vmatprep.subr.bf16.mxu0 0
      %395 = vmatpush1.bf16.xpose.msra.mxu0 0
      %396 = vmatprep.subr.bf16.mxu0 0
      %397 = vmatpush1.bf16.xpose.msra.mxu0 0
      %398 = vmatprep.subr.bf16.mxu0 0
      %399 = vmatpush1.bf16.xpose.msra.mxu0 0
      %400 = vmatprep.subr.bf16.mxu0 0
      %401 = vmatpush1.bf16.xpose.msra.mxu0 0
      %402 = vmatprep.subr.bf16.mxu0 0
      %403 = vmatpush1.bf16.xpose.msra.mxu0 0
      %404 = vmatprep.subr.bf16.mxu0 0
      %405 = vmatpush1.bf16.xpose.msra.mxu0 %v388
      %406 = vmatprep.subr.bf16.mxu0 0
      %407 = vmatpush2.bf16.xpose.msra.mxu0 0
      %408 = vmatprep.subr.bf16.mxu0 0
      %409 = vmatpush2.bf16.xpose.msra.mxu0 0
      %410 = vmatprep.subr.bf16.mxu0 0
      %411 = vmatpush2.bf16.xpose.msra.mxu0 0
      %412 = vmatprep.subr.bf16.mxu0 0
      %413 = vmatpush2.bf16.xpose.msra.mxu0 0
      %414 = vmatprep.subr.bf16.mxu0 0
      %415 = vmatpush2.bf16.xpose.msra.mxu0 0
      %416 = vmatprep.subr.bf16.mxu0 0
      %417 = vmatpush2.bf16.xpose.msra.mxu0 0
      %418 = vmatprep.subr.bf16.mxu0 0
      %419 = vmatpush2.bf16.xpose.msra.mxu0 0
      %420 = vmatprep.subr.bf16.mxu0 0
      %421 = vmatpush2.bf16.xpose.msra.mxu0 0
      %422 = vmatprep.mubr.bf16.mxu0 0
      %423 = vmatmul.mubr.bf16.gmra.mxu0 %v385
      %v424 = vpop.f32.mrf.mxu0
      %v425 = vadd.f32 0.0, %v424
      %v426 = vpop.f32.mrf.mxu0
      %v427 = vpop.f32.mrf.mxu0
      %v428 = vadd.f32 0.0, %v427
      %v429 = vpop.f32.mrf.mxu0
      %430 = vdwg.mxu0
      %v432 = vsel %vm383, %v376, 0
      %v435 = vsel %vm383, %v352, 0
      %437 = vmatprep.subr.bf16.mxu0 0
      %438 = vmatpush1.bf16.xpose.msra.mxu0 0
      %439 = vmatprep.subr.bf16.mxu0 0
      %440 = vmatpush1.bf16.xpose.msra.mxu0 0
      %441 = vmatprep.subr.bf16.mxu0 0
      %442 = vmatpush1.bf16.xpose.msra.mxu0 0
      %443 = vmatprep.subr.bf16.mxu0 0
      %444 = vmatpush1.bf16.xpose.msra.mxu0 0
      %445 = vmatprep.subr.bf16.mxu0 0
      %446 = vmatpush1.bf16.xpose.msra.mxu0 0
      %447 = vmatprep.subr.bf16.mxu0 0
      %448 = vmatpush1.bf16.xpose.msra.mxu0 0
      %449 = vmatprep.subr.bf16.mxu0 0
      %450 = vmatpush1.bf16.xpose.msra.mxu0 0
      %451 = vmatprep.subr.bf16.mxu0 0
      %452 = vmatpush1.bf16.xpose.msra.mxu0 %v435
      %453 = vmatprep.subr.bf16.mxu0 0
      %454 = vmatpush2.bf16.xpose.msra.mxu0 0
      %455 = vmatprep.subr.bf16.mxu0 0
      %456 = vmatpush2.bf16.xpose.msra.mxu0 0
      %457 = vmatprep.subr.bf16.mxu0 0
      %458 = vmatpush2.bf16.xpose.msra.mxu0 0
      %459 = vmatprep.subr.bf16.mxu0 0
      %460 = vmatpush2.bf16.xpose.msra.mxu0 0
      %461 = vmatprep.subr.bf16.mxu0 0
      %462 = vmatpush2.bf16.xpose.msra.mxu0 0
      %463 = vmatprep.subr.bf16.mxu0 0
      %464 = vmatpush2.bf16.xpose.msra.mxu0 0
      %465 = vmatprep.subr.bf16.mxu0 0
      %466 = vmatpush2.bf16.xpose.msra.mxu0 0
      %467 = vmatprep.subr.bf16.mxu0 0
      %468 = vmatpush2.bf16.xpose.msra.mxu0 0
      %469 = vmatprep.mubr.bf16.mxu0 0
      %470 = vmatmul.mubr.bf16.gmra.mxu0 %v432
      %v471 = vpop.f32.mrf.mxu0
      %v472 = vadd.f32 0.0, %v471
      %v473 = vpop.f32.mrf.mxu0
      %v474 = vpop.f32.mrf.mxu0
      %v475 = vadd.f32 0.0, %v474
      %v476 = vpop.f32.mrf.mxu0
      %477 = vdwg.mxu0
      %v479 = vsel %vm383, %v377, 0
      %v482 = vsel %vm383, %v353, 0
      %484 = vmatprep.subr.bf16.mxu0 0
      %485 = vmatpush1.bf16.xpose.msra.mxu0 0
      %486 = vmatprep.subr.bf16.mxu0 0
      %487 = vmatpush1.bf16.xpose.msra.mxu0 0
      %488 = vmatprep.subr.bf16.mxu0 0
      %489 = vmatpush1.bf16.xpose.msra.mxu0 0
      %490 = vmatprep.subr.bf16.mxu0 0
      %491 = vmatpush1.bf16.xpose.msra.mxu0 0
      %492 = vmatprep.subr.bf16.mxu0 0
      %493 = vmatpush1.bf16.xpose.msra.mxu0 0
      %494 = vmatprep.subr.bf16.mxu0 0
      %495 = vmatpush1.bf16.xpose.msra.mxu0 0
      %496 = vmatprep.subr.bf16.mxu0 0
      %497 = vmatpush1.bf16.xpose.msra.mxu0 0
      %498 = vmatprep.subr.bf16.mxu0 0
      %499 = vmatpush1.bf16.xpose.msra.mxu0 %v482
      %500 = vmatprep.subr.bf16.mxu0 0
      %501 = vmatpush2.bf16.xpose.msra.mxu0 0
      %502 = vmatprep.subr.bf16.mxu0 0
      %503 = vmatpush2.bf16.xpose.msra.mxu0 0
      %504 = vmatprep.subr.bf16.mxu0 0
      %505 = vmatpush2.bf16.xpose.msra.mxu0 0
      %506 = vmatprep.subr.bf16.mxu0 0
      %507 = vmatpush2.bf16.xpose.msra.mxu0 0
      %508 = vmatprep.subr.bf16.mxu0 0
      %509 = vmatpush2.bf16.xpose.msra.mxu0 0
      %510 = vmatprep.subr.bf16.mxu0 0
      %511 = vmatpush2.bf16.xpose.msra.mxu0 0
      %512 = vmatprep.subr.bf16.mxu0 0
      %513 = vmatpush2.bf16.xpose.msra.mxu0 0
      %514 = vmatprep.subr.bf16.mxu0 0
      %515 = vmatpush2.bf16.xpose.msra.mxu0 0
      %516 = vmatprep.mubr.bf16.mxu0 0
      %517 = vmatmul.mubr.bf16.gmra.mxu0 %v479
      %v518 = vpop.f32.mrf.mxu0
      %v519 = vadd.f32 0.0, %v518
      %v520 = vpop.f32.mrf.mxu0
      %v521 = vpop.f32.mrf.mxu0
      %v522 = vadd.f32 0.0, %v521
      %v523 = vpop.f32.mrf.mxu0
      %524 = vdwg.mxu0
      %v526 = vsel %vm383, %v378, 0
      %v529 = vsel %vm383, %v354, 0
      %531 = vmatprep.subr.bf16.mxu0 0
      %532 = vmatpush1.bf16.xpose.msra.mxu0 0
      %533 = vmatprep.subr.bf16.mxu0 0
      %534 = vmatpush1.bf16.xpose.msra.mxu0 0
      %535 = vmatprep.subr.bf16.mxu0 0
      %536 = vmatpush1.bf16.xpose.msra.mxu0 0
      %537 = vmatprep.subr.bf16.mxu0 0
      %538 = vmatpush1.bf16.xpose.msra.mxu0 0
      %539 = vmatprep.subr.bf16.mxu0 0
      %540 = vmatpush1.bf16.xpose.msra.mxu0 0
      %541 = vmatprep.subr.bf16.mxu0 0
      %542 = vmatpush1.bf16.xpose.msra.mxu0 0
      %543 = vmatprep.subr.bf16.mxu0 0
      %544 = vmatpush1.bf16.xpose.msra.mxu0 0
      %545 = vmatprep.subr.bf16.mxu0 0
      %546 = vmatpush1.bf16.xpose.msra.mxu0 %v529
      %547 = vmatprep.subr.bf16.mxu0 0
      %548 = vmatpush2.bf16.xpose.msra.mxu0 0
      %549 = vmatprep.subr.bf16.mxu0 0
      %550 = vmatpush2.bf16.xpose.msra.mxu0 0
      %551 = vmatprep.subr.bf16.mxu0 0
      %552 = vmatpush2.bf16.xpose.msra.mxu0 0
      %553 = vmatprep.subr.bf16.mxu0 0
      %554 = vmatpush2.bf16.xpose.msra.mxu0 0
      %555 = vmatprep.subr.bf16.mxu0 0
      %556 = vmatpush2.bf16.xpose.msra.mxu0 0
      %557 = vmatprep.subr.bf16.mxu0 0
      %558 = vmatpush2.bf16.xpose.msra.mxu0 0
      %559 = vmatprep.subr.bf16.mxu0 0
      %560 = vmatpush2.bf16.xpose.msra.mxu0 0
      %561 = vmatprep.subr.bf16.mxu0 0
      %562 = vmatpush2.bf16.xpose.msra.mxu0 0
      %563 = vmatprep.mubr.bf16.mxu0 0
      %564 = vmatmul.mubr.bf16.gmra.mxu0 %v526
      %v565 = vpop.f32.mrf.mxu0
      %v566 = vadd.f32 0.0, %v565
      %v567 = vpop.f32.mrf.mxu0
      %v568 = vpop.f32.mrf.mxu0
      %v569 = vadd.f32 0.0, %v568
      %v570 = vpop.f32.mrf.mxu0
      %571 = vdwg.mxu0
      %v573 = vsel %vm383, %v379, 0
      %v576 = vsel %vm383, %v355, 0
      %578 = vmatprep.subr.bf16.mxu0 0
      %579 = vmatpush1.bf16.xpose.msra.mxu0 0
      %580 = vmatprep.subr.bf16.mxu0 0
      %581 = vmatpush1.bf16.xpose.msra.mxu0 0
      %582 = vmatprep.subr.bf16.mxu0 0
      %583 = vmatpush1.bf16.xpose.msra.mxu0 0
      %584 = vmatprep.subr.bf16.mxu0 0
      %585 = vmatpush1.bf16.xpose.msra.mxu0 0
      %586 = vmatprep.subr.bf16.mxu0 0
      %587 = vmatpush1.bf16.xpose.msra.mxu0 0
      %588 = vmatprep.subr.bf16.mxu0 0
      %589 = vmatpush1.bf16.xpose.msra.mxu0 0
      %590 = vmatprep.subr.bf16.mxu0 0
      %591 = vmatpush1.bf16.xpose.msra.mxu0 0
      %592 = vmatprep.subr.bf16.mxu0 0
      %593 = vmatpush1.bf16.xpose.msra.mxu0 %v576
      %594 = vmatprep.subr.bf16.mxu0 0
      %595 = vmatpush2.bf16.xpose.msra.mxu0 0
      %596 = vmatprep.subr.bf16.mxu0 0
      %597 = vmatpush2.bf16.xpose.msra.mxu0 0
      %598 = vmatprep.subr.bf16.mxu0 0
      %599 = vmatpush2.bf16.xpose.msra.mxu0 0
      %600 = vmatprep.subr.bf16.mxu0 0
      %601 = vmatpush2.bf16.xpose.msra.mxu0 0
      %602 = vmatprep.subr.bf16.mxu0 0
      %603 = vmatpush2.bf16.xpose.msra.mxu0 0
      %604 = vmatprep.subr.bf16.mxu0 0
      %605 = vmatpush2.bf16.xpose.msra.mxu0 0
      %606 = vmatprep.subr.bf16.mxu0 0
      %607 = vmatpush2.bf16.xpose.msra.mxu0 0
      %608 = vmatprep.subr.bf16.mxu0 0
      %609 = vmatpush2.bf16.xpose.msra.mxu0 0
      %610 = vmatprep.mubr.bf16.mxu0 0
      %611 = vmatmul.mubr.bf16.gmra.mxu0 %v573
      %v612 = vpop.f32.mrf.mxu0
      %v613 = vadd.f32 0.0, %v612
      %v614 = vpop.f32.mrf.mxu0
      %v615 = vpop.f32.mrf.mxu0
      %v616 = vadd.f32 0.0, %v615
      %v617 = vpop.f32.mrf.mxu0
      %618 = vdwg.mxu0
      %v620 = vsel %vm383, %v380, 0
      %v623 = vsel %vm383, %v356, 0
      %625 = vmatprep.subr.bf16.mxu0 0
      %626 = vmatpush1.bf16.xpose.msra.mxu0 0
      %627 = vmatprep.subr.bf16.mxu0 0
      %628 = vmatpush1.bf16.xpose.msra.mxu0 0
      %629 = vmatprep.subr.bf16.mxu0 0
      %630 = vmatpush1.bf16.xpose.msra.mxu0 0
      %631 = vmatprep.subr.bf16.mxu0 0
      %632 = vmatpush1.bf16.xpose.msra.mxu0 0
      %633 = vmatprep.subr.bf16.mxu0 0
      %634 = vmatpush1.bf16.xpose.msra.mxu0 0
      %635 = vmatprep.subr.bf16.mxu0 0
      %636 = vmatpush1.bf16.xpose.msra.mxu0 0
      %637 = vmatprep.subr.bf16.mxu0 0
      %638 = vmatpush1.bf16.xpose.msra.mxu0 0
      %639 = vmatprep.subr.bf16.mxu0 0
      %640 = vmatpush1.bf16.xpose.msra.mxu0 %v623
      %641 = vmatprep.subr.bf16.mxu0 0
      %642 = vmatpush2.bf16.xpose.msra.mxu0 0
      %643 = vmatprep.subr.bf16.mxu0 0
      %644 = vmatpush2.bf16.xpose.msra.mxu0 0
      %645 = vmatprep.subr.bf16.mxu0 0
      %646 = vmatpush2.bf16.xpose.msra.mxu0 0
      %647 = vmatprep.subr.bf16.mxu0 0
      %648 = vmatpush2.bf16.xpose.msra.mxu0 0
      %649 = vmatprep.subr.bf16.mxu0 0
      %650 = vmatpush2.bf16.xpose.msra.mxu0 0
      %651 = vmatprep.subr.bf16.mxu0 0
      %652 = vmatpush2.bf16.xpose.msra.mxu0 0
      %653 = vmatprep.subr.bf16.mxu0 0
      %654 = vmatpush2.bf16.xpose.msra.mxu0 0
      %655 = vmatprep.subr.bf16.mxu0 0
      %656 = vmatpush2.bf16.xpose.msra.mxu0 0
      %657 = vmatprep.mubr.bf16.mxu0 0
      %658 = vmatmul.mubr.bf16.gmra.mxu0 %v620
      %v659 = vpop.f32.mrf.mxu0
      %v660 = vadd.f32 0.0, %v659
      %v661 = vpop.f32.mrf.mxu0
      %v662 = vpop.f32.mrf.mxu0
      %v663 = vadd.f32 0.0, %v662
      %v664 = vpop.f32.mrf.mxu0
      %665 = vdwg.mxu0
      %v667 = vsel %vm383, %v381, 0
      %v670 = vsel %vm383, %v357, 0
      %672 = vmatprep.subr.bf16.mxu0 0
      %673 = vmatpush1.bf16.xpose.msra.mxu0 0
      %674 = vmatprep.subr.bf16.mxu0 0
      %675 = vmatpush1.bf16.xpose.msra.mxu0 0
      %676 = vmatprep.subr.bf16.mxu0 0
      %677 = vmatpush1.bf16.xpose.msra.mxu0 0
      %678 = vmatprep.subr.bf16.mxu0 0
      %679 = vmatpush1.bf16.xpose.msra.mxu0 0
      %680 = vmatprep.subr.bf16.mxu0 0
      %681 = vmatpush1.bf16.xpose.msra.mxu0 0
      %682 = vmatprep.subr.bf16.mxu0 0
      %683 = vmatpush1.bf16.xpose.msra.mxu0 0
      %684 = vmatprep.subr.bf16.mxu0 0
      %685 = vmatpush1.bf16.xpose.msra.mxu0 0
      %686 = vmatprep.subr.bf16.mxu0 0
      %687 = vmatpush1.bf16.xpose.msra.mxu0 %v670
      %688 = vmatprep.subr.bf16.mxu0 0
      %689 = vmatpush2.bf16.xpose.msra.mxu0 0
      %690 = vmatprep.subr.bf16.mxu0 0
      %691 = vmatpush2.bf16.xpose.msra.mxu0 0
      %692 = vmatprep.subr.bf16.mxu0 0
      %693 = vmatpush2.bf16.xpose.msra.mxu0 0
      %694 = vmatprep.subr.bf16.mxu0 0
      %695 = vmatpush2.bf16.xpose.msra.mxu0 0
      %696 = vmatprep.subr.bf16.mxu0 0
      %697 = vmatpush2.bf16.xpose.msra.mxu0 0
      %698 = vmatprep.subr.bf16.mxu0 0
      %699 = vmatpush2.bf16.xpose.msra.mxu0 0
      %700 = vmatprep.subr.bf16.mxu0 0
      %701 = vmatpush2.bf16.xpose.msra.mxu0 0
      %702 = vmatprep.subr.bf16.mxu0 0
      %703 = vmatpush2.bf16.xpose.msra.mxu0 0
      %704 = vmatprep.mubr.bf16.mxu0 0
      %705 = vmatmul.mubr.bf16.gmra.mxu0 %v667
      %v706 = vpop.f32.mrf.mxu0
      %v707 = vadd.f32 0.0, %v706
      %v708 = vpop.f32.mrf.mxu0
      %v709 = vpop.f32.mrf.mxu0
      %v710 = vadd.f32 0.0, %v709
      %v711 = vpop.f32.mrf.mxu0
      %712 = vdwg.mxu0
      %v714 = vsel %vm383, %v382, 0
      %v717 = vsel %vm383, %v358, 0
      %719 = vmatprep.subr.bf16.mxu0 0
      %720 = vmatpush1.bf16.xpose.msra.mxu0 0
      %721 = vmatprep.subr.bf16.mxu0 0
      %722 = vmatpush1.bf16.xpose.msra.mxu0 0
      %723 = vmatprep.subr.bf16.mxu0 0
      %724 = vmatpush1.bf16.xpose.msra.mxu0 0
      %725 = vmatprep.subr.bf16.mxu0 0
      %726 = vmatpush1.bf16.xpose.msra.mxu0 0
      %727 = vmatprep.subr.bf16.mxu0 0
      %728 = vmatpush1.bf16.xpose.msra.mxu0 0
      %729 = vmatprep.subr.bf16.mxu0 0
      %730 = vmatpush1.bf16.xpose.msra.mxu0 0
      %731 = vmatprep.subr.bf16.mxu0 0
      %732 = vmatpush1.bf16.xpose.msra.mxu0 0
      %733 = vmatprep.subr.bf16.mxu0 0
      %734 = vmatpush1.bf16.xpose.msra.mxu0 %v717
      %735 = vmatprep.subr.bf16.mxu0 0
      %736 = vmatpush2.bf16.xpose.msra.mxu0 0
      %737 = vmatprep.subr.bf16.mxu0 0
      %738 = vmatpush2.bf16.xpose.msra.mxu0 0
      %739 = vmatprep.subr.bf16.mxu0 0
      %740 = vmatpush2.bf16.xpose.msra.mxu0 0
      %741 = vmatprep.subr.bf16.mxu0 0
      %742 = vmatpush2.bf16.xpose.msra.mxu0 0
      %743 = vmatprep.subr.bf16.mxu0 0
      %744 = vmatpush2.bf16.xpose.msra.mxu0 0
      %745 = vmatprep.subr.bf16.mxu0 0
      %746 = vmatpush2.bf16.xpose.msra.mxu0 0
      %747 = vmatprep.subr.bf16.mxu0 0
      %748 = vmatpush2.bf16.xpose.msra.mxu0 0
      %749 = vmatprep.subr.bf16.mxu0 0
      %750 = vmatpush2.bf16.xpose.msra.mxu0 0
      %751 = vmatprep.mubr.bf16.mxu0 0
      %752 = vmatmul.mubr.bf16.gmra.mxu0 %v714
      %v753 = vpop.f32.mrf.mxu0
      %v754 = vadd.f32 0.0, %v753
      %v755 = vpop.f32.mrf.mxu0
      %v756 = vpop.f32.mrf.mxu0
      %v757 = vadd.f32 0.0, %v756
      %v758 = vpop.f32.mrf.mxu0
      %759 = vdwg.mxu0
      %vm760 = vcmask 130048
      %v761 = vsel %vm760, %v425, -inf
      %762 = vmax.xlane.f32.xlu0 %v761
      %v763 = vpop.xlane.xlu0 %762
      %v764 = vsel %vm760, %v428, -inf
      %765 = vmax.xlane.f32.xlu0 %v764
      %v766 = vpop.xlane.xlu0 %765
      %v767 = vsel %vm760, %v472, -inf
      %768 = vmax.xlane.f32.xlu0 %v767
      %v769 = vpop.xlane.xlu0 %768
      %v770 = vsel %vm760, %v475, -inf
      %771 = vmax.xlane.f32.xlu0 %v770
      %v772 = vpop.xlane.xlu0 %771
      %v773 = vsel %vm760, %v519, -inf
      %774 = vmax.xlane.f32.xlu0 %v773
      %v775 = vpop.xlane.xlu0 %774
      %v776 = vsel %vm760, %v522, -inf
      %777 = vmax.xlane.f32.xlu0 %v776
      %v778 = vpop.xlane.xlu0 %777
      %v779 = vsel %vm760, %v566, -inf
      %780 = vmax.xlane.f32.xlu0 %v779
      %v781 = vpop.xlane.xlu0 %780
      %v782 = vsel %vm760, %v569, -inf
      %783 = vmax.xlane.f32.xlu0 %v782
      %v784 = vpop.xlane.xlu0 %783
      %v785 = vsel %vm760, %v613, -inf
      %786 = vmax.xlane.f32.xlu0 %v785
      %v787 = vpop.xlane.xlu0 %786
      %v788 = vsel %vm760, %v616, -inf
      %789 = vmax.xlane.f32.xlu0 %v788
      %v790 = vpop.xlane.xlu0 %789
      %v791 = vsel %vm760, %v660, -inf
      %792 = vmax.xlane.f32.xlu0 %v791
      %v793 = vpop.xlane.xlu0 %792
      %v794 = vsel %vm760, %v663, -inf
      %795 = vmax.xlane.f32.xlu0 %v794
      %v796 = vpop.xlane.xlu0 %795
      %v797 = vsel %vm760, %v707, -inf
      %798 = vmax.xlane.f32.xlu0 %v797
      %v799 = vpop.xlane.xlu0 %798
      %v800 = vsel %vm760, %v710, -inf
      %801 = vmax.xlane.f32.xlu0 %v800
      %v802 = vpop.xlane.xlu0 %801
      %v803 = vsel %vm760, %v754, -inf
      %804 = vmax.xlane.f32.xlu0 %v803
      %v805 = vpop.xlane.xlu0 %804
      %v806 = vsel %vm760, %v757, -inf
      %807 = vmax.xlane.f32.xlu0 %v806
      %v808 = vpop.xlane.xlu0 %807
      %v809 = vsub.f32 %v425, %v763
      %v810 = vsub.f32 %v428, %v766
      %v811 = vsub.f32 %v472, %v769
      %v812 = vsub.f32 %v475, %v772
      %v813 = vsub.f32 %v519, %v775
      %v814 = vsub.f32 %v522, %v778
      %v815 = vsub.f32 %v566, %v781
      %v816 = vsub.f32 %v569, %v784
      %v817 = vsub.f32 %v613, %v787
      %v818 = vsub.f32 %v616, %v790
      %v819 = vsub.f32 %v660, %v793
      %v820 = vsub.f32 %v663, %v796
      %v821 = vsub.f32 %v707, %v799
      %v822 = vsub.f32 %v710, %v802
      %v823 = vsub.f32 %v754, %v805
      %v824 = vsub.f32 %v757, %v808
      %v825 = vmul.f32 %v809, 1.442695
      %v826 = vpow.pop %v825
      %v827 = vmul.f32 %v810, 1.442695
      %v828 = vpow.pop %v827
      %v829 = vmul.f32 %v811, 1.442695
      %v830 = vpow.pop %v829
      %v831 = vmul.f32 %v812, 1.442695
      %v832 = vpow.pop %v831
      %v833 = vmul.f32 %v813, 1.442695
      %v834 = vpow.pop %v833
      %v835 = vmul.f32 %v814, 1.442695
      %v836 = vpow.pop %v835
      %v837 = vmul.f32 %v815, 1.442695
      %v838 = vpow.pop %v837
      %v839 = vmul.f32 %v816, 1.442695
      %v840 = vpow.pop %v839
      %v841 = vmul.f32 %v817, 1.442695
      %v842 = vpow.pop %v841
      %v843 = vmul.f32 %v818, 1.442695
      %v844 = vpow.pop %v843
      %v845 = vmul.f32 %v819, 1.442695
      %v846 = vpow.pop %v845
      %v847 = vmul.f32 %v820, 1.442695
      %v848 = vpow.pop %v847
      %v849 = vmul.f32 %v821, 1.442695
      %v850 = vpow.pop %v849
      %v851 = vmul.f32 %v822, 1.442695
      %v852 = vpow.pop %v851
      %v853 = vmul.f32 %v823, 1.442695
      %v854 = vpow.pop %v853
      %v855 = vmul.f32 %v824, 1.442695
      %v856 = vpow.pop %v855
      %v857 = vsel %vm760, %v826, 0.0
      %858 = vadd.xlane.f32.xlu0 %v857
      %v859 = vpop.xlane.xlu0 %858
      %v860 = vsel %vm760, %v828, 0.0
      %861 = vadd.xlane.f32.xlu0 %v860
      %v862 = vpop.xlane.xlu0 %861
      %v863 = vsel %vm760, %v830, 0.0
      %864 = vadd.xlane.f32.xlu0 %v863
      %v865 = vpop.xlane.xlu0 %864
      %v866 = vsel %vm760, %v832, 0.0
      %867 = vadd.xlane.f32.xlu0 %v866
      %v868 = vpop.xlane.xlu0 %867
      %v869 = vsel %vm760, %v834, 0.0
      %870 = vadd.xlane.f32.xlu0 %v869
      %v871 = vpop.xlane.xlu0 %870
      %v872 = vsel %vm760, %v836, 0.0
      %873 = vadd.xlane.f32.xlu0 %v872
      %v874 = vpop.xlane.xlu0 %873
      %v875 = vsel %vm760, %v838, 0.0
      %876 = vadd.xlane.f32.xlu0 %v875
      %v877 = vpop.xlane.xlu0 %876
      %v878 = vsel %vm760, %v840, 0.0
      %879 = vadd.xlane.f32.xlu0 %v878
      %v880 = vpop.xlane.xlu0 %879
      %v881 = vsel %vm760, %v842, 0.0
      %882 = vadd.xlane.f32.xlu0 %v881
      %v883 = vpop.xlane.xlu0 %882
      %v884 = vsel %vm760, %v844, 0.0
      %885 = vadd.xlane.f32.xlu0 %v884
      %v886 = vpop.xlane.xlu0 %885
      %v887 = vsel %vm760, %v846, 0.0
      %888 = vadd.xlane.f32.xlu0 %v887
      %v889 = vpop.xlane.xlu0 %888
      %v890 = vsel %vm760, %v848, 0.0
      %891 = vadd.xlane.f32.xlu0 %v890
      %v892 = vpop.xlane.xlu0 %891
      %v893 = vsel %vm760, %v850, 0.0
      %894 = vadd.xlane.f32.xlu0 %v893
      %v895 = vpop.xlane.xlu0 %894
      %v896 = vsel %vm760, %v852, 0.0
      %897 = vadd.xlane.f32.xlu0 %v896
      %v898 = vpop.xlane.xlu0 %897
      %v899 = vsel %vm760, %v854, 0.0
      %900 = vadd.xlane.f32.xlu0 %v899
      %v901 = vpop.xlane.xlu0 %900
      %v902 = vsel %vm760, %v856, 0.0
      %903 = vadd.xlane.f32.xlu0 %v902
      %v904 = vpop.xlane.xlu0 %903
      %v905 = vrcp.pop %v859
      %v906 = vrcp.pop %v862
      %v907 = vrcp.pop %v865
      %v908 = vrcp.pop %v868
      %v909 = vrcp.pop %v871
      %v910 = vrcp.pop %v874
      %v911 = vrcp.pop %v877
      %v912 = vrcp.pop %v880
      %v913 = vrcp.pop %v883
      %v914 = vrcp.pop %v886
      %v915 = vrcp.pop %v889
      %v916 = vrcp.pop %v892
      %v917 = vrcp.pop %v895
      %v918 = vrcp.pop %v898
      %v919 = vrcp.pop %v901
      %v920 = vrcp.pop %v904
      %v921 = vmul.f32 %v826, %v905
      %v922 = vmul.f32 %v828, %v906
      %v923 = vmul.f32 %v830, %v907
      %v924 = vmul.f32 %v832, %v908
      %v925 = vmul.f32 %v834, %v909
      %v926 = vmul.f32 %v836, %v910
      %v927 = vmul.f32 %v838, %v911
      %v928 = vmul.f32 %v840, %v912
      %v929 = vmul.f32 %v842, %v913
      %v930 = vmul.f32 %v844, %v914
      %v931 = vmul.f32 %v846, %v915
      %v932 = vmul.f32 %v848, %v916
      %v933 = vmul.f32 %v850, %v917
      %v934 = vmul.f32 %v852, %v918
      %v935 = vmul.f32 %v854, %v919
      %v936 = vmul.f32 %v856, %v920
      %v937 = vpack.c.bf16 %v922, %v921
      %v938 = vpack.c.bf16 %v924, %v923
      %v939 = vpack.c.bf16 %v926, %v925
      %v940 = vpack.c.bf16 %v928, %v927
      %v941 = vpack.c.bf16 %v930, %v929
      %v942 = vpack.c.bf16 %v932, %v931
      %v943 = vpack.c.bf16 %v934, %v933
      %v944 = vpack.c.bf16 %v936, %v935
      %v946 = vsel %vm760, %v937, 0
      %948 = vmatprep.subr.bf16.mxu0 0
      %949 = vmatpush1.bf16.msra.mxu0 0
      %950 = vmatprep.subr.bf16.mxu0 0
      %951 = vmatpush1.bf16.msra.mxu0 0
      %952 = vmatprep.subr.bf16.mxu0 0
      %953 = vmatpush1.bf16.msra.mxu0 0
      %954 = vmatprep.subr.bf16.mxu0 0
      %955 = vmatpush1.bf16.msra.mxu0 0
      %956 = vmatprep.subr.bf16.mxu0 0
      %957 = vmatpush1.bf16.msra.mxu0 0
      %958 = vmatprep.subr.bf16.mxu0 0
      %959 = vmatpush1.bf16.msra.mxu0 0
      %960 = vmatprep.subr.bf16.mxu0 0
      %961 = vmatpush1.bf16.msra.mxu0 0
      %962 = vmatprep.subr.bf16.mxu0 0
      %963 = vmatpush1.bf16.msra.mxu0 %v351
      %964 = vmatprep.subr.bf16.mxu0 0
      %965 = vmatpush2.bf16.msra.mxu0 0
      %966 = vmatprep.subr.bf16.mxu0 0
      %967 = vmatpush2.bf16.msra.mxu0 0
      %968 = vmatprep.subr.bf16.mxu0 0
      %969 = vmatpush2.bf16.msra.mxu0 0
      %970 = vmatprep.subr.bf16.mxu0 0
      %971 = vmatpush2.bf16.msra.mxu0 0
      %972 = vmatprep.subr.bf16.mxu0 0
      %973 = vmatpush2.bf16.msra.mxu0 0
      %974 = vmatprep.subr.bf16.mxu0 0
      %975 = vmatpush2.bf16.msra.mxu0 0
      %976 = vmatprep.subr.bf16.mxu0 0
      %977 = vmatpush2.bf16.msra.mxu0 0
      %978 = vmatprep.subr.bf16.mxu0 0
      %979 = vmatpush2.bf16.msra.mxu0 0
      %980 = vmatprep.mubr.bf16.mxu0 0
      %981 = vmatmul.mubr.bf16.gmra.mxu0 %v946
      %v982 = vpop.f32.mrf.mxu0
      %v983 = vadd.f32 0.0, %v982
      %v984 = vpop.f32.mrf.mxu0
      %v985 = vpop.f32.mrf.mxu0
      %v986 = vadd.f32 0.0, %v985
      %v987 = vpop.f32.mrf.mxu0
      %988 = vdwg.mxu0
      %v990 = vsel %vm760, %v938, 0
      %992 = vmatprep.subr.bf16.mxu0 0
      %993 = vmatpush1.bf16.msra.mxu0 0
      %994 = vmatprep.subr.bf16.mxu0 0
      %995 = vmatpush1.bf16.msra.mxu0 0
      %996 = vmatprep.subr.bf16.mxu0 0
      %997 = vmatpush1.bf16.msra.mxu0 0
      %998 = vmatprep.subr.bf16.mxu0 0
      %999 = vmatpush1.bf16.msra.mxu0 0
      %1000 = vmatprep.subr.bf16.mxu0 0
      %1001 = vmatpush1.bf16.msra.mxu0 0
      %1002 = vmatprep.subr.bf16.mxu0 0
      %1003 = vmatpush1.bf16.msra.mxu0 0
      %1004 = vmatprep.subr.bf16.mxu0 0
      %1005 = vmatpush1.bf16.msra.mxu0 0
      %1006 = vmatprep.subr.bf16.mxu0 0
      %1007 = vmatpush1.bf16.msra.mxu0 %v352
      %1008 = vmatprep.subr.bf16.mxu0 0
      %1009 = vmatpush2.bf16.msra.mxu0 0
      %1010 = vmatprep.subr.bf16.mxu0 0
      %1011 = vmatpush2.bf16.msra.mxu0 0
      %1012 = vmatprep.subr.bf16.mxu0 0
      %1013 = vmatpush2.bf16.msra.mxu0 0
      %1014 = vmatprep.subr.bf16.mxu0 0
      %1015 = vmatpush2.bf16.msra.mxu0 0
      %1016 = vmatprep.subr.bf16.mxu0 0
      %1017 = vmatpush2.bf16.msra.mxu0 0
      %1018 = vmatprep.subr.bf16.mxu0 0
      %1019 = vmatpush2.bf16.msra.mxu0 0
      %1020 = vmatprep.subr.bf16.mxu0 0
      %1021 = vmatpush2.bf16.msra.mxu0 0
      %1022 = vmatprep.subr.bf16.mxu0 0
      %1023 = vmatpush2.bf16.msra.mxu0 0
      %1024 = vmatprep.mubr.bf16.mxu0 0
      %1025 = vmatmul.mubr.bf16.gmra.mxu0 %v990
      %v1026 = vpop.f32.mrf.mxu0
      %v1027 = vadd.f32 0.0, %v1026
      %v1028 = vpop.f32.mrf.mxu0
      %v1029 = vpop.f32.mrf.mxu0
      %v1030 = vadd.f32 0.0, %v1029
      %v1031 = vpop.f32.mrf.mxu0
      %1032 = vdwg.mxu0
      %v1034 = vsel %vm760, %v939, 0
      %1036 = vmatprep.subr.bf16.mxu0 0
      %1037 = vmatpush1.bf16.msra.mxu0 0
      %1038 = vmatprep.subr.bf16.mxu0 0
      %1039 = vmatpush1.bf16.msra.mxu0 0
      %1040 = vmatprep.subr.bf16.mxu0 0
      %1041 = vmatpush1.bf16.msra.mxu0 0
      %1042 = vmatprep.subr.bf16.mxu0 0
      %1043 = vmatpush1.bf16.msra.mxu0 0
      %1044 = vmatprep.subr.bf16.mxu0 0
      %1045 = vmatpush1.bf16.msra.mxu0 0
      %1046 = vmatprep.subr.bf16.mxu0 0
      %1047 = vmatpush1.bf16.msra.mxu0 0
      %1048 = vmatprep.subr.bf16.mxu0 0
      %1049 = vmatpush1.bf16.msra.mxu0 0
      %1050 = vmatprep.subr.bf16.mxu0 0
      %1051 = vmatpush1.bf16.msra.mxu0 %v353
      %1052 = vmatprep.subr.bf16.mxu0 0
      %1053 = vmatpush2.bf16.msra.mxu0 0
      %1054 = vmatprep.subr.bf16.mxu0 0
      %1055 = vmatpush2.bf16.msra.mxu0 0
      %1056 = vmatprep.subr.bf16.mxu0 0
      %1057 = vmatpush2.bf16.msra.mxu0 0
      %1058 = vmatprep.subr.bf16.mxu0 0
      %1059 = vmatpush2.bf16.msra.mxu0 0
      %1060 = vmatprep.subr.bf16.mxu0 0
      %1061 = vmatpush2.bf16.msra.mxu0 0
      %1062 = vmatprep.subr.bf16.mxu0 0
      %1063 = vmatpush2.bf16.msra.mxu0 0
      %1064 = vmatprep.subr.bf16.mxu0 0
      %1065 = vmatpush2.bf16.msra.mxu0 0
      %1066 = vmatprep.subr.bf16.mxu0 0
      %1067 = vmatpush2.bf16.msra.mxu0 0
      %1068 = vmatprep.mubr.bf16.mxu0 0
      %1069 = vmatmul.mubr.bf16.gmra.mxu0 %v1034
      %v1070 = vpop.f32.mrf.mxu0
      %v1071 = vadd.f32 0.0, %v1070
      %v1072 = vpop.f32.mrf.mxu0
      %v1073 = vpop.f32.mrf.mxu0
      %v1074 = vadd.f32 0.0, %v1073
      %v1075 = vpop.f32.mrf.mxu0
      %1076 = vdwg.mxu0
      %v1078 = vsel %vm760, %v940, 0
      %1080 = vmatprep.subr.bf16.mxu0 0
      %1081 = vmatpush1.bf16.msra.mxu0 0
      %1082 = vmatprep.subr.bf16.mxu0 0
      %1083 = vmatpush1.bf16.msra.mxu0 0
      %1084 = vmatprep.subr.bf16.mxu0 0
      %1085 = vmatpush1.bf16.msra.mxu0 0
      %1086 = vmatprep.subr.bf16.mxu0 0
      %1087 = vmatpush1.bf16.msra.mxu0 0
      %1088 = vmatprep.subr.bf16.mxu0 0
      %1089 = vmatpush1.bf16.msra.mxu0 0
      %1090 = vmatprep.subr.bf16.mxu0 0
      %1091 = vmatpush1.bf16.msra.mxu0 0
      %1092 = vmatprep.subr.bf16.mxu0 0
      %1093 = vmatpush1.bf16.msra.mxu0 0
      %1094 = vmatprep.subr.bf16.mxu0 0
      %1095 = vmatpush1.bf16.msra.mxu0 %v354
      %1096 = vmatprep.subr.bf16.mxu0 0
      %1097 = vmatpush2.bf16.msra.mxu0 0
      %1098 = vmatprep.subr.bf16.mxu0 0
      %1099 = vmatpush2.bf16.msra.mxu0 0
      %1100 = vmatprep.subr.bf16.mxu0 0
      %1101 = vmatpush2.bf16.msra.mxu0 0
      %1102 = vmatprep.subr.bf16.mxu0 0
      %1103 = vmatpush2.bf16.msra.mxu0 0
      %1104 = vmatprep.subr.bf16.mxu0 0
      %1105 = vmatpush2.bf16.msra.mxu0 0
      %1106 = vmatprep.subr.bf16.mxu0 0
      %1107 = vmatpush2.bf16.msra.mxu0 0
      %1108 = vmatprep.subr.bf16.mxu0 0
      %1109 = vmatpush2.bf16.msra.mxu0 0
      %1110 = vmatprep.subr.bf16.mxu0 0
      %1111 = vmatpush2.bf16.msra.mxu0 0
      %1112 = vmatprep.mubr.bf16.mxu0 0
      %1113 = vmatmul.mubr.bf16.gmra.mxu0 %v1078
      %v1114 = vpop.f32.mrf.mxu0
      %v1115 = vadd.f32 0.0, %v1114
      %v1116 = vpop.f32.mrf.mxu0
      %v1117 = vpop.f32.mrf.mxu0
      %v1118 = vadd.f32 0.0, %v1117
      %v1119 = vpop.f32.mrf.mxu0
      %1120 = vdwg.mxu0
      %v1122 = vsel %vm760, %v941, 0
      %1124 = vmatprep.subr.bf16.mxu0 0
      %1125 = vmatpush1.bf16.msra.mxu0 0
      %1126 = vmatprep.subr.bf16.mxu0 0
      %1127 = vmatpush1.bf16.msra.mxu0 0
      %1128 = vmatprep.subr.bf16.mxu0 0
      %1129 = vmatpush1.bf16.msra.mxu0 0
      %1130 = vmatprep.subr.bf16.mxu0 0
      %1131 = vmatpush1.bf16.msra.mxu0 0
      %1132 = vmatprep.subr.bf16.mxu0 0
      %1133 = vmatpush1.bf16.msra.mxu0 0
      %1134 = vmatprep.subr.bf16.mxu0 0
      %1135 = vmatpush1.bf16.msra.mxu0 0
      %1136 = vmatprep.subr.bf16.mxu0 0
      %1137 = vmatpush1.bf16.msra.mxu0 0
      %1138 = vmatprep.subr.bf16.mxu0 0
      %1139 = vmatpush1.bf16.msra.mxu0 %v355
      %1140 = vmatprep.subr.bf16.mxu0 0
      %1141 = vmatpush2.bf16.msra.mxu0 0
      %1142 = vmatprep.subr.bf16.mxu0 0
      %1143 = vmatpush2.bf16.msra.mxu0 0
      %1144 = vmatprep.subr.bf16.mxu0 0
      %1145 = vmatpush2.bf16.msra.mxu0 0
      %1146 = vmatprep.subr.bf16.mxu0 0
      %1147 = vmatpush2.bf16.msra.mxu0 0
      %1148 = vmatprep.subr.bf16.mxu0 0
      %1149 = vmatpush2.bf16.msra.mxu0 0
      %1150 = vmatprep.subr.bf16.mxu0 0
      %1151 = vmatpush2.bf16.msra.mxu0 0
      %1152 = vmatprep.subr.bf16.mxu0 0
      %1153 = vmatpush2.bf16.msra.mxu0 0
      %1154 = vmatprep.subr.bf16.mxu0 0
      %1155 = vmatpush2.bf16.msra.mxu0 0
      %1156 = vmatprep.mubr.bf16.mxu0 0
      %1157 = vmatmul.mubr.bf16.gmra.mxu0 %v1122
      %v1158 = vpop.f32.mrf.mxu0
      %v1159 = vadd.f32 0.0, %v1158
      %v1160 = vpop.f32.mrf.mxu0
      %v1161 = vpop.f32.mrf.mxu0
      %v1162 = vadd.f32 0.0, %v1161
      %v1163 = vpop.f32.mrf.mxu0
      %1164 = vdwg.mxu0
      %v1166 = vsel %vm760, %v942, 0
      %1168 = vmatprep.subr.bf16.mxu0 0
      %1169 = vmatpush1.bf16.msra.mxu0 0
      %1170 = vmatprep.subr.bf16.mxu0 0
      %1171 = vmatpush1.bf16.msra.mxu0 0
      %1172 = vmatprep.subr.bf16.mxu0 0
      %1173 = vmatpush1.bf16.msra.mxu0 0
      %1174 = vmatprep.subr.bf16.mxu0 0
      %1175 = vmatpush1.bf16.msra.mxu0 0
      %1176 = vmatprep.subr.bf16.mxu0 0
      %1177 = vmatpush1.bf16.msra.mxu0 0
      %1178 = vmatprep.subr.bf16.mxu0 0
      %1179 = vmatpush1.bf16.msra.mxu0 0
      %1180 = vmatprep.subr.bf16.mxu0 0
      %1181 = vmatpush1.bf16.msra.mxu0 0
      %1182 = vmatprep.subr.bf16.mxu0 0
      %1183 = vmatpush1.bf16.msra.mxu0 %v356
      %1184 = vmatprep.subr.bf16.mxu0 0
      %1185 = vmatpush2.bf16.msra.mxu0 0
      %1186 = vmatprep.subr.bf16.mxu0 0
      %1187 = vmatpush2.bf16.msra.mxu0 0
      %1188 = vmatprep.subr.bf16.mxu0 0
      %1189 = vmatpush2.bf16.msra.mxu0 0
      %1190 = vmatprep.subr.bf16.mxu0 0
      %1191 = vmatpush2.bf16.msra.mxu0 0
      %1192 = vmatprep.subr.bf16.mxu0 0
      %1193 = vmatpush2.bf16.msra.mxu0 0
      %1194 = vmatprep.subr.bf16.mxu0 0
      %1195 = vmatpush2.bf16.msra.mxu0 0
      %1196 = vmatprep.subr.bf16.mxu0 0
      %1197 = vmatpush2.bf16.msra.mxu0 0
      %1198 = vmatprep.subr.bf16.mxu0 0
      %1199 = vmatpush2.bf16.msra.mxu0 0
      %1200 = vmatprep.mubr.bf16.mxu0 0
      %1201 = vmatmul.mubr.bf16.gmra.mxu0 %v1166
      %v1202 = vpop.f32.mrf.mxu0
      %v1203 = vadd.f32 0.0, %v1202
      %v1204 = vpop.f32.mrf.mxu0
      %v1205 = vpop.f32.mrf.mxu0
      %v1206 = vadd.f32 0.0, %v1205
      %v1207 = vpop.f32.mrf.mxu0
      %1208 = vdwg.mxu0
      %v1210 = vsel %vm760, %v943, 0
      %1212 = vmatprep.subr.bf16.mxu0 0
      %1213 = vmatpush1.bf16.msra.mxu0 0
      %1214 = vmatprep.subr.bf16.mxu0 0
      %1215 = vmatpush1.bf16.msra.mxu0 0
      %1216 = vmatprep.subr.bf16.mxu0 0
      %1217 = vmatpush1.bf16.msra.mxu0 0
      %1218 = vmatprep.subr.bf16.mxu0 0
      %1219 = vmatpush1.bf16.msra.mxu0 0
      %1220 = vmatprep.subr.bf16.mxu0 0
      %1221 = vmatpush1.bf16.msra.mxu0 0
      %1222 = vmatprep.subr.bf16.mxu0 0
      %1223 = vmatpush1.bf16.msra.mxu0 0
      %1224 = vmatprep.subr.bf16.mxu0 0
      %1225 = vmatpush1.bf16.msra.mxu0 0
      %1226 = vmatprep.subr.bf16.mxu0 0
      %1227 = vmatpush1.bf16.msra.mxu0 %v357
      %1228 = vmatprep.subr.bf16.mxu0 0
      %1229 = vmatpush2.bf16.msra.mxu0 0
      %1230 = vmatprep.subr.bf16.mxu0 0
      %1231 = vmatpush2.bf16.msra.mxu0 0
      %1232 = vmatprep.subr.bf16.mxu0 0
      %1233 = vmatpush2.bf16.msra.mxu0 0
      %1234 = vmatprep.subr.bf16.mxu0 0
      %1235 = vmatpush2.bf16.msra.mxu0 0
      %1236 = vmatprep.subr.bf16.mxu0 0
      %1237 = vmatpush2.bf16.msra.mxu0 0
      %1238 = vmatprep.subr.bf16.mxu0 0
      %1239 = vmatpush2.bf16.msra.mxu0 0
      %1240 = vmatprep.subr.bf16.mxu0 0
      %1241 = vmatpush2.bf16.msra.mxu0 0
      %1242 = vmatprep.subr.bf16.mxu0 0
      %1243 = vmatpush2.bf16.msra.mxu0 0
      %1244 = vmatprep.mubr.bf16.mxu0 0
      %1245 = vmatmul.mubr.bf16.gmra.mxu0 %v1210
      %v1246 = vpop.f32.mrf.mxu0
      %v1247 = vadd.f32 0.0, %v1246
      %v1248 = vpop.f32.mrf.mxu0
      %v1249 = vpop.f32.mrf.mxu0
      %v1250 = vadd.f32 0.0, %v1249
      %v1251 = vpop.f32.mrf.mxu0
      %1252 = vdwg.mxu0
      %v1254 = vsel %vm760, %v944, 0
      %1256 = vmatprep.subr.bf16.mxu0 0
      %1257 = vmatpush1.bf16.msra.mxu0 0
      %1258 = vmatprep.subr.bf16.mxu0 0
      %1259 = vmatpush1.bf16.msra.mxu0 0
      %1260 = vmatprep.subr.bf16.mxu0 0
      %1261 = vmatpush1.bf16.msra.mxu0 0
      %1262 = vmatprep.subr.bf16.mxu0 0
      %1263 = vmatpush1.bf16.msra.mxu0 0
      %1264 = vmatprep.subr.bf16.mxu0 0
      %1265 = vmatpush1.bf16.msra.mxu0 0
      %1266 = vmatprep.subr.bf16.mxu0 0
      %1267 = vmatpush1.bf16.msra.mxu0 0
      %1268 = vmatprep.subr.bf16.mxu0 0
      %1269 = vmatpush1.bf16.msra.mxu0 0
      %1270 = vmatprep.subr.bf16.mxu0 0
      %1271 = vmatpush1.bf16.msra.mxu0 %v358
      %1272 = vmatprep.subr.bf16.mxu0 0
      %1273 = vmatpush2.bf16.msra.mxu0 0
      %1274 = vmatprep.subr.bf16.mxu0 0
      %1275 = vmatpush2.bf16.msra.mxu0 0
      %1276 = vmatprep.subr.bf16.mxu0 0
      %1277 = vmatpush2.bf16.msra.mxu0 0
      %1278 = vmatprep.subr.bf16.mxu0 0
      %1279 = vmatpush2.bf16.msra.mxu0 0
      %1280 = vmatprep.subr.bf16.mxu0 0
      %1281 = vmatpush2.bf16.msra.mxu0 0
      %1282 = vmatprep.subr.bf16.mxu0 0
      %1283 = vmatpush2.bf16.msra.mxu0 0
      %1284 = vmatprep.subr.bf16.mxu0 0
      %1285 = vmatpush2.bf16.msra.mxu0 0
      %1286 = vmatprep.subr.bf16.mxu0 0
      %1287 = vmatpush2.bf16.msra.mxu0 0
      %1288 = vmatprep.mubr.bf16.mxu0 0
      %1289 = vmatmul.mubr.bf16.gmra.mxu0 %v1254
      %v1290 = vpop.f32.mrf.mxu0
      %v1291 = vadd.f32 0.0, %v1290
      %v1292 = vpop.f32.mrf.mxu0
      %v1293 = vpop.f32.mrf.mxu0
      %v1294 = vadd.f32 0.0, %v1293
      %v1295 = vpop.f32.mrf.mxu0
      %1296 = vdwg.mxu0
      %v1297 = vsub.f32 %v335, %v983
      %v1298 = vsub.f32 %v336, %v986
      %v1299 = vsub.f32 %v337, %v1027
      %v1300 = vsub.f32 %v338, %v1030
      %v1301 = vsub.f32 %v339, %v1071
      %v1302 = vsub.f32 %v340, %v1074
      %v1303 = vsub.f32 %v341, %v1115
      %v1304 = vsub.f32 %v342, %v1118
      %v1305 = vsub.f32 %v343, %v1159
      %v1306 = vsub.f32 %v344, %v1162
      %v1307 = vsub.f32 %v345, %v1203
      %v1308 = vsub.f32 %v346, %v1206
      %v1309 = vsub.f32 %v347, %v1247
      %v1310 = vsub.f32 %v348, %v1250
      %v1311 = vsub.f32 %v349, %v1291
      %v1312 = vsub.f32 %v350, %v1294
      %v1313 = vpack.c.bf16 %v1298, %v1297
      %v1314 = vpack.c.bf16 %v1300, %v1299
      %v1315 = vpack.c.bf16 %v1302, %v1301
      %v1316 = vpack.c.bf16 %v1304, %v1303
      %v1317 = vpack.c.bf16 %v1306, %v1305
      %v1318 = vpack.c.bf16 %v1308, %v1307
      %v1319 = vpack.c.bf16 %v1310, %v1309
      %v1320 = vpack.c.bf16 %v1312, %v1311
      %v1329 = vunpack.c.l.b16 %v1313
      %v1330 = vunpack.c.h.b16 %v1313
      %v1331 = vunpack.c.l.b16 %v1314
      %v1332 = vunpack.c.h.b16 %v1314
      %v1333 = vunpack.c.l.b16 %v1315
      %v1334 = vunpack.c.h.b16 %v1315
      %v1335 = vunpack.c.l.b16 %v1316
      %v1336 = vunpack.c.h.b16 %v1316
      %v1337 = vunpack.c.l.b16 %v1317
      %v1338 = vunpack.c.h.b16 %v1317
      %v1339 = vunpack.c.l.b16 %v1318
      %v1340 = vunpack.c.h.b16 %v1318
      %v1341 = vunpack.c.l.b16 %v1319
      %v1342 = vunpack.c.h.b16 %v1319
      %v1343 = vunpack.c.l.b16 %v1320
      %v1344 = vunpack.c.h.b16 %v1320
      %v1345 = vpack.c.b16 %v1329, %v1329
      %v1346 = vpack.c.b16 %v1330, %v1330
      %v1347 = vpack.c.b16 %v1331, %v1331
      %v1348 = vpack.c.b16 %v1332, %v1332
      %v1349 = vpack.c.b16 %v1333, %v1333
      %v1350 = vpack.c.b16 %v1334, %v1334
      %v1351 = vpack.c.b16 %v1335, %v1335
      %v1352 = vpack.c.b16 %v1336, %v1336
      %v1353 = vpack.c.b16 %v1337, %v1337
      %v1354 = vpack.c.b16 %v1338, %v1338
      %v1355 = vpack.c.b16 %v1339, %v1339
      %v1356 = vpack.c.b16 %v1340, %v1340
      %v1357 = vpack.c.b16 %v1341, %v1341
      %v1358 = vpack.c.b16 %v1342, %v1342
      %v1359 = vpack.c.b16 %v1343, %v1343
      %v1360 = vpack.c.b16 %v1344, %v1344
      %vm1377 = vcmask 60416
      %1378 = vst.msk [vmem:[#allocation2] sm:$0xf] %vm1377, %v1345
      %1379 = vst.msk [vmem:[#allocation2 + $0x4] sm:$0xf] %vm1377, %v1346
      %1380 = vst.msk [vmem:[#allocation2 + $0x8] sm:$0xf] %vm1377, %v1347
      %1381 = vst.msk [vmem:[#allocation2 + $0xc] sm:$0xf] %vm1377, %v1348
      %1382 = vst.msk [vmem:[#allocation2 + $0x10] sm:$0xf] %vm1377, %v1349
      %1383 = vst.msk [vmem:[#allocation2 + $0x14] sm:$0xf] %vm1377, %v1350
      %1384 = vst.msk [vmem:[#allocation2 + $0x18] sm:$0xf] %vm1377, %v1351
      %1385 = vst.msk [vmem:[#allocation2 + $0x1c] sm:$0xf] %vm1377, %v1352
      %1386 = vst.msk [vmem:[#allocation2 + $0x20] sm:$0xf] %vm1377, %v1353
      %1387 = vst.msk [vmem:[#allocation2 + $0x24] sm:$0xf] %vm1377, %v1354
      %1388 = vst.msk [vmem:[#allocation2 + $0x28] sm:$0xf] %vm1377, %v1355
      %1389 = vst.msk [vmem:[#allocation2 + $0x2c] sm:$0xf] %vm1377, %v1356
      %1390 = vst.msk [vmem:[#allocation2 + $0x30] sm:$0xf] %vm1377, %v1357
      %1391 = vst.msk [vmem:[#allocation2 + $0x34] sm:$0xf] %vm1377, %v1358
      %1392 = vst.msk [vmem:[#allocation2 + $0x38] sm:$0xf] %vm1377, %v1359
      %1393 = vst.msk [vmem:[#allocation2 + $0x3c] sm:$0xf] %vm1377, %v1360
      %v1394 = vld [vmem:[%s3] sm:$0xf]
      %v1395 = vld [vmem:[#allocation2] sm:$0xf]
      %v1396 = vld [vmem:[#allocation2 + $0x4] sm:$0xf]
      %v1397 = vld [vmem:[#allocation2 + $0x8] sm:$0xf]
      %v1398 = vld [vmem:[#allocation2 + $0xc] sm:$0xf]
      %v1399 = vld [vmem:[#allocation2 + $0x10] sm:$0xf]
      %v1400 = vld [vmem:[#allocation2 + $0x14] sm:$0xf]
      %v1401 = vld [vmem:[#allocation2 + $0x18] sm:$0xf]
      %v1402 = vld [vmem:[#allocation2 + $0x1c] sm:$0xf]
      %v1403 = vld [vmem:[#allocation2 + $0x20] sm:$0xf]
      %v1404 = vld [vmem:[#allocation2 + $0x24] sm:$0xf]
      %v1405 = vld [vmem:[#allocation2 + $0x28] sm:$0xf]
      %v1406 = vld [vmem:[#allocation2 + $0x2c] sm:$0xf]
      %v1407 = vld [vmem:[#allocation2 + $0x30] sm:$0xf]
      %v1408 = vld [vmem:[#allocation2 + $0x34] sm:$0xf]
      %v1409 = vld [vmem:[#allocation2 + $0x38] sm:$0xf]
      %v1410 = vld [vmem:[#allocation2 + $0x3c] sm:$0xf]
      %v1411 = vld [vmem:[%s1] sm:$0xf]
      %v1412 = vlaneseq
      %v1413 = vshrl.u32 %v1412, 7
      %v1414 = vsub.s32 0, %v1413
      %v1415 = vrot.slane %v1394, %v1414
      %v1432 = vunpack.c.l.b16 %v1395
      %v1433 = vunpack.c.l.b16 %v1396
      %v1434 = vunpack.c.l.b16 %v1397
      %v1435 = vunpack.c.l.b16 %v1398
      %v1436 = vunpack.c.l.b16 %v1399
      %v1437 = vunpack.c.l.b16 %v1400
      %v1438 = vunpack.c.l.b16 %v1401
      %v1439 = vunpack.c.l.b16 %v1402
      %v1440 = vunpack.c.l.b16 %v1403
      %v1441 = vunpack.c.l.b16 %v1404
      %v1442 = vunpack.c.l.b16 %v1405
      %v1443 = vunpack.c.l.b16 %v1406
      %v1444 = vunpack.c.l.b16 %v1407
      %v1445 = vunpack.c.l.b16 %v1408
      %v1446 = vunpack.c.l.b16 %v1409
      %v1447 = vunpack.c.l.b16 %v1410
      %v1448 = vpack.c.b16 %v1433, %v1432
      %v1449 = vpack.c.b16 %v1435, %v1434
      %v1450 = vpack.c.b16 %v1437, %v1436
      %v1451 = vpack.c.b16 %v1439, %v1438
      %v1452 = vpack.c.b16 %v1441, %v1440
      %v1453 = vpack.c.b16 %v1443, %v1442
      %v1454 = vpack.c.b16 %v1445, %v1444
      %v1455 = vpack.c.b16 %v1447, %v1446
      %v1457 = vsel %vm383, %v1448, 0
      %v1460 = vsel %vm383, %v1449, 0
      %v1463 = vsel %vm383, %v1450, 0
      %v1466 = vsel %vm383, %v1451, 0
      %v1469 = vsel %vm383, %v1452, 0
      %v1472 = vsel %vm383, %v1453, 0
      %v1475 = vsel %vm383, %v1454, 0
      %v1478 = vsel %vm383, %v1455, 0
      %vm1480 = vcmask 1043456
      %v1482 = vsel %vm1480, %v1411, 0
      %1484 = vmatprep.subr.bf16.mxu0 0
      %1485 = vmatpush1.bf16.msra.mxu0 0
      %1486 = vmatprep.subr.bf16.mxu0 0
      %1487 = vmatpush1.bf16.msra.mxu0 0
      %1488 = vmatprep.subr.bf16.mxu0 0
      %1489 = vmatpush1.bf16.msra.mxu0 0
      %1490 = vmatprep.subr.bf16.mxu0 0
      %1491 = vmatpush1.bf16.msra.mxu0 0
      %1492 = vmatprep.subr.bf16.mxu0 0
      %1493 = vmatpush1.bf16.msra.mxu0 0
      %1494 = vmatprep.subr.bf16.mxu0 0
      %1495 = vmatpush1.bf16.msra.mxu0 0
      %1496 = vmatprep.subr.bf16.mxu0 0
      %1497 = vmatpush1.bf16.msra.mxu0 0
      %1498 = vmatprep.subr.bf16.mxu0 0
      %1499 = vmatpush1.bf16.msra.mxu0 %v1482
      %1500 = vmatprep.subr.bf16.mxu0 0
      %1501 = vmatpush2.bf16.msra.mxu0 0
      %1502 = vmatprep.subr.bf16.mxu0 0
      %1503 = vmatpush2.bf16.msra.mxu0 0
      %1504 = vmatprep.subr.bf16.mxu0 0
      %1505 = vmatpush2.bf16.msra.mxu0 0
      %1506 = vmatprep.subr.bf16.mxu0 0
      %1507 = vmatpush2.bf16.msra.mxu0 0
      %1508 = vmatprep.subr.bf16.mxu0 0
      %1509 = vmatpush2.bf16.msra.mxu0 0
      %1510 = vmatprep.subr.bf16.mxu0 0
      %1511 = vmatpush2.bf16.msra.mxu0 0
      %1512 = vmatprep.subr.bf16.mxu0 0
      %1513 = vmatpush2.bf16.msra.mxu0 0
      %1514 = vmatprep.subr.bf16.mxu0 0
      %1515 = vmatpush2.bf16.msra.mxu0 0
      %1516 = vmatprep.mubr.bf16.mxu0 0
      %1517 = vmatmul.mubr.bf16.gmra.mxu0 %v1457
      %v1518 = vpop.f32.mrf.mxu0
      %v1519 = vadd.f32 %v1415, %v1518
      %v1520 = vpop.f32.mrf.mxu0
      %v1521 = vpop.f32.mrf.mxu0
      %v1522 = vadd.f32 %v1415, %v1521
      %v1523 = vpop.f32.mrf.mxu0
      %1524 = vmatprep.mubr.bf16.mxu0 0
      %1525 = vmatmul.mubr.bf16.gmra.mxu0 %v1460
      %v1526 = vpop.f32.mrf.mxu0
      %v1527 = vadd.f32 %v1415, %v1526
      %v1528 = vpop.f32.mrf.mxu0
      %v1529 = vpop.f32.mrf.mxu0
      %v1530 = vadd.f32 %v1415, %v1529
      %v1531 = vpop.f32.mrf.mxu0
      %1532 = vmatprep.mubr.bf16.mxu0 0
      %1533 = vmatmul.mubr.bf16.gmra.mxu0 %v1463
      %v1534 = vpop.f32.mrf.mxu0
      %v1535 = vadd.f32 %v1415, %v1534
      %v1536 = vpop.f32.mrf.mxu0
      %v1537 = vpop.f32.mrf.mxu0
      %v1538 = vadd.f32 %v1415, %v1537
      %v1539 = vpop.f32.mrf.mxu0
      %1540 = vmatprep.mubr.bf16.mxu0 0
      %1541 = vmatmul.mubr.bf16.gmra.mxu0 %v1466
      %v1542 = vpop.f32.mrf.mxu0
      %v1543 = vadd.f32 %v1415, %v1542
      %v1544 = vpop.f32.mrf.mxu0
      %v1545 = vpop.f32.mrf.mxu0
      %v1546 = vadd.f32 %v1415, %v1545
      %v1547 = vpop.f32.mrf.mxu0
      %1548 = vmatprep.mubr.bf16.mxu0 0
      %1549 = vmatmul.mubr.bf16.gmra.mxu0 %v1469
      %v1550 = vpop.f32.mrf.mxu0
      %v1551 = vadd.f32 %v1415, %v1550
      %v1552 = vpop.f32.mrf.mxu0
      %v1553 = vpop.f32.mrf.mxu0
      %v1554 = vadd.f32 %v1415, %v1553
      %v1555 = vpop.f32.mrf.mxu0
      %1556 = vmatprep.mubr.bf16.mxu0 0
      %1557 = vmatmul.mubr.bf16.gmra.mxu0 %v1472
      %v1558 = vpop.f32.mrf.mxu0
      %v1559 = vadd.f32 %v1415, %v1558
      %v1560 = vpop.f32.mrf.mxu0
      %v1561 = vpop.f32.mrf.mxu0
      %v1562 = vadd.f32 %v1415, %v1561
      %v1563 = vpop.f32.mrf.mxu0
      %1564 = vmatprep.mubr.bf16.mxu0 0
      %1565 = vmatmul.mubr.bf16.gmra.mxu0 %v1475
      %v1566 = vpop.f32.mrf.mxu0
      %v1567 = vadd.f32 %v1415, %v1566
      %v1568 = vpop.f32.mrf.mxu0
      %v1569 = vpop.f32.mrf.mxu0
      %v1570 = vadd.f32 %v1415, %v1569
      %v1571 = vpop.f32.mrf.mxu0
      %1572 = vmatprep.mubr.bf16.mxu0 0
      %1573 = vmatmul.mubr.bf16.gmra.mxu0 %v1478
      %v1574 = vpop.f32.mrf.mxu0
      %v1575 = vadd.f32 %v1415, %v1574
      %v1576 = vpop.f32.mrf.mxu0
      %v1577 = vpop.f32.mrf.mxu0
      %v1578 = vadd.f32 %v1415, %v1577
      %v1579 = vpop.f32.mrf.mxu0
      %1580 = vdwg.mxu0
      %vm1581 = vcmask 261120
      %1582 = vst.msk [vmem:[#allocation4] sm:$0xff] %vm1581, %v1519
      %1583 = vst.msk [vmem:[#allocation4 + $0x8] sm:$0xff] %vm1581, %v1522
      %1584 = vst.msk [vmem:[#allocation4 + $0x10] sm:$0xff] %vm1581, %v1527
      %1585 = vst.msk [vmem:[#allocation4 + $0x18] sm:$0xff] %vm1581, %v1530
      %1586 = vst.msk [vmem:[#allocation4 + $0x20] sm:$0xff] %vm1581, %v1535
      %1587 = vst.msk [vmem:[#allocation4 + $0x28] sm:$0xff] %vm1581, %v1538
      %1588 = vst.msk [vmem:[#allocation4 + $0x30] sm:$0xff] %vm1581, %v1543
      %1589 = vst.msk [vmem:[#allocation4 + $0x38] sm:$0xff] %vm1581, %v1546
      %1590 = vst.msk [vmem:[#allocation4 + $0x40] sm:$0xff] %vm1581, %v1551
      %1591 = vst.msk [vmem:[#allocation4 + $0x48] sm:$0xff] %vm1581, %v1554
      %1592 = vst.msk [vmem:[#allocation4 + $0x50] sm:$0xff] %vm1581, %v1559
      %1593 = vst.msk [vmem:[#allocation4 + $0x58] sm:$0xff] %vm1581, %v1562
      %1594 = vst.msk [vmem:[#allocation4 + $0x60] sm:$0xff] %vm1581, %v1567
      %1595 = vst.msk [vmem:[#allocation4 + $0x68] sm:$0xff] %vm1581, %v1570
      %1596 = vst.msk [vmem:[#allocation4 + $0x70] sm:$0xff] %vm1581, %v1575
      %1597 = vst.msk [vmem:[#allocation4 + $0x78] sm:$0xff] %vm1581, %v1578
      %s1598 = scalar_lea.vmem %s1, 4
      %v1599 = vld [vmem:[%s1598] sm:$0xf]
      %v1600 = vlaneseq
      %v1601 = vshrl.u32 %v1600, 7
      %v1602 = vsub.s32 1, %v1601
      %v1603 = vrot.slane %v1394, %v1602
      %v1605 = vsel %vm1480, %v1599, 0
      %1607 = vmatprep.subr.bf16.mxu0 0
      %1608 = vmatpush1.bf16.msra.mxu0 0
      %1609 = vmatprep.subr.bf16.mxu0 0
      %1610 = vmatpush1.bf16.msra.mxu0 0
      %1611 = vmatprep.subr.bf16.mxu0 0
      %1612 = vmatpush1.bf16.msra.mxu0 0
      %1613 = vmatprep.subr.bf16.mxu0 0
      %1614 = vmatpush1.bf16.msra.mxu0 0
      %1615 = vmatprep.subr.bf16.mxu0 0
      %1616 = vmatpush1.bf16.msra.mxu0 0
      %1617 = vmatprep.subr.bf16.mxu0 0
      %1618 = vmatpush1.bf16.msra.mxu0 0
      %1619 = vmatprep.subr.bf16.mxu0 0
      %1620 = vmatpush1.bf16.msra.mxu0 0
      %1621 = vmatprep.subr.bf16.mxu0 0
      %1622 = vmatpush1.bf16.msra.mxu0 %v1605
      %1623 = vmatprep.subr.bf16.mxu0 0
      %1624 = vmatpush2.bf16.msra.mxu0 0
      %1625 = vmatprep.subr.bf16.mxu0 0
      %1626 = vmatpush2.bf16.msra.mxu0 0
      %1627 = vmatprep.subr.bf16.mxu0 0
      %1628 = vmatpush2.bf16.msra.mxu0 0
      %1629 = vmatprep.subr.bf16.mxu0 0
      %1630 = vmatpush2.bf16.msra.mxu0 0
      %1631 = vmatprep.subr.bf16.mxu0 0
      %1632 = vmatpush2.bf16.msra.mxu0 0
      %1633 = vmatprep.subr.bf16.mxu0 0
      %1634 = vmatpush2.bf16.msra.mxu0 0
      %1635 = vmatprep.subr.bf16.mxu0 0
      %1636 = vmatpush2.bf16.msra.mxu0 0
      %1637 = vmatprep.subr.bf16.mxu0 0
      %1638 = vmatpush2.bf16.msra.mxu0 0
      %1639 = vmatprep.mubr.bf16.mxu0 0
      %1640 = vmatmul.mubr.bf16.gmra.mxu0 %v1457
      %v1641 = vpop.f32.mrf.mxu0
      %v1642 = vadd.f32 %v1603, %v1641
      %v1643 = vpop.f32.mrf.mxu0
      %v1644 = vpop.f32.mrf.mxu0
      %v1645 = vadd.f32 %v1603, %v1644
      %v1646 = vpop.f32.mrf.mxu0
      %1647 = vmatprep.mubr.bf16.mxu0 0
      %1648 = vmatmul.mubr.bf16.gmra.mxu0 %v1460
      %v1649 = vpop.f32.mrf.mxu0
      %v1650 = vadd.f32 %v1603, %v1649
      %v1651 = vpop.f32.mrf.mxu0
      %v1652 = vpop.f32.mrf.mxu0
      %v1653 = vadd.f32 %v1603, %v1652
      %v1654 = vpop.f32.mrf.mxu0
      %1655 = vmatprep.mubr.bf16.mxu0 0
      %1656 = vmatmul.mubr.bf16.gmra.mxu0 %v1463
      %v1657 = vpop.f32.mrf.mxu0
      %v1658 = vadd.f32 %v1603, %v1657
      %v1659 = vpop.f32.mrf.mxu0
      %v1660 = vpop.f32.mrf.mxu0
      %v1661 = vadd.f32 %v1603, %v1660
      %v1662 = vpop.f32.mrf.mxu0
      %1663 = vmatprep.mubr.bf16.mxu0 0
      %1664 = vmatmul.mubr.bf16.gmra.mxu0 %v1466
      %v1665 = vpop.f32.mrf.mxu0
      %v1666 = vadd.f32 %v1603, %v1665
      %v1667 = vpop.f32.mrf.mxu0
      %v1668 = vpop.f32.mrf.mxu0
      %v1669 = vadd.f32 %v1603, %v1668
      %v1670 = vpop.f32.mrf.mxu0
      %1671 = vmatprep.mubr.bf16.mxu0 0
      %1672 = vmatmul.mubr.bf16.gmra.mxu0 %v1469
      %v1673 = vpop.f32.mrf.mxu0
      %v1674 = vadd.f32 %v1603, %v1673
      %v1675 = vpop.f32.mrf.mxu0
      %v1676 = vpop.f32.mrf.mxu0
      %v1677 = vadd.f32 %v1603, %v1676
      %v1678 = vpop.f32.mrf.mxu0
      %1679 = vmatprep.mubr.bf16.mxu0 0
      %1680 = vmatmul.mubr.bf16.gmra.mxu0 %v1472
      %v1681 = vpop.f32.mrf.mxu0
      %v1682 = vadd.f32 %v1603, %v1681
      %v1683 = vpop.f32.mrf.mxu0
      %v1684 = vpop.f32.mrf.mxu0
      %v1685 = vadd.f32 %v1603, %v1684
      %v1686 = vpop.f32.mrf.mxu0
      %1687 = vmatprep.mubr.bf16.mxu0 0
      %1688 = vmatmul.mubr.bf16.gmra.mxu0 %v1475
      %v1689 = vpop.f32.mrf.mxu0
      %v1690 = vadd.f32 %v1603, %v1689
      %v1691 = vpop.f32.mrf.mxu0
      %v1692 = vpop.f32.mrf.mxu0
      %v1693 = vadd.f32 %v1603, %v1692
      %v1694 = vpop.f32.mrf.mxu0
      %1695 = vmatprep.mubr.bf16.mxu0 0
      %1696 = vmatmul.mubr.bf16.gmra.mxu0 %v1478
      %v1697 = vpop.f32.mrf.mxu0
      %v1698 = vadd.f32 %v1603, %v1697
      %v1699 = vpop.f32.mrf.mxu0
      %v1700 = vpop.f32.mrf.mxu0
      %v1701 = vadd.f32 %v1603, %v1700
      %v1702 = vpop.f32.mrf.mxu0
      %1703 = vdwg.mxu0
      %1704 = vst.msk [vmem:[#allocation5] sm:$0xff] %vm1581, %v1642
      %1705 = vst.msk [vmem:[#allocation5 + $0x8] sm:$0xff] %vm1581, %v1645
      %1706 = vst.msk [vmem:[#allocation5 + $0x10] sm:$0xff] %vm1581, %v1650
      %1707 = vst.msk [vmem:[#allocation5 + $0x18] sm:$0xff] %vm1581, %v1653
      %1708 = vst.msk [vmem:[#allocation5 + $0x20] sm:$0xff] %vm1581, %v1658
      %1709 = vst.msk [vmem:[#allocation5 + $0x28] sm:$0xff] %vm1581, %v1661
      %1710 = vst.msk [vmem:[#allocation5 + $0x30] sm:$0xff] %vm1581, %v1666
      %1711 = vst.msk [vmem:[#allocation5 + $0x38] sm:$0xff] %vm1581, %v1669
      %1712 = vst.msk [vmem:[#allocation5 + $0x40] sm:$0xff] %vm1581, %v1674
      %1713 = vst.msk [vmem:[#allocation5 + $0x48] sm:$0xff] %vm1581, %v1677
      %1714 = vst.msk [vmem:[#allocation5 + $0x50] sm:$0xff] %vm1581, %v1682
      %1715 = vst.msk [vmem:[#allocation5 + $0x58] sm:$0xff] %vm1581, %v1685
      %1716 = vst.msk [vmem:[#allocation5 + $0x60] sm:$0xff] %vm1581, %v1690
      %1717 = vst.msk [vmem:[#allocation5 + $0x68] sm:$0xff] %vm1581, %v1693
      %1718 = vst.msk [vmem:[#allocation5 + $0x70] sm:$0xff] %vm1581, %v1698
      %1719 = vst.msk [vmem:[#allocation5 + $0x78] sm:$0xff] %vm1581, %v1701
      %s1720 = scalar_lea.vmem %s1, 8
      %v1721 = vld [vmem:[%s1720] sm:$0xf]
      %v1722 = vlaneseq
      %v1723 = vshrl.u32 %v1722, 7
      %v1724 = vsub.s32 2, %v1723
      %v1725 = vrot.slane %v1394, %v1724
      %v1727 = vsel %vm1480, %v1721, 0
      %1729 = vmatprep.subr.bf16.mxu0 0
      %1730 = vmatpush1.bf16.msra.mxu0 0
      %1731 = vmatprep.subr.bf16.mxu0 0
      %1732 = vmatpush1.bf16.msra.mxu0 0
      %1733 = vmatprep.subr.bf16.mxu0 0
      %1734 = vmatpush1.bf16.msra.mxu0 0
      %1735 = vmatprep.subr.bf16.mxu0 0
      %1736 = vmatpush1.bf16.msra.mxu0 0
      %1737 = vmatprep.subr.bf16.mxu0 0
      %1738 = vmatpush1.bf16.msra.mxu0 0
      %1739 = vmatprep.subr.bf16.mxu0 0
      %1740 = vmatpush1.bf16.msra.mxu0 0
      %1741 = vmatprep.subr.bf16.mxu0 0
      %1742 = vmatpush1.bf16.msra.mxu0 0
      %1743 = vmatprep.subr.bf16.mxu0 0
      %1744 = vmatpush1.bf16.msra.mxu0 %v1727
      %1745 = vmatprep.subr.bf16.mxu0 0
      %1746 = vmatpush2.bf16.msra.mxu0 0
      %1747 = vmatprep.subr.bf16.mxu0 0
      %1748 = vmatpush2.bf16.msra.mxu0 0
      %1749 = vmatprep.subr.bf16.mxu0 0
      %1750 = vmatpush2.bf16.msra.mxu0 0
      %1751 = vmatprep.subr.bf16.mxu0 0
      %1752 = vmatpush2.bf16.msra.mxu0 0
      %1753 = vmatprep.subr.bf16.mxu0 0
      %1754 = vmatpush2.bf16.msra.mxu0 0
      %1755 = vmatprep.subr.bf16.mxu0 0
      %1756 = vmatpush2.bf16.msra.mxu0 0
      %1757 = vmatprep.subr.bf16.mxu0 0
      %1758 = vmatpush2.bf16.msra.mxu0 0
      %1759 = vmatprep.subr.bf16.mxu0 0
      %1760 = vmatpush2.bf16.msra.mxu0 0
      %1761 = vmatprep.mubr.bf16.mxu0 0
      %1762 = vmatmul.mubr.bf16.gmra.mxu0 %v1457
      %v1763 = vpop.f32.mrf.mxu0
      %v1764 = vadd.f32 %v1725, %v1763
      %v1765 = vpop.f32.mrf.mxu0
      %v1766 = vpop.f32.mrf.mxu0
      %v1767 = vadd.f32 %v1725, %v1766
      %v1768 = vpop.f32.mrf.mxu0
      %1769 = vmatprep.mubr.bf16.mxu0 0
      %1770 = vmatmul.mubr.bf16.gmra.mxu0 %v1460
      %v1771 = vpop.f32.mrf.mxu0
      %v1772 = vadd.f32 %v1725, %v1771
      %v1773 = vpop.f32.mrf.mxu0
      %v1774 = vpop.f32.mrf.mxu0
      %v1775 = vadd.f32 %v1725, %v1774
      %v1776 = vpop.f32.mrf.mxu0
      %1777 = vmatprep.mubr.bf16.mxu0 0
      %1778 = vmatmul.mubr.bf16.gmra.mxu0 %v1463
      %v1779 = vpop.f32.mrf.mxu0
      %v1780 = vadd.f32 %v1725, %v1779
      %v1781 = vpop.f32.mrf.mxu0
      %v1782 = vpop.f32.mrf.mxu0
      %v1783 = vadd.f32 %v1725, %v1782
      %v1784 = vpop.f32.mrf.mxu0
      %1785 = vmatprep.mubr.bf16.mxu0 0
      %1786 = vmatmul.mubr.bf16.gmra.mxu0 %v1466
      %v1787 = vpop.f32.mrf.mxu0
      %v1788 = vadd.f32 %v1725, %v1787
      %v1789 = vpop.f32.mrf.mxu0
      %v1790 = vpop.f32.mrf.mxu0
      %v1791 = vadd.f32 %v1725, %v1790
      %v1792 = vpop.f32.mrf.mxu0
      %1793 = vmatprep.mubr.bf16.mxu0 0
      %1794 = vmatmul.mubr.bf16.gmra.mxu0 %v1469
      %v1795 = vpop.f32.mrf.mxu0
      %v1796 = vadd.f32 %v1725, %v1795
      %v1797 = vpop.f32.mrf.mxu0
      %v1798 = vpop.f32.mrf.mxu0
      %v1799 = vadd.f32 %v1725, %v1798
      %v1800 = vpop.f32.mrf.mxu0
      %1801 = vmatprep.mubr.bf16.mxu0 0
      %1802 = vmatmul.mubr.bf16.gmra.mxu0 %v1472
      %v1803 = vpop.f32.mrf.mxu0
      %v1804 = vadd.f32 %v1725, %v1803
      %v1805 = vpop.f32.mrf.mxu0
      %v1806 = vpop.f32.mrf.mxu0
      %v1807 = vadd.f32 %v1725, %v1806
      %v1808 = vpop.f32.mrf.mxu0
      %1809 = vmatprep.mubr.bf16.mxu0 0
      %1810 = vmatmul.mubr.bf16.gmra.mxu0 %v1475
      %v1811 = vpop.f32.mrf.mxu0
      %v1812 = vadd.f32 %v1725, %v1811
      %v1813 = vpop.f32.mrf.mxu0
      %v1814 = vpop.f32.mrf.mxu0
      %v1815 = vadd.f32 %v1725, %v1814
      %v1816 = vpop.f32.mrf.mxu0
      %1817 = vmatprep.mubr.bf16.mxu0 0
      %1818 = vmatmul.mubr.bf16.gmra.mxu0 %v1478
      %v1819 = vpop.f32.mrf.mxu0
      %v1820 = vadd.f32 %v1725, %v1819
      %v1821 = vpop.f32.mrf.mxu0
      %v1822 = vpop.f32.mrf.mxu0
      %v1823 = vadd.f32 %v1725, %v1822
      %v1824 = vpop.f32.mrf.mxu0
      %1825 = vdwg.mxu0
      %1826 = vst.msk [vmem:[#allocation6] sm:$0xff] %vm1581, %v1764
      %1827 = vst.msk [vmem:[#allocation6 + $0x8] sm:$0xff] %vm1581, %v1767
      %1828 = vst.msk [vmem:[#allocation6 + $0x10] sm:$0xff] %vm1581, %v1772
      %1829 = vst.msk [vmem:[#allocation6 + $0x18] sm:$0xff] %vm1581, %v1775
      %1830 = vst.msk [vmem:[#allocation6 + $0x20] sm:$0xff] %vm1581, %v1780
      %1831 = vst.msk [vmem:[#allocation6 + $0x28] sm:$0xff] %vm1581, %v1783
      %1832 = vst.msk [vmem:[#allocation6 + $0x30] sm:$0xff] %vm1581, %v1788
      %1833 = vst.msk [vmem:[#allocation6 + $0x38] sm:$0xff] %vm1581, %v1791
      %1834 = vst.msk [vmem:[#allocation6 + $0x40] sm:$0xff] %vm1581, %v1796
      %1835 = vst.msk [vmem:[#allocation6 + $0x48] sm:$0xff] %vm1581, %v1799
      %1836 = vst.msk [vmem:[#allocation6 + $0x50] sm:$0xff] %vm1581, %v1804
      %1837 = vst.msk [vmem:[#allocation6 + $0x58] sm:$0xff] %vm1581, %v1807
      %1838 = vst.msk [vmem:[#allocation6 + $0x60] sm:$0xff] %vm1581, %v1812
      %1839 = vst.msk [vmem:[#allocation6 + $0x68] sm:$0xff] %vm1581, %v1815
      %1840 = vst.msk [vmem:[#allocation6 + $0x70] sm:$0xff] %vm1581, %v1820
      %1841 = vst.msk [vmem:[#allocation6 + $0x78] sm:$0xff] %vm1581, %v1823
      %v1842 = vld [vmem:[%s2] sm:$0xf]
      %v1843 = vld [vmem:[%s2 + $0x4] sm:$0xf]
      %v1844 = vld [vmem:[%s2 + $0x8] sm:$0xf]
      %v1845 = vld [vmem:[%s2 + $0xc] sm:$0xf]
      %s1846 = scalar_lea.vmem %s2, 16
      %v1847 = vld [vmem:[%s1846] sm:$0xf]
      %v1848 = vld [vmem:[%s1846 + $0x4] sm:$0xf]
      %v1849 = vld [vmem:[%s1846 + $0x8] sm:$0xf]
      %v1850 = vld [vmem:[%s1846 + $0xc] sm:$0xf]
      %s1851 = scalar_lea.vmem %s2, 32
      %v1852 = vld [vmem:[%s1851] sm:$0xf]
      %v1853 = vld [vmem:[%s1851 + $0x4] sm:$0xf]
      %v1854 = vld [vmem:[%s1851 + $0x8] sm:$0xf]
      %v1855 = vld [vmem:[%s1851 + $0xc] sm:$0xf]
      %v1856 = vlaneseq
      %v1857 = vshrl.u32 %v1856, 7
      %v1858 = vsub.s32 3, %v1857
      %v1859 = vrot.slane %v1394, %v1858
      %v1864 = vunpack.c.l.b16 %v1842
      %v1865 = vunpack.c.l.b16 %v1843
      %v1866 = vunpack.c.l.b16 %v1844
      %v1867 = vunpack.c.l.b16 %v1845
      %v1868 = vpack.c.b16 %v1865, %v1864
      %v1869 = vpack.c.b16 %v1867, %v1866
      %v1873 = vsel %vm1581, 0, 0
      %1875 = vmatprep.subr.bf16.mxu0 0
      %1876 = vmatpush1.bf16.msra.mxu0 0
      %1877 = vmatprep.subr.bf16.mxu0 0
      %1878 = vmatpush1.bf16.msra.mxu0 0
      %1879 = vmatprep.subr.bf16.mxu0 0
      %1880 = vmatpush1.bf16.msra.mxu0 0
      %1881 = vmatprep.subr.bf16.mxu0 0
      %1882 = vmatpush1.bf16.msra.mxu0 0
      %1883 = vmatprep.subr.bf16.mxu0 0
      %1884 = vmatpush1.bf16.msra.mxu0 0
      %1885 = vmatprep.subr.bf16.mxu0 0
      %1886 = vmatpush1.bf16.msra.mxu0 0
      %1887 = vmatprep.subr.bf16.mxu0 0
      %1888 = vmatpush1.bf16.msra.mxu0 %v1869
      %1889 = vmatprep.subr.bf16.mxu0 0
      %1890 = vmatpush1.bf16.msra.mxu0 %v1868
      %1891 = vmatprep.subr.bf16.mxu0 0
      %1892 = vmatpush2.bf16.msra.mxu0 0
      %1893 = vmatprep.subr.bf16.mxu0 0
      %1894 = vmatpush2.bf16.msra.mxu0 0
      %1895 = vmatprep.subr.bf16.mxu0 0
      %1896 = vmatpush2.bf16.msra.mxu0 0
      %1897 = vmatprep.subr.bf16.mxu0 0
      %1898 = vmatpush2.bf16.msra.mxu0 0
      %1899 = vmatprep.subr.bf16.mxu0 0
      %1900 = vmatpush2.bf16.msra.mxu0 0
      %1901 = vmatprep.subr.bf16.mxu0 0
      %1902 = vmatpush2.bf16.msra.mxu0 0
      %1903 = vmatprep.subr.bf16.mxu0 0
      %1904 = vmatpush2.bf16.msra.mxu0 0
      %1905 = vmatprep.subr.bf16.mxu0 0
      %1906 = vmatpush2.bf16.msra.mxu0 0
      %1907 = vmatprep.mubr.bf16.mxu0 0
      %1908 = vmatmul.mubr.bf16.gmra.mxu0 %v1873
      %v1909 = vpop.f32.mrf.mxu0
      %v1910 = vadd.f32 0.0, %v1909
      %v1911 = vpop.f32.mrf.mxu0
      %v1912 = vpop.f32.mrf.mxu0
      %v1913 = vadd.f32 0.0, %v1912
      %v1914 = vpop.f32.mrf.mxu0
      %1915 = vdwg.mxu0
      %v1920 = vunpack.c.l.b16 %v1847
      %v1921 = vunpack.c.l.b16 %v1848
      %v1922 = vunpack.c.l.b16 %v1849
      %v1923 = vunpack.c.l.b16 %v1850
      %v1924 = vpack.c.b16 %v1921, %v1920
      %v1925 = vpack.c.b16 %v1923, %v1922
      %1928 = vmatprep.subr.bf16.mxu0 0
      %1929 = vmatpush1.bf16.msra.mxu0 0
      %1930 = vmatprep.subr.bf16.mxu0 0
      %1931 = vmatpush1.bf16.msra.mxu0 0
      %1932 = vmatprep.subr.bf16.mxu0 0
      %1933 = vmatpush1.bf16.msra.mxu0 0
      %1934 = vmatprep.subr.bf16.mxu0 0
      %1935 = vmatpush1.bf16.msra.mxu0 0
      %1936 = vmatprep.subr.bf16.mxu0 0
      %1937 = vmatpush1.bf16.msra.mxu0 0
      %1938 = vmatprep.subr.bf16.mxu0 0
      %1939 = vmatpush1.bf16.msra.mxu0 0
      %1940 = vmatprep.subr.bf16.mxu0 0
      %1941 = vmatpush1.bf16.msra.mxu0 %v1925
      %1942 = vmatprep.subr.bf16.mxu0 0
      %1943 = vmatpush1.bf16.msra.mxu0 %v1924
      %1944 = vmatprep.subr.bf16.mxu0 0
      %1945 = vmatpush2.bf16.msra.mxu0 0
      %1946 = vmatprep.subr.bf16.mxu0 0
      %1947 = vmatpush2.bf16.msra.mxu0 0
      %1948 = vmatprep.subr.bf16.mxu0 0
      %1949 = vmatpush2.bf16.msra.mxu0 0
      %1950 = vmatprep.subr.bf16.mxu0 0
      %1951 = vmatpush2.bf16.msra.mxu0 0
      %1952 = vmatprep.subr.bf16.mxu0 0
      %1953 = vmatpush2.bf16.msra.mxu0 0
      %1954 = vmatprep.subr.bf16.mxu0 0
      %1955 = vmatpush2.bf16.msra.mxu0 0
      %1956 = vmatprep.subr.bf16.mxu0 0
      %1957 = vmatpush2.bf16.msra.mxu0 0
      %1958 = vmatprep.subr.bf16.mxu0 0
      %1959 = vmatpush2.bf16.msra.mxu0 0
      %1960 = vmatprep.mubr.bf16.mxu0 0
      %1961 = vmatmul.mubr.bf16.gmra.mxu0 %v1873
      %v1962 = vpop.f32.mrf.mxu0
      %v1963 = vadd.f32 0.0, %v1962
      %v1964 = vpop.f32.mrf.mxu0
      %v1965 = vpop.f32.mrf.mxu0
      %v1966 = vadd.f32 0.0, %v1965
      %v1967 = vpop.f32.mrf.mxu0
      %1968 = vdwg.mxu0
      %v1973 = vunpack.c.l.b16 %v1852
      %v1974 = vunpack.c.l.b16 %v1853
      %v1975 = vunpack.c.l.b16 %v1854
      %v1976 = vunpack.c.l.b16 %v1855
      %v1977 = vpack.c.b16 %v1974, %v1973
      %v1978 = vpack.c.b16 %v1976, %v1975
      %1981 = vmatprep.subr.bf16.mxu0 0
      %1982 = vmatpush1.bf16.msra.mxu0 0
      %1983 = vmatprep.subr.bf16.mxu0 0
      %1984 = vmatpush1.bf16.msra.mxu0 0
      %1985 = vmatprep.subr.bf16.mxu0 0
      %1986 = vmatpush1.bf16.msra.mxu0 0
      %1987 = vmatprep.subr.bf16.mxu0 0
      %1988 = vmatpush1.bf16.msra.mxu0 0
      %1989 = vmatprep.subr.bf16.mxu0 0
      %1990 = vmatpush1.bf16.msra.mxu0 0
      %1991 = vmatprep.subr.bf16.mxu0 0
      %1992 = vmatpush1.bf16.msra.mxu0 0
      %1993 = vmatprep.subr.bf16.mxu0 0
      %1994 = vmatpush1.bf16.msra.mxu0 %v1978
      %1995 = vmatprep.subr.bf16.mxu0 0
      %1996 = vmatpush1.bf16.msra.mxu0 %v1977
      %1997 = vmatprep.subr.bf16.mxu0 0
      %1998 = vmatpush2.bf16.msra.mxu0 0
      %1999 = vmatprep.subr.bf16.mxu0 0
      %2000 = vmatpush2.bf16.msra.mxu0 0
      %2001 = vmatprep.subr.bf16.mxu0 0
      %2002 = vmatpush2.bf16.msra.mxu0 0
      %2003 = vmatprep.subr.bf16.mxu0 0
      %2004 = vmatpush2.bf16.msra.mxu0 0
      %2005 = vmatprep.subr.bf16.mxu0 0
      %2006 = vmatpush2.bf16.msra.mxu0 0
      %2007 = vmatprep.subr.bf16.mxu0 0
      %2008 = vmatpush2.bf16.msra.mxu0 0
      %2009 = vmatprep.subr.bf16.mxu0 0
      %2010 = vmatpush2.bf16.msra.mxu0 0
      %2011 = vmatprep.subr.bf16.mxu0 0
      %2012 = vmatpush2.bf16.msra.mxu0 0
      %2013 = vmatprep.mubr.bf16.mxu0 0
      %2014 = vmatmul.mubr.bf16.gmra.mxu0 %v1873
      %v2015 = vpop.f32.mrf.mxu0
      %v2016 = vadd.f32 %v1859, %v2015
      %v2017 = vpop.f32.mrf.mxu0
      %v2018 = vpop.f32.mrf.mxu0
      %v2019 = vadd.f32 %v1859, %v2018
      %v2020 = vpop.f32.mrf.mxu0
      %2021 = vdwg.mxu0
      %v2022 = vld [vmem:[#allocation4] sm:$0xff]
      %v2023 = vld [vmem:[#allocation4 + $0x8] sm:$0xff]
      %v2024 = vadd.f32 %v2022, %v1910
      %v2025 = vadd.f32 %v2023, %v1913
      %v2026 = vxor.u32 %v2024, 2147483648
      %v2027 = vxor.u32 %v2025, 2147483648
      %v2028 = vmul.f32 %v2026, 1.442695
      %v2029 = vpow.pop %v2028
      %v2030 = vmul.f32 %v2027, 1.442695
      %v2031 = vpow.pop %v2030
      %v2032 = vadd.f32 %v2029, 1.0
      %v2033 = vadd.f32 %v2031, 1.0
      %v2034 = vrcp.pop %v2032
      %v2035 = vmul.f32 1.0, %v2034
      %v2036 = vrcp.pop %v2033
      %v2037 = vmul.f32 1.0, %v2036
      %v2038 = vld [vmem:[#allocation5] sm:$0xff]
      %v2039 = vld [vmem:[#allocation5 + $0x8] sm:$0xff]
      %v2040 = vadd.f32 %v2038, %v1963
      %v2041 = vadd.f32 %v2039, %v1966
      %v2042 = vxor.u32 %v2040, 2147483648
      %v2043 = vxor.u32 %v2041, 2147483648
      %v2044 = vmul.f32 %v2042, 1.442695
      %v2045 = vpow.pop %v2044
      %v2046 = vmul.f32 %v2043, 1.442695
      %v2047 = vpow.pop %v2046
      %v2048 = vadd.f32 %v2045, 1.0
      %v2049 = vadd.f32 %v2047, 1.0
      %v2050 = vrcp.pop %v2048
      %v2051 = vmul.f32 1.0, %v2050
      %v2052 = vrcp.pop %v2049
      %v2053 = vmul.f32 1.0, %v2052
      %v2054 = vld [vmem:[#allocation6] sm:$0xff]
      %v2055 = vld [vmem:[#allocation6 + $0x8] sm:$0xff]
      %v2056 = vmul.f32 %v2035, %v2016
      %v2057 = vmul.f32 %v2037, %v2019
      %v2058 = vadd.f32 %v2054, %v2056
      %v2059 = vadd.f32 %v2055, %v2057
      %v2060 = vtanh.pop %v2058
      %v2061 = vtanh.pop %v2059
      %v2062 = vsub.f32 1.0, %v2051
      %v2063 = vsub.f32 1.0, %v2053
      %v2064 = vmul.f32 %v2062, %v2060
      %v2065 = vmul.f32 %v2063, %v2061
      %v2066 = vmul.f32 %v2051, 0.0
      %v2067 = vmul.f32 %v2053, 0.0
      %v2068 = vadd.f32 %v2064, %v2066
      %v2069 = vadd.f32 %v2065, %v2067
      %2070 = vst.msk [vmem:[#allocation3] sm:$0xff] %vm1581, %v2068
      %2071 = vst.msk [vmem:[#allocation3 + $0x8] sm:$0xff] %vm1581, %v2069
      %v2072 = vpack.c.bf16 %v2069, %v2068
      %v2074 = vsel %vm1581, %v2072, 0
      %2076 = vmatprep.subr.bf16.mxu0 0
      %2077 = vmatpush1.bf16.msra.mxu0 0
      %2078 = vmatprep.subr.bf16.mxu0 0
      %2079 = vmatpush1.bf16.msra.mxu0 0
      %2080 = vmatprep.subr.bf16.mxu0 0
      %2081 = vmatpush1.bf16.msra.mxu0 0
      %2082 = vmatprep.subr.bf16.mxu0 0
      %2083 = vmatpush1.bf16.msra.mxu0 0
      %2084 = vmatprep.subr.bf16.mxu0 0
      %2085 = vmatpush1.bf16.msra.mxu0 0
      %2086 = vmatprep.subr.bf16.mxu0 0
      %2087 = vmatpush1.bf16.msra.mxu0 0
      %2088 = vmatprep.subr.bf16.mxu0 0
      %2089 = vmatpush1.bf16.msra.mxu0 %v1869
      %2090 = vmatprep.subr.bf16.mxu0 0
      %2091 = vmatpush1.bf16.msra.mxu0 %v1868
      %2092 = vmatprep.subr.bf16.mxu0 0
      %2093 = vmatpush2.bf16.msra.mxu0 0
      %2094 = vmatprep.subr.bf16.mxu0 0
      %2095 = vmatpush2.bf16.msra.mxu0 0
      %2096 = vmatprep.subr.bf16.mxu0 0
      %2097 = vmatpush2.bf16.msra.mxu0 0
      %2098 = vmatprep.subr.bf16.mxu0 0
      %2099 = vmatpush2.bf16.msra.mxu0 0
      %2100 = vmatprep.subr.bf16.mxu0 0
      %2101 = vmatpush2.bf16.msra.mxu0 0
      %2102 = vmatprep.subr.bf16.mxu0 0
      %2103 = vmatpush2.bf16.msra.mxu0 0
      %2104 = vmatprep.subr.bf16.mxu0 0
      %2105 = vmatpush2.bf16.msra.mxu0 0
      %2106 = vmatprep.subr.bf16.mxu0 0
      %2107 = vmatpush2.bf16.msra.mxu0 0
      %2108 = vmatprep.mubr.bf16.mxu0 0
      %2109 = vmatmul.mubr.bf16.gmra.mxu0 %v2074
      %v2110 = vpop.f32.mrf.mxu0
      %v2111 = vadd.f32 0.0, %v2110
      %v2112 = vpop.f32.mrf.mxu0
      %v2113 = vpop.f32.mrf.mxu0
      %v2114 = vadd.f32 0.0, %v2113
      %v2115 = vpop.f32.mrf.mxu0
      %2116 = vdwg.mxu0
      %2117 = vmatprep.subr.bf16.mxu0 0
      %2118 = vmatpush1.bf16.msra.mxu0 0
      %2119 = vmatprep.subr.bf16.mxu0 0
      %2120 = vmatpush1.bf16.msra.mxu0 0
      %2121 = vmatprep.subr.bf16.mxu0 0
      %2122 = vmatpush1.bf16.msra.mxu0 0
      %2123 = vmatprep.subr.bf16.mxu0 0
      %2124 = vmatpush1.bf16.msra.mxu0 0
      %2125 = vmatprep.subr.bf16.mxu0 0
      %2126 = vmatpush1.bf16.msra.mxu0 0
      %2127 = vmatprep.subr.bf16.mxu0 0
      %2128 = vmatpush1.bf16.msra.mxu0 0
      %2129 = vmatprep.subr.bf16.mxu0 0
      %2130 = vmatpush1.bf16.msra.mxu0 %v1925
      %2131 = vmatprep.subr.bf16.mxu0 0
      %2132 = vmatpush1.bf16.msra.mxu0 %v1924
      %2133 = vmatprep.subr.bf16.mxu0 0
      %2134 = vmatpush2.bf16.msra.mxu0 0
      %2135 = vmatprep.subr.bf16.mxu0 0
      %2136 = vmatpush2.bf16.msra.mxu0 0
      %2137 = vmatprep.subr.bf16.mxu0 0
      %2138 = vmatpush2.bf16.msra.mxu0 0
      %2139 = vmatprep.subr.bf16.mxu0 0
      %2140 = vmatpush2.bf16.msra.mxu0 0
      %2141 = vmatprep.subr.bf16.mxu0 0
      %2142 = vmatpush2.bf16.msra.mxu0 0
      %2143 = vmatprep.subr.bf16.mxu0 0
      %2144 = vmatpush2.bf16.msra.mxu0 0
      %2145 = vmatprep.subr.bf16.mxu0 0
      %2146 = vmatpush2.bf16.msra.mxu0 0
      %2147 = vmatprep.subr.bf16.mxu0 0
      %2148 = vmatpush2.bf16.msra.mxu0 0
      %2149 = vmatprep.mubr.bf16.mxu0 0
      %2150 = vmatmul.mubr.bf16.gmra.mxu0 %v2074
      %v2151 = vpop.f32.mrf.mxu0
      %v2152 = vadd.f32 0.0, %v2151
      %v2153 = vpop.f32.mrf.mxu0
      %v2154 = vpop.f32.mrf.mxu0
      %v2155 = vadd.f32 0.0, %v2154
      %v2156 = vpop.f32.mrf.mxu0
      %2157 = vdwg.mxu0
      %2158 = vmatprep.subr.bf16.mxu0 0
      %2159 = vmatpush1.bf16.msra.mxu0 0
      %2160 = vmatprep.subr.bf16.mxu0 0
      %2161 = vmatpush1.bf16.msra.mxu0 0
      %2162 = vmatprep.subr.bf16.mxu0 0
      %2163 = vmatpush1.bf16.msra.mxu0 0
      %2164 = vmatprep.subr.bf16.mxu0 0
      %2165 = vmatpush1.bf16.msra.mxu0 0
      %2166 = vmatprep.subr.bf16.mxu0 0
      %2167 = vmatpush1.bf16.msra.mxu0 0
      %2168 = vmatprep.subr.bf16.mxu0 0
      %2169 = vmatpush1.bf16.msra.mxu0 0
      %2170 = vmatprep.subr.bf16.mxu0 0
      %2171 = vmatpush1.bf16.msra.mxu0 %v1978
      %2172 = vmatprep.subr.bf16.mxu0 0
      %2173 = vmatpush1.bf16.msra.mxu0 %v1977
      %2174 = vmatprep.subr.bf16.mxu0 0
      %2175 = vmatpush2.bf16.msra.mxu0 0
      %2176 = vmatprep.subr.bf16.mxu0 0
      %2177 = vmatpush2.bf16.msra.mxu0 0
      %2178 = vmatprep.subr.bf16.mxu0 0
      %2179 = vmatpush2.bf16.msra.mxu0 0
      %2180 = vmatprep.subr.bf16.mxu0 0
      %2181 = vmatpush2.bf16.msra.mxu0 0
      %2182 = vmatprep.subr.bf16.mxu0 0
      %2183 = vmatpush2.bf16.msra.mxu0 0
      %2184 = vmatprep.subr.bf16.mxu0 0
      %2185 = vmatpush2.bf16.msra.mxu0 0
      %2186 = vmatprep.subr.bf16.mxu0 0
      %2187 = vmatpush2.bf16.msra.mxu0 0
      %2188 = vmatprep.subr.bf16.mxu0 0
      %2189 = vmatpush2.bf16.msra.mxu0 0
      %2190 = vmatprep.mubr.bf16.mxu0 0
      %2191 = vmatmul.mubr.bf16.gmra.mxu0 %v2074
      %v2192 = vpop.f32.mrf.mxu0
      %v2193 = vadd.f32 %v1859, %v2192
      %v2194 = vpop.f32.mrf.mxu0
      %v2195 = vpop.f32.mrf.mxu0
      %v2196 = vadd.f32 %v1859, %v2195
      %v2197 = vpop.f32.mrf.mxu0
      %2198 = vdwg.mxu0
      %s2199 = scalar_lea.vmem [#allocation4], 16
      %v2200 = vld [vmem:[%s2199] sm:$0xff]
      %v2201 = vld [vmem:[%s2199 + $0x8] sm:$0xff]
      %v2202 = vadd.f32 %v2200, %v2111
      %v2203 = vadd.f32 %v2201, %v2114
      %v2204 = vxor.u32 %v2202, 2147483648
      %v2205 = vxor.u32 %v2203, 2147483648
      %v2206 = vmul.f32 %v2204, 1.442695
      %v2207 = vpow.pop %v2206
      %v2208 = vmul.f32 %v2205, 1.442695
      %v2209 = vpow.pop %v2208
      %v2210 = vadd.f32 %v2207, 1.0
      %v2211 = vadd.f32 %v2209, 1.0
      %v2212 = vrcp.pop %v2210
      %v2213 = vmul.f32 1.0, %v2212
      %v2214 = vrcp.pop %v2211
      %v2215 = vmul.f32 1.0, %v2214
      %s2216 = scalar_lea.vmem [#allocation5], 16
      %v2217 = vld [vmem:[%s2216] sm:$0xff]
      %v2218 = vld [vmem:[%s2216 + $0x8] sm:$0xff]
      %v2219 = vadd.f32 %v2217, %v2152
      %v2220 = vadd.f32 %v2218, %v2155
      %v2221 = vxor.u32 %v2219, 2147483648
      %v2222 = vxor.u32 %v2220, 2147483648
      %v2223 = vmul.f32 %v2221, 1.442695
      %v2224 = vpow.pop %v2223
      %v2225 = vmul.f32 %v2222, 1.442695
      %v2226 = vpow.pop %v2225
      %v2227 = vadd.f32 %v2224, 1.0
      %v2228 = vadd.f32 %v2226, 1.0
      %v2229 = vrcp.pop %v2227
      %v2230 = vmul.f32 1.0, %v2229
      %v2231 = vrcp.pop %v2228
      %v2232 = vmul.f32 1.0, %v2231
      %s2233 = scalar_lea.vmem [#allocation6], 16
      %v2234 = vld [vmem:[%s2233] sm:$0xff]
      %v2235 = vld [vmem:[%s2233 + $0x8] sm:$0xff]
      %v2236 = vmul.f32 %v2213, %v2193
      %v2237 = vmul.f32 %v2215, %v2196
      %v2238 = vadd.f32 %v2234, %v2236
      %v2239 = vadd.f32 %v2235, %v2237
      %v2240 = vtanh.pop %v2238
      %v2241 = vtanh.pop %v2239
      %v2242 = vsub.f32 1.0, %v2230
      %v2243 = vsub.f32 1.0, %v2232
      %v2244 = vmul.f32 %v2242, %v2240
      %v2245 = vmul.f32 %v2243, %v2241
      %v2246 = vmul.f32 %v2230, %v2068
      %v2247 = vmul.f32 %v2232, %v2069
      %v2248 = vadd.f32 %v2244, %v2246
      %v2249 = vadd.f32 %v2245, %v2247
      %s2250 = scalar_lea.vmem [#allocation3], 16
      %2251 = vst.msk [vmem:[%s2250] sm:$0xff] %vm1581, %v2248
      %2252 = vst.msk [vmem:[%s2250 + $0x8] sm:$0xff] %vm1581, %v2249
      %v2253 = vpack.c.bf16 %v2249, %v2248
      %v2255 = vsel %vm1581, %v2253, 0
      %2257 = vmatprep.subr.bf16.mxu0 0
      %2258 = vmatpush1.bf16.msra.mxu0 0
      %2259 = vmatprep.subr.bf16.mxu0 0
      %2260 = vmatpush1.bf16.msra.mxu0 0
      %2261 = vmatprep.subr.bf16.mxu0 0
      %2262 = vmatpush1.bf16.msra.mxu0 0
      %2263 = vmatprep.subr.bf16.mxu0 0
      %2264 = vmatpush1.bf16.msra.mxu0 0
      %2265 = vmatprep.subr.bf16.mxu0 0
      %2266 = vmatpush1.bf16.msra.mxu0 0
      %2267 = vmatprep.subr.bf16.mxu0 0
      %2268 = vmatpush1.bf16.msra.mxu0 0
      %2269 = vmatprep.subr.bf16.mxu0 0
      %2270 = vmatpush1.bf16.msra.mxu0 %v1869
      %2271 = vmatprep.subr.bf16.mxu0 0
      %2272 = vmatpush1.bf16.msra.mxu0 %v1868
      %2273 = vmatprep.subr.bf16.mxu0 0
      %2274 = vmatpush2.bf16.msra.mxu0 0
      %2275 = vmatprep.subr.bf16.mxu0 0
      %2276 = vmatpush2.bf16.msra.mxu0 0
      %2277 = vmatprep.subr.bf16.mxu0 0
      %2278 = vmatpush2.bf16.msra.mxu0 0
      %2279 = vmatprep.subr.bf16.mxu0 0
      %2280 = vmatpush2.bf16.msra.mxu0 0
      %2281 = vmatprep.subr.bf16.mxu0 0
      %2282 = vmatpush2.bf16.msra.mxu0 0
      %2283 = vmatprep.subr.bf16.mxu0 0
      %2284 = vmatpush2.bf16.msra.mxu0 0
      %2285 = vmatprep.subr.bf16.mxu0 0
      %2286 = vmatpush2.bf16.msra.mxu0 0
      %2287 = vmatprep.subr.bf16.mxu0 0
      %2288 = vmatpush2.bf16.msra.mxu0 0
      %2289 = vmatprep.mubr.bf16.mxu0 0
      %2290 = vmatmul.mubr.bf16.gmra.mxu0 %v2255
      %v2291 = vpop.f32.mrf.mxu0
      %v2292 = vadd.f32 0.0, %v2291
      %v2293 = vpop.f32.mrf.mxu0
      %v2294 = vpop.f32.mrf.mxu0
      %v2295 = vadd.f32 0.0, %v2294
      %v2296 = vpop.f32.mrf.mxu0
      %2297 = vdwg.mxu0
      %2298 = vmatprep.subr.bf16.mxu0 0
      %2299 = vmatpush1.bf16.msra.mxu0 0
      %2300 = vmatprep.subr.bf16.mxu0 0
      %2301 = vmatpush1.bf16.msra.mxu0 0
      %2302 = vmatprep.subr.bf16.mxu0 0
      %2303 = vmatpush1.bf16.msra.mxu0 0
      %2304 = vmatprep.subr.bf16.mxu0 0
      %2305 = vmatpush1.bf16.msra.mxu0 0
      %2306 = vmatprep.subr.bf16.mxu0 0
      %2307 = vmatpush1.bf16.msra.mxu0 0
      %2308 = vmatprep.subr.bf16.mxu0 0
      %2309 = vmatpush1.bf16.msra.mxu0 0
      %2310 = vmatprep.subr.bf16.mxu0 0
      %2311 = vmatpush1.bf16.msra.mxu0 %v1925
      %2312 = vmatprep.subr.bf16.mxu0 0
      %2313 = vmatpush1.bf16.msra.mxu0 %v1924
      %2314 = vmatprep.subr.bf16.mxu0 0
      %2315 = vmatpush2.bf16.msra.mxu0 0
      %2316 = vmatprep.subr.bf16.mxu0 0
      %2317 = vmatpush2.bf16.msra.mxu0 0
      %2318 = vmatprep.subr.bf16.mxu0 0
      %2319 = vmatpush2.bf16.msra.mxu0 0
      %2320 = vmatprep.subr.bf16.mxu0 0
      %2321 = vmatpush2.bf16.msra.mxu0 0
      %2322 = vmatprep.subr.bf16.mxu0 0
      %2323 = vmatpush2.bf16.msra.mxu0 0
      %2324 = vmatprep.subr.bf16.mxu0 0
      %2325 = vmatpush2.bf16.msra.mxu0 0
      %2326 = vmatprep.subr.bf16.mxu0 0
      %2327 = vmatpush2.bf16.msra.mxu0 0
      %2328 = vmatprep.subr.bf16.mxu0 0
      %2329 = vmatpush2.bf16.msra.mxu0 0
      %2330 = vmatprep.mubr.bf16.mxu0 0
      %2331 = vmatmul.mubr.bf16.gmra.mxu0 %v2255
      %v2332 = vpop.f32.mrf.mxu0
      %v2333 = vadd.f32 0.0, %v2332
      %v2334 = vpop.f32.mrf.mxu0
      %v2335 = vpop.f32.mrf.mxu0
      %v2336 = vadd.f32 0.0, %v2335
      %v2337 = vpop.f32.mrf.mxu0
      %2338 = vdwg.mxu0
      %2339 = vmatprep.subr.bf16.mxu0 0
      %2340 = vmatpush1.bf16.msra.mxu0 0
      %2341 = vmatprep.subr.bf16.mxu0 0
      %2342 = vmatpush1.bf16.msra.mxu0 0
      %2343 = vmatprep.subr.bf16.mxu0 0
      %2344 = vmatpush1.bf16.msra.mxu0 0
      %2345 = vmatprep.subr.bf16.mxu0 0
      %2346 = vmatpush1.bf16.msra.mxu0 0
      %2347 = vmatprep.subr.bf16.mxu0 0
      %2348 = vmatpush1.bf16.msra.mxu0 0
      %2349 = vmatprep.subr.bf16.mxu0 0
      %2350 = vmatpush1.bf16.msra.mxu0 0
      %2351 = vmatprep.subr.bf16.mxu0 0
      %2352 = vmatpush1.bf16.msra.mxu0 %v1978
      %2353 = vmatprep.subr.bf16.mxu0 0
      %2354 = vmatpush1.bf16.msra.mxu0 %v1977
      %2355 = vmatprep.subr.bf16.mxu0 0
      %2356 = vmatpush2.bf16.msra.mxu0 0
      %2357 = vmatprep.subr.bf16.mxu0 0
      %2358 = vmatpush2.bf16.msra.mxu0 0
      %2359 = vmatprep.subr.bf16.mxu0 0
      %2360 = vmatpush2.bf16.msra.mxu0 0
      %2361 = vmatprep.subr.bf16.mxu0 0
      %2362 = vmatpush2.bf16.msra.mxu0 0
      %2363 = vmatprep.subr.bf16.mxu0 0
      %2364 = vmatpush2.bf16.msra.mxu0 0
      %2365 = vmatprep.subr.bf16.mxu0 0
      %2366 = vmatpush2.bf16.msra.mxu0 0
      %2367 = vmatprep.subr.bf16.mxu0 0
      %2368 = vmatpush2.bf16.msra.mxu0 0
      %2369 = vmatprep.subr.bf16.mxu0 0
      %2370 = vmatpush2.bf16.msra.mxu0 0
      %2371 = vmatprep.mubr.bf16.mxu0 0
      %2372 = vmatmul.mubr.bf16.gmra.mxu0 %v2255
      %v2373 = vpop.f32.mrf.mxu0
      %v2374 = vadd.f32 %v1859, %v2373
      %v2375 = vpop.f32.mrf.mxu0
      %v2376 = vpop.f32.mrf.mxu0
      %v2377 = vadd.f32 %v1859, %v2376
      %v2378 = vpop.f32.mrf.mxu0
      %2379 = vdwg.mxu0
      %s2380 = scalar_lea.vmem [#allocation4], 32
      %v2381 = vld [vmem:[%s2380] sm:$0xff]
      %v2382 = vld [vmem:[%s2380 + $0x8] sm:$0xff]
      %v2383 = vadd.f32 %v2381, %v2292
      %v2384 = vadd.f32 %v2382, %v2295
      %v2385 = vxor.u32 %v2383, 2147483648
      %v2386 = vxor.u32 %v2384, 2147483648
      %v2387 = vmul.f32 %v2385, 1.442695
      %v2388 = vpow.pop %v2387
      %v2389 = vmul.f32 %v2386, 1.442695
      %v2390 = vpow.pop %v2389
      %v2391 = vadd.f32 %v2388, 1.0
      %v2392 = vadd.f32 %v2390, 1.0
      %v2393 = vrcp.pop %v2391
      %v2394 = vmul.f32 1.0, %v2393
      %v2395 = vrcp.pop %v2392
      %v2396 = vmul.f32 1.0, %v2395
      %s2397 = scalar_lea.vmem [#allocation5], 32
      %v2398 = vld [vmem:[%s2397] sm:$0xff]
      %v2399 = vld [vmem:[%s2397 + $0x8] sm:$0xff]
      %v2400 = vadd.f32 %v2398, %v2333
      %v2401 = vadd.f32 %v2399, %v2336
      %v2402 = vxor.u32 %v2400, 2147483648
      %v2403 = vxor.u32 %v2401, 2147483648
      %v2404 = vmul.f32 %v2402, 1.442695
      %v2405 = vpow.pop %v2404
      %v2406 = vmul.f32 %v2403, 1.442695
      %v2407 = vpow.pop %v2406
      %v2408 = vadd.f32 %v2405, 1.0
      %v2409 = vadd.f32 %v2407, 1.0
      %v2410 = vrcp.pop %v2408
      %v2411 = vmul.f32 1.0, %v2410
      %v2412 = vrcp.pop %v2409
      %v2413 = vmul.f32 1.0, %v2412
      %s2414 = scalar_lea.vmem [#allocation6], 32
      %v2415 = vld [vmem:[%s2414] sm:$0xff]
      %v2416 = vld [vmem:[%s2414 + $0x8] sm:$0xff]
      %v2417 = vmul.f32 %v2394, %v2374
      %v2418 = vmul.f32 %v2396, %v2377
      %v2419 = vadd.f32 %v2415, %v2417
      %v2420 = vadd.f32 %v2416, %v2418
      %v2421 = vtanh.pop %v2419
      %v2422 = vtanh.pop %v2420
      %v2423 = vsub.f32 1.0, %v2411
      %v2424 = vsub.f32 1.0, %v2413
      %v2425 = vmul.f32 %v2423, %v2421
      %v2426 = vmul.f32 %v2424, %v2422
      %v2427 = vmul.f32 %v2411, %v2248
      %v2428 = vmul.f32 %v2413, %v2249
      %v2429 = vadd.f32 %v2425, %v2427
      %v2430 = vadd.f32 %v2426, %v2428
      %s2431 = scalar_lea.vmem [#allocation3], 32
      %2432 = vst.msk [vmem:[%s2431] sm:$0xff] %vm1581, %v2429
      %2433 = vst.msk [vmem:[%s2431 + $0x8] sm:$0xff] %vm1581, %v2430
      %v2434 = vpack.c.bf16 %v2430, %v2429
      %v2436 = vsel %vm1581, %v2434, 0
      %2438 = vmatprep.subr.bf16.mxu0 0
      %2439 = vmatpush1.bf16.msra.mxu0 0
      %2440 = vmatprep.subr.bf16.mxu0 0
      %2441 = vmatpush1.bf16.msra.mxu0 0
      %2442 = vmatprep.subr.bf16.mxu0 0
      %2443 = vmatpush1.bf16.msra.mxu0 0
      %2444 = vmatprep.subr.bf16.mxu0 0
      %2445 = vmatpush1.bf16.msra.mxu0 0
      %2446 = vmatprep.subr.bf16.mxu0 0
      %2447 = vmatpush1.bf16.msra.mxu0 0
      %2448 = vmatprep.subr.bf16.mxu0 0
      %2449 = vmatpush1.bf16.msra.mxu0 0
      %2450 = vmatprep.subr.bf16.mxu0 0
      %2451 = vmatpush1.bf16.msra.mxu0 %v1869
      %2452 = vmatprep.subr.bf16.mxu0 0
      %2453 = vmatpush1.bf16.msra.mxu0 %v1868
      %2454 = vmatprep.subr.bf16.mxu0 0
      %2455 = vmatpush2.bf16.msra.mxu0 0
      %2456 = vmatprep.subr.bf16.mxu0 0
      %2457 = vmatpush2.bf16.msra.mxu0 0
      %2458 = vmatprep.subr.bf16.mxu0 0
      %2459 = vmatpush2.bf16.msra.mxu0 0
      %2460 = vmatprep.subr.bf16.mxu0 0
      %2461 = vmatpush2.bf16.msra.mxu0 0
      %2462 = vmatprep.subr.bf16.mxu0 0
      %2463 = vmatpush2.bf16.msra.mxu0 0
      %2464 = vmatprep.subr.bf16.mxu0 0
      %2465 = vmatpush2.bf16.msra.mxu0 0
      %2466 = vmatprep.subr.bf16.mxu0 0
      %2467 = vmatpush2.bf16.msra.mxu0 0
      %2468 = vmatprep.subr.bf16.mxu0 0
      %2469 = vmatpush2.bf16.msra.mxu0 0
      %2470 = vmatprep.mubr.bf16.mxu0 0
      %2471 = vmatmul.mubr.bf16.gmra.mxu0 %v2436
      %v2472 = vpop.f32.mrf.mxu0
      %v2473 = vadd.f32 0.0, %v2472
      %v2474 = vpop.f32.mrf.mxu0
      %v2475 = vpop.f32.mrf.mxu0
      %v2476 = vadd.f32 0.0, %v2475
      %v2477 = vpop.f32.mrf.mxu0
      %2478 = vdwg.mxu0
      %2479 = vmatprep.subr.bf16.mxu0 0
      %2480 = vmatpush1.bf16.msra.mxu0 0
      %2481 = vmatprep.subr.bf16.mxu0 0
      %2482 = vmatpush1.bf16.msra.mxu0 0
      %2483 = vmatprep.subr.bf16.mxu0 0
      %2484 = vmatpush1.bf16.msra.mxu0 0
      %2485 = vmatprep.subr.bf16.mxu0 0
      %2486 = vmatpush1.bf16.msra.mxu0 0
      %2487 = vmatprep.subr.bf16.mxu0 0
      %2488 = vmatpush1.bf16.msra.mxu0 0
      %2489 = vmatprep.subr.bf16.mxu0 0
      %2490 = vmatpush1.bf16.msra.mxu0 0
      %2491 = vmatprep.subr.bf16.mxu0 0
      %2492 = vmatpush1.bf16.msra.mxu0 %v1925
      %2493 = vmatprep.subr.bf16.mxu0 0
      %2494 = vmatpush1.bf16.msra.mxu0 %v1924
      %2495 = vmatprep.subr.bf16.mxu0 0
      %2496 = vmatpush2.bf16.msra.mxu0 0
      %2497 = vmatprep.subr.bf16.mxu0 0
      %2498 = vmatpush2.bf16.msra.mxu0 0
      %2499 = vmatprep.subr.bf16.mxu0 0
      %2500 = vmatpush2.bf16.msra.mxu0 0
      %2501 = vmatprep.subr.bf16.mxu0 0
      %2502 = vmatpush2.bf16.msra.mxu0 0
      %2503 = vmatprep.subr.bf16.mxu0 0
      %2504 = vmatpush2.bf16.msra.mxu0 0
      %2505 = vmatprep.subr.bf16.mxu0 0
      %2506 = vmatpush2.bf16.msra.mxu0 0
      %2507 = vmatprep.subr.bf16.mxu0 0
      %2508 = vmatpush2.bf16.msra.mxu0 0
      %2509 = vmatprep.subr.bf16.mxu0 0
      %2510 = vmatpush2.bf16.msra.mxu0 0
      %2511 = vmatprep.mubr.bf16.mxu0 0
      %2512 = vmatmul.mubr.bf16.gmra.mxu0 %v2436
      %v2513 = vpop.f32.mrf.mxu0
      %v2514 = vadd.f32 0.0, %v2513
      %v2515 = vpop.f32.mrf.mxu0
      %v2516 = vpop.f32.mrf.mxu0
      %v2517 = vadd.f32 0.0, %v2516
      %v2518 = vpop.f32.mrf.mxu0
      %2519 = vdwg.mxu0
      %2520 = vmatprep.subr.bf16.mxu0 0
      %2521 = vmatpush1.bf16.msra.mxu0 0
      %2522 = vmatprep.subr.bf16.mxu0 0
      %2523 = vmatpush1.bf16.msra.mxu0 0
      %2524 = vmatprep.subr.bf16.mxu0 0
      %2525 = vmatpush1.bf16.msra.mxu0 0
      %2526 = vmatprep.subr.bf16.mxu0 0
      %2527 = vmatpush1.bf16.msra.mxu0 0
      %2528 = vmatprep.subr.bf16.mxu0 0
      %2529 = vmatpush1.bf16.msra.mxu0 0
      %2530 = vmatprep.subr.bf16.mxu0 0
      %2531 = vmatpush1.bf16.msra.mxu0 0
      %2532 = vmatprep.subr.bf16.mxu0 0
      %2533 = vmatpush1.bf16.msra.mxu0 %v1978
      %2534 = vmatprep.subr.bf16.mxu0 0
      %2535 = vmatpush1.bf16.msra.mxu0 %v1977
      %2536 = vmatprep.subr.bf16.mxu0 0
      %2537 = vmatpush2.bf16.msra.mxu0 0
      %2538 = vmatprep.subr.bf16.mxu0 0
      %2539 = vmatpush2.bf16.msra.mxu0 0
      %2540 = vmatprep.subr.bf16.mxu0 0
      %2541 = vmatpush2.bf16.msra.mxu0 0
      %2542 = vmatprep.subr.bf16.mxu0 0
      %2543 = vmatpush2.bf16.msra.mxu0 0
      %2544 = vmatprep.subr.bf16.mxu0 0
      %2545 = vmatpush2.bf16.msra.mxu0 0
      %2546 = vmatprep.subr.bf16.mxu0 0
      %2547 = vmatpush2.bf16.msra.mxu0 0
      %2548 = vmatprep.subr.bf16.mxu0 0
      %2549 = vmatpush2.bf16.msra.mxu0 0
      %2550 = vmatprep.subr.bf16.mxu0 0
      %2551 = vmatpush2.bf16.msra.mxu0 0
      %2552 = vmatprep.mubr.bf16.mxu0 0
      %2553 = vmatmul.mubr.bf16.gmra.mxu0 %v2436
      %v2554 = vpop.f32.mrf.mxu0
      %v2555 = vadd.f32 %v1859, %v2554
      %v2556 = vpop.f32.mrf.mxu0
      %v2557 = vpop.f32.mrf.mxu0
      %v2558 = vadd.f32 %v1859, %v2557
      %v2559 = vpop.f32.mrf.mxu0
      %2560 = vdwg.mxu0
      %s2561 = scalar_lea.vmem [#allocation4], 48
      %v2562 = vld [vmem:[%s2561] sm:$0xff]
      %v2563 = vld [vmem:[%s2561 + $0x8] sm:$0xff]
      %v2564 = vadd.f32 %v2562, %v2473
      %v2565 = vadd.f32 %v2563, %v2476
      %v2566 = vxor.u32 %v2564, 2147483648
      %v2567 = vxor.u32 %v2565, 2147483648
      %v2568 = vmul.f32 %v2566, 1.442695
      %v2569 = vpow.pop %v2568
      %v2570 = vmul.f32 %v2567, 1.442695
      %v2571 = vpow.pop %v2570
      %v2572 = vadd.f32 %v2569, 1.0
      %v2573 = vadd.f32 %v2571, 1.0
      %v2574 = vrcp.pop %v2572
      %v2575 = vmul.f32 1.0, %v2574
      %v2576 = vrcp.pop %v2573
      %v2577 = vmul.f32 1.0, %v2576
      %s2578 = scalar_lea.vmem [#allocation5], 48
      %v2579 = vld [vmem:[%s2578] sm:$0xff]
      %v2580 = vld [vmem:[%s2578 + $0x8] sm:$0xff]
      %v2581 = vadd.f32 %v2579, %v2514
      %v2582 = vadd.f32 %v2580, %v2517
      %v2583 = vxor.u32 %v2581, 2147483648
      %v2584 = vxor.u32 %v2582, 2147483648
      %v2585 = vmul.f32 %v2583, 1.442695
      %v2586 = vpow.pop %v2585
      %v2587 = vmul.f32 %v2584, 1.442695
      %v2588 = vpow.pop %v2587
      %v2589 = vadd.f32 %v2586, 1.0
      %v2590 = vadd.f32 %v2588, 1.0
      %v2591 = vrcp.pop %v2589
      %v2592 = vmul.f32 1.0, %v2591
      %v2593 = vrcp.pop %v2590
      %v2594 = vmul.f32 1.0, %v2593
      %s2595 = scalar_lea.vmem [#allocation6], 48
      %v2596 = vld [vmem:[%s2595] sm:$0xff]
      %v2597 = vld [vmem:[%s2595 + $0x8] sm:$0xff]
      %v2598 = vmul.f32 %v2575, %v2555
      %v2599 = vmul.f32 %v2577, %v2558
      %v2600 = vadd.f32 %v2596, %v2598
      %v2601 = vadd.f32 %v2597, %v2599
      %v2602 = vtanh.pop %v2600
      %v2603 = vtanh.pop %v2601
      %v2604 = vsub.f32 1.0, %v2592
      %v2605 = vsub.f32 1.0, %v2594
      %v2606 = vmul.f32 %v2604, %v2602
      %v2607 = vmul.f32 %v2605, %v2603
      %v2608 = vmul.f32 %v2592, %v2429
      %v2609 = vmul.f32 %v2594, %v2430
      %v2610 = vadd.f32 %v2606, %v2608
      %v2611 = vadd.f32 %v2607, %v2609
      %s2612 = scalar_lea.vmem [#allocation3], 48
      %2613 = vst.msk [vmem:[%s2612] sm:$0xff] %vm1581, %v2610
      %2614 = vst.msk [vmem:[%s2612 + $0x8] sm:$0xff] %vm1581, %v2611
      %v2615 = vpack.c.bf16 %v2611, %v2610
      %v2617 = vsel %vm1581, %v2615, 0
      %2619 = vmatprep.subr.bf16.mxu0 0
      %2620 = vmatpush1.bf16.msra.mxu0 0
      %2621 = vmatprep.subr.bf16.mxu0 0
      %2622 = vmatpush1.bf16.msra.mxu0 0
      %2623 = vmatprep.subr.bf16.mxu0 0
      %2624 = vmatpush1.bf16.msra.mxu0 0
      %2625 = vmatprep.subr.bf16.mxu0 0
      %2626 = vmatpush1.bf16.msra.mxu0 0
      %2627 = vmatprep.subr.bf16.mxu0 0
      %2628 = vmatpush1.bf16.msra.mxu0 0
      %2629 = vmatprep.subr.bf16.mxu0 0
      %2630 = vmatpush1.bf16.msra.mxu0 0
      %2631 = vmatprep.subr.bf16.mxu0 0
      %2632 = vmatpush1.bf16.msra.mxu0 %v1869
      %2633 = vmatprep.subr.bf16.mxu0 0
      %2634 = vmatpush1.bf16.msra.mxu0 %v1868
      %2635 = vmatprep.subr.bf16.mxu0 0
      %2636 = vmatpush2.bf16.msra.mxu0 0
      %2637 = vmatprep.subr.bf16.mxu0 0
      %2638 = vmatpush2.bf16.msra.mxu0 0
      %2639 = vmatprep.subr.bf16.mxu0 0
      %2640 = vmatpush2.bf16.msra.mxu0 0
      %2641 = vmatprep.subr.bf16.mxu0 0
      %2642 = vmatpush2.bf16.msra.mxu0 0
      %2643 = vmatprep.subr.bf16.mxu0 0
      %2644 = vmatpush2.bf16.msra.mxu0 0
      %2645 = vmatprep.subr.bf16.mxu0 0
      %2646 = vmatpush2.bf16.msra.mxu0 0
      %2647 = vmatprep.subr.bf16.mxu0 0
      %2648 = vmatpush2.bf16.msra.mxu0 0
      %2649 = vmatprep.subr.bf16.mxu0 0
      %2650 = vmatpush2.bf16.msra.mxu0 0
      %2651 = vmatprep.mubr.bf16.mxu0 0
      %2652 = vmatmul.mubr.bf16.gmra.mxu0 %v2617
      %v2653 = vpop.f32.mrf.mxu0
      %v2654 = vadd.f32 0.0, %v2653
      %v2655 = vpop.f32.mrf.mxu0
      %v2656 = vpop.f32.mrf.mxu0
      %v2657 = vadd.f32 0.0, %v2656
      %v2658 = vpop.f32.mrf.mxu0
      %2659 = vdwg.mxu0
      %2660 = vmatprep.subr.bf16.mxu0 0
      %2661 = vmatpush1.bf16.msra.mxu0 0
      %2662 = vmatprep.subr.bf16.mxu0 0
      %2663 = vmatpush1.bf16.msra.mxu0 0
      %2664 = vmatprep.subr.bf16.mxu0 0
      %2665 = vmatpush1.bf16.msra.mxu0 0
      %2666 = vmatprep.subr.bf16.mxu0 0
      %2667 = vmatpush1.bf16.msra.mxu0 0
      %2668 = vmatprep.subr.bf16.mxu0 0
      %2669 = vmatpush1.bf16.msra.mxu0 0
      %2670 = vmatprep.subr.bf16.mxu0 0
      %2671 = vmatpush1.bf16.msra.mxu0 0
      %2672 = vmatprep.subr.bf16.mxu0 0
      %2673 = vmatpush1.bf16.msra.mxu0 %v1925
      %2674 = vmatprep.subr.bf16.mxu0 0
      %2675 = vmatpush1.bf16.msra.mxu0 %v1924
      %2676 = vmatprep.subr.bf16.mxu0 0
      %2677 = vmatpush2.bf16.msra.mxu0 0
      %2678 = vmatprep.subr.bf16.mxu0 0
      %2679 = vmatpush2.bf16.msra.mxu0 0
      %2680 = vmatprep.subr.bf16.mxu0 0
      %2681 = vmatpush2.bf16.msra.mxu0 0
      %2682 = vmatprep.subr.bf16.mxu0 0
      %2683 = vmatpush2.bf16.msra.mxu0 0
      %2684 = vmatprep.subr.bf16.mxu0 0
      %2685 = vmatpush2.bf16.msra.mxu0 0
      %2686 = vmatprep.subr.bf16.mxu0 0
      %2687 = vmatpush2.bf16.msra.mxu0 0
      %2688 = vmatprep.subr.bf16.mxu0 0
      %2689 = vmatpush2.bf16.msra.mxu0 0
      %2690 = vmatprep.subr.bf16.mxu0 0
      %2691 = vmatpush2.bf16.msra.mxu0 0
      %2692 = vmatprep.mubr.bf16.mxu0 0
      %2693 = vmatmul.mubr.bf16.gmra.mxu0 %v2617
      %v2694 = vpop.f32.mrf.mxu0
      %v2695 = vadd.f32 0.0, %v2694
      %v2696 = vpop.f32.mrf.mxu0
      %v2697 = vpop.f32.mrf.mxu0
      %v2698 = vadd.f32 0.0, %v2697
      %v2699 = vpop.f32.mrf.mxu0
      %2700 = vdwg.mxu0
      %2701 = vmatprep.subr.bf16.mxu0 0
      %2702 = vmatpush1.bf16.msra.mxu0 0
      %2703 = vmatprep.subr.bf16.mxu0 0
      %2704 = vmatpush1.bf16.msra.mxu0 0
      %2705 = vmatprep.subr.bf16.mxu0 0
      %2706 = vmatpush1.bf16.msra.mxu0 0
      %2707 = vmatprep.subr.bf16.mxu0 0
      %2708 = vmatpush1.bf16.msra.mxu0 0
      %2709 = vmatprep.subr.bf16.mxu0 0
      %2710 = vmatpush1.bf16.msra.mxu0 0
      %2711 = vmatprep.subr.bf16.mxu0 0
      %2712 = vmatpush1.bf16.msra.mxu0 0
      %2713 = vmatprep.subr.bf16.mxu0 0
      %2714 = vmatpush1.bf16.msra.mxu0 %v1978
      %2715 = vmatprep.subr.bf16.mxu0 0
      %2716 = vmatpush1.bf16.msra.mxu0 %v1977
      %2717 = vmatprep.subr.bf16.mxu0 0
      %2718 = vmatpush2.bf16.msra.mxu0 0
      %2719 = vmatprep.subr.bf16.mxu0 0
      %2720 = vmatpush2.bf16.msra.mxu0 0
      %2721 = vmatprep.subr.bf16.mxu0 0
      %2722 = vmatpush2.bf16.msra.mxu0 0
      %2723 = vmatprep.subr.bf16.mxu0 0
      %2724 = vmatpush2.bf16.msra.mxu0 0
      %2725 = vmatprep.subr.bf16.mxu0 0
      %2726 = vmatpush2.bf16.msra.mxu0 0
      %2727 = vmatprep.subr.bf16.mxu0 0
      %2728 = vmatpush2.bf16.msra.mxu0 0
      %2729 = vmatprep.subr.bf16.mxu0 0
      %2730 = vmatpush2.bf16.msra.mxu0 0
      %2731 = vmatprep.subr.bf16.mxu0 0
      %2732 = vmatpush2.bf16.msra.mxu0 0
      %2733 = vmatprep.mubr.bf16.mxu0 0
      %2734 = vmatmul.mubr.bf16.gmra.mxu0 %v2617
      %v2735 = vpop.f32.mrf.mxu0
      %v2736 = vadd.f32 %v1859, %v2735
      %v2737 = vpop.f32.mrf.mxu0
      %v2738 = vpop.f32.mrf.mxu0
      %v2739 = vadd.f32 %v1859, %v2738
      %v2740 = vpop.f32.mrf.mxu0
      %2741 = vdwg.mxu0
      %s2742 = scalar_lea.vmem [#allocation4], 64
      %v2743 = vld [vmem:[%s2742] sm:$0xff]
      %v2744 = vld [vmem:[%s2742 + $0x8] sm:$0xff]
      %v2745 = vadd.f32 %v2743, %v2654
      %v2746 = vadd.f32 %v2744, %v2657
      %v2747 = vxor.u32 %v2745, 2147483648
      %v2748 = vxor.u32 %v2746, 2147483648
      %v2749 = vmul.f32 %v2747, 1.442695
      %v2750 = vpow.pop %v2749
      %v2751 = vmul.f32 %v2748, 1.442695
      %v2752 = vpow.pop %v2751
      %v2753 = vadd.f32 %v2750, 1.0
      %v2754 = vadd.f32 %v2752, 1.0
      %v2755 = vrcp.pop %v2753
      %v2756 = vmul.f32 1.0, %v2755
      %v2757 = vrcp.pop %v2754
      %v2758 = vmul.f32 1.0, %v2757
      %s2759 = scalar_lea.vmem [#allocation5], 64
      %v2760 = vld [vmem:[%s2759] sm:$0xff]
      %v2761 = vld [vmem:[%s2759 + $0x8] sm:$0xff]
      %v2762 = vadd.f32 %v2760, %v2695
      %v2763 = vadd.f32 %v2761, %v2698
      %v2764 = vxor.u32 %v2762, 2147483648
      %v2765 = vxor.u32 %v2763, 2147483648
      %v2766 = vmul.f32 %v2764, 1.442695
      %v2767 = vpow.pop %v2766
      %v2768 = vmul.f32 %v2765, 1.442695
      %v2769 = vpow.pop %v2768
      %v2770 = vadd.f32 %v2767, 1.0
      %v2771 = vadd.f32 %v2769, 1.0
      %v2772 = vrcp.pop %v2770
      %v2773 = vmul.f32 1.0, %v2772
      %v2774 = vrcp.pop %v2771
      %v2775 = vmul.f32 1.0, %v2774
      %s2776 = scalar_lea.vmem [#allocation6], 64
      %v2777 = vld [vmem:[%s2776] sm:$0xff]
      %v2778 = vld [vmem:[%s2776 + $0x8] sm:$0xff]
      %v2779 = vmul.f32 %v2756, %v2736
      %v2780 = vmul.f32 %v2758, %v2739
      %v2781 = vadd.f32 %v2777, %v2779
      %v2782 = vadd.f32 %v2778, %v2780
      %v2783 = vtanh.pop %v2781
      %v2784 = vtanh.pop %v2782
      %v2785 = vsub.f32 1.0, %v2773
      %v2786 = vsub.f32 1.0, %v2775
      %v2787 = vmul.f32 %v2785, %v2783
      %v2788 = vmul.f32 %v2786, %v2784
      %v2789 = vmul.f32 %v2773, %v2610
      %v2790 = vmul.f32 %v2775, %v2611
      %v2791 = vadd.f32 %v2787, %v2789
      %v2792 = vadd.f32 %v2788, %v2790
      %s2793 = scalar_lea.vmem [#allocation3], 64
      %2794 = vst.msk [vmem:[%s2793] sm:$0xff] %vm1581, %v2791
      %2795 = vst.msk [vmem:[%s2793 + $0x8] sm:$0xff] %vm1581, %v2792
      %v2796 = vpack.c.bf16 %v2792, %v2791
      %v2798 = vsel %vm1581, %v2796, 0
      %2800 = vmatprep.subr.bf16.mxu0 0
      %2801 = vmatpush1.bf16.msra.mxu0 0
      %2802 = vmatprep.subr.bf16.mxu0 0
      %2803 = vmatpush1.bf16.msra.mxu0 0
      %2804 = vmatprep.subr.bf16.mxu0 0
      %2805 = vmatpush1.bf16.msra.mxu0 0
      %2806 = vmatprep.subr.bf16.mxu0 0
      %2807 = vmatpush1.bf16.msra.mxu0 0
      %2808 = vmatprep.subr.bf16.mxu0 0
      %2809 = vmatpush1.bf16.msra.mxu0 0
      %2810 = vmatprep.subr.bf16.mxu0 0
      %2811 = vmatpush1.bf16.msra.mxu0 0
      %2812 = vmatprep.subr.bf16.mxu0 0
      %2813 = vmatpush1.bf16.msra.mxu0 %v1869
      %2814 = vmatprep.subr.bf16.mxu0 0
      %2815 = vmatpush1.bf16.msra.mxu0 %v1868
      %2816 = vmatprep.subr.bf16.mxu0 0
      %2817 = vmatpush2.bf16.msra.mxu0 0
      %2818 = vmatprep.subr.bf16.mxu0 0
      %2819 = vmatpush2.bf16.msra.mxu0 0
      %2820 = vmatprep.subr.bf16.mxu0 0
      %2821 = vmatpush2.bf16.msra.mxu0 0
      %2822 = vmatprep.subr.bf16.mxu0 0
      %2823 = vmatpush2.bf16.msra.mxu0 0
      %2824 = vmatprep.subr.bf16.mxu0 0
      %2825 = vmatpush2.bf16.msra.mxu0 0
      %2826 = vmatprep.subr.bf16.mxu0 0
      %2827 = vmatpush2.bf16.msra.mxu0 0
      %2828 = vmatprep.subr.bf16.mxu0 0
      %2829 = vmatpush2.bf16.msra.mxu0 0
      %2830 = vmatprep.subr.bf16.mxu0 0
      %2831 = vmatpush2.bf16.msra.mxu0 0
      %2832 = vmatprep.mubr.bf16.mxu0 0
      %2833 = vmatmul.mubr.bf16.gmra.mxu0 %v2798
      %v2834 = vpop.f32.mrf.mxu0
      %v2835 = vadd.f32 0.0, %v2834
      %v2836 = vpop.f32.mrf.mxu0
      %v2837 = vpop.f32.mrf.mxu0
      %v2838 = vadd.f32 0.0, %v2837
      %v2839 = vpop.f32.mrf.mxu0
      %2840 = vdwg.mxu0
      %2841 = vmatprep.subr.bf16.mxu0 0
      %2842 = vmatpush1.bf16.msra.mxu0 0
      %2843 = vmatprep.subr.bf16.mxu0 0
      %2844 = vmatpush1.bf16.msra.mxu0 0
      %2845 = vmatprep.subr.bf16.mxu0 0
      %2846 = vmatpush1.bf16.msra.mxu0 0
      %2847 = vmatprep.subr.bf16.mxu0 0
      %2848 = vmatpush1.bf16.msra.mxu0 0
      %2849 = vmatprep.subr.bf16.mxu0 0
      %2850 = vmatpush1.bf16.msra.mxu0 0
      %2851 = vmatprep.subr.bf16.mxu0 0
      %2852 = vmatpush1.bf16.msra.mxu0 0
      %2853 = vmatprep.subr.bf16.mxu0 0
      %2854 = vmatpush1.bf16.msra.mxu0 %v1925
      %2855 = vmatprep.subr.bf16.mxu0 0
      %2856 = vmatpush1.bf16.msra.mxu0 %v1924
      %2857 = vmatprep.subr.bf16.mxu0 0
      %2858 = vmatpush2.bf16.msra.mxu0 0
      %2859 = vmatprep.subr.bf16.mxu0 0
      %2860 = vmatpush2.bf16.msra.mxu0 0
      %2861 = vmatprep.subr.bf16.mxu0 0
      %2862 = vmatpush2.bf16.msra.mxu0 0
      %2863 = vmatprep.subr.bf16.mxu0 0
      %2864 = vmatpush2.bf16.msra.mxu0 0
      %2865 = vmatprep.subr.bf16.mxu0 0
      %2866 = vmatpush2.bf16.msra.mxu0 0
      %2867 = vmatprep.subr.bf16.mxu0 0
      %2868 = vmatpush2.bf16.msra.mxu0 0
      %2869 = vmatprep.subr.bf16.mxu0 0
      %2870 = vmatpush2.bf16.msra.mxu0 0
      %2871 = vmatprep.subr.bf16.mxu0 0
      %2872 = vmatpush2.bf16.msra.mxu0 0
      %2873 = vmatprep.mubr.bf16.mxu0 0
      %2874 = vmatmul.mubr.bf16.gmra.mxu0 %v2798
      %v2875 = vpop.f32.mrf.mxu0
      %v2876 = vadd.f32 0.0, %v2875
      %v2877 = vpop.f32.mrf.mxu0
      %v2878 = vpop.f32.mrf.mxu0
      %v2879 = vadd.f32 0.0, %v2878
      %v2880 = vpop.f32.mrf.mxu0
      %2881 = vdwg.mxu0
      %2882 = vmatprep.subr.bf16.mxu0 0
      %2883 = vmatpush1.bf16.msra.mxu0 0
      %2884 = vmatprep.subr.bf16.mxu0 0
      %2885 = vmatpush1.bf16.msra.mxu0 0
      %2886 = vmatprep.subr.bf16.mxu0 0
      %2887 = vmatpush1.bf16.msra.mxu0 0
      %2888 = vmatprep.subr.bf16.mxu0 0
      %2889 = vmatpush1.bf16.msra.mxu0 0
      %2890 = vmatprep.subr.bf16.mxu0 0
      %2891 = vmatpush1.bf16.msra.mxu0 0
      %2892 = vmatprep.subr.bf16.mxu0 0
      %2893 = vmatpush1.bf16.msra.mxu0 0
      %2894 = vmatprep.subr.bf16.mxu0 0
      %2895 = vmatpush1.bf16.msra.mxu0 %v1978
      %2896 = vmatprep.subr.bf16.mxu0 0
      %2897 = vmatpush1.bf16.msra.mxu0 %v1977
      %2898 = vmatprep.subr.bf16.mxu0 0
      %2899 = vmatpush2.bf16.msra.mxu0 0
      %2900 = vmatprep.subr.bf16.mxu0 0
      %2901 = vmatpush2.bf16.msra.mxu0 0
      %2902 = vmatprep.subr.bf16.mxu0 0
      %2903 = vmatpush2.bf16.msra.mxu0 0
      %2904 = vmatprep.subr.bf16.mxu0 0
      %2905 = vmatpush2.bf16.msra.mxu0 0
      %2906 = vmatprep.subr.bf16.mxu0 0
      %2907 = vmatpush2.bf16.msra.mxu0 0
      %2908 = vmatprep.subr.bf16.mxu0 0
      %2909 = vmatpush2.bf16.msra.mxu0 0
      %2910 = vmatprep.subr.bf16.mxu0 0
      %2911 = vmatpush2.bf16.msra.mxu0 0
      %2912 = vmatprep.subr.bf16.mxu0 0
      %2913 = vmatpush2.bf16.msra.mxu0 0
      %2914 = vmatprep.mubr.bf16.mxu0 0
      %2915 = vmatmul.mubr.bf16.gmra.mxu0 %v2798
      %v2916 = vpop.f32.mrf.mxu0
      %v2917 = vadd.f32 %v1859, %v2916
      %v2918 = vpop.f32.mrf.mxu0
      %v2919 = vpop.f32.mrf.mxu0
      %v2920 = vadd.f32 %v1859, %v2919
      %v2921 = vpop.f32.mrf.mxu0
      %2922 = vdwg.mxu0
      %s2923 = scalar_lea.vmem [#allocation4], 80
      %v2924 = vld [vmem:[%s2923] sm:$0xff]
      %v2925 = vld [vmem:[%s2923 + $0x8] sm:$0xff]
      %v2926 = vadd.f32 %v2924, %v2835
      %v2927 = vadd.f32 %v2925, %v2838
      %v2928 = vxor.u32 %v2926, 2147483648
      %v2929 = vxor.u32 %v2927, 2147483648
      %v2930 = vmul.f32 %v2928, 1.442695
      %v2931 = vpow.pop %v2930
      %v2932 = vmul.f32 %v2929, 1.442695
      %v2933 = vpow.pop %v2932
      %v2934 = vadd.f32 %v2931, 1.0
      %v2935 = vadd.f32 %v2933, 1.0
      %v2936 = vrcp.pop %v2934
      %v2937 = vmul.f32 1.0, %v2936
      %v2938 = vrcp.pop %v2935
      %v2939 = vmul.f32 1.0, %v2938
      %s2940 = scalar_lea.vmem [#allocation5], 80
      %v2941 = vld [vmem:[%s2940] sm:$0xff]
      %v2942 = vld [vmem:[%s2940 + $0x8] sm:$0xff]
      %v2943 = vadd.f32 %v2941, %v2876
      %v2944 = vadd.f32 %v2942, %v2879
      %v2945 = vxor.u32 %v2943, 2147483648
      %v2946 = vxor.u32 %v2944, 2147483648
      %v2947 = vmul.f32 %v2945, 1.442695
      %v2948 = vpow.pop %v2947
      %v2949 = vmul.f32 %v2946, 1.442695
      %v2950 = vpow.pop %v2949
      %v2951 = vadd.f32 %v2948, 1.0
      %v2952 = vadd.f32 %v2950, 1.0
      %v2953 = vrcp.pop %v2951
      %v2954 = vmul.f32 1.0, %v2953
      %v2955 = vrcp.pop %v2952
      %v2956 = vmul.f32 1.0, %v2955
      %s2957 = scalar_lea.vmem [#allocation6], 80
      %v2958 = vld [vmem:[%s2957] sm:$0xff]
      %v2959 = vld [vmem:[%s2957 + $0x8] sm:$0xff]
      %v2960 = vmul.f32 %v2937, %v2917
      %v2961 = vmul.f32 %v2939, %v2920
      %v2962 = vadd.f32 %v2958, %v2960
      %v2963 = vadd.f32 %v2959, %v2961
      %v2964 = vtanh.pop %v2962
      %v2965 = vtanh.pop %v2963
      %v2966 = vsub.f32 1.0, %v2954
      %v2967 = vsub.f32 1.0, %v2956
      %v2968 = vmul.f32 %v2966, %v2964
      %v2969 = vmul.f32 %v2967, %v2965
      %v2970 = vmul.f32 %v2954, %v2791
      %v2971 = vmul.f32 %v2956, %v2792
      %v2972 = vadd.f32 %v2968, %v2970
      %v2973 = vadd.f32 %v2969, %v2971
      %s2974 = scalar_lea.vmem [#allocation3], 80
      %2975 = vst.msk [vmem:[%s2974] sm:$0xff] %vm1581, %v2972
      %2976 = vst.msk [vmem:[%s2974 + $0x8] sm:$0xff] %vm1581, %v2973
      %v2977 = vpack.c.bf16 %v2973, %v2972
      %v2979 = vsel %vm1581, %v2977, 0
      %2981 = vmatprep.subr.bf16.mxu0 0
      %2982 = vmatpush1.bf16.msra.mxu0 0
      %2983 = vmatprep.subr.bf16.mxu0 0
      %2984 = vmatpush1.bf16.msra.mxu0 0
      %2985 = vmatprep.subr.bf16.mxu0 0
      %2986 = vmatpush1.bf16.msra.mxu0 0
      %2987 = vmatprep.subr.bf16.mxu0 0
      %2988 = vmatpush1.bf16.msra.mxu0 0
      %2989 = vmatprep.subr.bf16.mxu0 0
      %2990 = vmatpush1.bf16.msra.mxu0 0
      %2991 = vmatprep.subr.bf16.mxu0 0
      %2992 = vmatpush1.bf16.msra.mxu0 0
      %2993 = vmatprep.subr.bf16.mxu0 0
      %2994 = vmatpush1.bf16.msra.mxu0 %v1869
      %2995 = vmatprep.subr.bf16.mxu0 0
      %2996 = vmatpush1.bf16.msra.mxu0 %v1868
      %2997 = vmatprep.subr.bf16.mxu0 0
      %2998 = vmatpush2.bf16.msra.mxu0 0
      %2999 = vmatprep.subr.bf16.mxu0 0
      %3000 = vmatpush2.bf16.msra.mxu0 0
      %3001 = vmatprep.subr.bf16.mxu0 0
      %3002 = vmatpush2.bf16.msra.mxu0 0
      %3003 = vmatprep.subr.bf16.mxu0 0
      %3004 = vmatpush2.bf16.msra.mxu0 0
      %3005 = vmatprep.subr.bf16.mxu0 0
      %3006 = vmatpush2.bf16.msra.mxu0 0
      %3007 = vmatprep.subr.bf16.mxu0 0
      %3008 = vmatpush2.bf16.msra.mxu0 0
      %3009 = vmatprep.subr.bf16.mxu0 0
      %3010 = vmatpush2.bf16.msra.mxu0 0
      %3011 = vmatprep.subr.bf16.mxu0 0
      %3012 = vmatpush2.bf16.msra.mxu0 0
      %3013 = vmatprep.mubr.bf16.mxu0 0
      %3014 = vmatmul.mubr.bf16.gmra.mxu0 %v2979
      %v3015 = vpop.f32.mrf.mxu0
      %v3016 = vadd.f32 0.0, %v3015
      %v3017 = vpop.f32.mrf.mxu0
      %v3018 = vpop.f32.mrf.mxu0
      %v3019 = vadd.f32 0.0, %v3018
      %v3020 = vpop.f32.mrf.mxu0
      %3021 = vdwg.mxu0
      %3022 = vmatprep.subr.bf16.mxu0 0
      %3023 = vmatpush1.bf16.msra.mxu0 0
      %3024 = vmatprep.subr.bf16.mxu0 0
      %3025 = vmatpush1.bf16.msra.mxu0 0
      %3026 = vmatprep.subr.bf16.mxu0 0
      %3027 = vmatpush1.bf16.msra.mxu0 0
      %3028 = vmatprep.subr.bf16.mxu0 0
      %3029 = vmatpush1.bf16.msra.mxu0 0
      %3030 = vmatprep.subr.bf16.mxu0 0
      %3031 = vmatpush1.bf16.msra.mxu0 0
      %3032 = vmatprep.subr.bf16.mxu0 0
      %3033 = vmatpush1.bf16.msra.mxu0 0
      %3034 = vmatprep.subr.bf16.mxu0 0
      %3035 = vmatpush1.bf16.msra.mxu0 %v1925
      %3036 = vmatprep.subr.bf16.mxu0 0
      %3037 = vmatpush1.bf16.msra.mxu0 %v1924
      %3038 = vmatprep.subr.bf16.mxu0 0
      %3039 = vmatpush2.bf16.msra.mxu0 0
      %3040 = vmatprep.subr.bf16.mxu0 0
      %3041 = vmatpush2.bf16.msra.mxu0 0
      %3042 = vmatprep.subr.bf16.mxu0 0
      %3043 = vmatpush2.bf16.msra.mxu0 0
      %3044 = vmatprep.subr.bf16.mxu0 0
      %3045 = vmatpush2.bf16.msra.mxu0 0
      %3046 = vmatprep.subr.bf16.mxu0 0
      %3047 = vmatpush2.bf16.msra.mxu0 0
      %3048 = vmatprep.subr.bf16.mxu0 0
      %3049 = vmatpush2.bf16.msra.mxu0 0
      %3050 = vmatprep.subr.bf16.mxu0 0
      %3051 = vmatpush2.bf16.msra.mxu0 0
      %3052 = vmatprep.subr.bf16.mxu0 0
      %3053 = vmatpush2.bf16.msra.mxu0 0
      %3054 = vmatprep.mubr.bf16.mxu0 0
      %3055 = vmatmul.mubr.bf16.gmra.mxu0 %v2979
      %v3056 = vpop.f32.mrf.mxu0
      %v3057 = vadd.f32 0.0, %v3056
      %v3058 = vpop.f32.mrf.mxu0
      %v3059 = vpop.f32.mrf.mxu0
      %v3060 = vadd.f32 0.0, %v3059
      %v3061 = vpop.f32.mrf.mxu0
      %3062 = vdwg.mxu0
      %3063 = vmatprep.subr.bf16.mxu0 0
      %3064 = vmatpush1.bf16.msra.mxu0 0
      %3065 = vmatprep.subr.bf16.mxu0 0
      %3066 = vmatpush1.bf16.msra.mxu0 0
      %3067 = vmatprep.subr.bf16.mxu0 0
      %3068 = vmatpush1.bf16.msra.mxu0 0
      %3069 = vmatprep.subr.bf16.mxu0 0
      %3070 = vmatpush1.bf16.msra.mxu0 0
      %3071 = vmatprep.subr.bf16.mxu0 0
      %3072 = vmatpush1.bf16.msra.mxu0 0
      %3073 = vmatprep.subr.bf16.mxu0 0
      %3074 = vmatpush1.bf16.msra.mxu0 0
      %3075 = vmatprep.subr.bf16.mxu0 0
      %3076 = vmatpush1.bf16.msra.mxu0 %v1978
      %3077 = vmatprep.subr.bf16.mxu0 0
      %3078 = vmatpush1.bf16.msra.mxu0 %v1977
      %3079 = vmatprep.subr.bf16.mxu0 0
      %3080 = vmatpush2.bf16.msra.mxu0 0
      %3081 = vmatprep.subr.bf16.mxu0 0
      %3082 = vmatpush2.bf16.msra.mxu0 0
      %3083 = vmatprep.subr.bf16.mxu0 0
      %3084 = vmatpush2.bf16.msra.mxu0 0
      %3085 = vmatprep.subr.bf16.mxu0 0
      %3086 = vmatpush2.bf16.msra.mxu0 0
      %3087 = vmatprep.subr.bf16.mxu0 0
      %3088 = vmatpush2.bf16.msra.mxu0 0
      %3089 = vmatprep.subr.bf16.mxu0 0
      %3090 = vmatpush2.bf16.msra.mxu0 0
      %3091 = vmatprep.subr.bf16.mxu0 0
      %3092 = vmatpush2.bf16.msra.mxu0 0
      %3093 = vmatprep.subr.bf16.mxu0 0
      %3094 = vmatpush2.bf16.msra.mxu0 0
      %3095 = vmatprep.mubr.bf16.mxu0 0
      %3096 = vmatmul.mubr.bf16.gmra.mxu0 %v2979
      %v3097 = vpop.f32.mrf.mxu0
      %v3098 = vadd.f32 %v1859, %v3097
      %v3099 = vpop.f32.mrf.mxu0
      %v3100 = vpop.f32.mrf.mxu0
      %v3101 = vadd.f32 %v1859, %v3100
      %v3102 = vpop.f32.mrf.mxu0
      %3103 = vdwg.mxu0
      %s3104 = scalar_lea.vmem [#allocation4], 96
      %v3105 = vld [vmem:[%s3104] sm:$0xff]
      %v3106 = vld [vmem:[%s3104 + $0x8] sm:$0xff]
      %v3107 = vadd.f32 %v3105, %v3016
      %v3108 = vadd.f32 %v3106, %v3019
      %v3109 = vxor.u32 %v3107, 2147483648
      %v3110 = vxor.u32 %v3108, 2147483648
      %v3111 = vmul.f32 %v3109, 1.442695
      %v3112 = vpow.pop %v3111
      %v3113 = vmul.f32 %v3110, 1.442695
      %v3114 = vpow.pop %v3113
      %v3115 = vadd.f32 %v3112, 1.0
      %v3116 = vadd.f32 %v3114, 1.0
      %v3117 = vrcp.pop %v3115
      %v3118 = vmul.f32 1.0, %v3117
      %v3119 = vrcp.pop %v3116
      %v3120 = vmul.f32 1.0, %v3119
      %s3121 = scalar_lea.vmem [#allocation5], 96
      %v3122 = vld [vmem:[%s3121] sm:$0xff]
      %v3123 = vld [vmem:[%s3121 + $0x8] sm:$0xff]
      %v3124 = vadd.f32 %v3122, %v3057
      %v3125 = vadd.f32 %v3123, %v3060
      %v3126 = vxor.u32 %v3124, 2147483648
      %v3127 = vxor.u32 %v3125, 2147483648
      %v3128 = vmul.f32 %v3126, 1.442695
      %v3129 = vpow.pop %v3128
      %v3130 = vmul.f32 %v3127, 1.442695
      %v3131 = vpow.pop %v3130
      %v3132 = vadd.f32 %v3129, 1.0
      %v3133 = vadd.f32 %v3131, 1.0
      %v3134 = vrcp.pop %v3132
      %v3135 = vmul.f32 1.0, %v3134
      %v3136 = vrcp.pop %v3133
      %v3137 = vmul.f32 1.0, %v3136
      %s3138 = scalar_lea.vmem [#allocation6], 96
      %v3139 = vld [vmem:[%s3138] sm:$0xff]
      %v3140 = vld [vmem:[%s3138 + $0x8] sm:$0xff]
      %v3141 = vmul.f32 %v3118, %v3098
      %v3142 = vmul.f32 %v3120, %v3101
      %v3143 = vadd.f32 %v3139, %v3141
      %v3144 = vadd.f32 %v3140, %v3142
      %v3145 = vtanh.pop %v3143
      %v3146 = vtanh.pop %v3144
      %v3147 = vsub.f32 1.0, %v3135
      %v3148 = vsub.f32 1.0, %v3137
      %v3149 = vmul.f32 %v3147, %v3145
      %v3150 = vmul.f32 %v3148, %v3146
      %v3151 = vmul.f32 %v3135, %v2972
      %v3152 = vmul.f32 %v3137, %v2973
      %v3153 = vadd.f32 %v3149, %v3151
      %v3154 = vadd.f32 %v3150, %v3152
      %s3155 = scalar_lea.vmem [#allocation3], 96
      %3156 = vst.msk [vmem:[%s3155] sm:$0xff] %vm1581, %v3153
      %3157 = vst.msk [vmem:[%s3155 + $0x8] sm:$0xff] %vm1581, %v3154
      %v3158 = vpack.c.bf16 %v3154, %v3153
      %v3160 = vsel %vm1581, %v3158, 0
      %3162 = vmatprep.subr.bf16.mxu0 0
      %3163 = vmatpush1.bf16.msra.mxu0 0
      %3164 = vmatprep.subr.bf16.mxu0 0
      %3165 = vmatpush1.bf16.msra.mxu0 0
      %3166 = vmatprep.subr.bf16.mxu0 0
      %3167 = vmatpush1.bf16.msra.mxu0 0
      %3168 = vmatprep.subr.bf16.mxu0 0
      %3169 = vmatpush1.bf16.msra.mxu0 0
      %3170 = vmatprep.subr.bf16.mxu0 0
      %3171 = vmatpush1.bf16.msra.mxu0 0
      %3172 = vmatprep.subr.bf16.mxu0 0
      %3173 = vmatpush1.bf16.msra.mxu0 0
      %3174 = vmatprep.subr.bf16.mxu0 0
      %3175 = vmatpush1.bf16.msra.mxu0 %v1869
      %3176 = vmatprep.subr.bf16.mxu0 0
      %3177 = vmatpush1.bf16.msra.mxu0 %v1868
      %3178 = vmatprep.subr.bf16.mxu0 0
      %3179 = vmatpush2.bf16.msra.mxu0 0
      %3180 = vmatprep.subr.bf16.mxu0 0
      %3181 = vmatpush2.bf16.msra.mxu0 0
      %3182 = vmatprep.subr.bf16.mxu0 0
      %3183 = vmatpush2.bf16.msra.mxu0 0
      %3184 = vmatprep.subr.bf16.mxu0 0
      %3185 = vmatpush2.bf16.msra.mxu0 0
      %3186 = vmatprep.subr.bf16.mxu0 0
      %3187 = vmatpush2.bf16.msra.mxu0 0
      %3188 = vmatprep.subr.bf16.mxu0 0
      %3189 = vmatpush2.bf16.msra.mxu0 0
      %3190 = vmatprep.subr.bf16.mxu0 0
      %3191 = vmatpush2.bf16.msra.mxu0 0
      %3192 = vmatprep.subr.bf16.mxu0 0
      %3193 = vmatpush2.bf16.msra.mxu0 0
      %3194 = vmatprep.mubr.bf16.mxu0 0
      %3195 = vmatmul.mubr.bf16.gmra.mxu0 %v3160
      %v3196 = vpop.f32.mrf.mxu0
      %v3197 = vadd.f32 0.0, %v3196
      %v3198 = vpop.f32.mrf.mxu0
      %v3199 = vpop.f32.mrf.mxu0
      %v3200 = vadd.f32 0.0, %v3199
      %v3201 = vpop.f32.mrf.mxu0
      %3202 = vdwg.mxu0
      %3203 = vmatprep.subr.bf16.mxu0 0
      %3204 = vmatpush1.bf16.msra.mxu0 0
      %3205 = vmatprep.subr.bf16.mxu0 0
      %3206 = vmatpush1.bf16.msra.mxu0 0
      %3207 = vmatprep.subr.bf16.mxu0 0
      %3208 = vmatpush1.bf16.msra.mxu0 0
      %3209 = vmatprep.subr.bf16.mxu0 0
      %3210 = vmatpush1.bf16.msra.mxu0 0
      %3211 = vmatprep.subr.bf16.mxu0 0
      %3212 = vmatpush1.bf16.msra.mxu0 0
      %3213 = vmatprep.subr.bf16.mxu0 0
      %3214 = vmatpush1.bf16.msra.mxu0 0
      %3215 = vmatprep.subr.bf16.mxu0 0
      %3216 = vmatpush1.bf16.msra.mxu0 %v1925
      %3217 = vmatprep.subr.bf16.mxu0 0
      %3218 = vmatpush1.bf16.msra.mxu0 %v1924
      %3219 = vmatprep.subr.bf16.mxu0 0
      %3220 = vmatpush2.bf16.msra.mxu0 0
      %3221 = vmatprep.subr.bf16.mxu0 0
      %3222 = vmatpush2.bf16.msra.mxu0 0
      %3223 = vmatprep.subr.bf16.mxu0 0
      %3224 = vmatpush2.bf16.msra.mxu0 0
      %3225 = vmatprep.subr.bf16.mxu0 0
      %3226 = vmatpush2.bf16.msra.mxu0 0
      %3227 = vmatprep.subr.bf16.mxu0 0
      %3228 = vmatpush2.bf16.msra.mxu0 0
      %3229 = vmatprep.subr.bf16.mxu0 0
      %3230 = vmatpush2.bf16.msra.mxu0 0
      %3231 = vmatprep.subr.bf16.mxu0 0
      %3232 = vmatpush2.bf16.msra.mxu0 0
      %3233 = vmatprep.subr.bf16.mxu0 0
      %3234 = vmatpush2.bf16.msra.mxu0 0
      %3235 = vmatprep.mubr.bf16.mxu0 0
      %3236 = vmatmul.mubr.bf16.gmra.mxu0 %v3160
      %v3237 = vpop.f32.mrf.mxu0
      %v3238 = vadd.f32 0.0, %v3237
      %v3239 = vpop.f32.mrf.mxu0
      %v3240 = vpop.f32.mrf.mxu0
      %v3241 = vadd.f32 0.0, %v3240
      %v3242 = vpop.f32.mrf.mxu0
      %3243 = vdwg.mxu0
      %3244 = vmatprep.subr.bf16.mxu0 0
      %3245 = vmatpush1.bf16.msra.mxu0 0
      %3246 = vmatprep.subr.bf16.mxu0 0
      %3247 = vmatpush1.bf16.msra.mxu0 0
      %3248 = vmatprep.subr.bf16.mxu0 0
      %3249 = vmatpush1.bf16.msra.mxu0 0
      %3250 = vmatprep.subr.bf16.mxu0 0
      %3251 = vmatpush1.bf16.msra.mxu0 0
      %3252 = vmatprep.subr.bf16.mxu0 0
      %3253 = vmatpush1.bf16.msra.mxu0 0
      %3254 = vmatprep.subr.bf16.mxu0 0
      %3255 = vmatpush1.bf16.msra.mxu0 0
      %3256 = vmatprep.subr.bf16.mxu0 0
      %3257 = vmatpush1.bf16.msra.mxu0 %v1978
      %3258 = vmatprep.subr.bf16.mxu0 0
      %3259 = vmatpush1.bf16.msra.mxu0 %v1977
      %3260 = vmatprep.subr.bf16.mxu0 0
      %3261 = vmatpush2.bf16.msra.mxu0 0
      %3262 = vmatprep.subr.bf16.mxu0 0
      %3263 = vmatpush2.bf16.msra.mxu0 0
      %3264 = vmatprep.subr.bf16.mxu0 0
      %3265 = vmatpush2.bf16.msra.mxu0 0
      %3266 = vmatprep.subr.bf16.mxu0 0
      %3267 = vmatpush2.bf16.msra.mxu0 0
      %3268 = vmatprep.subr.bf16.mxu0 0
      %3269 = vmatpush2.bf16.msra.mxu0 0
      %3270 = vmatprep.subr.bf16.mxu0 0
      %3271 = vmatpush2.bf16.msra.mxu0 0
      %3272 = vmatprep.subr.bf16.mxu0 0
      %3273 = vmatpush2.bf16.msra.mxu0 0
      %3274 = vmatprep.subr.bf16.mxu0 0
      %3275 = vmatpush2.bf16.msra.mxu0 0
      %3276 = vmatprep.mubr.bf16.mxu0 0
      %3277 = vmatmul.mubr.bf16.gmra.mxu0 %v3160
      %v3278 = vpop.f32.mrf.mxu0
      %v3279 = vadd.f32 %v1859, %v3278
      %v3280 = vpop.f32.mrf.mxu0
      %v3281 = vpop.f32.mrf.mxu0
      %v3282 = vadd.f32 %v1859, %v3281
      %v3283 = vpop.f32.mrf.mxu0
      %3284 = vdwg.mxu0
      %s3285 = scalar_lea.vmem [#allocation4], 112
      %v3286 = vld [vmem:[%s3285] sm:$0xff]
      %v3287 = vld [vmem:[%s3285 + $0x8] sm:$0xff]
      %v3288 = vadd.f32 %v3286, %v3197
      %v3289 = vadd.f32 %v3287, %v3200
      %v3290 = vxor.u32 %v3288, 2147483648
      %v3291 = vxor.u32 %v3289, 2147483648
      %v3292 = vmul.f32 %v3290, 1.442695
      %v3293 = vpow.pop %v3292
      %v3294 = vmul.f32 %v3291, 1.442695
      %v3295 = vpow.pop %v3294
      %v3296 = vadd.f32 %v3293, 1.0
      %v3297 = vadd.f32 %v3295, 1.0
      %v3298 = vrcp.pop %v3296
      %v3299 = vmul.f32 1.0, %v3298
      %v3300 = vrcp.pop %v3297
      %v3301 = vmul.f32 1.0, %v3300
      %s3302 = scalar_lea.vmem [#allocation5], 112
      %v3303 = vld [vmem:[%s3302] sm:$0xff]
      %v3304 = vld [vmem:[%s3302 + $0x8] sm:$0xff]
      %v3305 = vadd.f32 %v3303, %v3238
      %v3306 = vadd.f32 %v3304, %v3241
      %v3307 = vxor.u32 %v3305, 2147483648
      %v3308 = vxor.u32 %v3306, 2147483648
      %v3309 = vmul.f32 %v3307, 1.442695
      %v3310 = vpow.pop %v3309
      %v3311 = vmul.f32 %v3308, 1.442695
      %v3312 = vpow.pop %v3311
      %v3313 = vadd.f32 %v3310, 1.0
      %v3314 = vadd.f32 %v3312, 1.0
      %v3315 = vrcp.pop %v3313
      %v3316 = vmul.f32 1.0, %v3315
      %v3317 = vrcp.pop %v3314
      %v3318 = vmul.f32 1.0, %v3317
      %s3319 = scalar_lea.vmem [#allocation6], 112
      %v3320 = vld [vmem:[%s3319] sm:$0xff]
      %v3321 = vld [vmem:[%s3319 + $0x8] sm:$0xff]
      %v3322 = vmul.f32 %v3299, %v3279
      %v3323 = vmul.f32 %v3301, %v3282
      %v3324 = vadd.f32 %v3320, %v3322
      %v3325 = vadd.f32 %v3321, %v3323
      %v3326 = vtanh.pop %v3324
      %v3327 = vtanh.pop %v3325
      %v3328 = vsub.f32 1.0, %v3316
      %v3329 = vsub.f32 1.0, %v3318
      %v3330 = vmul.f32 %v3328, %v3326
      %v3331 = vmul.f32 %v3329, %v3327
      %v3332 = vmul.f32 %v3316, %v3153
      %v3333 = vmul.f32 %v3318, %v3154
      %v3334 = vadd.f32 %v3330, %v3332
      %v3335 = vadd.f32 %v3331, %v3333
      %s3336 = scalar_lea.vmem [#allocation3], 112
      %3337 = vst.msk [vmem:[%s3336] sm:$0xff] %vm1581, %v3334
      %3338 = vst.msk [vmem:[%s3336 + $0x8] sm:$0xff] %vm1581, %v3335
      %v3339 = vld [vmem:[%s6] sm:$0xf]
      %v3340 = vld [vmem:[#allocation3] sm:$0xff]
      %v3341 = vld [vmem:[#allocation3 + $0x8] sm:$0xff]
      %v3342 = vld [vmem:[#allocation3 + $0x10] sm:$0xff]
      %v3343 = vld [vmem:[#allocation3 + $0x18] sm:$0xff]
      %v3344 = vld [vmem:[#allocation3 + $0x20] sm:$0xff]
      %v3345 = vld [vmem:[#allocation3 + $0x28] sm:$0xff]
      %v3346 = vld [vmem:[#allocation3 + $0x30] sm:$0xff]
      %v3347 = vld [vmem:[#allocation3 + $0x38] sm:$0xff]
      %v3348 = vld [vmem:[#allocation3 + $0x40] sm:$0xff]
      %v3349 = vld [vmem:[#allocation3 + $0x48] sm:$0xff]
      %v3350 = vld [vmem:[#allocation3 + $0x50] sm:$0xff]
      %v3351 = vld [vmem:[#allocation3 + $0x58] sm:$0xff]
      %v3352 = vld [vmem:[#allocation3 + $0x60] sm:$0xff]
      %v3353 = vld [vmem:[#allocation3 + $0x68] sm:$0xff]
      %v3354 = vld [vmem:[#allocation3 + $0x70] sm:$0xff]
      %v3355 = vld [vmem:[#allocation3 + $0x78] sm:$0xff]
      %v3356 = vpack.c.bf16 %v3341, %v3340
      %v3357 = vpack.c.bf16 %v3343, %v3342
      %v3358 = vpack.c.bf16 %v3345, %v3344
      %v3359 = vpack.c.bf16 %v3347, %v3346
      %v3360 = vpack.c.bf16 %v3349, %v3348
      %v3361 = vpack.c.bf16 %v3351, %v3350
      %v3362 = vpack.c.bf16 %v3353, %v3352
      %v3363 = vpack.c.bf16 %v3355, %v3354
      %v3364 = vld [vmem:[%s4] sm:$0xf]
      %v3365 = vld [vmem:[%s4 + $0x4] sm:$0xf]
      %v3366 = vld [vmem:[%s4 + $0x8] sm:$0xf]
      %v3367 = vld [vmem:[%s4 + $0xc] sm:$0xf]
      %v3368 = vlaneseq
      %v3369 = vshrl.u32 %v3368, 7
      %v3370 = vsub.s32 0, %v3369
      %v3371 = vrot.slane %v3339, %v3370
      %v3376 = vunpack.c.l.b16 %v3364
      %v3377 = vunpack.c.l.b16 %v3365
      %v3378 = vunpack.c.l.b16 %v3366
      %v3379 = vunpack.c.l.b16 %v3367
      %v3380 = vpack.c.b16 %v3377, %v3376
      %v3381 = vpack.c.b16 %v3379, %v3378
      %v3385 = vsel %vm1581, %v3356, 0
      %v3388 = vsel %vm1581, %v3357, 0
      %v3391 = vsel %vm1581, %v3358, 0
      %v3394 = vsel %vm1581, %v3359, 0
      %v3397 = vsel %vm1581, %v3360, 0
      %v3400 = vsel %vm1581, %v3361, 0
      %v3403 = vsel %vm1581, %v3362, 0
      %v3406 = vsel %vm1581, %v3363, 0
      %3408 = vmatprep.subr.bf16.mxu0 0
      %3409 = vmatpush1.bf16.msra.mxu0 0
      %3410 = vmatprep.subr.bf16.mxu0 0
      %3411 = vmatpush1.bf16.msra.mxu0 0
      %3412 = vmatprep.subr.bf16.mxu0 0
      %3413 = vmatpush1.bf16.msra.mxu0 0
      %3414 = vmatprep.subr.bf16.mxu0 0
      %3415 = vmatpush1.bf16.msra.mxu0 0
      %3416 = vmatprep.subr.bf16.mxu0 0
      %3417 = vmatpush1.bf16.msra.mxu0 0
      %3418 = vmatprep.subr.bf16.mxu0 0
      %3419 = vmatpush1.bf16.msra.mxu0 0
      %3420 = vmatprep.subr.bf16.mxu0 0
      %3421 = vmatpush1.bf16.msra.mxu0 %v3381
      %3422 = vmatprep.subr.bf16.mxu0 0
      %3423 = vmatpush1.bf16.msra.mxu0 %v3380
      %3424 = vmatprep.subr.bf16.mxu0 0
      %3425 = vmatpush2.bf16.msra.mxu0 0
      %3426 = vmatprep.subr.bf16.mxu0 0
      %3427 = vmatpush2.bf16.msra.mxu0 0
      %3428 = vmatprep.subr.bf16.mxu0 0
      %3429 = vmatpush2.bf16.msra.mxu0 0
      %3430 = vmatprep.subr.bf16.mxu0 0
      %3431 = vmatpush2.bf16.msra.mxu0 0
      %3432 = vmatprep.subr.bf16.mxu0 0
      %3433 = vmatpush2.bf16.msra.mxu0 0
      %3434 = vmatprep.subr.bf16.mxu0 0
      %3435 = vmatpush2.bf16.msra.mxu0 0
      %3436 = vmatprep.subr.bf16.mxu0 0
      %3437 = vmatpush2.bf16.msra.mxu0 0
      %3438 = vmatprep.subr.bf16.mxu0 0
      %3439 = vmatpush2.bf16.msra.mxu0 0
      %3440 = vmatprep.mubr.bf16.mxu0 0
      %3441 = vmatmul.mubr.bf16.gmra.mxu0 %v3385
      %v3442 = vpop.f32.mrf.mxu0
      %v3443 = vadd.f32 %v3371, %v3442
      %v3444 = vpop.f32.mrf.mxu0
      %v3445 = vpop.f32.mrf.mxu0
      %v3446 = vadd.f32 %v3371, %v3445
      %v3447 = vpop.f32.mrf.mxu0
      %3448 = vmatprep.mubr.bf16.mxu0 0
      %3449 = vmatmul.mubr.bf16.gmra.mxu0 %v3388
      %v3450 = vpop.f32.mrf.mxu0
      %v3451 = vadd.f32 %v3371, %v3450
      %v3452 = vpop.f32.mrf.mxu0
      %v3453 = vpop.f32.mrf.mxu0
      %v3454 = vadd.f32 %v3371, %v3453
      %v3455 = vpop.f32.mrf.mxu0
      %3456 = vmatprep.mubr.bf16.mxu0 0
      %3457 = vmatmul.mubr.bf16.gmra.mxu0 %v3391
      %v3458 = vpop.f32.mrf.mxu0
      %v3459 = vadd.f32 %v3371, %v3458
      %v3460 = vpop.f32.mrf.mxu0
      %v3461 = vpop.f32.mrf.mxu0
      %v3462 = vadd.f32 %v3371, %v3461
      %v3463 = vpop.f32.mrf.mxu0
      %3464 = vmatprep.mubr.bf16.mxu0 0
      %3465 = vmatmul.mubr.bf16.gmra.mxu0 %v3394
      %v3466 = vpop.f32.mrf.mxu0
      %v3467 = vadd.f32 %v3371, %v3466
      %v3468 = vpop.f32.mrf.mxu0
      %v3469 = vpop.f32.mrf.mxu0
      %v3470 = vadd.f32 %v3371, %v3469
      %v3471 = vpop.f32.mrf.mxu0
      %3472 = vmatprep.mubr.bf16.mxu0 0
      %3473 = vmatmul.mubr.bf16.gmra.mxu0 %v3397
      %v3474 = vpop.f32.mrf.mxu0
      %v3475 = vadd.f32 %v3371, %v3474
      %v3476 = vpop.f32.mrf.mxu0
      %v3477 = vpop.f32.mrf.mxu0
      %v3478 = vadd.f32 %v3371, %v3477
      %v3479 = vpop.f32.mrf.mxu0
      %3480 = vmatprep.mubr.bf16.mxu0 0
      %3481 = vmatmul.mubr.bf16.gmra.mxu0 %v3400
      %v3482 = vpop.f32.mrf.mxu0
      %v3483 = vadd.f32 %v3371, %v3482
      %v3484 = vpop.f32.mrf.mxu0
      %v3485 = vpop.f32.mrf.mxu0
      %v3486 = vadd.f32 %v3371, %v3485
      %v3487 = vpop.f32.mrf.mxu0
      %3488 = vmatprep.mubr.bf16.mxu0 0
      %3489 = vmatmul.mubr.bf16.gmra.mxu0 %v3403
      %v3490 = vpop.f32.mrf.mxu0
      %v3491 = vadd.f32 %v3371, %v3490
      %v3492 = vpop.f32.mrf.mxu0
      %v3493 = vpop.f32.mrf.mxu0
      %v3494 = vadd.f32 %v3371, %v3493
      %v3495 = vpop.f32.mrf.mxu0
      %3496 = vmatprep.mubr.bf16.mxu0 0
      %3497 = vmatmul.mubr.bf16.gmra.mxu0 %v3406
      %v3498 = vpop.f32.mrf.mxu0
      %v3499 = vadd.f32 %v3371, %v3498
      %v3500 = vpop.f32.mrf.mxu0
      %v3501 = vpop.f32.mrf.mxu0
      %v3502 = vadd.f32 %v3371, %v3501
      %v3503 = vpop.f32.mrf.mxu0
      %3504 = vdwg.mxu0
      %3505 = vst.msk [vmem:[#allocation4] sm:$0xff] %vm1581, %v3443
      %3506 = vst.msk [vmem:[#allocation4 + $0x8] sm:$0xff] %vm1581, %v3446
      %3507 = vst.msk [vmem:[#allocation4 + $0x10] sm:$0xff] %vm1581, %v3451
      %3508 = vst.msk [vmem:[#allocation4 + $0x18] sm:$0xff] %vm1581, %v3454
      %3509 = vst.msk [vmem:[#allocation4 + $0x20] sm:$0xff] %vm1581, %v3459
      %3510 = vst.msk [vmem:[#allocation4 + $0x28] sm:$0xff] %vm1581, %v3462
      %3511 = vst.msk [vmem:[#allocation4 + $0x30] sm:$0xff] %vm1581, %v3467
      %3512 = vst.msk [vmem:[#allocation4 + $0x38] sm:$0xff] %vm1581, %v3470
      %3513 = vst.msk [vmem:[#allocation4 + $0x40] sm:$0xff] %vm1581, %v3475
      %3514 = vst.msk [vmem:[#allocation4 + $0x48] sm:$0xff] %vm1581, %v3478
      %3515 = vst.msk [vmem:[#allocation4 + $0x50] sm:$0xff] %vm1581, %v3483
      %3516 = vst.msk [vmem:[#allocation4 + $0x58] sm:$0xff] %vm1581, %v3486
      %3517 = vst.msk [vmem:[#allocation4 + $0x60] sm:$0xff] %vm1581, %v3491
      %3518 = vst.msk [vmem:[#allocation4 + $0x68] sm:$0xff] %vm1581, %v3494
      %3519 = vst.msk [vmem:[#allocation4 + $0x70] sm:$0xff] %vm1581, %v3499
      %3520 = vst.msk [vmem:[#allocation4 + $0x78] sm:$0xff] %vm1581, %v3502
      %s3521 = scalar_lea.vmem %s4, 16
      %v3522 = vld [vmem:[%s3521] sm:$0xf]
      %v3523 = vld [vmem:[%s3521 + $0x4] sm:$0xf]
      %v3524 = vld [vmem:[%s3521 + $0x8] sm:$0xf]
      %v3525 = vld [vmem:[%s3521 + $0xc] sm:$0xf]
      %v3526 = vlaneseq
      %v3527 = vshrl.u32 %v3526, 7
      %v3528 = vsub.s32 1, %v3527
      %v3529 = vrot.slane %v3339, %v3528
      %v3534 = vunpack.c.l.b16 %v3522
      %v3535 = vunpack.c.l.b16 %v3523
      %v3536 = vunpack.c.l.b16 %v3524
      %v3537 = vunpack.c.l.b16 %v3525
      %v3538 = vpack.c.b16 %v3535, %v3534
      %v3539 = vpack.c.b16 %v3537, %v3536
      %3542 = vmatprep.subr.bf16.mxu0 0
      %3543 = vmatpush1.bf16.msra.mxu0 0
      %3544 = vmatprep.subr.bf16.mxu0 0
      %3545 = vmatpush1.bf16.msra.mxu0 0
      %3546 = vmatprep.subr.bf16.mxu0 0
      %3547 = vmatpush1.bf16.msra.mxu0 0
      %3548 = vmatprep.subr.bf16.mxu0 0
      %3549 = vmatpush1.bf16.msra.mxu0 0
      %3550 = vmatprep.subr.bf16.mxu0 0
      %3551 = vmatpush1.bf16.msra.mxu0 0
      %3552 = vmatprep.subr.bf16.mxu0 0
      %3553 = vmatpush1.bf16.msra.mxu0 0
      %3554 = vmatprep.subr.bf16.mxu0 0
      %3555 = vmatpush1.bf16.msra.mxu0 %v3539
      %3556 = vmatprep.subr.bf16.mxu0 0
      %3557 = vmatpush1.bf16.msra.mxu0 %v3538
      %3558 = vmatprep.subr.bf16.mxu0 0
      %3559 = vmatpush2.bf16.msra.mxu0 0
      %3560 = vmatprep.subr.bf16.mxu0 0
      %3561 = vmatpush2.bf16.msra.mxu0 0
      %3562 = vmatprep.subr.bf16.mxu0 0
      %3563 = vmatpush2.bf16.msra.mxu0 0
      %3564 = vmatprep.subr.bf16.mxu0 0
      %3565 = vmatpush2.bf16.msra.mxu0 0
      %3566 = vmatprep.subr.bf16.mxu0 0
      %3567 = vmatpush2.bf16.msra.mxu0 0
      %3568 = vmatprep.subr.bf16.mxu0 0
      %3569 = vmatpush2.bf16.msra.mxu0 0
      %3570 = vmatprep.subr.bf16.mxu0 0
      %3571 = vmatpush2.bf16.msra.mxu0 0
      %3572 = vmatprep.subr.bf16.mxu0 0
      %3573 = vmatpush2.bf16.msra.mxu0 0
      %3574 = vmatprep.mubr.bf16.mxu0 0
      %3575 = vmatmul.mubr.bf16.gmra.mxu0 %v3385
      %v3576 = vpop.f32.mrf.mxu0
      %v3577 = vadd.f32 %v3529, %v3576
      %v3578 = vpop.f32.mrf.mxu0
      %v3579 = vpop.f32.mrf.mxu0
      %v3580 = vadd.f32 %v3529, %v3579
      %v3581 = vpop.f32.mrf.mxu0
      %3582 = vmatprep.mubr.bf16.mxu0 0
      %3583 = vmatmul.mubr.bf16.gmra.mxu0 %v3388
      %v3584 = vpop.f32.mrf.mxu0
      %v3585 = vadd.f32 %v3529, %v3584
      %v3586 = vpop.f32.mrf.mxu0
      %v3587 = vpop.f32.mrf.mxu0
      %v3588 = vadd.f32 %v3529, %v3587
      %v3589 = vpop.f32.mrf.mxu0
      %3590 = vmatprep.mubr.bf16.mxu0 0
      %3591 = vmatmul.mubr.bf16.gmra.mxu0 %v3391
      %v3592 = vpop.f32.mrf.mxu0
      %v3593 = vadd.f32 %v3529, %v3592
      %v3594 = vpop.f32.mrf.mxu0
      %v3595 = vpop.f32.mrf.mxu0
      %v3596 = vadd.f32 %v3529, %v3595
      %v3597 = vpop.f32.mrf.mxu0
      %3598 = vmatprep.mubr.bf16.mxu0 0
      %3599 = vmatmul.mubr.bf16.gmra.mxu0 %v3394
      %v3600 = vpop.f32.mrf.mxu0
      %v3601 = vadd.f32 %v3529, %v3600
      %v3602 = vpop.f32.mrf.mxu0
      %v3603 = vpop.f32.mrf.mxu0
      %v3604 = vadd.f32 %v3529, %v3603
      %v3605 = vpop.f32.mrf.mxu0
      %3606 = vmatprep.mubr.bf16.mxu0 0
      %3607 = vmatmul.mubr.bf16.gmra.mxu0 %v3397
      %v3608 = vpop.f32.mrf.mxu0
      %v3609 = vadd.f32 %v3529, %v3608
      %v3610 = vpop.f32.mrf.mxu0
      %v3611 = vpop.f32.mrf.mxu0
      %v3612 = vadd.f32 %v3529, %v3611
      %v3613 = vpop.f32.mrf.mxu0
      %3614 = vmatprep.mubr.bf16.mxu0 0
      %3615 = vmatmul.mubr.bf16.gmra.mxu0 %v3400
      %v3616 = vpop.f32.mrf.mxu0
      %v3617 = vadd.f32 %v3529, %v3616
      %v3618 = vpop.f32.mrf.mxu0
      %v3619 = vpop.f32.mrf.mxu0
      %v3620 = vadd.f32 %v3529, %v3619
      %v3621 = vpop.f32.mrf.mxu0
      %3622 = vmatprep.mubr.bf16.mxu0 0
      %3623 = vmatmul.mubr.bf16.gmra.mxu0 %v3403
      %v3624 = vpop.f32.mrf.mxu0
      %v3625 = vadd.f32 %v3529, %v3624
      %v3626 = vpop.f32.mrf.mxu0
      %v3627 = vpop.f32.mrf.mxu0
      %v3628 = vadd.f32 %v3529, %v3627
      %v3629 = vpop.f32.mrf.mxu0
      %3630 = vmatprep.mubr.bf16.mxu0 0
      %3631 = vmatmul.mubr.bf16.gmra.mxu0 %v3406
      %v3632 = vpop.f32.mrf.mxu0
      %v3633 = vadd.f32 %v3529, %v3632
      %v3634 = vpop.f32.mrf.mxu0
      %v3635 = vpop.f32.mrf.mxu0
      %v3636 = vadd.f32 %v3529, %v3635
      %v3637 = vpop.f32.mrf.mxu0
      %3638 = vdwg.mxu0
      %3639 = vst.msk [vmem:[#allocation5] sm:$0xff] %vm1581, %v3577
      %3640 = vst.msk [vmem:[#allocation5 + $0x8] sm:$0xff] %vm1581, %v3580
      %3641 = vst.msk [vmem:[#allocation5 + $0x10] sm:$0xff] %vm1581, %v3585
      %3642 = vst.msk [vmem:[#allocation5 + $0x18] sm:$0xff] %vm1581, %v3588
      %3643 = vst.msk [vmem:[#allocation5 + $0x20] sm:$0xff] %vm1581, %v3593
      %3644 = vst.msk [vmem:[#allocation5 + $0x28] sm:$0xff] %vm1581, %v3596
      %3645 = vst.msk [vmem:[#allocation5 + $0x30] sm:$0xff] %vm1581, %v3601
      %3646 = vst.msk [vmem:[#allocation5 + $0x38] sm:$0xff] %vm1581, %v3604
      %3647 = vst.msk [vmem:[#allocation5 + $0x40] sm:$0xff] %vm1581, %v3609
      %3648 = vst.msk [vmem:[#allocation5 + $0x48] sm:$0xff] %vm1581, %v3612
      %3649 = vst.msk [vmem:[#allocation5 + $0x50] sm:$0xff] %vm1581, %v3617
      %3650 = vst.msk [vmem:[#allocation5 + $0x58] sm:$0xff] %vm1581, %v3620
      %3651 = vst.msk [vmem:[#allocation5 + $0x60] sm:$0xff] %vm1581, %v3625
      %3652 = vst.msk [vmem:[#allocation5 + $0x68] sm:$0xff] %vm1581, %v3628
      %3653 = vst.msk [vmem:[#allocation5 + $0x70] sm:$0xff] %vm1581, %v3633
      %3654 = vst.msk [vmem:[#allocation5 + $0x78] sm:$0xff] %vm1581, %v3636
      %s3655 = scalar_lea.vmem %s4, 32
      %v3656 = vld [vmem:[%s3655] sm:$0xf]
      %v3657 = vld [vmem:[%s3655 + $0x4] sm:$0xf]
      %v3658 = vld [vmem:[%s3655 + $0x8] sm:$0xf]
      %v3659 = vld [vmem:[%s3655 + $0xc] sm:$0xf]
      %v3660 = vlaneseq
      %v3661 = vshrl.u32 %v3660, 7
      %v3662 = vsub.s32 2, %v3661
      %v3663 = vrot.slane %v3339, %v3662
      %v3668 = vunpack.c.l.b16 %v3656
      %v3669 = vunpack.c.l.b16 %v3657
      %v3670 = vunpack.c.l.b16 %v3658
      %v3671 = vunpack.c.l.b16 %v3659
      %v3672 = vpack.c.b16 %v3669, %v3668
      %v3673 = vpack.c.b16 %v3671, %v3670
      %3676 = vmatprep.subr.bf16.mxu0 0
      %3677 = vmatpush1.bf16.msra.mxu0 0
      %3678 = vmatprep.subr.bf16.mxu0 0
      %3679 = vmatpush1.bf16.msra.mxu0 0
      %3680 = vmatprep.subr.bf16.mxu0 0
      %3681 = vmatpush1.bf16.msra.mxu0 0
      %3682 = vmatprep.subr.bf16.mxu0 0
      %3683 = vmatpush1.bf16.msra.mxu0 0
      %3684 = vmatprep.subr.bf16.mxu0 0
      %3685 = vmatpush1.bf16.msra.mxu0 0
      %3686 = vmatprep.subr.bf16.mxu0 0
      %3687 = vmatpush1.bf16.msra.mxu0 0
      %3688 = vmatprep.subr.bf16.mxu0 0
      %3689 = vmatpush1.bf16.msra.mxu0 %v3673
      %3690 = vmatprep.subr.bf16.mxu0 0
      %3691 = vmatpush1.bf16.msra.mxu0 %v3672
      %3692 = vmatprep.subr.bf16.mxu0 0
      %3693 = vmatpush2.bf16.msra.mxu0 0
      %3694 = vmatprep.subr.bf16.mxu0 0
      %3695 = vmatpush2.bf16.msra.mxu0 0
      %3696 = vmatprep.subr.bf16.mxu0 0
      %3697 = vmatpush2.bf16.msra.mxu0 0
      %3698 = vmatprep.subr.bf16.mxu0 0
      %3699 = vmatpush2.bf16.msra.mxu0 0
      %3700 = vmatprep.subr.bf16.mxu0 0
      %3701 = vmatpush2.bf16.msra.mxu0 0
      %3702 = vmatprep.subr.bf16.mxu0 0
      %3703 = vmatpush2.bf16.msra.mxu0 0
      %3704 = vmatprep.subr.bf16.mxu0 0
      %3705 = vmatpush2.bf16.msra.mxu0 0
      %3706 = vmatprep.subr.bf16.mxu0 0
      %3707 = vmatpush2.bf16.msra.mxu0 0
      %3708 = vmatprep.mubr.bf16.mxu0 0
      %3709 = vmatmul.mubr.bf16.gmra.mxu0 %v3385
      %v3710 = vpop.f32.mrf.mxu0
      %v3711 = vadd.f32 %v3663, %v3710
      %v3712 = vpop.f32.mrf.mxu0
      %v3713 = vpop.f32.mrf.mxu0
      %v3714 = vadd.f32 %v3663, %v3713
      %v3715 = vpop.f32.mrf.mxu0
      %3716 = vmatprep.mubr.bf16.mxu0 0
      %3717 = vmatmul.mubr.bf16.gmra.mxu0 %v3388
      %v3718 = vpop.f32.mrf.mxu0
      %v3719 = vadd.f32 %v3663, %v3718
      %v3720 = vpop.f32.mrf.mxu0
      %v3721 = vpop.f32.mrf.mxu0
      %v3722 = vadd.f32 %v3663, %v3721
      %v3723 = vpop.f32.mrf.mxu0
      %3724 = vmatprep.mubr.bf16.mxu0 0
      %3725 = vmatmul.mubr.bf16.gmra.mxu0 %v3391
      %v3726 = vpop.f32.mrf.mxu0
      %v3727 = vadd.f32 %v3663, %v3726
      %v3728 = vpop.f32.mrf.mxu0
      %v3729 = vpop.f32.mrf.mxu0
      %v3730 = vadd.f32 %v3663, %v3729
      %v3731 = vpop.f32.mrf.mxu0
      %3732 = vmatprep.mubr.bf16.mxu0 0
      %3733 = vmatmul.mubr.bf16.gmra.mxu0 %v3394
      %v3734 = vpop.f32.mrf.mxu0
      %v3735 = vadd.f32 %v3663, %v3734
      %v3736 = vpop.f32.mrf.mxu0
      %v3737 = vpop.f32.mrf.mxu0
      %v3738 = vadd.f32 %v3663, %v3737
      %v3739 = vpop.f32.mrf.mxu0
      %3740 = vmatprep.mubr.bf16.mxu0 0
      %3741 = vmatmul.mubr.bf16.gmra.mxu0 %v3397
      %v3742 = vpop.f32.mrf.mxu0
      %v3743 = vadd.f32 %v3663, %v3742
      %v3744 = vpop.f32.mrf.mxu0
      %v3745 = vpop.f32.mrf.mxu0
      %v3746 = vadd.f32 %v3663, %v3745
      %v3747 = vpop.f32.mrf.mxu0
      %3748 = vmatprep.mubr.bf16.mxu0 0
      %3749 = vmatmul.mubr.bf16.gmra.mxu0 %v3400
      %v3750 = vpop.f32.mrf.mxu0
      %v3751 = vadd.f32 %v3663, %v3750
      %v3752 = vpop.f32.mrf.mxu0
      %v3753 = vpop.f32.mrf.mxu0
      %v3754 = vadd.f32 %v3663, %v3753
      %v3755 = vpop.f32.mrf.mxu0
      %3756 = vmatprep.mubr.bf16.mxu0 0
      %3757 = vmatmul.mubr.bf16.gmra.mxu0 %v3403
      %v3758 = vpop.f32.mrf.mxu0
      %v3759 = vadd.f32 %v3663, %v3758
      %v3760 = vpop.f32.mrf.mxu0
      %v3761 = vpop.f32.mrf.mxu0
      %v3762 = vadd.f32 %v3663, %v3761
      %v3763 = vpop.f32.mrf.mxu0
      %3764 = vmatprep.mubr.bf16.mxu0 0
      %3765 = vmatmul.mubr.bf16.gmra.mxu0 %v3406
      %v3766 = vpop.f32.mrf.mxu0
      %v3767 = vadd.f32 %v3663, %v3766
      %v3768 = vpop.f32.mrf.mxu0
      %v3769 = vpop.f32.mrf.mxu0
      %v3770 = vadd.f32 %v3663, %v3769
      %v3771 = vpop.f32.mrf.mxu0
      %3772 = vdwg.mxu0
      %3773 = vst.msk [vmem:[#allocation6] sm:$0xff] %vm1581, %v3711
      %3774 = vst.msk [vmem:[#allocation6 + $0x8] sm:$0xff] %vm1581, %v3714
      %3775 = vst.msk [vmem:[#allocation6 + $0x10] sm:$0xff] %vm1581, %v3719
      %3776 = vst.msk [vmem:[#allocation6 + $0x18] sm:$0xff] %vm1581, %v3722
      %3777 = vst.msk [vmem:[#allocation6 + $0x20] sm:$0xff] %vm1581, %v3727
      %3778 = vst.msk [vmem:[#allocation6 + $0x28] sm:$0xff] %vm1581, %v3730
      %3779 = vst.msk [vmem:[#allocation6 + $0x30] sm:$0xff] %vm1581, %v3735
      %3780 = vst.msk [vmem:[#allocation6 + $0x38] sm:$0xff] %vm1581, %v3738
      %3781 = vst.msk [vmem:[#allocation6 + $0x40] sm:$0xff] %vm1581, %v3743
      %3782 = vst.msk [vmem:[#allocation6 + $0x48] sm:$0xff] %vm1581, %v3746
      %3783 = vst.msk [vmem:[#allocation6 + $0x50] sm:$0xff] %vm1581, %v3751
      %3784 = vst.msk [vmem:[#allocation6 + $0x58] sm:$0xff] %vm1581, %v3754
      %3785 = vst.msk [vmem:[#allocation6 + $0x60] sm:$0xff] %vm1581, %v3759
      %3786 = vst.msk [vmem:[#allocation6 + $0x68] sm:$0xff] %vm1581, %v3762
      %3787 = vst.msk [vmem:[#allocation6 + $0x70] sm:$0xff] %vm1581, %v3767
      %3788 = vst.msk [vmem:[#allocation6 + $0x78] sm:$0xff] %vm1581, %v3770
      %v3789 = vld [vmem:[%s5] sm:$0xf]
      %v3790 = vld [vmem:[%s5 + $0x4] sm:$0xf]
      %v3791 = vld [vmem:[%s5 + $0x8] sm:$0xf]
      %v3792 = vld [vmem:[%s5 + $0xc] sm:$0xf]
      %s3793 = scalar_lea.vmem %s5, 16
      %v3794 = vld [vmem:[%s3793] sm:$0xf]
      %v3795 = vld [vmem:[%s3793 + $0x4] sm:$0xf]
      %v3796 = vld [vmem:[%s3793 + $0x8] sm:$0xf]
      %v3797 = vld [vmem:[%s3793 + $0xc] sm:$0xf]
      %s3798 = scalar_lea.vmem %s5, 32
      %v3799 = vld [vmem:[%s3798] sm:$0xf]
      %v3800 = vld [vmem:[%s3798 + $0x4] sm:$0xf]
      %v3801 = vld [vmem:[%s3798 + $0x8] sm:$0xf]
      %v3802 = vld [vmem:[%s3798 + $0xc] sm:$0xf]
      %v3803 = vlaneseq
      %v3804 = vshrl.u32 %v3803, 7
      %v3805 = vsub.s32 3, %v3804
      %v3806 = vrot.slane %v3339, %v3805
      %v3811 = vunpack.c.l.b16 %v3789
      %v3812 = vunpack.c.l.b16 %v3790
      %v3813 = vunpack.c.l.b16 %v3791
      %v3814 = vunpack.c.l.b16 %v3792
      %v3815 = vpack.c.b16 %v3812, %v3811
      %v3816 = vpack.c.b16 %v3814, %v3813
      %3819 = vmatprep.subr.bf16.mxu0 0
      %3820 = vmatpush1.bf16.msra.mxu0 0
      %3821 = vmatprep.subr.bf16.mxu0 0
      %3822 = vmatpush1.bf16.msra.mxu0 0
      %3823 = vmatprep.subr.bf16.mxu0 0
      %3824 = vmatpush1.bf16.msra.mxu0 0
      %3825 = vmatprep.subr.bf16.mxu0 0
      %3826 = vmatpush1.bf16.msra.mxu0 0
      %3827 = vmatprep.subr.bf16.mxu0 0
      %3828 = vmatpush1.bf16.msra.mxu0 0
      %3829 = vmatprep.subr.bf16.mxu0 0
      %3830 = vmatpush1.bf16.msra.mxu0 0
      %3831 = vmatprep.subr.bf16.mxu0 0
      %3832 = vmatpush1.bf16.msra.mxu0 %v3816
      %3833 = vmatprep.subr.bf16.mxu0 0
      %3834 = vmatpush1.bf16.msra.mxu0 %v3815
      %3835 = vmatprep.subr.bf16.mxu0 0
      %3836 = vmatpush2.bf16.msra.mxu0 0
      %3837 = vmatprep.subr.bf16.mxu0 0
      %3838 = vmatpush2.bf16.msra.mxu0 0
      %3839 = vmatprep.subr.bf16.mxu0 0
      %3840 = vmatpush2.bf16.msra.mxu0 0
      %3841 = vmatprep.subr.bf16.mxu0 0
      %3842 = vmatpush2.bf16.msra.mxu0 0
      %3843 = vmatprep.subr.bf16.mxu0 0
      %3844 = vmatpush2.bf16.msra.mxu0 0
      %3845 = vmatprep.subr.bf16.mxu0 0
      %3846 = vmatpush2.bf16.msra.mxu0 0
      %3847 = vmatprep.subr.bf16.mxu0 0
      %3848 = vmatpush2.bf16.msra.mxu0 0
      %3849 = vmatprep.subr.bf16.mxu0 0
      %3850 = vmatpush2.bf16.msra.mxu0 0
      %3851 = vmatprep.mubr.bf16.mxu0 0
      %3852 = vmatmul.mubr.bf16.gmra.mxu0 %v1873
      %v3853 = vpop.f32.mrf.mxu0
      %v3854 = vadd.f32 0.0, %v3853
      %v3855 = vpop.f32.mrf.mxu0
      %v3856 = vpop.f32.mrf.mxu0
      %v3857 = vadd.f32 0.0, %v3856
      %v3858 = vpop.f32.mrf.mxu0
      %3859 = vdwg.mxu0
      %v3864 = vunpack.c.l.b16 %v3794
      %v3865 = vunpack.c.l.b16 %v3795
      %v3866 = vunpack.c.l.b16 %v3796
      %v3867 = vunpack.c.l.b16 %v3797
      %v3868 = vpack.c.b16 %v3865, %v3864
      %v3869 = vpack.c.b16 %v3867, %v3866
      %3872 = vmatprep.subr.bf16.mxu0 0
      %3873 = vmatpush1.bf16.msra.mxu0 0
      %3874 = vmatprep.subr.bf16.mxu0 0
      %3875 = vmatpush1.bf16.msra.mxu0 0
      %3876 = vmatprep.subr.bf16.mxu0 0
      %3877 = vmatpush1.bf16.msra.mxu0 0
      %3878 = vmatprep.subr.bf16.mxu0 0
      %3879 = vmatpush1.bf16.msra.mxu0 0
      %3880 = vmatprep.subr.bf16.mxu0 0
      %3881 = vmatpush1.bf16.msra.mxu0 0
      %3882 = vmatprep.subr.bf16.mxu0 0
      %3883 = vmatpush1.bf16.msra.mxu0 0
      %3884 = vmatprep.subr.bf16.mxu0 0
      %3885 = vmatpush1.bf16.msra.mxu0 %v3869
      %3886 = vmatprep.subr.bf16.mxu0 0
      %3887 = vmatpush1.bf16.msra.mxu0 %v3868
      %3888 = vmatprep.subr.bf16.mxu0 0
      %3889 = vmatpush2.bf16.msra.mxu0 0
      %3890 = vmatprep.subr.bf16.mxu0 0
      %3891 = vmatpush2.bf16.msra.mxu0 0
      %3892 = vmatprep.subr.bf16.mxu0 0
      %3893 = vmatpush2.bf16.msra.mxu0 0
      %3894 = vmatprep.subr.bf16.mxu0 0
      %3895 = vmatpush2.bf16.msra.mxu0 0
      %3896 = vmatprep.subr.bf16.mxu0 0
      %3897 = vmatpush2.bf16.msra.mxu0 0
      %3898 = vmatprep.subr.bf16.mxu0 0
      %3899 = vmatpush2.bf16.msra.mxu0 0
      %3900 = vmatprep.subr.bf16.mxu0 0
      %3901 = vmatpush2.bf16.msra.mxu0 0
      %3902 = vmatprep.subr.bf16.mxu0 0
      %3903 = vmatpush2.bf16.msra.mxu0 0
      %3904 = vmatprep.mubr.bf16.mxu0 0
      %3905 = vmatmul.mubr.bf16.gmra.mxu0 %v1873
      %v3906 = vpop.f32.mrf.mxu0
      %v3907 = vadd.f32 0.0, %v3906
      %v3908 = vpop.f32.mrf.mxu0
      %v3909 = vpop.f32.mrf.mxu0
      %v3910 = vadd.f32 0.0, %v3909
      %v3911 = vpop.f32.mrf.mxu0
      %3912 = vdwg.mxu0
      %v3917 = vunpack.c.l.b16 %v3799
      %v3918 = vunpack.c.l.b16 %v3800
      %v3919 = vunpack.c.l.b16 %v3801
      %v3920 = vunpack.c.l.b16 %v3802
      %v3921 = vpack.c.b16 %v3918, %v3917
      %v3922 = vpack.c.b16 %v3920, %v3919
      %3925 = vmatprep.subr.bf16.mxu0 0
      %3926 = vmatpush1.bf16.msra.mxu0 0
      %3927 = vmatprep.subr.bf16.mxu0 0
      %3928 = vmatpush1.bf16.msra.mxu0 0
      %3929 = vmatprep.subr.bf16.mxu0 0
      %3930 = vmatpush1.bf16.msra.mxu0 0
      %3931 = vmatprep.subr.bf16.mxu0 0
      %3932 = vmatpush1.bf16.msra.mxu0 0
      %3933 = vmatprep.subr.bf16.mxu0 0
      %3934 = vmatpush1.bf16.msra.mxu0 0
      %3935 = vmatprep.subr.bf16.mxu0 0
      %3936 = vmatpush1.bf16.msra.mxu0 0
      %3937 = vmatprep.subr.bf16.mxu0 0
      %3938 = vmatpush1.bf16.msra.mxu0 %v3922
      %3939 = vmatprep.subr.bf16.mxu0 0
      %3940 = vmatpush1.bf16.msra.mxu0 %v3921
      %3941 = vmatprep.subr.bf16.mxu0 0
      %3942 = vmatpush2.bf16.msra.mxu0 0
      %3943 = vmatprep.subr.bf16.mxu0 0
      %3944 = vmatpush2.bf16.msra.mxu0 0
      %3945 = vmatprep.subr.bf16.mxu0 0
      %3946 = vmatpush2.bf16.msra.mxu0 0
      %3947 = vmatprep.subr.bf16.mxu0 0
      %3948 = vmatpush2.bf16.msra.mxu0 0
      %3949 = vmatprep.subr.bf16.mxu0 0
      %3950 = vmatpush2.bf16.msra.mxu0 0
      %3951 = vmatprep.subr.bf16.mxu0 0
      %3952 = vmatpush2.bf16.msra.mxu0 0
      %3953 = vmatprep.subr.bf16.mxu0 0
      %3954 = vmatpush2.bf16.msra.mxu0 0
      %3955 = vmatprep.subr.bf16.mxu0 0
      %3956 = vmatpush2.bf16.msra.mxu0 0
      %3957 = vmatprep.mubr.bf16.mxu0 0
      %3958 = vmatmul.mubr.bf16.gmra.mxu0 %v1873
      %v3959 = vpop.f32.mrf.mxu0
      %v3960 = vadd.f32 %v3806, %v3959
      %v3961 = vpop.f32.mrf.mxu0
      %v3962 = vpop.f32.mrf.mxu0
      %v3963 = vadd.f32 %v3806, %v3962
      %v3964 = vpop.f32.mrf.mxu0
      %3965 = vdwg.mxu0
      %v3966 = vld [vmem:[#allocation4] sm:$0xff]
      %v3967 = vld [vmem:[#allocation4 + $0x8] sm:$0xff]
      %v3968 = vadd.f32 %v3966, %v3854
      %v3969 = vadd.f32 %v3967, %v3857
      %v3970 = vxor.u32 %v3968, 2147483648
      %v3971 = vxor.u32 %v3969, 2147483648
      %v3972 = vmul.f32 %v3970, 1.442695
      %v3973 = vpow.pop %v3972
      %v3974 = vmul.f32 %v3971, 1.442695
      %v3975 = vpow.pop %v3974
      %v3976 = vadd.f32 %v3973, 1.0
      %v3977 = vadd.f32 %v3975, 1.0
      %v3978 = vrcp.pop %v3976
      %v3979 = vmul.f32 1.0, %v3978
      %v3980 = vrcp.pop %v3977
      %v3981 = vmul.f32 1.0, %v3980
      %v3982 = vld [vmem:[#allocation5] sm:$0xff]
      %v3983 = vld [vmem:[#allocation5 + $0x8] sm:$0xff]
      %v3984 = vadd.f32 %v3982, %v3907
      %v3985 = vadd.f32 %v3983, %v3910
      %v3986 = vxor.u32 %v3984, 2147483648
      %v3987 = vxor.u32 %v3985, 2147483648
      %v3988 = vmul.f32 %v3986, 1.442695
      %v3989 = vpow.pop %v3988
      %v3990 = vmul.f32 %v3987, 1.442695
      %v3991 = vpow.pop %v3990
      %v3992 = vadd.f32 %v3989, 1.0
      %v3993 = vadd.f32 %v3991, 1.0
      %v3994 = vrcp.pop %v3992
      %v3995 = vmul.f32 1.0, %v3994
      %v3996 = vrcp.pop %v3993
      %v3997 = vmul.f32 1.0, %v3996
      %v3998 = vld [vmem:[#allocation6] sm:$0xff]
      %v3999 = vld [vmem:[#allocation6 + $0x8] sm:$0xff]
      %v4000 = vmul.f32 %v3979, %v3960
      %v4001 = vmul.f32 %v3981, %v3963
      %v4002 = vadd.f32 %v3998, %v4000
      %v4003 = vadd.f32 %v3999, %v4001
      %v4004 = vtanh.pop %v4002
      %v4005 = vtanh.pop %v4003
      %v4006 = vsub.f32 1.0, %v3995
      %v4007 = vsub.f32 1.0, %v3997
      %v4008 = vmul.f32 %v4006, %v4004
      %v4009 = vmul.f32 %v4007, %v4005
      %v4010 = vmul.f32 %v3995, 0.0
      %v4011 = vmul.f32 %v3997, 0.0
      %v4012 = vadd.f32 %v4008, %v4010
      %v4013 = vadd.f32 %v4009, %v4011
      %v4014 = vpack.c.bf16 %v4013, %v4012
      %v4016 = vsel %vm1581, %v4014, 0
      %4018 = vmatprep.subr.bf16.mxu0 0
      %4019 = vmatpush1.bf16.msra.mxu0 0
      %4020 = vmatprep.subr.bf16.mxu0 0
      %4021 = vmatpush1.bf16.msra.mxu0 0
      %4022 = vmatprep.subr.bf16.mxu0 0
      %4023 = vmatpush1.bf16.msra.mxu0 0
      %4024 = vmatprep.subr.bf16.mxu0 0
      %4025 = vmatpush1.bf16.msra.mxu0 0
      %4026 = vmatprep.subr.bf16.mxu0 0
      %4027 = vmatpush1.bf16.msra.mxu0 0
      %4028 = vmatprep.subr.bf16.mxu0 0
      %4029 = vmatpush1.bf16.msra.mxu0 0
      %4030 = vmatprep.subr.bf16.mxu0 0
      %4031 = vmatpush1.bf16.msra.mxu0 %v3816
      %4032 = vmatprep.subr.bf16.mxu0 0
      %4033 = vmatpush1.bf16.msra.mxu0 %v3815
      %4034 = vmatprep.subr.bf16.mxu0 0
      %4035 = vmatpush2.bf16.msra.mxu0 0
      %4036 = vmatprep.subr.bf16.mxu0 0
      %4037 = vmatpush2.bf16.msra.mxu0 0
      %4038 = vmatprep.subr.bf16.mxu0 0
      %4039 = vmatpush2.bf16.msra.mxu0 0
      %4040 = vmatprep.subr.bf16.mxu0 0
      %4041 = vmatpush2.bf16.msra.mxu0 0
      %4042 = vmatprep.subr.bf16.mxu0 0
      %4043 = vmatpush2.bf16.msra.mxu0 0
      %4044 = vmatprep.subr.bf16.mxu0 0
      %4045 = vmatpush2.bf16.msra.mxu0 0
      %4046 = vmatprep.subr.bf16.mxu0 0
      %4047 = vmatpush2.bf16.msra.mxu0 0
      %4048 = vmatprep.subr.bf16.mxu0 0
      %4049 = vmatpush2.bf16.msra.mxu0 0
      %4050 = vmatprep.mubr.bf16.mxu0 0
      %4051 = vmatmul.mubr.bf16.gmra.mxu0 %v4016
      %v4052 = vpop.f32.mrf.mxu0
      %v4053 = vadd.f32 0.0, %v4052
      %v4054 = vpop.f32.mrf.mxu0
      %v4055 = vpop.f32.mrf.mxu0
      %v4056 = vadd.f32 0.0, %v4055
      %v4057 = vpop.f32.mrf.mxu0
      %4058 = vdwg.mxu0
      %4059 = vmatprep.subr.bf16.mxu0 0
      %4060 = vmatpush1.bf16.msra.mxu0 0
      %4061 = vmatprep.subr.bf16.mxu0 0
      %4062 = vmatpush1.bf16.msra.mxu0 0
      %4063 = vmatprep.subr.bf16.mxu0 0
      %4064 = vmatpush1.bf16.msra.mxu0 0
      %4065 = vmatprep.subr.bf16.mxu0 0
      %4066 = vmatpush1.bf16.msra.mxu0 0
      %4067 = vmatprep.subr.bf16.mxu0 0
      %4068 = vmatpush1.bf16.msra.mxu0 0
      %4069 = vmatprep.subr.bf16.mxu0 0
      %4070 = vmatpush1.bf16.msra.mxu0 0
      %4071 = vmatprep.subr.bf16.mxu0 0
      %4072 = vmatpush1.bf16.msra.mxu0 %v3869
      %4073 = vmatprep.subr.bf16.mxu0 0
      %4074 = vmatpush1.bf16.msra.mxu0 %v3868
      %4075 = vmatprep.subr.bf16.mxu0 0
      %4076 = vmatpush2.bf16.msra.mxu0 0
      %4077 = vmatprep.subr.bf16.mxu0 0
      %4078 = vmatpush2.bf16.msra.mxu0 0
      %4079 = vmatprep.subr.bf16.mxu0 0
      %4080 = vmatpush2.bf16.msra.mxu0 0
      %4081 = vmatprep.subr.bf16.mxu0 0
      %4082 = vmatpush2.bf16.msra.mxu0 0
      %4083 = vmatprep.subr.bf16.mxu0 0
      %4084 = vmatpush2.bf16.msra.mxu0 0
      %4085 = vmatprep.subr.bf16.mxu0 0
      %4086 = vmatpush2.bf16.msra.mxu0 0
      %4087 = vmatprep.subr.bf16.mxu0 0
      %4088 = vmatpush2.bf16.msra.mxu0 0
      %4089 = vmatprep.subr.bf16.mxu0 0
      %4090 = vmatpush2.bf16.msra.mxu0 0
      %4091 = vmatprep.mubr.bf16.mxu0 0
      %4092 = vmatmul.mubr.bf16.gmra.mxu0 %v4016
      %v4093 = vpop.f32.mrf.mxu0
      %v4094 = vadd.f32 0.0, %v4093
      %v4095 = vpop.f32.mrf.mxu0
      %v4096 = vpop.f32.mrf.mxu0
      %v4097 = vadd.f32 0.0, %v4096
      %v4098 = vpop.f32.mrf.mxu0
      %4099 = vdwg.mxu0
      %4100 = vmatprep.subr.bf16.mxu0 0
      %4101 = vmatpush1.bf16.msra.mxu0 0
      %4102 = vmatprep.subr.bf16.mxu0 0
      %4103 = vmatpush1.bf16.msra.mxu0 0
      %4104 = vmatprep.subr.bf16.mxu0 0
      %4105 = vmatpush1.bf16.msra.mxu0 0
      %4106 = vmatprep.subr.bf16.mxu0 0
      %4107 = vmatpush1.bf16.msra.mxu0 0
      %4108 = vmatprep.subr.bf16.mxu0 0
      %4109 = vmatpush1.bf16.msra.mxu0 0
      %4110 = vmatprep.subr.bf16.mxu0 0
      %4111 = vmatpush1.bf16.msra.mxu0 0
      %4112 = vmatprep.subr.bf16.mxu0 0
      %4113 = vmatpush1.bf16.msra.mxu0 %v3922
      %4114 = vmatprep.subr.bf16.mxu0 0
      %4115 = vmatpush1.bf16.msra.mxu0 %v3921
      %4116 = vmatprep.subr.bf16.mxu0 0
      %4117 = vmatpush2.bf16.msra.mxu0 0
      %4118 = vmatprep.subr.bf16.mxu0 0
      %4119 = vmatpush2.bf16.msra.mxu0 0
      %4120 = vmatprep.subr.bf16.mxu0 0
      %4121 = vmatpush2.bf16.msra.mxu0 0
      %4122 = vmatprep.subr.bf16.mxu0 0
      %4123 = vmatpush2.bf16.msra.mxu0 0
      %4124 = vmatprep.subr.bf16.mxu0 0
      %4125 = vmatpush2.bf16.msra.mxu0 0
      %4126 = vmatprep.subr.bf16.mxu0 0
      %4127 = vmatpush2.bf16.msra.mxu0 0
      %4128 = vmatprep.subr.bf16.mxu0 0
      %4129 = vmatpush2.bf16.msra.mxu0 0
      %4130 = vmatprep.subr.bf16.mxu0 0
      %4131 = vmatpush2.bf16.msra.mxu0 0
      %4132 = vmatprep.mubr.bf16.mxu0 0
      %4133 = vmatmul.mubr.bf16.gmra.mxu0 %v4016
      %v4134 = vpop.f32.mrf.mxu0
      %v4135 = vadd.f32 %v3806, %v4134
      %v4136 = vpop.f32.mrf.mxu0
      %v4137 = vpop.f32.mrf.mxu0
      %v4138 = vadd.f32 %v3806, %v4137
      %v4139 = vpop.f32.mrf.mxu0
      %4140 = vdwg.mxu0
      %v4141 = vld [vmem:[%s2199] sm:$0xff]
      %v4142 = vld [vmem:[%s2199 + $0x8] sm:$0xff]
      %v4143 = vadd.f32 %v4141, %v4053
      %v4144 = vadd.f32 %v4142, %v4056
      %v4145 = vxor.u32 %v4143, 2147483648
      %v4146 = vxor.u32 %v4144, 2147483648
      %v4147 = vmul.f32 %v4145, 1.442695
      %v4148 = vpow.pop %v4147
      %v4149 = vmul.f32 %v4146, 1.442695
      %v4150 = vpow.pop %v4149
      %v4151 = vadd.f32 %v4148, 1.0
      %v4152 = vadd.f32 %v4150, 1.0
      %v4153 = vrcp.pop %v4151
      %v4154 = vmul.f32 1.0, %v4153
      %v4155 = vrcp.pop %v4152
      %v4156 = vmul.f32 1.0, %v4155
      %v4157 = vld [vmem:[%s2216] sm:$0xff]
      %v4158 = vld [vmem:[%s2216 + $0x8] sm:$0xff]
      %v4159 = vadd.f32 %v4157, %v4094
      %v4160 = vadd.f32 %v4158, %v4097
      %v4161 = vxor.u32 %v4159, 2147483648
      %v4162 = vxor.u32 %v4160, 2147483648
      %v4163 = vmul.f32 %v4161, 1.442695
      %v4164 = vpow.pop %v4163
      %v4165 = vmul.f32 %v4162, 1.442695
      %v4166 = vpow.pop %v4165
      %v4167 = vadd.f32 %v4164, 1.0
      %v4168 = vadd.f32 %v4166, 1.0
      %v4169 = vrcp.pop %v4167
      %v4170 = vmul.f32 1.0, %v4169
      %v4171 = vrcp.pop %v4168
      %v4172 = vmul.f32 1.0, %v4171
      %v4173 = vld [vmem:[%s2233] sm:$0xff]
      %v4174 = vld [vmem:[%s2233 + $0x8] sm:$0xff]
      %v4175 = vmul.f32 %v4154, %v4135
      %v4176 = vmul.f32 %v4156, %v4138
      %v4177 = vadd.f32 %v4173, %v4175
      %v4178 = vadd.f32 %v4174, %v4176
      %v4179 = vtanh.pop %v4177
      %v4180 = vtanh.pop %v4178
      %v4181 = vsub.f32 1.0, %v4170
      %v4182 = vsub.f32 1.0, %v4172
      %v4183 = vmul.f32 %v4181, %v4179
      %v4184 = vmul.f32 %v4182, %v4180
      %v4185 = vmul.f32 %v4170, %v4012
      %v4186 = vmul.f32 %v4172, %v4013
      %v4187 = vadd.f32 %v4183, %v4185
      %v4188 = vadd.f32 %v4184, %v4186
      %v4189 = vpack.c.bf16 %v4188, %v4187
      %v4191 = vsel %vm1581, %v4189, 0
      %4193 = vmatprep.subr.bf16.mxu0 0
      %4194 = vmatpush1.bf16.msra.mxu0 0
      %4195 = vmatprep.subr.bf16.mxu0 0
      %4196 = vmatpush1.bf16.msra.mxu0 0
      %4197 = vmatprep.subr.bf16.mxu0 0
      %4198 = vmatpush1.bf16.msra.mxu0 0
      %4199 = vmatprep.subr.bf16.mxu0 0
      %4200 = vmatpush1.bf16.msra.mxu0 0
      %4201 = vmatprep.subr.bf16.mxu0 0
      %4202 = vmatpush1.bf16.msra.mxu0 0
      %4203 = vmatprep.subr.bf16.mxu0 0
      %4204 = vmatpush1.bf16.msra.mxu0 0
      %4205 = vmatprep.subr.bf16.mxu0 0
      %4206 = vmatpush1.bf16.msra.mxu0 %v3816
      %4207 = vmatprep.subr.bf16.mxu0 0
      %4208 = vmatpush1.bf16.msra.mxu0 %v3815
      %4209 = vmatprep.subr.bf16.mxu0 0
      %4210 = vmatpush2.bf16.msra.mxu0 0
      %4211 = vmatprep.subr.bf16.mxu0 0
      %4212 = vmatpush2.bf16.msra.mxu0 0
      %4213 = vmatprep.subr.bf16.mxu0 0
      %4214 = vmatpush2.bf16.msra.mxu0 0
      %4215 = vmatprep.subr.bf16.mxu0 0
      %4216 = vmatpush2.bf16.msra.mxu0 0
      %4217 = vmatprep.subr.bf16.mxu0 0
      %4218 = vmatpush2.bf16.msra.mxu0 0
      %4219 = vmatprep.subr.bf16.mxu0 0
      %4220 = vmatpush2.bf16.msra.mxu0 0
      %4221 = vmatprep.subr.bf16.mxu0 0
      %4222 = vmatpush2.bf16.msra.mxu0 0
      %4223 = vmatprep.subr.bf16.mxu0 0
      %4224 = vmatpush2.bf16.msra.mxu0 0
      %4225 = vmatprep.mubr.bf16.mxu0 0
      %4226 = vmatmul.mubr.bf16.gmra.mxu0 %v4191
      %v4227 = vpop.f32.mrf.mxu0
      %v4228 = vadd.f32 0.0, %v4227
      %v4229 = vpop.f32.mrf.mxu0
      %v4230 = vpop.f32.mrf.mxu0
      %v4231 = vadd.f32 0.0, %v4230
      %v4232 = vpop.f32.mrf.mxu0
      %4233 = vdwg.mxu0
      %4234 = vmatprep.subr.bf16.mxu0 0
      %4235 = vmatpush1.bf16.msra.mxu0 0
      %4236 = vmatprep.subr.bf16.mxu0 0
      %4237 = vmatpush1.bf16.msra.mxu0 0
      %4238 = vmatprep.subr.bf16.mxu0 0
      %4239 = vmatpush1.bf16.msra.mxu0 0
      %4240 = vmatprep.subr.bf16.mxu0 0
      %4241 = vmatpush1.bf16.msra.mxu0 0
      %4242 = vmatprep.subr.bf16.mxu0 0
      %4243 = vmatpush1.bf16.msra.mxu0 0
      %4244 = vmatprep.subr.bf16.mxu0 0
      %4245 = vmatpush1.bf16.msra.mxu0 0
      %4246 = vmatprep.subr.bf16.mxu0 0
      %4247 = vmatpush1.bf16.msra.mxu0 %v3869
      %4248 = vmatprep.subr.bf16.mxu0 0
      %4249 = vmatpush1.bf16.msra.mxu0 %v3868
      %4250 = vmatprep.subr.bf16.mxu0 0
      %4251 = vmatpush2.bf16.msra.mxu0 0
      %4252 = vmatprep.subr.bf16.mxu0 0
      %4253 = vmatpush2.bf16.msra.mxu0 0
      %4254 = vmatprep.subr.bf16.mxu0 0
      %4255 = vmatpush2.bf16.msra.mxu0 0
      %4256 = vmatprep.subr.bf16.mxu0 0
      %4257 = vmatpush2.bf16.msra.mxu0 0
      %4258 = vmatprep.subr.bf16.mxu0 0
      %4259 = vmatpush2.bf16.msra.mxu0 0
      %4260 = vmatprep.subr.bf16.mxu0 0
      %4261 = vmatpush2.bf16.msra.mxu0 0
      %4262 = vmatprep.subr.bf16.mxu0 0
      %4263 = vmatpush2.bf16.msra.mxu0 0
      %4264 = vmatprep.subr.bf16.mxu0 0
      %4265 = vmatpush2.bf16.msra.mxu0 0
      %4266 = vmatprep.mubr.bf16.mxu0 0
      %4267 = vmatmul.mubr.bf16.gmra.mxu0 %v4191
      %v4268 = vpop.f32.mrf.mxu0
      %v4269 = vadd.f32 0.0, %v4268
      %v4270 = vpop.f32.mrf.mxu0
      %v4271 = vpop.f32.mrf.mxu0
      %v4272 = vadd.f32 0.0, %v4271
      %v4273 = vpop.f32.mrf.mxu0
      %4274 = vdwg.mxu0
      %4275 = vmatprep.subr.bf16.mxu0 0
      %4276 = vmatpush1.bf16.msra.mxu0 0
      %4277 = vmatprep.subr.bf16.mxu0 0
      %4278 = vmatpush1.bf16.msra.mxu0 0
      %4279 = vmatprep.subr.bf16.mxu0 0
      %4280 = vmatpush1.bf16.msra.mxu0 0
      %4281 = vmatprep.subr.bf16.mxu0 0
      %4282 = vmatpush1.bf16.msra.mxu0 0
      %4283 = vmatprep.subr.bf16.mxu0 0
      %4284 = vmatpush1.bf16.msra.mxu0 0
      %4285 = vmatprep.subr.bf16.mxu0 0
      %4286 = vmatpush1.bf16.msra.mxu0 0
      %4287 = vmatprep.subr.bf16.mxu0 0
      %4288 = vmatpush1.bf16.msra.mxu0 %v3922
      %4289 = vmatprep.subr.bf16.mxu0 0
      %4290 = vmatpush1.bf16.msra.mxu0 %v3921
      %4291 = vmatprep.subr.bf16.mxu0 0
      %4292 = vmatpush2.bf16.msra.mxu0 0
      %4293 = vmatprep.subr.bf16.mxu0 0
      %4294 = vmatpush2.bf16.msra.mxu0 0
      %4295 = vmatprep.subr.bf16.mxu0 0
      %4296 = vmatpush2.bf16.msra.mxu0 0
      %4297 = vmatprep.subr.bf16.mxu0 0
      %4298 = vmatpush2.bf16.msra.mxu0 0
      %4299 = vmatprep.subr.bf16.mxu0 0
      %4300 = vmatpush2.bf16.msra.mxu0 0
      %4301 = vmatprep.subr.bf16.mxu0 0
      %4302 = vmatpush2.bf16.msra.mxu0 0
      %4303 = vmatprep.subr.bf16.mxu0 0
      %4304 = vmatpush2.bf16.msra.mxu0 0
      %4305 = vmatprep.subr.bf16.mxu0 0
      %4306 = vmatpush2.bf16.msra.mxu0 0
      %4307 = vmatprep.mubr.bf16.mxu0 0
      %4308 = vmatmul.mubr.bf16.gmra.mxu0 %v4191
      %v4309 = vpop.f32.mrf.mxu0
      %v4310 = vadd.f32 %v3806, %v4309
      %v4311 = vpop.f32.mrf.mxu0
      %v4312 = vpop.f32.mrf.mxu0
      %v4313 = vadd.f32 %v3806, %v4312
      %v4314 = vpop.f32.mrf.mxu0
      %4315 = vdwg.mxu0
      %v4316 = vld [vmem:[%s2380] sm:$0xff]
      %v4317 = vld [vmem:[%s2380 + $0x8] sm:$0xff]
      %v4318 = vadd.f32 %v4316, %v4228
      %v4319 = vadd.f32 %v4317, %v4231
      %v4320 = vxor.u32 %v4318, 2147483648
      %v4321 = vxor.u32 %v4319, 2147483648
      %v4322 = vmul.f32 %v4320, 1.442695
      %v4323 = vpow.pop %v4322
      %v4324 = vmul.f32 %v4321, 1.442695
      %v4325 = vpow.pop %v4324
      %v4326 = vadd.f32 %v4323, 1.0
      %v4327 = vadd.f32 %v4325, 1.0
      %v4328 = vrcp.pop %v4326
      %v4329 = vmul.f32 1.0, %v4328
      %v4330 = vrcp.pop %v4327
      %v4331 = vmul.f32 1.0, %v4330
      %v4332 = vld [vmem:[%s2397] sm:$0xff]
      %v4333 = vld [vmem:[%s2397 + $0x8] sm:$0xff]
      %v4334 = vadd.f32 %v4332, %v4269
      %v4335 = vadd.f32 %v4333, %v4272
      %v4336 = vxor.u32 %v4334, 2147483648
      %v4337 = vxor.u32 %v4335, 2147483648
      %v4338 = vmul.f32 %v4336, 1.442695
      %v4339 = vpow.pop %v4338
      %v4340 = vmul.f32 %v4337, 1.442695
      %v4341 = vpow.pop %v4340
      %v4342 = vadd.f32 %v4339, 1.0
      %v4343 = vadd.f32 %v4341, 1.0
      %v4344 = vrcp.pop %v4342
      %v4345 = vmul.f32 1.0, %v4344
      %v4346 = vrcp.pop %v4343
      %v4347 = vmul.f32 1.0, %v4346
      %v4348 = vld [vmem:[%s2414] sm:$0xff]
      %v4349 = vld [vmem:[%s2414 + $0x8] sm:$0xff]
      %v4350 = vmul.f32 %v4329, %v4310
      %v4351 = vmul.f32 %v4331, %v4313
      %v4352 = vadd.f32 %v4348, %v4350
      %v4353 = vadd.f32 %v4349, %v4351
      %v4354 = vtanh.pop %v4352
      %v4355 = vtanh.pop %v4353
      %v4356 = vsub.f32 1.0, %v4345
      %v4357 = vsub.f32 1.0, %v4347
      %v4358 = vmul.f32 %v4356, %v4354
      %v4359 = vmul.f32 %v4357, %v4355
      %v4360 = vmul.f32 %v4345, %v4187
      %v4361 = vmul.f32 %v4347, %v4188
      %v4362 = vadd.f32 %v4358, %v4360
      %v4363 = vadd.f32 %v4359, %v4361
      %v4364 = vpack.c.bf16 %v4363, %v4362
      %v4366 = vsel %vm1581, %v4364, 0
      %4368 = vmatprep.subr.bf16.mxu0 0
      %4369 = vmatpush1.bf16.msra.mxu0 0
      %4370 = vmatprep.subr.bf16.mxu0 0
      %4371 = vmatpush1.bf16.msra.mxu0 0
      %4372 = vmatprep.subr.bf16.mxu0 0
      %4373 = vmatpush1.bf16.msra.mxu0 0
      %4374 = vmatprep.subr.bf16.mxu0 0
      %4375 = vmatpush1.bf16.msra.mxu0 0
      %4376 = vmatprep.subr.bf16.mxu0 0
      %4377 = vmatpush1.bf16.msra.mxu0 0
      %4378 = vmatprep.subr.bf16.mxu0 0
      %4379 = vmatpush1.bf16.msra.mxu0 0
      %4380 = vmatprep.subr.bf16.mxu0 0
      %4381 = vmatpush1.bf16.msra.mxu0 %v3816
      %4382 = vmatprep.subr.bf16.mxu0 0
      %4383 = vmatpush1.bf16.msra.mxu0 %v3815
      %4384 = vmatprep.subr.bf16.mxu0 0
      %4385 = vmatpush2.bf16.msra.mxu0 0
      %4386 = vmatprep.subr.bf16.mxu0 0
      %4387 = vmatpush2.bf16.msra.mxu0 0
      %4388 = vmatprep.subr.bf16.mxu0 0
      %4389 = vmatpush2.bf16.msra.mxu0 0
      %4390 = vmatprep.subr.bf16.mxu0 0
      %4391 = vmatpush2.bf16.msra.mxu0 0
      %4392 = vmatprep.subr.bf16.mxu0 0
      %4393 = vmatpush2.bf16.msra.mxu0 0
      %4394 = vmatprep.subr.bf16.mxu0 0
      %4395 = vmatpush2.bf16.msra.mxu0 0
      %4396 = vmatprep.subr.bf16.mxu0 0
      %4397 = vmatpush2.bf16.msra.mxu0 0
      %4398 = vmatprep.subr.bf16.mxu0 0
      %4399 = vmatpush2.bf16.msra.mxu0 0
      %4400 = vmatprep.mubr.bf16.mxu0 0
      %4401 = vmatmul.mubr.bf16.gmra.mxu0 %v4366
      %v4402 = vpop.f32.mrf.mxu0
      %v4403 = vadd.f32 0.0, %v4402
      %v4404 = vpop.f32.mrf.mxu0
      %v4405 = vpop.f32.mrf.mxu0
      %v4406 = vadd.f32 0.0, %v4405
      %v4407 = vpop.f32.mrf.mxu0
      %4408 = vdwg.mxu0
      %4409 = vmatprep.subr.bf16.mxu0 0
      %4410 = vmatpush1.bf16.msra.mxu0 0
      %4411 = vmatprep.subr.bf16.mxu0 0
      %4412 = vmatpush1.bf16.msra.mxu0 0
      %4413 = vmatprep.subr.bf16.mxu0 0
      %4414 = vmatpush1.bf16.msra.mxu0 0
      %4415 = vmatprep.subr.bf16.mxu0 0
      %4416 = vmatpush1.bf16.msra.mxu0 0
      %4417 = vmatprep.subr.bf16.mxu0 0
      %4418 = vmatpush1.bf16.msra.mxu0 0
      %4419 = vmatprep.subr.bf16.mxu0 0
      %4420 = vmatpush1.bf16.msra.mxu0 0
      %4421 = vmatprep.subr.bf16.mxu0 0
      %4422 = vmatpush1.bf16.msra.mxu0 %v3869
      %4423 = vmatprep.subr.bf16.mxu0 0
      %4424 = vmatpush1.bf16.msra.mxu0 %v3868
      %4425 = vmatprep.subr.bf16.mxu0 0
      %4426 = vmatpush2.bf16.msra.mxu0 0
      %4427 = vmatprep.subr.bf16.mxu0 0
      %4428 = vmatpush2.bf16.msra.mxu0 0
      %4429 = vmatprep.subr.bf16.mxu0 0
      %4430 = vmatpush2.bf16.msra.mxu0 0
      %4431 = vmatprep.subr.bf16.mxu0 0
      %4432 = vmatpush2.bf16.msra.mxu0 0
      %4433 = vmatprep.subr.bf16.mxu0 0
      %4434 = vmatpush2.bf16.msra.mxu0 0
      %4435 = vmatprep.subr.bf16.mxu0 0
      %4436 = vmatpush2.bf16.msra.mxu0 0
      %4437 = vmatprep.subr.bf16.mxu0 0
      %4438 = vmatpush2.bf16.msra.mxu0 0
      %4439 = vmatprep.subr.bf16.mxu0 0
      %4440 = vmatpush2.bf16.msra.mxu0 0
      %4441 = vmatprep.mubr.bf16.mxu0 0
      %4442 = vmatmul.mubr.bf16.gmra.mxu0 %v4366
      %v4443 = vpop.f32.mrf.mxu0
      %v4444 = vadd.f32 0.0, %v4443
      %v4445 = vpop.f32.mrf.mxu0
      %v4446 = vpop.f32.mrf.mxu0
      %v4447 = vadd.f32 0.0, %v4446
      %v4448 = vpop.f32.mrf.mxu0
      %4449 = vdwg.mxu0
      %4450 = vmatprep.subr.bf16.mxu0 0
      %4451 = vmatpush1.bf16.msra.mxu0 0
      %4452 = vmatprep.subr.bf16.mxu0 0
      %4453 = vmatpush1.bf16.msra.mxu0 0
      %4454 = vmatprep.subr.bf16.mxu0 0
      %4455 = vmatpush1.bf16.msra.mxu0 0
      %4456 = vmatprep.subr.bf16.mxu0 0
      %4457 = vmatpush1.bf16.msra.mxu0 0
      %4458 = vmatprep.subr.bf16.mxu0 0
      %4459 = vmatpush1.bf16.msra.mxu0 0
      %4460 = vmatprep.subr.bf16.mxu0 0
      %4461 = vmatpush1.bf16.msra.mxu0 0
      %4462 = vmatprep.subr.bf16.mxu0 0
      %4463 = vmatpush1.bf16.msra.mxu0 %v3922
      %4464 = vmatprep.subr.bf16.mxu0 0
      %4465 = vmatpush1.bf16.msra.mxu0 %v3921
      %4466 = vmatprep.subr.bf16.mxu0 0
      %4467 = vmatpush2.bf16.msra.mxu0 0
      %4468 = vmatprep.subr.bf16.mxu0 0
      %4469 = vmatpush2.bf16.msra.mxu0 0
      %4470 = vmatprep.subr.bf16.mxu0 0
      %4471 = vmatpush2.bf16.msra.mxu0 0
      %4472 = vmatprep.subr.bf16.mxu0 0
      %4473 = vmatpush2.bf16.msra.mxu0 0
      %4474 = vmatprep.subr.bf16.mxu0 0
      %4475 = vmatpush2.bf16.msra.mxu0 0
      %4476 = vmatprep.subr.bf16.mxu0 0
      %4477 = vmatpush2.bf16.msra.mxu0 0
      %4478 = vmatprep.subr.bf16.mxu0 0
      %4479 = vmatpush2.bf16.msra.mxu0 0
      %4480 = vmatprep.subr.bf16.mxu0 0
      %4481 = vmatpush2.bf16.msra.mxu0 0
      %4482 = vmatprep.mubr.bf16.mxu0 0
      %4483 = vmatmul.mubr.bf16.gmra.mxu0 %v4366
      %v4484 = vpop.f32.mrf.mxu0
      %v4485 = vadd.f32 %v3806, %v4484
      %v4486 = vpop.f32.mrf.mxu0
      %v4487 = vpop.f32.mrf.mxu0
      %v4488 = vadd.f32 %v3806, %v4487
      %v4489 = vpop.f32.mrf.mxu0
      %4490 = vdwg.mxu0
      %v4491 = vld [vmem:[%s2561] sm:$0xff]
      %v4492 = vld [vmem:[%s2561 + $0x8] sm:$0xff]
      %v4493 = vadd.f32 %v4491, %v4403
      %v4494 = vadd.f32 %v4492, %v4406
      %v4495 = vxor.u32 %v4493, 2147483648
      %v4496 = vxor.u32 %v4494, 2147483648
      %v4497 = vmul.f32 %v4495, 1.442695
      %v4498 = vpow.pop %v4497
      %v4499 = vmul.f32 %v4496, 1.442695
      %v4500 = vpow.pop %v4499
      %v4501 = vadd.f32 %v4498, 1.0
      %v4502 = vadd.f32 %v4500, 1.0
      %v4503 = vrcp.pop %v4501
      %v4504 = vmul.f32 1.0, %v4503
      %v4505 = vrcp.pop %v4502
      %v4506 = vmul.f32 1.0, %v4505
      %v4507 = vld [vmem:[%s2578] sm:$0xff]
      %v4508 = vld [vmem:[%s2578 + $0x8] sm:$0xff]
      %v4509 = vadd.f32 %v4507, %v4444
      %v4510 = vadd.f32 %v4508, %v4447
      %v4511 = vxor.u32 %v4509, 2147483648
      %v4512 = vxor.u32 %v4510, 2147483648
      %v4513 = vmul.f32 %v4511, 1.442695
      %v4514 = vpow.pop %v4513
      %v4515 = vmul.f32 %v4512, 1.442695
      %v4516 = vpow.pop %v4515
      %v4517 = vadd.f32 %v4514, 1.0
      %v4518 = vadd.f32 %v4516, 1.0
      %v4519 = vrcp.pop %v4517
      %v4520 = vmul.f32 1.0, %v4519
      %v4521 = vrcp.pop %v4518
      %v4522 = vmul.f32 1.0, %v4521
      %v4523 = vld [vmem:[%s2595] sm:$0xff]
      %v4524 = vld [vmem:[%s2595 + $0x8] sm:$0xff]
      %v4525 = vmul.f32 %v4504, %v4485
      %v4526 = vmul.f32 %v4506, %v4488
      %v4527 = vadd.f32 %v4523, %v4525
      %v4528 = vadd.f32 %v4524, %v4526
      %v4529 = vtanh.pop %v4527
      %v4530 = vtanh.pop %v4528
      %v4531 = vsub.f32 1.0, %v4520
      %v4532 = vsub.f32 1.0, %v4522
      %v4533 = vmul.f32 %v4531, %v4529
      %v4534 = vmul.f32 %v4532, %v4530
      %v4535 = vmul.f32 %v4520, %v4362
      %v4536 = vmul.f32 %v4522, %v4363
      %v4537 = vadd.f32 %v4533, %v4535
      %v4538 = vadd.f32 %v4534, %v4536
      %v4539 = vpack.c.bf16 %v4538, %v4537
      %v4541 = vsel %vm1581, %v4539, 0
      %4543 = vmatprep.subr.bf16.mxu0 0
      %4544 = vmatpush1.bf16.msra.mxu0 0
      %4545 = vmatprep.subr.bf16.mxu0 0
      %4546 = vmatpush1.bf16.msra.mxu0 0
      %4547 = vmatprep.subr.bf16.mxu0 0
      %4548 = vmatpush1.bf16.msra.mxu0 0
      %4549 = vmatprep.subr.bf16.mxu0 0
      %4550 = vmatpush1.bf16.msra.mxu0 0
      %4551 = vmatprep.subr.bf16.mxu0 0
      %4552 = vmatpush1.bf16.msra.mxu0 0
      %4553 = vmatprep.subr.bf16.mxu0 0
      %4554 = vmatpush1.bf16.msra.mxu0 0
      %4555 = vmatprep.subr.bf16.mxu0 0
      %4556 = vmatpush1.bf16.msra.mxu0 %v3816
      %4557 = vmatprep.subr.bf16.mxu0 0
      %4558 = vmatpush1.bf16.msra.mxu0 %v3815
      %4559 = vmatprep.subr.bf16.mxu0 0
      %4560 = vmatpush2.bf16.msra.mxu0 0
      %4561 = vmatprep.subr.bf16.mxu0 0
      %4562 = vmatpush2.bf16.msra.mxu0 0
      %4563 = vmatprep.subr.bf16.mxu0 0
      %4564 = vmatpush2.bf16.msra.mxu0 0
      %4565 = vmatprep.subr.bf16.mxu0 0
      %4566 = vmatpush2.bf16.msra.mxu0 0
      %4567 = vmatprep.subr.bf16.mxu0 0
      %4568 = vmatpush2.bf16.msra.mxu0 0
      %4569 = vmatprep.subr.bf16.mxu0 0
      %4570 = vmatpush2.bf16.msra.mxu0 0
      %4571 = vmatprep.subr.bf16.mxu0 0
      %4572 = vmatpush2.bf16.msra.mxu0 0
      %4573 = vmatprep.subr.bf16.mxu0 0
      %4574 = vmatpush2.bf16.msra.mxu0 0
      %4575 = vmatprep.mubr.bf16.mxu0 0
      %4576 = vmatmul.mubr.bf16.gmra.mxu0 %v4541
      %v4577 = vpop.f32.mrf.mxu0
      %v4578 = vadd.f32 0.0, %v4577
      %v4579 = vpop.f32.mrf.mxu0
      %v4580 = vpop.f32.mrf.mxu0
      %v4581 = vadd.f32 0.0, %v4580
      %v4582 = vpop.f32.mrf.mxu0
      %4583 = vdwg.mxu0
      %4584 = vmatprep.subr.bf16.mxu0 0
      %4585 = vmatpush1.bf16.msra.mxu0 0
      %4586 = vmatprep.subr.bf16.mxu0 0
      %4587 = vmatpush1.bf16.msra.mxu0 0
      %4588 = vmatprep.subr.bf16.mxu0 0
      %4589 = vmatpush1.bf16.msra.mxu0 0
      %4590 = vmatprep.subr.bf16.mxu0 0
      %4591 = vmatpush1.bf16.msra.mxu0 0
      %4592 = vmatprep.subr.bf16.mxu0 0
      %4593 = vmatpush1.bf16.msra.mxu0 0
      %4594 = vmatprep.subr.bf16.mxu0 0
      %4595 = vmatpush1.bf16.msra.mxu0 0
      %4596 = vmatprep.subr.bf16.mxu0 0
      %4597 = vmatpush1.bf16.msra.mxu0 %v3869
      %4598 = vmatprep.subr.bf16.mxu0 0
      %4599 = vmatpush1.bf16.msra.mxu0 %v3868
      %4600 = vmatprep.subr.bf16.mxu0 0
      %4601 = vmatpush2.bf16.msra.mxu0 0
      %4602 = vmatprep.subr.bf16.mxu0 0
      %4603 = vmatpush2.bf16.msra.mxu0 0
      %4604 = vmatprep.subr.bf16.mxu0 0
      %4605 = vmatpush2.bf16.msra.mxu0 0
      %4606 = vmatprep.subr.bf16.mxu0 0
      %4607 = vmatpush2.bf16.msra.mxu0 0
      %4608 = vmatprep.subr.bf16.mxu0 0
      %4609 = vmatpush2.bf16.msra.mxu0 0
      %4610 = vmatprep.subr.bf16.mxu0 0
      %4611 = vmatpush2.bf16.msra.mxu0 0
      %4612 = vmatprep.subr.bf16.mxu0 0
      %4613 = vmatpush2.bf16.msra.mxu0 0
      %4614 = vmatprep.subr.bf16.mxu0 0
      %4615 = vmatpush2.bf16.msra.mxu0 0
      %4616 = vmatprep.mubr.bf16.mxu0 0
      %4617 = vmatmul.mubr.bf16.gmra.mxu0 %v4541
      %v4618 = vpop.f32.mrf.mxu0
      %v4619 = vadd.f32 0.0, %v4618
      %v4620 = vpop.f32.mrf.mxu0
      %v4621 = vpop.f32.mrf.mxu0
      %v4622 = vadd.f32 0.0, %v4621
      %v4623 = vpop.f32.mrf.mxu0
      %4624 = vdwg.mxu0
      %4625 = vmatprep.subr.bf16.mxu0 0
      %4626 = vmatpush1.bf16.msra.mxu0 0
      %4627 = vmatprep.subr.bf16.mxu0 0
      %4628 = vmatpush1.bf16.msra.mxu0 0
      %4629 = vmatprep.subr.bf16.mxu0 0
      %4630 = vmatpush1.bf16.msra.mxu0 0
      %4631 = vmatprep.subr.bf16.mxu0 0
      %4632 = vmatpush1.bf16.msra.mxu0 0
      %4633 = vmatprep.subr.bf16.mxu0 0
      %4634 = vmatpush1.bf16.msra.mxu0 0
      %4635 = vmatprep.subr.bf16.mxu0 0
      %4636 = vmatpush1.bf16.msra.mxu0 0
      %4637 = vmatprep.subr.bf16.mxu0 0
      %4638 = vmatpush1.bf16.msra.mxu0 %v3922
      %4639 = vmatprep.subr.bf16.mxu0 0
      %4640 = vmatpush1.bf16.msra.mxu0 %v3921
      %4641 = vmatprep.subr.bf16.mxu0 0
      %4642 = vmatpush2.bf16.msra.mxu0 0
      %4643 = vmatprep.subr.bf16.mxu0 0
      %4644 = vmatpush2.bf16.msra.mxu0 0
      %4645 = vmatprep.subr.bf16.mxu0 0
      %4646 = vmatpush2.bf16.msra.mxu0 0
      %4647 = vmatprep.subr.bf16.mxu0 0
      %4648 = vmatpush2.bf16.msra.mxu0 0
      %4649 = vmatprep.subr.bf16.mxu0 0
      %4650 = vmatpush2.bf16.msra.mxu0 0
      %4651 = vmatprep.subr.bf16.mxu0 0
      %4652 = vmatpush2.bf16.msra.mxu0 0
      %4653 = vmatprep.subr.bf16.mxu0 0
      %4654 = vmatpush2.bf16.msra.mxu0 0
      %4655 = vmatprep.subr.bf16.mxu0 0
      %4656 = vmatpush2.bf16.msra.mxu0 0
      %4657 = vmatprep.mubr.bf16.mxu0 0
      %4658 = vmatmul.mubr.bf16.gmra.mxu0 %v4541
      %v4659 = vpop.f32.mrf.mxu0
      %v4660 = vadd.f32 %v3806, %v4659
      %v4661 = vpop.f32.mrf.mxu0
      %v4662 = vpop.f32.mrf.mxu0
      %v4663 = vadd.f32 %v3806, %v4662
      %v4664 = vpop.f32.mrf.mxu0
      %4665 = vdwg.mxu0
      %v4666 = vld [vmem:[%s2742] sm:$0xff]
      %v4667 = vld [vmem:[%s2742 + $0x8] sm:$0xff]
      %v4668 = vadd.f32 %v4666, %v4578
      %v4669 = vadd.f32 %v4667, %v4581
      %v4670 = vxor.u32 %v4668, 2147483648
      %v4671 = vxor.u32 %v4669, 2147483648
      %v4672 = vmul.f32 %v4670, 1.442695
      %v4673 = vpow.pop %v4672
      %v4674 = vmul.f32 %v4671, 1.442695
      %v4675 = vpow.pop %v4674
      %v4676 = vadd.f32 %v4673, 1.0
      %v4677 = vadd.f32 %v4675, 1.0
      %v4678 = vrcp.pop %v4676
      %v4679 = vmul.f32 1.0, %v4678
      %v4680 = vrcp.pop %v4677
      %v4681 = vmul.f32 1.0, %v4680
      %v4682 = vld [vmem:[%s2759] sm:$0xff]
      %v4683 = vld [vmem:[%s2759 + $0x8] sm:$0xff]
      %v4684 = vadd.f32 %v4682, %v4619
      %v4685 = vadd.f32 %v4683, %v4622
      %v4686 = vxor.u32 %v4684, 2147483648
      %v4687 = vxor.u32 %v4685, 2147483648
      %v4688 = vmul.f32 %v4686, 1.442695
      %v4689 = vpow.pop %v4688
      %v4690 = vmul.f32 %v4687, 1.442695
      %v4691 = vpow.pop %v4690
      %v4692 = vadd.f32 %v4689, 1.0
      %v4693 = vadd.f32 %v4691, 1.0
      %v4694 = vrcp.pop %v4692
      %v4695 = vmul.f32 1.0, %v4694
      %v4696 = vrcp.pop %v4693
      %v4697 = vmul.f32 1.0, %v4696
      %v4698 = vld [vmem:[%s2776] sm:$0xff]
      %v4699 = vld [vmem:[%s2776 + $0x8] sm:$0xff]
      %v4700 = vmul.f32 %v4679, %v4660
      %v4701 = vmul.f32 %v4681, %v4663
      %v4702 = vadd.f32 %v4698, %v4700
      %v4703 = vadd.f32 %v4699, %v4701
      %v4704 = vtanh.pop %v4702
      %v4705 = vtanh.pop %v4703
      %v4706 = vsub.f32 1.0, %v4695
      %v4707 = vsub.f32 1.0, %v4697
      %v4708 = vmul.f32 %v4706, %v4704
      %v4709 = vmul.f32 %v4707, %v4705
      %v4710 = vmul.f32 %v4695, %v4537
      %v4711 = vmul.f32 %v4697, %v4538
      %v4712 = vadd.f32 %v4708, %v4710
      %v4713 = vadd.f32 %v4709, %v4711
      %v4714 = vpack.c.bf16 %v4713, %v4712
      %v4716 = vsel %vm1581, %v4714, 0
      %4718 = vmatprep.subr.bf16.mxu0 0
      %4719 = vmatpush1.bf16.msra.mxu0 0
      %4720 = vmatprep.subr.bf16.mxu0 0
      %4721 = vmatpush1.bf16.msra.mxu0 0
      %4722 = vmatprep.subr.bf16.mxu0 0
      %4723 = vmatpush1.bf16.msra.mxu0 0
      %4724 = vmatprep.subr.bf16.mxu0 0
      %4725 = vmatpush1.bf16.msra.mxu0 0
      %4726 = vmatprep.subr.bf16.mxu0 0
      %4727 = vmatpush1.bf16.msra.mxu0 0
      %4728 = vmatprep.subr.bf16.mxu0 0
      %4729 = vmatpush1.bf16.msra.mxu0 0
      %4730 = vmatprep.subr.bf16.mxu0 0
      %4731 = vmatpush1.bf16.msra.mxu0 %v3816
      %4732 = vmatprep.subr.bf16.mxu0 0
      %4733 = vmatpush1.bf16.msra.mxu0 %v3815
      %4734 = vmatprep.subr.bf16.mxu0 0
      %4735 = vmatpush2.bf16.msra.mxu0 0
      %4736 = vmatprep.subr.bf16.mxu0 0
      %4737 = vmatpush2.bf16.msra.mxu0 0
      %4738 = vmatprep.subr.bf16.mxu0 0
      %4739 = vmatpush2.bf16.msra.mxu0 0
      %4740 = vmatprep.subr.bf16.mxu0 0
      %4741 = vmatpush2.bf16.msra.mxu0 0
      %4742 = vmatprep.subr.bf16.mxu0 0
      %4743 = vmatpush2.bf16.msra.mxu0 0
      %4744 = vmatprep.subr.bf16.mxu0 0
      %4745 = vmatpush2.bf16.msra.mxu0 0
      %4746 = vmatprep.subr.bf16.mxu0 0
      %4747 = vmatpush2.bf16.msra.mxu0 0
      %4748 = vmatprep.subr.bf16.mxu0 0
      %4749 = vmatpush2.bf16.msra.mxu0 0
      %4750 = vmatprep.mubr.bf16.mxu0 0
      %4751 = vmatmul.mubr.bf16.gmra.mxu0 %v4716
      %v4752 = vpop.f32.mrf.mxu0
      %v4753 = vadd.f32 0.0, %v4752
      %v4754 = vpop.f32.mrf.mxu0
      %v4755 = vpop.f32.mrf.mxu0
      %v4756 = vadd.f32 0.0, %v4755
      %v4757 = vpop.f32.mrf.mxu0
      %4758 = vdwg.mxu0
      %4759 = vmatprep.subr.bf16.mxu0 0
      %4760 = vmatpush1.bf16.msra.mxu0 0
      %4761 = vmatprep.subr.bf16.mxu0 0
      %4762 = vmatpush1.bf16.msra.mxu0 0
      %4763 = vmatprep.subr.bf16.mxu0 0
      %4764 = vmatpush1.bf16.msra.mxu0 0
      %4765 = vmatprep.subr.bf16.mxu0 0
      %4766 = vmatpush1.bf16.msra.mxu0 0
      %4767 = vmatprep.subr.bf16.mxu0 0
      %4768 = vmatpush1.bf16.msra.mxu0 0
      %4769 = vmatprep.subr.bf16.mxu0 0
      %4770 = vmatpush1.bf16.msra.mxu0 0
      %4771 = vmatprep.subr.bf16.mxu0 0
      %4772 = vmatpush1.bf16.msra.mxu0 %v3869
      %4773 = vmatprep.subr.bf16.mxu0 0
      %4774 = vmatpush1.bf16.msra.mxu0 %v3868
      %4775 = vmatprep.subr.bf16.mxu0 0
      %4776 = vmatpush2.bf16.msra.mxu0 0
      %4777 = vmatprep.subr.bf16.mxu0 0
      %4778 = vmatpush2.bf16.msra.mxu0 0
      %4779 = vmatprep.subr.bf16.mxu0 0
      %4780 = vmatpush2.bf16.msra.mxu0 0
      %4781 = vmatprep.subr.bf16.mxu0 0
      %4782 = vmatpush2.bf16.msra.mxu0 0
      %4783 = vmatprep.subr.bf16.mxu0 0
      %4784 = vmatpush2.bf16.msra.mxu0 0
      %4785 = vmatprep.subr.bf16.mxu0 0
      %4786 = vmatpush2.bf16.msra.mxu0 0
      %4787 = vmatprep.subr.bf16.mxu0 0
      %4788 = vmatpush2.bf16.msra.mxu0 0
      %4789 = vmatprep.subr.bf16.mxu0 0
      %4790 = vmatpush2.bf16.msra.mxu0 0
      %4791 = vmatprep.mubr.bf16.mxu0 0
      %4792 = vmatmul.mubr.bf16.gmra.mxu0 %v4716
      %v4793 = vpop.f32.mrf.mxu0
      %v4794 = vadd.f32 0.0, %v4793
      %v4795 = vpop.f32.mrf.mxu0
      %v4796 = vpop.f32.mrf.mxu0
      %v4797 = vadd.f32 0.0, %v4796
      %v4798 = vpop.f32.mrf.mxu0
      %4799 = vdwg.mxu0
      %4800 = vmatprep.subr.bf16.mxu0 0
      %4801 = vmatpush1.bf16.msra.mxu0 0
      %4802 = vmatprep.subr.bf16.mxu0 0
      %4803 = vmatpush1.bf16.msra.mxu0 0
      %4804 = vmatprep.subr.bf16.mxu0 0
      %4805 = vmatpush1.bf16.msra.mxu0 0
      %4806 = vmatprep.subr.bf16.mxu0 0
      %4807 = vmatpush1.bf16.msra.mxu0 0
      %4808 = vmatprep.subr.bf16.mxu0 0
      %4809 = vmatpush1.bf16.msra.mxu0 0
      %4810 = vmatprep.subr.bf16.mxu0 0
      %4811 = vmatpush1.bf16.msra.mxu0 0
      %4812 = vmatprep.subr.bf16.mxu0 0
      %4813 = vmatpush1.bf16.msra.mxu0 %v3922
      %4814 = vmatprep.subr.bf16.mxu0 0
      %4815 = vmatpush1.bf16.msra.mxu0 %v3921
      %4816 = vmatprep.subr.bf16.mxu0 0
      %4817 = vmatpush2.bf16.msra.mxu0 0
      %4818 = vmatprep.subr.bf16.mxu0 0
      %4819 = vmatpush2.bf16.msra.mxu0 0
      %4820 = vmatprep.subr.bf16.mxu0 0
      %4821 = vmatpush2.bf16.msra.mxu0 0
      %4822 = vmatprep.subr.bf16.mxu0 0
      %4823 = vmatpush2.bf16.msra.mxu0 0
      %4824 = vmatprep.subr.bf16.mxu0 0
      %4825 = vmatpush2.bf16.msra.mxu0 0
      %4826 = vmatprep.subr.bf16.mxu0 0
      %4827 = vmatpush2.bf16.msra.mxu0 0
      %4828 = vmatprep.subr.bf16.mxu0 0
      %4829 = vmatpush2.bf16.msra.mxu0 0
      %4830 = vmatprep.subr.bf16.mxu0 0
      %4831 = vmatpush2.bf16.msra.mxu0 0
      %4832 = vmatprep.mubr.bf16.mxu0 0
      %4833 = vmatmul.mubr.bf16.gmra.mxu0 %v4716
      %v4834 = vpop.f32.mrf.mxu0
      %v4835 = vadd.f32 %v3806, %v4834
      %v4836 = vpop.f32.mrf.mxu0
      %v4837 = vpop.f32.mrf.mxu0
      %v4838 = vadd.f32 %v3806, %v4837
      %v4839 = vpop.f32.mrf.mxu0
      %4840 = vdwg.mxu0
      %v4841 = vld [vmem:[%s2923] sm:$0xff]
      %v4842 = vld [vmem:[%s2923 + $0x8] sm:$0xff]
      %v4843 = vadd.f32 %v4841, %v4753
      %v4844 = vadd.f32 %v4842, %v4756
      %v4845 = vxor.u32 %v4843, 2147483648
      %v4846 = vxor.u32 %v4844, 2147483648
      %v4847 = vmul.f32 %v4845, 1.442695
      %v4848 = vpow.pop %v4847
      %v4849 = vmul.f32 %v4846, 1.442695
      %v4850 = vpow.pop %v4849
      %v4851 = vadd.f32 %v4848, 1.0
      %v4852 = vadd.f32 %v4850, 1.0
      %v4853 = vrcp.pop %v4851
      %v4854 = vmul.f32 1.0, %v4853
      %v4855 = vrcp.pop %v4852
      %v4856 = vmul.f32 1.0, %v4855
      %v4857 = vld [vmem:[%s2940] sm:$0xff]
      %v4858 = vld [vmem:[%s2940 + $0x8] sm:$0xff]
      %v4859 = vadd.f32 %v4857, %v4794
      %v4860 = vadd.f32 %v4858, %v4797
      %v4861 = vxor.u32 %v4859, 2147483648
      %v4862 = vxor.u32 %v4860, 2147483648
      %v4863 = vmul.f32 %v4861, 1.442695
      %v4864 = vpow.pop %v4863
      %v4865 = vmul.f32 %v4862, 1.442695
      %v4866 = vpow.pop %v4865
      %v4867 = vadd.f32 %v4864, 1.0
      %v4868 = vadd.f32 %v4866, 1.0
      %v4869 = vrcp.pop %v4867
      %v4870 = vmul.f32 1.0, %v4869
      %v4871 = vrcp.pop %v4868
      %v4872 = vmul.f32 1.0, %v4871
      %v4873 = vld [vmem:[%s2957] sm:$0xff]
      %v4874 = vld [vmem:[%s2957 + $0x8] sm:$0xff]
      %v4875 = vmul.f32 %v4854, %v4835
      %v4876 = vmul.f32 %v4856, %v4838
      %v4877 = vadd.f32 %v4873, %v4875
      %v4878 = vadd.f32 %v4874, %v4876
      %v4879 = vtanh.pop %v4877
      %v4880 = vtanh.pop %v4878
      %v4881 = vsub.f32 1.0, %v4870
      %v4882 = vsub.f32 1.0, %v4872
      %v4883 = vmul.f32 %v4881, %v4879
      %v4884 = vmul.f32 %v4882, %v4880
      %v4885 = vmul.f32 %v4870, %v4712
      %v4886 = vmul.f32 %v4872, %v4713
      %v4887 = vadd.f32 %v4883, %v4885
      %v4888 = vadd.f32 %v4884, %v4886
      %v4889 = vpack.c.bf16 %v4888, %v4887
      %v4891 = vsel %vm1581, %v4889, 0
      %4893 = vmatprep.subr.bf16.mxu0 0
      %4894 = vmatpush1.bf16.msra.mxu0 0
      %4895 = vmatprep.subr.bf16.mxu0 0
      %4896 = vmatpush1.bf16.msra.mxu0 0
      %4897 = vmatprep.subr.bf16.mxu0 0
      %4898 = vmatpush1.bf16.msra.mxu0 0
      %4899 = vmatprep.subr.bf16.mxu0 0
      %4900 = vmatpush1.bf16.msra.mxu0 0
      %4901 = vmatprep.subr.bf16.mxu0 0
      %4902 = vmatpush1.bf16.msra.mxu0 0
      %4903 = vmatprep.subr.bf16.mxu0 0
      %4904 = vmatpush1.bf16.msra.mxu0 0
      %4905 = vmatprep.subr.bf16.mxu0 0
      %4906 = vmatpush1.bf16.msra.mxu0 %v3816
      %4907 = vmatprep.subr.bf16.mxu0 0
      %4908 = vmatpush1.bf16.msra.mxu0 %v3815
      %4909 = vmatprep.subr.bf16.mxu0 0
      %4910 = vmatpush2.bf16.msra.mxu0 0
      %4911 = vmatprep.subr.bf16.mxu0 0
      %4912 = vmatpush2.bf16.msra.mxu0 0
      %4913 = vmatprep.subr.bf16.mxu0 0
      %4914 = vmatpush2.bf16.msra.mxu0 0
      %4915 = vmatprep.subr.bf16.mxu0 0
      %4916 = vmatpush2.bf16.msra.mxu0 0
      %4917 = vmatprep.subr.bf16.mxu0 0
      %4918 = vmatpush2.bf16.msra.mxu0 0
      %4919 = vmatprep.subr.bf16.mxu0 0
      %4920 = vmatpush2.bf16.msra.mxu0 0
      %4921 = vmatprep.subr.bf16.mxu0 0
      %4922 = vmatpush2.bf16.msra.mxu0 0
      %4923 = vmatprep.subr.bf16.mxu0 0
      %4924 = vmatpush2.bf16.msra.mxu0 0
      %4925 = vmatprep.mubr.bf16.mxu0 0
      %4926 = vmatmul.mubr.bf16.gmra.mxu0 %v4891
      %v4927 = vpop.f32.mrf.mxu0
      %v4928 = vadd.f32 0.0, %v4927
      %v4929 = vpop.f32.mrf.mxu0
      %v4930 = vpop.f32.mrf.mxu0
      %v4931 = vadd.f32 0.0, %v4930
      %v4932 = vpop.f32.mrf.mxu0
      %4933 = vdwg.mxu0
      %4934 = vmatprep.subr.bf16.mxu0 0
      %4935 = vmatpush1.bf16.msra.mxu0 0
      %4936 = vmatprep.subr.bf16.mxu0 0
      %4937 = vmatpush1.bf16.msra.mxu0 0
      %4938 = vmatprep.subr.bf16.mxu0 0
      %4939 = vmatpush1.bf16.msra.mxu0 0
      %4940 = vmatprep.subr.bf16.mxu0 0
      %4941 = vmatpush1.bf16.msra.mxu0 0
      %4942 = vmatprep.subr.bf16.mxu0 0
      %4943 = vmatpush1.bf16.msra.mxu0 0
      %4944 = vmatprep.subr.bf16.mxu0 0
      %4945 = vmatpush1.bf16.msra.mxu0 0
      %4946 = vmatprep.subr.bf16.mxu0 0
      %4947 = vmatpush1.bf16.msra.mxu0 %v3869
      %4948 = vmatprep.subr.bf16.mxu0 0
      %4949 = vmatpush1.bf16.msra.mxu0 %v3868
      %4950 = vmatprep.subr.bf16.mxu0 0
      %4951 = vmatpush2.bf16.msra.mxu0 0
      %4952 = vmatprep.subr.bf16.mxu0 0
      %4953 = vmatpush2.bf16.msra.mxu0 0
      %4954 = vmatprep.subr.bf16.mxu0 0
      %4955 = vmatpush2.bf16.msra.mxu0 0
      %4956 = vmatprep.subr.bf16.mxu0 0
      %4957 = vmatpush2.bf16.msra.mxu0 0
      %4958 = vmatprep.subr.bf16.mxu0 0
      %4959 = vmatpush2.bf16.msra.mxu0 0
      %4960 = vmatprep.subr.bf16.mxu0 0
      %4961 = vmatpush2.bf16.msra.mxu0 0
      %4962 = vmatprep.subr.bf16.mxu0 0
      %4963 = vmatpush2.bf16.msra.mxu0 0
      %4964 = vmatprep.subr.bf16.mxu0 0
      %4965 = vmatpush2.bf16.msra.mxu0 0
      %4966 = vmatprep.mubr.bf16.mxu0 0
      %4967 = vmatmul.mubr.bf16.gmra.mxu0 %v4891
      %v4968 = vpop.f32.mrf.mxu0
      %v4969 = vadd.f32 0.0, %v4968
      %v4970 = vpop.f32.mrf.mxu0
      %v4971 = vpop.f32.mrf.mxu0
      %v4972 = vadd.f32 0.0, %v4971
      %v4973 = vpop.f32.mrf.mxu0
      %4974 = vdwg.mxu0
      %4975 = vmatprep.subr.bf16.mxu0 0
      %4976 = vmatpush1.bf16.msra.mxu0 0
      %4977 = vmatprep.subr.bf16.mxu0 0
      %4978 = vmatpush1.bf16.msra.mxu0 0
      %4979 = vmatprep.subr.bf16.mxu0 0
      %4980 = vmatpush1.bf16.msra.mxu0 0
      %4981 = vmatprep.subr.bf16.mxu0 0
      %4982 = vmatpush1.bf16.msra.mxu0 0
      %4983 = vmatprep.subr.bf16.mxu0 0
      %4984 = vmatpush1.bf16.msra.mxu0 0
      %4985 = vmatprep.subr.bf16.mxu0 0
      %4986 = vmatpush1.bf16.msra.mxu0 0
      %4987 = vmatprep.subr.bf16.mxu0 0
      %4988 = vmatpush1.bf16.msra.mxu0 %v3922
      %4989 = vmatprep.subr.bf16.mxu0 0
      %4990 = vmatpush1.bf16.msra.mxu0 %v3921
      %4991 = vmatprep.subr.bf16.mxu0 0
      %4992 = vmatpush2.bf16.msra.mxu0 0
      %4993 = vmatprep.subr.bf16.mxu0 0
      %4994 = vmatpush2.bf16.msra.mxu0 0
      %4995 = vmatprep.subr.bf16.mxu0 0
      %4996 = vmatpush2.bf16.msra.mxu0 0
      %4997 = vmatprep.subr.bf16.mxu0 0
      %4998 = vmatpush2.bf16.msra.mxu0 0
      %4999 = vmatprep.subr.bf16.mxu0 0
      %5000 = vmatpush2.bf16.msra.mxu0 0
      %5001 = vmatprep.subr.bf16.mxu0 0
      %5002 = vmatpush2.bf16.msra.mxu0 0
      %5003 = vmatprep.subr.bf16.mxu0 0
      %5004 = vmatpush2.bf16.msra.mxu0 0
      %5005 = vmatprep.subr.bf16.mxu0 0
      %5006 = vmatpush2.bf16.msra.mxu0 0
      %5007 = vmatprep.mubr.bf16.mxu0 0
      %5008 = vmatmul.mubr.bf16.gmra.mxu0 %v4891
      %v5009 = vpop.f32.mrf.mxu0
      %v5010 = vadd.f32 %v3806, %v5009
      %v5011 = vpop.f32.mrf.mxu0
      %v5012 = vpop.f32.mrf.mxu0
      %v5013 = vadd.f32 %v3806, %v5012
      %v5014 = vpop.f32.mrf.mxu0
      %5015 = vdwg.mxu0
      %v5016 = vld [vmem:[%s3104] sm:$0xff]
      %v5017 = vld [vmem:[%s3104 + $0x8] sm:$0xff]
      %v5018 = vadd.f32 %v5016, %v4928
      %v5019 = vadd.f32 %v5017, %v4931
      %v5020 = vxor.u32 %v5018, 2147483648
      %v5021 = vxor.u32 %v5019, 2147483648
      %v5022 = vmul.f32 %v5020, 1.442695
      %v5023 = vpow.pop %v5022
      %v5024 = vmul.f32 %v5021, 1.442695
      %v5025 = vpow.pop %v5024
      %v5026 = vadd.f32 %v5023, 1.0
      %v5027 = vadd.f32 %v5025, 1.0
      %v5028 = vrcp.pop %v5026
      %v5029 = vmul.f32 1.0, %v5028
      %v5030 = vrcp.pop %v5027
      %v5031 = vmul.f32 1.0, %v5030
      %v5032 = vld [vmem:[%s3121] sm:$0xff]
      %v5033 = vld [vmem:[%s3121 + $0x8] sm:$0xff]
      %v5034 = vadd.f32 %v5032, %v4969
      %v5035 = vadd.f32 %v5033, %v4972
      %v5036 = vxor.u32 %v5034, 2147483648
      %v5037 = vxor.u32 %v5035, 2147483648
      %v5038 = vmul.f32 %v5036, 1.442695
      %v5039 = vpow.pop %v5038
      %v5040 = vmul.f32 %v5037, 1.442695
      %v5041 = vpow.pop %v5040
      %v5042 = vadd.f32 %v5039, 1.0
      %v5043 = vadd.f32 %v5041, 1.0
      %v5044 = vrcp.pop %v5042
      %v5045 = vmul.f32 1.0, %v5044
      %v5046 = vrcp.pop %v5043
      %v5047 = vmul.f32 1.0, %v5046
      %v5048 = vld [vmem:[%s3138] sm:$0xff]
      %v5049 = vld [vmem:[%s3138 + $0x8] sm:$0xff]
      %v5050 = vmul.f32 %v5029, %v5010
      %v5051 = vmul.f32 %v5031, %v5013
      %v5052 = vadd.f32 %v5048, %v5050
      %v5053 = vadd.f32 %v5049, %v5051
      %v5054 = vtanh.pop %v5052
      %v5055 = vtanh.pop %v5053
      %v5056 = vsub.f32 1.0, %v5045
      %v5057 = vsub.f32 1.0, %v5047
      %v5058 = vmul.f32 %v5056, %v5054
      %v5059 = vmul.f32 %v5057, %v5055
      %v5060 = vmul.f32 %v5045, %v4887
      %v5061 = vmul.f32 %v5047, %v4888
      %v5062 = vadd.f32 %v5058, %v5060
      %v5063 = vadd.f32 %v5059, %v5061
      %v5064 = vpack.c.bf16 %v5063, %v5062
      %v5066 = vsel %vm1581, %v5064, 0
      %5068 = vmatprep.subr.bf16.mxu0 0
      %5069 = vmatpush1.bf16.msra.mxu0 0
      %5070 = vmatprep.subr.bf16.mxu0 0
      %5071 = vmatpush1.bf16.msra.mxu0 0
      %5072 = vmatprep.subr.bf16.mxu0 0
      %5073 = vmatpush1.bf16.msra.mxu0 0
      %5074 = vmatprep.subr.bf16.mxu0 0
      %5075 = vmatpush1.bf16.msra.mxu0 0
      %5076 = vmatprep.subr.bf16.mxu0 0
      %5077 = vmatpush1.bf16.msra.mxu0 0
      %5078 = vmatprep.subr.bf16.mxu0 0
      %5079 = vmatpush1.bf16.msra.mxu0 0
      %5080 = vmatprep.subr.bf16.mxu0 0
      %5081 = vmatpush1.bf16.msra.mxu0 %v3816
      %5082 = vmatprep.subr.bf16.mxu0 0
      %5083 = vmatpush1.bf16.msra.mxu0 %v3815
      %5084 = vmatprep.subr.bf16.mxu0 0
      %5085 = vmatpush2.bf16.msra.mxu0 0
      %5086 = vmatprep.subr.bf16.mxu0 0
      %5087 = vmatpush2.bf16.msra.mxu0 0
      %5088 = vmatprep.subr.bf16.mxu0 0
      %5089 = vmatpush2.bf16.msra.mxu0 0
      %5090 = vmatprep.subr.bf16.mxu0 0
      %5091 = vmatpush2.bf16.msra.mxu0 0
      %5092 = vmatprep.subr.bf16.mxu0 0
      %5093 = vmatpush2.bf16.msra.mxu0 0
      %5094 = vmatprep.subr.bf16.mxu0 0
      %5095 = vmatpush2.bf16.msra.mxu0 0
      %5096 = vmatprep.subr.bf16.mxu0 0
      %5097 = vmatpush2.bf16.msra.mxu0 0
      %5098 = vmatprep.subr.bf16.mxu0 0
      %5099 = vmatpush2.bf16.msra.mxu0 0
      %5100 = vmatprep.mubr.bf16.mxu0 0
      %5101 = vmatmul.mubr.bf16.gmra.mxu0 %v5066
      %v5102 = vpop.f32.mrf.mxu0
      %v5103 = vadd.f32 0.0, %v5102
      %v5104 = vpop.f32.mrf.mxu0
      %v5105 = vpop.f32.mrf.mxu0
      %v5106 = vadd.f32 0.0, %v5105
      %v5107 = vpop.f32.mrf.mxu0
      %5108 = vdwg.mxu0
      %5109 = vmatprep.subr.bf16.mxu0 0
      %5110 = vmatpush1.bf16.msra.mxu0 0
      %5111 = vmatprep.subr.bf16.mxu0 0
      %5112 = vmatpush1.bf16.msra.mxu0 0
      %5113 = vmatprep.subr.bf16.mxu0 0
      %5114 = vmatpush1.bf16.msra.mxu0 0
      %5115 = vmatprep.subr.bf16.mxu0 0
      %5116 = vmatpush1.bf16.msra.mxu0 0
      %5117 = vmatprep.subr.bf16.mxu0 0
      %5118 = vmatpush1.bf16.msra.mxu0 0
      %5119 = vmatprep.subr.bf16.mxu0 0
      %5120 = vmatpush1.bf16.msra.mxu0 0
      %5121 = vmatprep.subr.bf16.mxu0 0
      %5122 = vmatpush1.bf16.msra.mxu0 %v3869
      %5123 = vmatprep.subr.bf16.mxu0 0
      %5124 = vmatpush1.bf16.msra.mxu0 %v3868
      %5125 = vmatprep.subr.bf16.mxu0 0
      %5126 = vmatpush2.bf16.msra.mxu0 0
      %5127 = vmatprep.subr.bf16.mxu0 0
      %5128 = vmatpush2.bf16.msra.mxu0 0
      %5129 = vmatprep.subr.bf16.mxu0 0
      %5130 = vmatpush2.bf16.msra.mxu0 0
      %5131 = vmatprep.subr.bf16.mxu0 0
      %5132 = vmatpush2.bf16.msra.mxu0 0
      %5133 = vmatprep.subr.bf16.mxu0 0
      %5134 = vmatpush2.bf16.msra.mxu0 0
      %5135 = vmatprep.subr.bf16.mxu0 0
      %5136 = vmatpush2.bf16.msra.mxu0 0
      %5137 = vmatprep.subr.bf16.mxu0 0
      %5138 = vmatpush2.bf16.msra.mxu0 0
      %5139 = vmatprep.subr.bf16.mxu0 0
      %5140 = vmatpush2.bf16.msra.mxu0 0
      %5141 = vmatprep.mubr.bf16.mxu0 0
      %5142 = vmatmul.mubr.bf16.gmra.mxu0 %v5066
      %v5143 = vpop.f32.mrf.mxu0
      %v5144 = vadd.f32 0.0, %v5143
      %v5145 = vpop.f32.mrf.mxu0
      %v5146 = vpop.f32.mrf.mxu0
      %v5147 = vadd.f32 0.0, %v5146
      %v5148 = vpop.f32.mrf.mxu0
      %5149 = vdwg.mxu0
      %5150 = vmatprep.subr.bf16.mxu0 0
      %5151 = vmatpush1.bf16.msra.mxu0 0
      %5152 = vmatprep.subr.bf16.mxu0 0
      %5153 = vmatpush1.bf16.msra.mxu0 0
      %5154 = vmatprep.subr.bf16.mxu0 0
      %5155 = vmatpush1.bf16.msra.mxu0 0
      %5156 = vmatprep.subr.bf16.mxu0 0
      %5157 = vmatpush1.bf16.msra.mxu0 0
      %5158 = vmatprep.subr.bf16.mxu0 0
      %5159 = vmatpush1.bf16.msra.mxu0 0
      %5160 = vmatprep.subr.bf16.mxu0 0
      %5161 = vmatpush1.bf16.msra.mxu0 0
      %5162 = vmatprep.subr.bf16.mxu0 0
      %5163 = vmatpush1.bf16.msra.mxu0 %v3922
      %5164 = vmatprep.subr.bf16.mxu0 0
      %5165 = vmatpush1.bf16.msra.mxu0 %v3921
      %5166 = vmatprep.subr.bf16.mxu0 0
      %5167 = vmatpush2.bf16.msra.mxu0 0
      %5168 = vmatprep.subr.bf16.mxu0 0
      %5169 = vmatpush2.bf16.msra.mxu0 0
      %5170 = vmatprep.subr.bf16.mxu0 0
      %5171 = vmatpush2.bf16.msra.mxu0 0
      %5172 = vmatprep.subr.bf16.mxu0 0
      %5173 = vmatpush2.bf16.msra.mxu0 0
      %5174 = vmatprep.subr.bf16.mxu0 0
      %5175 = vmatpush2.bf16.msra.mxu0 0
      %5176 = vmatprep.subr.bf16.mxu0 0
      %5177 = vmatpush2.bf16.msra.mxu0 0
      %5178 = vmatprep.subr.bf16.mxu0 0
      %5179 = vmatpush2.bf16.msra.mxu0 0
      %5180 = vmatprep.subr.bf16.mxu0 0
      %5181 = vmatpush2.bf16.msra.mxu0 0
      %5182 = vmatprep.mubr.bf16.mxu0 0
      %5183 = vmatmul.mubr.bf16.gmra.mxu0 %v5066
      %v5184 = vpop.f32.mrf.mxu0
      %v5185 = vadd.f32 %v3806, %v5184
      %v5186 = vpop.f32.mrf.mxu0
      %v5187 = vpop.f32.mrf.mxu0
      %v5188 = vadd.f32 %v3806, %v5187
      %v5189 = vpop.f32.mrf.mxu0
      %5190 = vdwg.mxu0
      %v5191 = vld [vmem:[%s3285] sm:$0xff]
      %v5192 = vld [vmem:[%s3285 + $0x8] sm:$0xff]
      %v5193 = vadd.f32 %v5191, %v5103
      %v5194 = vadd.f32 %v5192, %v5106
      %v5195 = vxor.u32 %v5193, 2147483648
      %v5196 = vxor.u32 %v5194, 2147483648
      %v5197 = vmul.f32 %v5195, 1.442695
      %v5198 = vpow.pop %v5197
      %v5199 = vmul.f32 %v5196, 1.442695
      %v5200 = vpow.pop %v5199
      %v5201 = vadd.f32 %v5198, 1.0
      %v5202 = vadd.f32 %v5200, 1.0
      %v5203 = vrcp.pop %v5201
      %v5204 = vmul.f32 1.0, %v5203
      %v5205 = vrcp.pop %v5202
      %v5206 = vmul.f32 1.0, %v5205
      %v5207 = vld [vmem:[%s3302] sm:$0xff]
      %v5208 = vld [vmem:[%s3302 + $0x8] sm:$0xff]
      %v5209 = vadd.f32 %v5207, %v5144
      %v5210 = vadd.f32 %v5208, %v5147
      %v5211 = vxor.u32 %v5209, 2147483648
      %v5212 = vxor.u32 %v5210, 2147483648
      %v5213 = vmul.f32 %v5211, 1.442695
      %v5214 = vpow.pop %v5213
      %v5215 = vmul.f32 %v5212, 1.442695
      %v5216 = vpow.pop %v5215
      %v5217 = vadd.f32 %v5214, 1.0
      %v5218 = vadd.f32 %v5216, 1.0
      %v5219 = vrcp.pop %v5217
      %v5220 = vmul.f32 1.0, %v5219
      %v5221 = vrcp.pop %v5218
      %v5222 = vmul.f32 1.0, %v5221
      %v5223 = vld [vmem:[%s3319] sm:$0xff]
      %v5224 = vld [vmem:[%s3319 + $0x8] sm:$0xff]
      %v5225 = vmul.f32 %v5204, %v5185
      %v5226 = vmul.f32 %v5206, %v5188
      %v5227 = vadd.f32 %v5223, %v5225
      %v5228 = vadd.f32 %v5224, %v5226
      %v5229 = vtanh.pop %v5227
      %v5230 = vtanh.pop %v5228
      %v5231 = vsub.f32 1.0, %v5220
      %v5232 = vsub.f32 1.0, %v5222
      %v5233 = vmul.f32 %v5231, %v5229
      %v5234 = vmul.f32 %v5232, %v5230
      %v5235 = vmul.f32 %v5220, %v5062
      %v5236 = vmul.f32 %v5222, %v5063
      %v5237 = vadd.f32 %v5233, %v5235
      %v5238 = vadd.f32 %v5234, %v5236
      %v5239 = vpack.c.bf16 %v5238, %v5237
      %v5240 = vld [vmem:[%s7] sm:$0xf]
      %v5241 = vld [vmem:[%s7 + $0x4] sm:$0xf]
      %v5242 = vld [vmem:[%s7 + $0x8] sm:$0xf]
      %v5243 = vld [vmem:[%s7 + $0xc] sm:$0xf]
      %v5244 = vld [vmem:[%s8] sm:$0x1]
      %v5246 = vlaneseq
      %v5247 = vshrl.u32 %v5246, 7
      %v5248 = vsub.s32 0, %v5247
      %v5249 = vrot.slane %v5244, %v5248
      %v5255 = vunpack.c.l.b16 %v5240
      %v5256 = vunpack.c.l.b16 %v5241
      %v5257 = vunpack.c.l.b16 %v5242
      %v5258 = vunpack.c.l.b16 %v5243
      %v5259 = vpack.c.b16 %v5256, %v5255
      %v5260 = vpack.c.b16 %v5258, %v5257
      %v5264 = vsel %vm1581, %v5239, 0
      %5266 = vmatprep.subr.bf16.mxu0 0
      %5267 = vmatpush1.bf16.msra.mxu0 0
      %5268 = vmatprep.subr.bf16.mxu0 0
      %5269 = vmatpush1.bf16.msra.mxu0 0
      %5270 = vmatprep.subr.bf16.mxu0 0
      %5271 = vmatpush1.bf16.msra.mxu0 0
      %5272 = vmatprep.subr.bf16.mxu0 0
      %5273 = vmatpush1.bf16.msra.mxu0 0
      %5274 = vmatprep.subr.bf16.mxu0 0
      %5275 = vmatpush1.bf16.msra.mxu0 0
      %5276 = vmatprep.subr.bf16.mxu0 0
      %5277 = vmatpush1.bf16.msra.mxu0 0
      %5278 = vmatprep.subr.bf16.mxu0 0
      %5279 = vmatpush1.bf16.msra.mxu0 %v5260
      %5280 = vmatprep.subr.bf16.mxu0 0
      %5281 = vmatpush1.bf16.msra.mxu0 %v5259
      %5282 = vmatprep.subr.bf16.mxu0 0
      %5283 = vmatpush2.bf16.msra.mxu0 0
      %5284 = vmatprep.subr.bf16.mxu0 0
      %5285 = vmatpush2.bf16.msra.mxu0 0
      %5286 = vmatprep.subr.bf16.mxu0 0
      %5287 = vmatpush2.bf16.msra.mxu0 0
      %5288 = vmatprep.subr.bf16.mxu0 0
      %5289 = vmatpush2.bf16.msra.mxu0 0
      %5290 = vmatprep.subr.bf16.mxu0 0
      %5291 = vmatpush2.bf16.msra.mxu0 0
      %5292 = vmatprep.subr.bf16.mxu0 0
      %5293 = vmatpush2.bf16.msra.mxu0 0
      %5294 = vmatprep.subr.bf16.mxu0 0
      %5295 = vmatpush2.bf16.msra.mxu0 0
      %5296 = vmatprep.subr.bf16.mxu0 0
      %5297 = vmatpush2.bf16.msra.mxu0 0
      %5298 = vmatprep.mubr.bf16.mxu0 0
      %5299 = vmatmul.mubr.bf16.gmra.mxu0 %v5264
      %v5300 = vpop.f32.mrf.mxu0
      %v5301 = vadd.f32 %v5249, %v5300
      %v5302 = vpop.f32.mrf.mxu0
      %v5303 = vpop.f32.mrf.mxu0
      %v5304 = vadd.f32 %v5249, %v5303
      %v5305 = vpop.f32.mrf.mxu0
      %5306 = vdwg.mxu0
      %5307 = vst.msk [vmem:[%s332] sm:$0xff] %vm383, %v5301
      %5308 = vst.msk [vmem:[%s332 + $0x8] sm:$0xff] %vm383, %v5304
      %s5309 = smul.u32 2, %s20
      %p5310 = scmp.lt.s32.totalorder %s5309, 3
      %s5311 = scalar_select %p5310, %s5309, 3
      %s5312 = smul.addr %s5311, 8
      %s5313 = scalar_lea.vmem %s9, %s5312
      // Predicated region
      $region57: #{cst_risk_factor.1} parent=55 // pred_check
        %p5314 = pneg %p232
      $region58: #{cst_risk_factor.1} parent=55 // pred_check_branch
        %5316 = sbr.rel (%p5314) target = $region60
      $region59: #{cst_risk_factor.1} parent=55 // pred_region
        %s5317 = smul.u32 2, %s20
      $region60: #{cst_risk_factor.1} parent=55 // pred_fallthru
        _
    $region56: #{cst_risk_factor.1} parent=5 // pred_fallthru
      _
    %p5318 = scmp.le.s32.totalorder 2, %s15
    // Predicated region
    $region61: #{cst_risk_factor.1} parent=5 // pred_check
      %p5319 = pneg %p5318
    $region62: #{cst_risk_factor.1} parent=5 // pred_check_branch
      %5321 = sbr.rel (%p5319) target = $region64
    $region63: #{cst_risk_factor.1} parent=5 // pred_region
      %s5322 = ssub.s32 %s15, 2
      // Predicated region
      $region65: #{cst_risk_factor.1} parent=63 // pred_check
        %p5323 = pneg %p238
      $region66: #{cst_risk_factor.1} parent=63 // pred_check_branch
        %5325 = sbr.rel (%p5323) target = $region68
      $region67: #{cst_risk_factor.1} parent=63 // pred_region
        %s5326 = smul.u32 2, %s21
        %p5327 = scmp.lt.s32.totalorder %s5326, 3
        %s5328 = scalar_select %p5327, %s5326, 3
        %s5329 = smul.addr %s5328, 8
        %s5330 = scalar_lea.vmem %s9, %s5329
      $region68: #{cst_risk_factor.1} parent=63 // pred_fallthru
        _
    $region64: #{cst_risk_factor.1} parent=5 // pred_fallthru
      _
  $region6: #{cst_risk_factor.1} parent=0 // loop_footer
    %s19 = sadd.s32 1, %s15
  $region7: #{cst_risk_factor.1} parent=0 // loop_footer_branch
    %14 = sbr.rel target = $region3
  $region8: #{cst_risk_factor.1} parent=0 // loop_exit
    _

</llo_original>
